<compile_context>
chip_gen: v7x
topology: tpu7x:2x2x1
jax: 0.10.0
libtpu: 0.0.40
codegen_flags: <defaults>
</compile_context>

<pallas_src>
import jax
import jax.numpy as jnp
from jax import lax
from jax.experimental import pallas as pl
from jax.experimental.pallas import tpu as pltpu

LANES = 128  # channel (lane) width used for every layer inside the kernel


def _rup8(n):
    return ((n + 7) // 8) * 8


# ----------------------------------------------------------------------------
# Fused Pallas kernel
# ----------------------------------------------------------------------------
def _make_kernel(h1, w1):
    # Layer resolutions (en_max1/2 pad=0, en_max3 pad=1, all kernel=stride=2).
    h2, w2 = h1 // 2, w1 // 2
    h3, w3 = h2 // 2, w2 // 2
    h4, w4 = h3 // 2 + 1, w3 // 2 + 1

    def mpad(h, w):          # zero-bordered canvas rows per image
        return (h + 2) * (w + 2)

    def mprime(h, w):        # GEMM rows: first..last interior canvas row
        return mpad(h, w) - 2 * (w + 3)

    m1p, m2p, m3p, m4p = (mprime(h1, w1), mprime(h2, w2),
                          mprime(h3, w3), mprime(h4, w4))

    def kernel(x_ref, cw_ref, cb_ref, fw_ref, fb_ref, o_ref,
               c2a, c2b, c3a, c3b, c4, work):
        # Re-zero the internal canvases every image.  This guarantees zero
        # SAME-padding borders even when the parallel batch grid is split
        # across TensorCores (scratch is per-core and not zero-initialized).
        for c in (c2a, c2b, c3a, c3b, c4):
            c[...] = jnp.zeros_like(c)

        def conv(src_ref, idx, m, w):
            """3x3 / stride-1 / SAME conv as a single im2col GEMM.

            src_ref is a zero-bordered canvas ((h+2)*(w+2) rows, pitch w+2).
            Output value row v = y*(w+2) + x for interior pixel (y, x); rows
            with x >= w are junk and are never consumed downstream.
            """
            pitch = w + 2
            taps = [src_ref[pl.ds((pitch + 1) + (dy - 1) * pitch + (dx - 1),
                                  m), :]
                    for dy in range(3) for dx in range(3)]
            cols = jnp.concatenate(taps, axis=1)                # (m, 1152)
            out = jnp.dot(cols, cw_ref[idx],
                          preferred_element_type=jnp.float32)
            return out + cb_ref[pl.ds(idx, 1), :]               # bias, once

        def store_interior(val, h, w, dst_ref):
            """Write interior pixels of a conv-output value into a same-
            resolution canvas (borders stay zero)."""
            pitch = w + 2
            for y in range(h):
                dst_ref[pl.ds((y + 1) * pitch + 1, w), :] = \
                    val[y * pitch:y * pitch + w, :]

        def maxpool2(src_ref, h, w, dst_ref):
            """MaxPool2d(2, 2, padding=0): VPU max of 4 stride-2 row slices
            per output spatial row, written into the next canvas interior."""
            pitch, wo = w + 2, w // 2
            dpitch = wo + 2
            for yo in range(h // 2):
                r0 = (2 * yo) * pitch
                r1 = (2 * yo + 1) * pitch
                t = jnp.maximum(
                    jnp.maximum(src_ref[pl.ds(r0, wo, stride=2), :],
                                src_ref[pl.ds(r0 + 1, wo, stride=2), :]),
                    jnp.maximum(src_ref[pl.ds(r1, wo, stride=2), :],
                                src_ref[pl.ds(r1 + 1, wo, stride=2), :]))
                dst_ref[pl.ds((yo + 1) * dpitch + 1, wo), :] = t

        def maxpool2_pad1(src_ref, h, w, dst_ref):
            """MaxPool2d(2, 2, padding=1): window taps clamped in-bounds
            (duplicating an in-window pixel never changes a max, so this is
            exactly equivalent to PyTorch's -inf padding)."""
            pitch = w + 2
            ho, wo = h // 2 + 1, w // 2 + 1
            dpitch = wo + 2
            for yo in range(ho):
                ya, yb = max(2 * yo - 1, 0), min(2 * yo, h - 1)
                rm = src_ref[pl.ds(ya * pitch, w), :]
                if yb != ya:
                    rm = jnp.maximum(rm, src_ref[pl.ds(yb * pitch, w), :])
                pieces = []
                for xo in range(wo):
                    xa, xb = max(2 * xo - 1, 0), min(2 * xo, w - 1)
                    p = rm[xa:xa + 1, :]
                    if xb != xa:
                        p = jnp.maximum(p, rm[xb:xb + 1, :])
                    pieces.append(p)
                dst_ref[pl.ds((yo + 1) * dpitch + 1, wo), :] = \
                    jnp.concatenate(pieces, axis=0)

        # ---- encoder ------------------------------------------------------
        v = conv(x_ref, 0, m1p, w1)                      # en_conv1
        work[pl.ds(0, m1p), :] = v
        maxpool2(work, h1, w1, c2a)                      # en_max1

        v = conv(c2a, 1, m2p, w2)                        # en_conv2a
        store_interior(v, h2, w2, c2b)
        v = conv(c2b, 2, m2p, w2)                        # en_conv2b
        work[pl.ds(0, m2p), :] = v
        maxpool2(work, h2, w2, c3a)                      # en_max2

        v = conv(c3a, 3, m3p, w3)                        # en_conv3a
        store_interior(v, h3, w3, c3b)
        v = conv(c3b, 4, m3p, w3)                        # en_conv3b
        work[pl.ds(0, m3p), :] = v
        maxpool2_pad1(work, h3, w3, c4)                  # en_max3 (pad=1)

        v = conv(c4, 5, m4p, w4)                         # en_conv4

        # Global spatial max pool over the h4 x w4 interior rows.
        pitch4 = w4 + 2
        rows = v[0:w4, :]
        for y in range(1, h4):
            rows = jnp.maximum(rows, v[y * pitch4:y * pitch4 + w4, :])
        g = jnp.max(rows, axis=0, keepdims=True)         # (1, 128)

        # fc1/relu, fc2/relu, fc3.  Weights are stored (in, out); PyTorch
        # Linear weights are (out, in) and need a transpose when porting.
        h = jnp.maximum(
            jnp.dot(g, fw_ref[0], preferred_element_type=jnp.float32)
            + fb_ref[pl.ds(0, 1), :], 0.0)
        h = jnp.maximum(
            jnp.dot(h, fw_ref[1], preferred_element_type=jnp.float32)
            + fb_ref[pl.ds(1, 1), :], 0.0)
        o_ref[...] = (
            jnp.dot(h, fw_ref[2], preferred_element_type=jnp.float32)
            + fb_ref[pl.ds(2, 1), :]).astype(o_ref.dtype)

    return kernel


# ----------------------------------------------------------------------------
# Public forward (single fused pallas_call, batch grid) and pure-JAX reference
# ----------------------------------------------------------------------------
def kazunet_forward(x_nchw, p):
    B, cin, h1, w1 = x_nchw.shape
    num_classes = p["fc3_w"].shape[1]
    assert cin <= LANES and num_classes <= LANES
    assert h1 % 4 == 0 and w1 % 4 == 0 and h1 >= 8 and w1 >= 8

    h2, w2 = h1 // 2, w1 // 2
    h3, w3 = h2 // 2, w2 // 2
    h4, w4 = h3 // 2 + 1, w3 // 2 + 1
    mc1 = (h1 + 2) * (w1 + 2)
    mc2 = (h2 + 2) * (w2 + 2)
    mc3 = (h3 + 2) * (w3 + 2)
    mc4 = (h4 + 2) * (w4 + 2)
    m1p = mc1 - 2 * (w1 + 3)

    # Input -> zero-bordered per-image canvas, channels padded to 128 lanes.
    x = jnp.transpose(x_nchw, (0, 2, 3, 1)).astype(jnp.float32)
    x = jnp.pad(x, ((0, 0), (1, 1), (1, 1), (0, LANES - cin)))
    x = x.reshape(B, mc1, LANES)

    # Packed operands (5 HBM->VMEM transfers instead of 22).
    def conv_w(w):
        ci, co = w.shape[2], w.shape[3]
        w = jnp.pad(w, ((0, 0), (0, 0), (0, LANES - ci), (0, LANES - co)))
        return w.reshape(9 * LANES, LANES)        # rows: (tap, cin) major->minor

    def vec(b):
        return jnp.pad(b, (0, LANES - b.shape[0]))

    cw = jnp.stack([conv_w(p[k]) for k in
                    ("c1_w", "c2a_w", "c2b_w", "c3a_w", "c3b_w", "c4_w")])
    cb = jnp.stack([vec(p[k]) for k in
                    ("c1_b", "c2a_b", "c2b_b", "c3a_b", "c3b_b", "c4_b")])
    fw = jnp.stack([p["fc1_w"], p["fc2_w"],
                    jnp.pad(p["fc3_w"], ((0, 0), (0, LANES - num_classes)))])
    fb = jnp.stack([vec(p["fc1_b"]), vec(p["fc2_b"]), vec(p["fc3_b"])])

    kernel = _make_kernel(h1, w1)

    out = pl.pallas_call(
        kernel,
        out_shape=jax.ShapeDtypeStruct((B, 1, LANES), jnp.float32),
        grid=(B,),
        in_specs=[
            pl.BlockSpec((None, mc1, LANES), lambda b: (b, 0, 0)),       # x
            pl.BlockSpec((6, 9 * LANES, LANES), lambda b: (0, 0, 0)),    # conv w
            pl.BlockSpec((6, LANES), lambda b: (0, 0)),                  # conv b
            pl.BlockSpec((3, LANES, LANES), lambda b: (0, 0, 0)),        # fc w
            pl.BlockSpec((3, LANES), lambda b: (0, 0)),                  # fc b
        ],
        out_specs=pl.BlockSpec((None, 1, LANES), lambda b: (b, 0, 0)),
        scratch_shapes=[
            pltpu.VMEM((_rup8(mc2), LANES), jnp.float32),   # canvas 2a
            pltpu.VMEM((_rup8(mc2), LANES), jnp.float32),   # canvas 2b
            pltpu.VMEM((_rup8(mc3), LANES), jnp.float32),   # canvas 3a
            pltpu.VMEM((_rup8(mc3), LANES), jnp.float32),   # canvas 3b
            pltpu.VMEM((_rup8(mc4), LANES), jnp.float32),   # canvas 4
            pltpu.VMEM((_rup8(m1p), LANES), jnp.float32),   # pool staging
        ],
        compiler_params=pltpu.CompilerParams(
            dimension_semantics=("parallel",),
            vmem_limit_bytes=32 * 1024 * 1024),
    )(x, cw, cb, fw, fb)

    return out.reshape(B, LANES)[:, :num_classes]


def kazunet_reference(x_nchw, p):
    """Pure-JAX (XLA) reference for correctness checking."""
    x = jnp.transpose(x_nchw, (0, 2, 3, 1))
    dn = ("NHWC", "HWIO", "NHWC")

    def conv(h, w, b):
        return lax.conv_general_dilated(h, w, (1, 1), "SAME",
                                        dimension_numbers=dn) + b

    def pool(h, pad):
        padding = ((0, 0), (pad, pad), (pad, pad), (0, 0))
        return lax.reduce_window(h, -jnp.inf, lax.max,
                                 (1, 2, 2, 1), (1, 2, 2, 1), padding)

    x = conv(x, p["c1_w"], p["c1_b"]); x = pool(x, 0)
    x = conv(x, p["c2a_w"], p["c2a_b"]); x = conv(x, p["c2b_w"], p["c2b_b"]); x = pool(x, 0)
    x = conv(x, p["c3a_w"], p["c3a_b"]); x = conv(x, p["c3b_w"], p["c3b_b"]); x = pool(x, 1)
    x = conv(x, p["c4_w"], p["c4_b"])
    x = jnp.max(x, axis=(1, 2))                       # global max pool -> (B, 128)
    x = jnp.maximum(x @ p["fc1_w"] + p["fc1_b"], 0.0)
    x = jnp.maximum(x @ p["fc2_w"] + p["fc2_b"], 0.0)
    return x @ p["fc3_w"] + p["fc3_b"]


# ----------------------------------------------------------------------------
# Deterministic parameter init (synthetic weights; shapes from __init__)
# ----------------------------------------------------------------------------
def init_params(key, num_input_channels=4, num_classes=3):
    keys = jax.random.split(key, 20)
    ki = iter(range(20))

    def conv_wb(cin, cout):
        kw, kb = keys[next(ki)], keys[next(ki)]
        scale = 1.0 / jnp.sqrt(9.0 * cin)
        w = jax.random.normal(kw, (3, 3, cin, cout), jnp.float32) * scale
        b = jax.random.normal(kb, (cout,), jnp.float32) * 0.01
        return w, b

    def fc_wb(fin, fout):
        kw, kb = keys[next(ki)], keys[next(ki)]
        scale = 1.0 / jnp.sqrt(float(fin))
        w = jax.random.normal(kw, (fin, fout), jnp.float32) * scale  # (in, out)
        b = jax.random.normal(kb, (fout,), jnp.float32) * 0.01
        return w, b

    p = {}
    p["c1_w"], p["c1_b"] = conv_wb(num_input_channels, 64)
    p["c2a_w"], p["c2a_b"] = conv_wb(64, 64)
    p["c2b_w"], p["c2b_b"] = conv_wb(64, 64)
    p["c3a_w"], p["c3a_b"] = conv_wb(64, 128)
    p["c3b_w"], p["c3b_b"] = conv_wb(128, 128)
    p["c4_w"], p["c4_b"] = conv_wb(128, 128)
    p["fc1_w"], p["fc1_b"] = fc_wb(128, 128)
    p["fc2_w"], p["fc2_b"] = fc_wb(128, 128)
    p["fc3_w"], p["fc3_b"] = fc_wb(128, num_classes)
    return p


if __name__ == "__main__":
    key = jax.random.PRNGKey(0)
    kp, kx = jax.random.split(key)

    # KazuNet(num_input_channels=4, num_classes=3) on a 16x16 input, batch 2.
    num_input_channels, num_classes = 4, 3
    params = init_params(kp, num_input_channels, num_classes)
    x = jax.random.normal(kx, (2, num_input_channels, 16, 16), jnp.float32)  # NCHW

    out = jax.jit(kazunet_forward)(x, params)
    out = jax.block_until_ready(out)
    assert out.shape == (2, num_classes)

    ref = kazunet_reference(x, params)
    assert jnp.allclose(out, ref, atol=1e-3, rtol=1e-3), (
        "Pallas output does not match JAX reference")

    print("KERNEL_OK")
</pallas_src>

<mosaic_0001>
module attributes {stable_mosaic.version = 11 : i64} {
  func.func @kernel(%arg0: i32, %arg1: memref<1x324x128xf32, #tpu.memory_space<vmem>>, %arg2: memref<6x1152x128xf32, #tpu.memory_space<vmem>>, %arg3: memref<6x128xf32, #tpu.memory_space<vmem>>, %arg4: memref<3x128x128xf32, #tpu.memory_space<vmem>>, %arg5: memref<3x128xf32, #tpu.memory_space<vmem>>, %arg6: memref<1x1x128xf32, #tpu.memory_space<vmem>>, %arg7: memref<104x128xf32, #tpu.memory_space<vmem>>, %arg8: memref<104x128xf32, #tpu.memory_space<vmem>>, %arg9: memref<40x128xf32, #tpu.memory_space<vmem>>, %arg10: memref<40x128xf32, #tpu.memory_space<vmem>>, %arg11: memref<32x128xf32, #tpu.memory_space<vmem>>, %arg12: memref<288x128xf32, #tpu.memory_space<vmem>>) attributes {dimension_semantics = [#tpu.dimension_semantics<parallel>], iteration_bounds = array<i64: 2>, scalar_prefetch = 0 : i64, scratch_operands = 6 : i64, tpu.core_type = #tpu.core_type<tc>, window_params = [{transform_indices = @transform_0, window_bounds = array<i64: 1, 324, 128>}, {pipeline_mode = #tpu.pipeline_mode<synchronous>, transform_indices = @transform_1, window_bounds = array<i64: 6, 1152, 128>}, {pipeline_mode = #tpu.pipeline_mode<synchronous>, transform_indices = @transform_2, window_bounds = array<i64: 6, 128>}, {pipeline_mode = #tpu.pipeline_mode<synchronous>, transform_indices = @transform_3, window_bounds = array<i64: 3, 128, 128>}, {pipeline_mode = #tpu.pipeline_mode<synchronous>, transform_indices = @transform_4, window_bounds = array<i64: 3, 128>}, {transform_indices = @transform_5, window_bounds = array<i64: 1, 1, 128>}]} {
    %cst = arith.constant 0.000000e+00 : f32
    %0 = vector.broadcast %cst : f32 to vector<104x128xf32>
    %c0 = arith.constant 0 : index
    %c0_0 = arith.constant 0 : index
    %1 = vector.load %arg7[%c0, %c0_0] : memref<104x128xf32, #tpu.memory_space<vmem>>, vector<104x128xf32>
    tpu.vector_store %arg7[%c0, %c0_0], %0 {strides = array<i32>} : memref<104x128xf32, #tpu.memory_space<vmem>>, vector<104x128xf32>,
    %cst_1 = arith.constant 0.000000e+00 : f32
    %2 = vector.broadcast %cst_1 : f32 to vector<104x128xf32>
    %c0_2 = arith.constant 0 : index
    %c0_3 = arith.constant 0 : index
    %3 = vector.load %arg8[%c0_2, %c0_3] : memref<104x128xf32, #tpu.memory_space<vmem>>, vector<104x128xf32>
    tpu.vector_store %arg8[%c0_2, %c0_3], %2 {strides = array<i32>} : memref<104x128xf32, #tpu.memory_space<vmem>>, vector<104x128xf32>,
    %cst_4 = arith.constant 0.000000e+00 : f32
    %4 = vector.broadcast %cst_4 : f32 to vector<40x128xf32>
    %c0_5 = arith.constant 0 : index
    %c0_6 = arith.constant 0 : index
    %5 = vector.load %arg9[%c0_5, %c0_6] : memref<40x128xf32, #tpu.memory_space<vmem>>, vector<40x128xf32>
    tpu.vector_store %arg9[%c0_5, %c0_6], %4 {strides = array<i32>} : memref<40x128xf32, #tpu.memory_space<vmem>>, vector<40x128xf32>,
    %cst_7 = arith.constant 0.000000e+00 : f32
    %6 = vector.broadcast %cst_7 : f32 to vector<40x128xf32>
    %c0_8 = arith.constant 0 : index
    %c0_9 = arith.constant 0 : index
    %7 = vector.load %arg10[%c0_8, %c0_9] : memref<40x128xf32, #tpu.memory_space<vmem>>, vector<40x128xf32>
    tpu.vector_store %arg10[%c0_8, %c0_9], %6 {strides = array<i32>} : memref<40x128xf32, #tpu.memory_space<vmem>>, vector<40x128xf32>,
    %cst_10 = arith.constant 0.000000e+00 : f32
    %8 = vector.broadcast %cst_10 : f32 to vector<32x128xf32>
    %c0_11 = arith.constant 0 : index
    %c0_12 = arith.constant 0 : index
    %9 = vector.load %arg11[%c0_11, %c0_12] : memref<32x128xf32, #tpu.memory_space<vmem>>, vector<32x128xf32>
    tpu.vector_store %arg11[%c0_11, %c0_12], %8 {strides = array<i32>} : memref<32x128xf32, #tpu.memory_space<vmem>>, vector<32x128xf32>,
    %c0_13 = arith.constant 0 : index
    %c0_14 = arith.constant 0 : index
    %c0_15 = arith.constant 0 : index
    %10 = vector.load %arg1[%c0_13, %c0_14, %c0_15] : memref<1x324x128xf32, #tpu.memory_space<vmem>>, vector<1x286x128xf32>
    %11 = vector.shape_cast %10 : vector<1x286x128xf32> to vector<286x128xf32>
    %c0_16 = arith.constant 0 : index
    %c1 = arith.constant 1 : index
    %c0_17 = arith.constant 0 : index
    %12 = vector.load %arg1[%c0_16, %c1, %c0_17] : memref<1x324x128xf32, #tpu.memory_space<vmem>>, vector<1x286x128xf32>
    %13 = vector.shape_cast %12 : vector<1x286x128xf32> to vector<286x128xf32>
    %c0_18 = arith.constant 0 : index
    %c2 = arith.constant 2 : index
    %c0_19 = arith.constant 0 : index
    %14 = vector.load %arg1[%c0_18, %c2, %c0_19] : memref<1x324x128xf32, #tpu.memory_space<vmem>>, vector<1x286x128xf32>
    %15 = vector.shape_cast %14 : vector<1x286x128xf32> to vector<286x128xf32>
    %c0_20 = arith.constant 0 : index
    %c18 = arith.constant 18 : index
    %c0_21 = arith.constant 0 : index
    %16 = vector.load %arg1[%c0_20, %c18, %c0_21] : memref<1x324x128xf32, #tpu.memory_space<vmem>>, vector<1x286x128xf32>
    %17 = vector.shape_cast %16 : vector<1x286x128xf32> to vector<286x128xf32>
    %c0_22 = arith.constant 0 : index
    %c19 = arith.constant 19 : index
    %c0_23 = arith.constant 0 : index
    %18 = vector.load %arg1[%c0_22, %c19, %c0_23] : memref<1x324x128xf32, #tpu.memory_space<vmem>>, vector<1x286x128xf32>
    %19 = vector.shape_cast %18 : vector<1x286x128xf32> to vector<286x128xf32>
    %c0_24 = arith.constant 0 : index
    %c20 = arith.constant 20 : index
    %c0_25 = arith.constant 0 : index
    %20 = vector.load %arg1[%c0_24, %c20, %c0_25] : memref<1x324x128xf32, #tpu.memory_space<vmem>>, vector<1x286x128xf32>
    %21 = vector.shape_cast %20 : vector<1x286x128xf32> to vector<286x128xf32>
    %c0_26 = arith.constant 0 : index
    %c36 = arith.constant 36 : index
    %c0_27 = arith.constant 0 : index
    %22 = vector.load %arg1[%c0_26, %c36, %c0_27] : memref<1x324x128xf32, #tpu.memory_space<vmem>>, vector<1x286x128xf32>
    %23 = vector.shape_cast %22 : vector<1x286x128xf32> to vector<286x128xf32>
    %c0_28 = arith.constant 0 : index
    %c37 = arith.constant 37 : index
    %c0_29 = arith.constant 0 : index
    %24 = vector.load %arg1[%c0_28, %c37, %c0_29] : memref<1x324x128xf32, #tpu.memory_space<vmem>>, vector<1x286x128xf32>
    %25 = vector.shape_cast %24 : vector<1x286x128xf32> to vector<286x128xf32>
    %c0_30 = arith.constant 0 : index
    %c38 = arith.constant 38 : index
    %c0_31 = arith.constant 0 : index
    %26 = vector.load %arg1[%c0_30, %c38, %c0_31] : memref<1x324x128xf32, #tpu.memory_space<vmem>>, vector<1x286x128xf32>
    %27 = vector.shape_cast %26 : vector<1x286x128xf32> to vector<286x128xf32>
    %28 = tpu.concatenate %11, %13, %15, %17, %19, %21, %23, %25, %27 in 1 : vector<286x128xf32>, vector<286x128xf32>, vector<286x128xf32>, vector<286x128xf32>, vector<286x128xf32>, vector<286x128xf32>, vector<286x128xf32>, vector<286x128xf32>, vector<286x128xf32> -> vector<286x1152xf32>
    %c0_32 = arith.constant 0 : index
    %c0_33 = arith.constant 0 : index
    %c0_34 = arith.constant 0 : index
    %29 = vector.load %arg2[%c0_32, %c0_33, %c0_34] : memref<6x1152x128xf32, #tpu.memory_space<vmem>>, vector<1x1152x128xf32>
    %30 = vector.shape_cast %29 : vector<1x1152x128xf32> to vector<1152x128xf32>
    %cst_35 = arith.constant dense<0.000000e+00> : vector<286x128xf32>
    %31 = tpu.matmul %28, %30, %cst_35 {dimension_numbers = #tpu.dot_dimension_numbers<[1], [0], [0], [1], [0, 0, 1, 1], [], []>} : vector<286x1152xf32>, vector<1152x128xf32>, vector<286x128xf32> -> vector<286x128xf32>
    %c0_36 = arith.constant 0 : index
    %c0_37 = arith.constant 0 : index
    %32 = vector.load %arg3[%c0_36, %c0_37] : memref<6x128xf32, #tpu.memory_space<vmem>>, vector<1x128xf32>
    %33 = vector.broadcast %32 : vector<1x128xf32> to vector<286x128xf32>
    %34 = arith.addf %31, %33 : vector<286x128xf32>
    %c0_38 = arith.constant 0 : index
    %c0_39 = arith.constant 0 : index
    %35 = vector.load %arg12[%c0_38, %c0_39] : memref<288x128xf32, #tpu.memory_space<vmem>>, vector<286x128xf32>
    tpu.vector_store %arg12[%c0_38, %c0_39], %34 {strides = array<i32>} : memref<288x128xf32, #tpu.memory_space<vmem>>, vector<286x128xf32>,
    %c0_40 = arith.constant 0 : index
    %c0_41 = arith.constant 0 : index
    %36 = tpu.strided_load %arg12[%c0_40, %c0_41] {strides = array<i32: 2, 1>} : memref<288x128xf32, #tpu.memory_space<vmem>>, vector<8x128xf32>
    %c1_42 = arith.constant 1 : index
    %c0_43 = arith.constant 0 : index
    %37 = tpu.strided_load %arg12[%c1_42, %c0_43] {strides = array<i32: 2, 1>} : memref<288x128xf32, #tpu.memory_space<vmem>>, vector<8x128xf32>
    %38 = arith.maximumf %36, %37 : vector<8x128xf32>
    %c18_44 = arith.constant 18 : index
    %c0_45 = arith.constant 0 : index
    %39 = tpu.strided_load %arg12[%c18_44, %c0_45] {strides = array<i32: 2, 1>} : memref<288x128xf32, #tpu.memory_space<vmem>>, vector<8x128xf32>
    %c19_46 = arith.constant 19 : index
    %c0_47 = arith.constant 0 : index
    %40 = tpu.strided_load %arg12[%c19_46, %c0_47] {strides = array<i32: 2, 1>} : memref<288x128xf32, #tpu.memory_space<vmem>>, vector<8x128xf32>
    %41 = arith.maximumf %39, %40 : vector<8x128xf32>
    %42 = arith.maximumf %38, %41 : vector<8x128xf32>
    %c11 = arith.constant 11 : index
    %c0_48 = arith.constant 0 : index
    %43 = vector.load %arg7[%c11, %c0_48] : memref<104x128xf32, #tpu.memory_space<vmem>>, vector<8x128xf32>
    tpu.vector_store %arg7[%c11, %c0_48], %42 {strides = array<i32>} : memref<104x128xf32, #tpu.memory_space<vmem>>, vector<8x128xf32>,
    %c36_49 = arith.constant 36 : index
    %c0_50 = arith.constant 0 : index
    %44 = tpu.strided_load %arg12[%c36_49, %c0_50] {strides = array<i32: 2, 1>} : memref<288x128xf32, #tpu.memory_space<vmem>>, vector<8x128xf32>
    %c37_51 = arith.constant 37 : index
    %c0_52 = arith.constant 0 : index
    %45 = tpu.strided_load %arg12[%c37_51, %c0_52] {strides = array<i32: 2, 1>} : memref<288x128xf32, #tpu.memory_space<vmem>>, vector<8x128xf32>
    %46 = arith.maximumf %44, %45 : vector<8x128xf32>
    %c54 = arith.constant 54 : index
    %c0_53 = arith.constant 0 : index
    %47 = tpu.strided_load %arg12[%c54, %c0_53] {strides = array<i32: 2, 1>} : memref<288x128xf32, #tpu.memory_space<vmem>>, vector<8x128xf32>
    %c55 = arith.constant 55 : index
    %c0_54 = arith.constant 0 : index
    %48 = tpu.strided_load %arg12[%c55, %c0_54] {strides = array<i32: 2, 1>} : memref<288x128xf32, #tpu.memory_space<vmem>>, vector<8x128xf32>
    %49 = arith.maximumf %47, %48 : vector<8x128xf32>
    %50 = arith.maximumf %46, %49 : vector<8x128xf32>
    %c21 = arith.constant 21 : index
    %c0_55 = arith.constant 0 : index
    %51 = vector.load %arg7[%c21, %c0_55] : memref<104x128xf32, #tpu.memory_space<vmem>>, vector<8x128xf32>
    tpu.vector_store %arg7[%c21, %c0_55], %50 {strides = array<i32>} : memref<104x128xf32, #tpu.memory_space<vmem>>, vector<8x128xf32>,
    %c72 = arith.constant 72 : index
    %c0_56 = arith.constant 0 : index
    %52 = tpu.strided_load %arg12[%c72, %c0_56] {strides = array<i32: 2, 1>} : memref<288x128xf32, #tpu.memory_space<vmem>>, vector<8x128xf32>
    %c73 = arith.constant 73 : index
    %c0_57 = arith.constant 0 : index
    %53 = tpu.strided_load %arg12[%c73, %c0_57] {strides = array<i32: 2, 1>} : memref<288x128xf32, #tpu.memory_space<vmem>>, vector<8x128xf32>
    %54 = arith.maximumf %52, %53 : vector<8x128xf32>
    %c90 = arith.constant 90 : index
    %c0_58 = arith.constant 0 : index
    %55 = tpu.strided_load %arg12[%c90, %c0_58] {strides = array<i32: 2, 1>} : memref<288x128xf32, #tpu.memory_space<vmem>>, vector<8x128xf32>
    %c91 = arith.constant 91 : index
    %c0_59 = arith.constant 0 : index
    %56 = tpu.strided_load %arg12[%c91, %c0_59] {strides = array<i32: 2, 1>} : memref<288x128xf32, #tpu.memory_space<vmem>>, vector<8x128xf32>
    %57 = arith.maximumf %55, %56 : vector<8x128xf32>
    %58 = arith.maximumf %54, %57 : vector<8x128xf32>
    %c31 = arith.constant 31 : index
    %c0_60 = arith.constant 0 : index
    %59 = vector.load %arg7[%c31, %c0_60] : memref<104x128xf32, #tpu.memory_space<vmem>>, vector<8x128xf32>
    tpu.vector_store %arg7[%c31, %c0_60], %58 {strides = array<i32>} : memref<104x128xf32, #tpu.memory_space<vmem>>, vector<8x128xf32>,
    %c108 = arith.constant 108 : index
    %c0_61 = arith.constant 0 : index
    %60 = tpu.strided_load %arg12[%c108, %c0_61] {strides = array<i32: 2, 1>} : memref<288x128xf32, #tpu.memory_space<vmem>>, vector<8x128xf32>
    %c109 = arith.constant 109 : index
    %c0_62 = arith.constant 0 : index
    %61 = tpu.strided_load %arg12[%c109, %c0_62] {strides = array<i32: 2, 1>} : memref<288x128xf32, #tpu.memory_space<vmem>>, vector<8x128xf32>
    %62 = arith.maximumf %60, %61 : vector<8x128xf32>
    %c126 = arith.constant 126 : index
    %c0_63 = arith.constant 0 : index
    %63 = tpu.strided_load %arg12[%c126, %c0_63] {strides = array<i32: 2, 1>} : memref<288x128xf32, #tpu.memory_space<vmem>>, vector<8x128xf32>
    %c127 = arith.constant 127 : index
    %c0_64 = arith.constant 0 : index
    %64 = tpu.strided_load %arg12[%c127, %c0_64] {strides = array<i32: 2, 1>} : memref<288x128xf32, #tpu.memory_space<vmem>>, vector<8x128xf32>
    %65 = arith.maximumf %63, %64 : vector<8x128xf32>
    %66 = arith.maximumf %62, %65 : vector<8x128xf32>
    %c41 = arith.constant 41 : index
    %c0_65 = arith.constant 0 : index
    %67 = vector.load %arg7[%c41, %c0_65] : memref<104x128xf32, #tpu.memory_space<vmem>>, vector<8x128xf32>
    tpu.vector_store %arg7[%c41, %c0_65], %66 {strides = array<i32>} : memref<104x128xf32, #tpu.memory_space<vmem>>, vector<8x128xf32>,
    %c144 = arith.constant 144 : index
    %c0_66 = arith.constant 0 : index
    %68 = tpu.strided_load %arg12[%c144, %c0_66] {strides = array<i32: 2, 1>} : memref<288x128xf32, #tpu.memory_space<vmem>>, vector<8x128xf32>
    %c145 = arith.constant 145 : index
    %c0_67 = arith.constant 0 : index
    %69 = tpu.strided_load %arg12[%c145, %c0_67] {strides = array<i32: 2, 1>} : memref<288x128xf32, #tpu.memory_space<vmem>>, vector<8x128xf32>
    %70 = arith.maximumf %68, %69 : vector<8x128xf32>
    %c162 = arith.constant 162 : index
    %c0_68 = arith.constant 0 : index
    %71 = tpu.strided_load %arg12[%c162, %c0_68] {strides = array<i32: 2, 1>} : memref<288x128xf32, #tpu.memory_space<vmem>>, vector<8x128xf32>
    %c163 = arith.constant 163 : index
    %c0_69 = arith.constant 0 : index
    %72 = tpu.strided_load %arg12[%c163, %c0_69] {strides = array<i32: 2, 1>} : memref<288x128xf32, #tpu.memory_space<vmem>>, vector<8x128xf32>
    %73 = arith.maximumf %71, %72 : vector<8x128xf32>
    %74 = arith.maximumf %70, %73 : vector<8x128xf32>
    %c51 = arith.constant 51 : index
    %c0_70 = arith.constant 0 : index
    %75 = vector.load %arg7[%c51, %c0_70] : memref<104x128xf32, #tpu.memory_space<vmem>>, vector<8x128xf32>
    tpu.vector_store %arg7[%c51, %c0_70], %74 {strides = array<i32>} : memref<104x128xf32, #tpu.memory_space<vmem>>, vector<8x128xf32>,
    %c180 = arith.constant 180 : index
    %c0_71 = arith.constant 0 : index
    %76 = tpu.strided_load %arg12[%c180, %c0_71] {strides = array<i32: 2, 1>} : memref<288x128xf32, #tpu.memory_space<vmem>>, vector<8x128xf32>
    %c181 = arith.constant 181 : index
    %c0_72 = arith.constant 0 : index
    %77 = tpu.strided_load %arg12[%c181, %c0_72] {strides = array<i32: 2, 1>} : memref<288x128xf32, #tpu.memory_space<vmem>>, vector<8x128xf32>
    %78 = arith.maximumf %76, %77 : vector<8x128xf32>
    %c198 = arith.constant 198 : index
    %c0_73 = arith.constant 0 : index
    %79 = tpu.strided_load %arg12[%c198, %c0_73] {strides = array<i32: 2, 1>} : memref<288x128xf32, #tpu.memory_space<vmem>>, vector<8x128xf32>
    %c199 = arith.constant 199 : index
    %c0_74 = arith.constant 0 : index
    %80 = tpu.strided_load %arg12[%c199, %c0_74] {strides = array<i32: 2, 1>} : memref<288x128xf32, #tpu.memory_space<vmem>>, vector<8x128xf32>
    %81 = arith.maximumf %79, %80 : vector<8x128xf32>
    %82 = arith.maximumf %78, %81 : vector<8x128xf32>
    %c61 = arith.constant 61 : index
    %c0_75 = arith.constant 0 : index
    %83 = vector.load %arg7[%c61, %c0_75] : memref<104x128xf32, #tpu.memory_space<vmem>>, vector<8x128xf32>
    tpu.vector_store %arg7[%c61, %c0_75], %82 {strides = array<i32>} : memref<104x128xf32, #tpu.memory_space<vmem>>, vector<8x128xf32>,
    %c216 = arith.constant 216 : index
    %c0_76 = arith.constant 0 : index
    %84 = tpu.strided_load %arg12[%c216, %c0_76] {strides = array<i32: 2, 1>} : memref<288x128xf32, #tpu.memory_space<vmem>>, vector<8x128xf32>
    %c217 = arith.constant 217 : index
    %c0_77 = arith.constant 0 : index
    %85 = tpu.strided_load %arg12[%c217, %c0_77] {strides = array<i32: 2, 1>} : memref<288x128xf32, #tpu.memory_space<vmem>>, vector<8x128xf32>
    %86 = arith.maximumf %84, %85 : vector<8x128xf32>
    %c234 = arith.constant 234 : index
    %c0_78 = arith.constant 0 : index
    %87 = tpu.strided_load %arg12[%c234, %c0_78] {strides = array<i32: 2, 1>} : memref<288x128xf32, #tpu.memory_space<vmem>>, vector<8x128xf32>
    %c235 = arith.constant 235 : index
    %c0_79 = arith.constant 0 : index
    %88 = tpu.strided_load %arg12[%c235, %c0_79] {strides = array<i32: 2, 1>} : memref<288x128xf32, #tpu.memory_space<vmem>>, vector<8x128xf32>
    %89 = arith.maximumf %87, %88 : vector<8x128xf32>
    %90 = arith.maximumf %86, %89 : vector<8x128xf32>
    %c71 = arith.constant 71 : index
    %c0_80 = arith.constant 0 : index
    %91 = vector.load %arg7[%c71, %c0_80] : memref<104x128xf32, #tpu.memory_space<vmem>>, vector<8x128xf32>
    tpu.vector_store %arg7[%c71, %c0_80], %90 {strides = array<i32>} : memref<104x128xf32, #tpu.memory_space<vmem>>, vector<8x128xf32>,
    %c252 = arith.constant 252 : index
    %c0_81 = arith.constant 0 : index
    %92 = tpu.strided_load %arg12[%c252, %c0_81] {strides = array<i32: 2, 1>} : memref<288x128xf32, #tpu.memory_space<vmem>>, vector<8x128xf32>
    %c253 = arith.constant 253 : index
    %c0_82 = arith.constant 0 : index
    %93 = tpu.strided_load %arg12[%c253, %c0_82] {strides = array<i32: 2, 1>} : memref<288x128xf32, #tpu.memory_space<vmem>>, vector<8x128xf32>
    %94 = arith.maximumf %92, %93 : vector<8x128xf32>
    %c270 = arith.constant 270 : index
    %c0_83 = arith.constant 0 : index
    %95 = tpu.strided_load %arg12[%c270, %c0_83] {strides = array<i32: 2, 1>} : memref<288x128xf32, #tpu.memory_space<vmem>>, vector<8x128xf32>
    %c271 = arith.constant 271 : index
    %c0_84 = arith.constant 0 : index
    %96 = tpu.strided_load %arg12[%c271, %c0_84] {strides = array<i32: 2, 1>} : memref<288x128xf32, #tpu.memory_space<vmem>>, vector<8x128xf32>
    %97 = arith.maximumf %95, %96 : vector<8x128xf32>
    %98 = arith.maximumf %94, %97 : vector<8x128xf32>
    %c81 = arith.constant 81 : index
    %c0_85 = arith.constant 0 : index
    %99 = vector.load %arg7[%c81, %c0_85] : memref<104x128xf32, #tpu.memory_space<vmem>>, vector<8x128xf32>
    tpu.vector_store %arg7[%c81, %c0_85], %98 {strides = array<i32>} : memref<104x128xf32, #tpu.memory_space<vmem>>, vector<8x128xf32>,
    %c0_86 = arith.constant 0 : index
    %c0_87 = arith.constant 0 : index
    %100 = vector.load %arg7[%c0_86, %c0_87] : memref<104x128xf32, #tpu.memory_space<vmem>>, vector<78x128xf32>
    %c1_88 = arith.constant 1 : index
    %c0_89 = arith.constant 0 : index
    %101 = vector.load %arg7[%c1_88, %c0_89] : memref<104x128xf32, #tpu.memory_space<vmem>>, vector<78x128xf32>
    %c2_90 = arith.constant 2 : index
    %c0_91 = arith.constant 0 : index
    %102 = vector.load %arg7[%c2_90, %c0_91] : memref<104x128xf32, #tpu.memory_space<vmem>>, vector<78x128xf32>
    %c10 = arith.constant 10 : index
    %c0_92 = arith.constant 0 : index
    %103 = vector.load %arg7[%c10, %c0_92] : memref<104x128xf32, #tpu.memory_space<vmem>>, vector<78x128xf32>
    %c11_93 = arith.constant 11 : index
    %c0_94 = arith.constant 0 : index
    %104 = vector.load %arg7[%c11_93, %c0_94] : memref<104x128xf32, #tpu.memory_space<vmem>>, vector<78x128xf32>
    %c12 = arith.constant 12 : index
    %c0_95 = arith.constant 0 : index
    %105 = vector.load %arg7[%c12, %c0_95] : memref<104x128xf32, #tpu.memory_space<vmem>>, vector<78x128xf32>
    %c20_96 = arith.constant 20 : index
    %c0_97 = arith.constant 0 : index
    %106 = vector.load %arg7[%c20_96, %c0_97] : memref<104x128xf32, #tpu.memory_space<vmem>>, vector<78x128xf32>
    %c21_98 = arith.constant 21 : index
    %c0_99 = arith.constant 0 : index
    %107 = vector.load %arg7[%c21_98, %c0_99] : memref<104x128xf32, #tpu.memory_space<vmem>>, vector<78x128xf32>
    %c22 = arith.constant 22 : index
    %c0_100 = arith.constant 0 : index
    %108 = vector.load %arg7[%c22, %c0_100] : memref<104x128xf32, #tpu.memory_space<vmem>>, vector<78x128xf32>
    %109 = tpu.concatenate %100, %101, %102, %103, %104, %105, %106, %107, %108 in 1 : vector<78x128xf32>, vector<78x128xf32>, vector<78x128xf32>, vector<78x128xf32>, vector<78x128xf32>, vector<78x128xf32>, vector<78x128xf32>, vector<78x128xf32>, vector<78x128xf32> -> vector<78x1152xf32>
    %c1_101 = arith.constant 1 : index
    %c0_102 = arith.constant 0 : index
    %c0_103 = arith.constant 0 : index
    %110 = vector.load %arg2[%c1_101, %c0_102, %c0_103] : memref<6x1152x128xf32, #tpu.memory_space<vmem>>, vector<1x1152x128xf32>
    %111 = vector.shape_cast %110 : vector<1x1152x128xf32> to vector<1152x128xf32>
    %cst_104 = arith.constant dense<0.000000e+00> : vector<78x128xf32>
    %112 = tpu.matmul %109, %111, %cst_104 {dimension_numbers = #tpu.dot_dimension_numbers<[1], [0], [0], [1], [0, 0, 1, 1], [], []>} : vector<78x1152xf32>, vector<1152x128xf32>, vector<78x128xf32> -> vector<78x128xf32>
    %c1_105 = arith.constant 1 : index
    %c0_106 = arith.constant 0 : index
    %113 = vector.load %arg3[%c1_105, %c0_106] : memref<6x128xf32, #tpu.memory_space<vmem>>, vector<1x128xf32>
    %114 = vector.broadcast %113 : vector<1x128xf32> to vector<78x128xf32>
    %115 = arith.addf %112, %114 : vector<78x128xf32>
    %116 = vector.extract_strided_slice %115 {offsets = [0, 0], sizes = [8, 128], strides = [1, 1]} : vector<78x128xf32> to vector<8x128xf32>
    %c11_107 = arith.constant 11 : index
    %c0_108 = arith.constant 0 : index
    %117 = vector.load %arg8[%c11_107, %c0_108] : memref<104x128xf32, #tpu.memory_space<vmem>>, vector<8x128xf32>
    tpu.vector_store %arg8[%c11_107, %c0_108], %116 {strides = array<i32>} : memref<104x128xf32, #tpu.memory_space<vmem>>, vector<8x128xf32>,
    %118 = vector.extract_strided_slice %115 {offsets = [10, 0], sizes = [8, 128], strides = [1, 1]} : vector<78x128xf32> to vector<8x128xf32>
    %c21_109 = arith.constant 21 : index
    %c0_110 = arith.constant 0 : index
    %119 = vector.load %arg8[%c21_109, %c0_110] : memref<104x128xf32, #tpu.memory_space<vmem>>, vector<8x128xf32>
    tpu.vector_store %arg8[%c21_109, %c0_110], %118 {strides = array<i32>} : memref<104x128xf32, #tpu.memory_space<vmem>>, vector<8x128xf32>,
    %120 = vector.extract_strided_slice %115 {offsets = [20, 0], sizes = [8, 128], strides = [1, 1]} : vector<78x128xf32> to vector<8x128xf32>
    %c31_111 = arith.constant 31 : index
    %c0_112 = arith.constant 0 : index
    %121 = vector.load %arg8[%c31_111, %c0_112] : memref<104x128xf32, #tpu.memory_space<vmem>>, vector<8x128xf32>
    tpu.vector_store %arg8[%c31_111, %c0_112], %120 {strides = array<i32>} : memref<104x128xf32, #tpu.memory_space<vmem>>, vector<8x128xf32>,
    %122 = vector.extract_strided_slice %115 {offsets = [30, 0], sizes = [8, 128], strides = [1, 1]} : vector<78x128xf32> to vector<8x128xf32>
    %c41_113 = arith.constant 41 : index
    %c0_114 = arith.constant 0 : index
    %123 = vector.load %arg8[%c41_113, %c0_114] : memref<104x128xf32, #tpu.memory_space<vmem>>, vector<8x128xf32>
    tpu.vector_store %arg8[%c41_113, %c0_114], %122 {strides = array<i32>} : memref<104x128xf32, #tpu.memory_space<vmem>>, vector<8x128xf32>,
    %124 = vector.extract_strided_slice %115 {offsets = [40, 0], sizes = [8, 128], strides = [1, 1]} : vector<78x128xf32> to vector<8x128xf32>
    %c51_115 = arith.constant 51 : index
    %c0_116 = arith.constant 0 : index
    %125 = vector.load %arg8[%c51_115, %c0_116] : memref<104x128xf32, #tpu.memory_space<vmem>>, vector<8x128xf32>
    tpu.vector_store %arg8[%c51_115, %c0_116], %124 {strides = array<i32>} : memref<104x128xf32, #tpu.memory_space<vmem>>, vector<8x128xf32>,
    %126 = vector.extract_strided_slice %115 {offsets = [50, 0], sizes = [8, 128], strides = [1, 1]} : vector<78x128xf32> to vector<8x128xf32>
    %c61_117 = arith.constant 61 : index
    %c0_118 = arith.constant 0 : index
    %127 = vector.load %arg8[%c61_117, %c0_118] : memref<104x128xf32, #tpu.memory_space<vmem>>, vector<8x128xf32>
    tpu.vector_store %arg8[%c61_117, %c0_118], %126 {strides = array<i32>} : memref<104x128xf32, #tpu.memory_space<vmem>>, vector<8x128xf32>,
    %128 = vector.extract_strided_slice %115 {offsets = [60, 0], sizes = [8, 128], strides = [1, 1]} : vector<78x128xf32> to vector<8x128xf32>
    %c71_119 = arith.constant 71 : index
    %c0_120 = arith.constant 0 : index
    %129 = vector.load %arg8[%c71_119, %c0_120] : memref<104x128xf32, #tpu.memory_space<vmem>>, vector<8x128xf32>
    tpu.vector_store %arg8[%c71_119, %c0_120], %128 {strides = array<i32>} : memref<104x128xf32, #tpu.memory_space<vmem>>, vector<8x128xf32>,
    %130 = vector.extract_strided_slice %115 {offsets = [70, 0], sizes = [8, 128], strides = [1, 1]} : vector<78x128xf32> to vector<8x128xf32>
    %c81_121 = arith.constant 81 : index
    %c0_122 = arith.constant 0 : index
    %131 = vector.load %arg8[%c81_121, %c0_122] : memref<104x128xf32, #tpu.memory_space<vmem>>, vector<8x128xf32>
    tpu.vector_store %arg8[%c81_121, %c0_122], %130 {strides = array<i32>} : memref<104x128xf32, #tpu.memory_space<vmem>>, vector<8x128xf32>,
    %c0_123 = arith.constant 0 : index
    %c0_124 = arith.constant 0 : index
    %132 = vector.load %arg8[%c0_123, %c0_124] : memref<104x128xf32, #tpu.memory_space<vmem>>, vector<78x128xf32>
    %c1_125 = arith.constant 1 : index
    %c0_126 = arith.constant 0 : index
    %133 = vector.load %arg8[%c1_125, %c0_126] : memref<104x128xf32, #tpu.memory_space<vmem>>, vector<78x128xf32>
    %c2_127 = arith.constant 2 : index
    %c0_128 = arith.constant 0 : index
    %134 = vector.load %arg8[%c2_127, %c0_128] : memref<104x128xf32, #tpu.memory_space<vmem>>, vector<78x128xf32>
    %c10_129 = arith.constant 10 : index
    %c0_130 = arith.constant 0 : index
    %135 = vector.load %arg8[%c10_129, %c0_130] : memref<104x128xf32, #tpu.memory_space<vmem>>, vector<78x128xf32>
    %c11_131 = arith.constant 11 : index
    %c0_132 = arith.constant 0 : index
    %136 = vector.load %arg8[%c11_131, %c0_132] : memref<104x128xf32, #tpu.memory_space<vmem>>, vector<78x128xf32>
    %c12_133 = arith.constant 12 : index
    %c0_134 = arith.constant 0 : index
    %137 = vector.load %arg8[%c12_133, %c0_134] : memref<104x128xf32, #tpu.memory_space<vmem>>, vector<78x128xf32>
    %c20_135 = arith.constant 20 : index
    %c0_136 = arith.constant 0 : index
    %138 = vector.load %arg8[%c20_135, %c0_136] : memref<104x128xf32, #tpu.memory_space<vmem>>, vector<78x128xf32>
    %c21_137 = arith.constant 21 : index
    %c0_138 = arith.constant 0 : index
    %139 = vector.load %arg8[%c21_137, %c0_138] : memref<104x128xf32, #tpu.memory_space<vmem>>, vector<78x128xf32>
    %c22_139 = arith.constant 22 : index
    %c0_140 = arith.constant 0 : index
    %140 = vector.load %arg8[%c22_139, %c0_140] : memref<104x128xf32, #tpu.memory_space<vmem>>, vector<78x128xf32>
    %141 = tpu.concatenate %132, %133, %134, %135, %136, %137, %138, %139, %140 in 1 : vector<78x128xf32>, vector<78x128xf32>, vector<78x128xf32>, vector<78x128xf32>, vector<78x128xf32>, vector<78x128xf32>, vector<78x128xf32>, vector<78x128xf32>, vector<78x128xf32> -> vector<78x1152xf32>
    %c2_141 = arith.constant 2 : index
    %c0_142 = arith.constant 0 : index
    %c0_143 = arith.constant 0 : index
    %142 = vector.load %arg2[%c2_141, %c0_142, %c0_143] : memref<6x1152x128xf32, #tpu.memory_space<vmem>>, vector<1x1152x128xf32>
    %143 = vector.shape_cast %142 : vector<1x1152x128xf32> to vector<1152x128xf32>
    %cst_144 = arith.constant dense<0.000000e+00> : vector<78x128xf32>
    %144 = tpu.matmul %141, %143, %cst_144 {dimension_numbers = #tpu.dot_dimension_numbers<[1], [0], [0], [1], [0, 0, 1, 1], [], []>} : vector<78x1152xf32>, vector<1152x128xf32>, vector<78x128xf32> -> vector<78x128xf32>
    %c2_145 = arith.constant 2 : index
    %c0_146 = arith.constant 0 : index
    %145 = vector.load %arg3[%c2_145, %c0_146] : memref<6x128xf32, #tpu.memory_space<vmem>>, vector<1x128xf32>
    %146 = vector.broadcast %145 : vector<1x128xf32> to vector<78x128xf32>
    %147 = arith.addf %144, %146 : vector<78x128xf32>
    %c0_147 = arith.constant 0 : index
    %c0_148 = arith.constant 0 : index
    %148 = vector.load %arg12[%c0_147, %c0_148] : memref<288x128xf32, #tpu.memory_space<vmem>>, vector<78x128xf32>
    tpu.vector_store %arg12[%c0_147, %c0_148], %147 {strides = array<i32>} : memref<288x128xf32, #tpu.memory_space<vmem>>, vector<78x128xf32>,
    %c0_149 = arith.constant 0 : index
    %c0_150 = arith.constant 0 : index
    %149 = tpu.strided_load %arg12[%c0_149, %c0_150] {strides = array<i32: 2, 1>} : memref<288x128xf32, #tpu.memory_space<vmem>>, vector<4x128xf32>
    %c1_151 = arith.constant 1 : index
    %c0_152 = arith.constant 0 : index
    %150 = tpu.strided_load %arg12[%c1_151, %c0_152] {strides = array<i32: 2, 1>} : memref<288x128xf32, #tpu.memory_space<vmem>>, vector<4x128xf32>
    %151 = arith.maximumf %149, %150 : vector<4x128xf32>
    %c10_153 = arith.constant 10 : index
    %c0_154 = arith.constant 0 : index
    %152 = tpu.strided_load %arg12[%c10_153, %c0_154] {strides = array<i32: 2, 1>} : memref<288x128xf32, #tpu.memory_space<vmem>>, vector<4x128xf32>
    %c11_155 = arith.constant 11 : index
    %c0_156 = arith.constant 0 : index
    %153 = tpu.strided_load %arg12[%c11_155, %c0_156] {strides = array<i32: 2, 1>} : memref<288x128xf32, #tpu.memory_space<vmem>>, vector<4x128xf32>
    %154 = arith.maximumf %152, %153 : vector<4x128xf32>
    %155 = arith.maximumf %151, %154 : vector<4x128xf32>
    %c7 = arith.constant 7 : index
    %c0_157 = arith.constant 0 : index
    %156 = vector.load %arg9[%c7, %c0_157] : memref<40x128xf32, #tpu.memory_space<vmem>>, vector<4x128xf32>
    tpu.vector_store %arg9[%c7, %c0_157], %155 {strides = array<i32>} : memref<40x128xf32, #tpu.memory_space<vmem>>, vector<4x128xf32>,
    %c20_158 = arith.constant 20 : index
    %c0_159 = arith.constant 0 : index
    %157 = tpu.strided_load %arg12[%c20_158, %c0_159] {strides = array<i32: 2, 1>} : memref<288x128xf32, #tpu.memory_space<vmem>>, vector<4x128xf32>
    %c21_160 = arith.constant 21 : index
    %c0_161 = arith.constant 0 : index
    %158 = tpu.strided_load %arg12[%c21_160, %c0_161] {strides = array<i32: 2, 1>} : memref<288x128xf32, #tpu.memory_space<vmem>>, vector<4x128xf32>
    %159 = arith.maximumf %157, %158 : vector<4x128xf32>
    %c30 = arith.constant 30 : index
    %c0_162 = arith.constant 0 : index
    %160 = tpu.strided_load %arg12[%c30, %c0_162] {strides = array<i32: 2, 1>} : memref<288x128xf32, #tpu.memory_space<vmem>>, vector<4x128xf32>
    %c31_163 = arith.constant 31 : index
    %c0_164 = arith.constant 0 : index
    %161 = tpu.strided_load %arg12[%c31_163, %c0_164] {strides = array<i32: 2, 1>} : memref<288x128xf32, #tpu.memory_space<vmem>>, vector<4x128xf32>
    %162 = arith.maximumf %160, %161 : vector<4x128xf32>
    %163 = arith.maximumf %159, %162 : vector<4x128xf32>
    %c13 = arith.constant 13 : index
    %c0_165 = arith.constant 0 : index
    %164 = vector.load %arg9[%c13, %c0_165] : memref<40x128xf32, #tpu.memory_space<vmem>>, vector<4x128xf32>
    tpu.vector_store %arg9[%c13, %c0_165], %163 {strides = array<i32>} : memref<40x128xf32, #tpu.memory_space<vmem>>, vector<4x128xf32>,
    %c40 = arith.constant 40 : index
    %c0_166 = arith.constant 0 : index
    %165 = tpu.strided_load %arg12[%c40, %c0_166] {strides = array<i32: 2, 1>} : memref<288x128xf32, #tpu.memory_space<vmem>>, vector<4x128xf32>
    %c41_167 = arith.constant 41 : index
    %c0_168 = arith.constant 0 : index
    %166 = tpu.strided_load %arg12[%c41_167, %c0_168] {strides = array<i32: 2, 1>} : memref<288x128xf32, #tpu.memory_space<vmem>>, vector<4x128xf32>
    %167 = arith.maximumf %165, %166 : vector<4x128xf32>
    %c50 = arith.constant 50 : index
    %c0_169 = arith.constant 0 : index
    %168 = tpu.strided_load %arg12[%c50, %c0_169] {strides = array<i32: 2, 1>} : memref<288x128xf32, #tpu.memory_space<vmem>>, vector<4x128xf32>
    %c51_170 = arith.constant 51 : index
    %c0_171 = arith.constant 0 : index
    %169 = tpu.strided_load %arg12[%c51_170, %c0_171] {strides = array<i32: 2, 1>} : memref<288x128xf32, #tpu.memory_space<vmem>>, vector<4x128xf32>
    %170 = arith.maximumf %168, %169 : vector<4x128xf32>
    %171 = arith.maximumf %167, %170 : vector<4x128xf32>
    %c19_172 = arith.constant 19 : index
    %c0_173 = arith.constant 0 : index
    %172 = vector.load %arg9[%c19_172, %c0_173] : memref<40x128xf32, #tpu.memory_space<vmem>>, vector<4x128xf32>
    tpu.vector_store %arg9[%c19_172, %c0_173], %171 {strides = array<i32>} : memref<40x128xf32, #tpu.memory_space<vmem>>, vector<4x128xf32>,
    %c60 = arith.constant 60 : index
    %c0_174 = arith.constant 0 : index
    %173 = tpu.strided_load %arg12[%c60, %c0_174] {strides = array<i32: 2, 1>} : memref<288x128xf32, #tpu.memory_space<vmem>>, vector<4x128xf32>
    %c61_175 = arith.constant 61 : index
    %c0_176 = arith.constant 0 : index
    %174 = tpu.strided_load %arg12[%c61_175, %c0_176] {strides = array<i32: 2, 1>} : memref<288x128xf32, #tpu.memory_space<vmem>>, vector<4x128xf32>
    %175 = arith.maximumf %173, %174 : vector<4x128xf32>
    %c70 = arith.constant 70 : index
    %c0_177 = arith.constant 0 : index
    %176 = tpu.strided_load %arg12[%c70, %c0_177] {strides = array<i32: 2, 1>} : memref<288x128xf32, #tpu.memory_space<vmem>>, vector<4x128xf32>
    %c71_178 = arith.constant 71 : index
    %c0_179 = arith.constant 0 : index
    %177 = tpu.strided_load %arg12[%c71_178, %c0_179] {strides = array<i32: 2, 1>} : memref<288x128xf32, #tpu.memory_space<vmem>>, vector<4x128xf32>
    %178 = arith.maximumf %176, %177 : vector<4x128xf32>
    %179 = arith.maximumf %175, %178 : vector<4x128xf32>
    %c25 = arith.constant 25 : index
    %c0_180 = arith.constant 0 : index
    %180 = vector.load %arg9[%c25, %c0_180] : memref<40x128xf32, #tpu.memory_space<vmem>>, vector<4x128xf32>
    tpu.vector_store %arg9[%c25, %c0_180], %179 {strides = array<i32>} : memref<40x128xf32, #tpu.memory_space<vmem>>, vector<4x128xf32>,
    %c0_181 = arith.constant 0 : index
    %c0_182 = arith.constant 0 : index
    %181 = vector.load %arg9[%c0_181, %c0_182] : memref<40x128xf32, #tpu.memory_space<vmem>>, vector<22x128xf32>
    %c1_183 = arith.constant 1 : index
    %c0_184 = arith.constant 0 : index
    %182 = vector.load %arg9[%c1_183, %c0_184] : memref<40x128xf32, #tpu.memory_space<vmem>>, vector<22x128xf32>
    %c2_185 = arith.constant 2 : index
    %c0_186 = arith.constant 0 : index
    %183 = vector.load %arg9[%c2_185, %c0_186] : memref<40x128xf32, #tpu.memory_space<vmem>>, vector<22x128xf32>
    %c6 = arith.constant 6 : index
    %c0_187 = arith.constant 0 : index
    %184 = vector.load %arg9[%c6, %c0_187] : memref<40x128xf32, #tpu.memory_space<vmem>>, vector<22x128xf32>
    %c7_188 = arith.constant 7 : index
    %c0_189 = arith.constant 0 : index
    %185 = vector.load %arg9[%c7_188, %c0_189] : memref<40x128xf32, #tpu.memory_space<vmem>>, vector<22x128xf32>
    %c8 = arith.constant 8 : index
    %c0_190 = arith.constant 0 : index
    %186 = vector.load %arg9[%c8, %c0_190] : memref<40x128xf32, #tpu.memory_space<vmem>>, vector<22x128xf32>
    %c12_191 = arith.constant 12 : index
    %c0_192 = arith.constant 0 : index
    %187 = vector.load %arg9[%c12_191, %c0_192] : memref<40x128xf32, #tpu.memory_space<vmem>>, vector<22x128xf32>
    %c13_193 = arith.constant 13 : index
    %c0_194 = arith.constant 0 : index
    %188 = vector.load %arg9[%c13_193, %c0_194] : memref<40x128xf32, #tpu.memory_space<vmem>>, vector<22x128xf32>
    %c14 = arith.constant 14 : index
    %c0_195 = arith.constant 0 : index
    %189 = vector.load %arg9[%c14, %c0_195] : memref<40x128xf32, #tpu.memory_space<vmem>>, vector<22x128xf32>
    %190 = tpu.concatenate %181, %182, %183, %184, %185, %186, %187, %188, %189 in 1 : vector<22x128xf32>, vector<22x128xf32>, vector<22x128xf32>, vector<22x128xf32>, vector<22x128xf32>, vector<22x128xf32>, vector<22x128xf32>, vector<22x128xf32>, vector<22x128xf32> -> vector<22x1152xf32>
    %c3 = arith.constant 3 : index
    %c0_196 = arith.constant 0 : index
    %c0_197 = arith.constant 0 : index
    %191 = vector.load %arg2[%c3, %c0_196, %c0_197] : memref<6x1152x128xf32, #tpu.memory_space<vmem>>, vector<1x1152x128xf32>
    %192 = vector.shape_cast %191 : vector<1x1152x128xf32> to vector<1152x128xf32>
    %cst_198 = arith.constant dense<0.000000e+00> : vector<22x128xf32>
    %193 = tpu.matmul %190, %192, %cst_198 {dimension_numbers = #tpu.dot_dimension_numbers<[1], [0], [0], [1], [0, 0, 1, 1], [], []>} : vector<22x1152xf32>, vector<1152x128xf32>, vector<22x128xf32> -> vector<22x128xf32>
    %c3_199 = arith.constant 3 : index
    %c0_200 = arith.constant 0 : index
    %194 = vector.load %arg3[%c3_199, %c0_200] : memref<6x128xf32, #tpu.memory_space<vmem>>, vector<1x128xf32>
    %195 = vector.broadcast %194 : vector<1x128xf32> to vector<22x128xf32>
    %196 = arith.addf %193, %195 : vector<22x128xf32>
    %197 = vector.extract_strided_slice %196 {offsets = [0, 0], sizes = [4, 128], strides = [1, 1]} : vector<22x128xf32> to vector<4x128xf32>
    %c7_201 = arith.constant 7 : index
    %c0_202 = arith.constant 0 : index
    %198 = vector.load %arg10[%c7_201, %c0_202] : memref<40x128xf32, #tpu.memory_space<vmem>>, vector<4x128xf32>
    tpu.vector_store %arg10[%c7_201, %c0_202], %197 {strides = array<i32>} : memref<40x128xf32, #tpu.memory_space<vmem>>, vector<4x128xf32>,
    %199 = vector.extract_strided_slice %196 {offsets = [6, 0], sizes = [4, 128], strides = [1, 1]} : vector<22x128xf32> to vector<4x128xf32>
    %c13_203 = arith.constant 13 : index
    %c0_204 = arith.constant 0 : index
    %200 = vector.load %arg10[%c13_203, %c0_204] : memref<40x128xf32, #tpu.memory_space<vmem>>, vector<4x128xf32>
    tpu.vector_store %arg10[%c13_203, %c0_204], %199 {strides = array<i32>} : memref<40x128xf32, #tpu.memory_space<vmem>>, vector<4x128xf32>,
    %201 = vector.extract_strided_slice %196 {offsets = [12, 0], sizes = [4, 128], strides = [1, 1]} : vector<22x128xf32> to vector<4x128xf32>
    %c19_205 = arith.constant 19 : index
    %c0_206 = arith.constant 0 : index
    %202 = vector.load %arg10[%c19_205, %c0_206] : memref<40x128xf32, #tpu.memory_space<vmem>>, vector<4x128xf32>
    tpu.vector_store %arg10[%c19_205, %c0_206], %201 {strides = array<i32>} : memref<40x128xf32, #tpu.memory_space<vmem>>, vector<4x128xf32>,
    %203 = vector.extract_strided_slice %196 {offsets = [18, 0], sizes = [4, 128], strides = [1, 1]} : vector<22x128xf32> to vector<4x128xf32>
    %c25_207 = arith.constant 25 : index
    %c0_208 = arith.constant 0 : index
    %204 = vector.load %arg10[%c25_207, %c0_208] : memref<40x128xf32, #tpu.memory_space<vmem>>, vector<4x128xf32>
    tpu.vector_store %arg10[%c25_207, %c0_208], %203 {strides = array<i32>} : memref<40x128xf32, #tpu.memory_space<vmem>>, vector<4x128xf32>,
    %c0_209 = arith.constant 0 : index
    %c0_210 = arith.constant 0 : index
    %205 = vector.load %arg10[%c0_209, %c0_210] : memref<40x128xf32, #tpu.memory_space<vmem>>, vector<22x128xf32>
    %c1_211 = arith.constant 1 : index
    %c0_212 = arith.constant 0 : index
    %206 = vector.load %arg10[%c1_211, %c0_212] : memref<40x128xf32, #tpu.memory_space<vmem>>, vector<22x128xf32>
    %c2_213 = arith.constant 2 : index
    %c0_214 = arith.constant 0 : index
    %207 = vector.load %arg10[%c2_213, %c0_214] : memref<40x128xf32, #tpu.memory_space<vmem>>, vector<22x128xf32>
    %c6_215 = arith.constant 6 : index
    %c0_216 = arith.constant 0 : index
    %208 = vector.load %arg10[%c6_215, %c0_216] : memref<40x128xf32, #tpu.memory_space<vmem>>, vector<22x128xf32>
    %c7_217 = arith.constant 7 : index
    %c0_218 = arith.constant 0 : index
    %209 = vector.load %arg10[%c7_217, %c0_218] : memref<40x128xf32, #tpu.memory_space<vmem>>, vector<22x128xf32>
    %c8_219 = arith.constant 8 : index
    %c0_220 = arith.constant 0 : index
    %210 = vector.load %arg10[%c8_219, %c0_220] : memref<40x128xf32, #tpu.memory_space<vmem>>, vector<22x128xf32>
    %c12_221 = arith.constant 12 : index
    %c0_222 = arith.constant 0 : index
    %211 = vector.load %arg10[%c12_221, %c0_222] : memref<40x128xf32, #tpu.memory_space<vmem>>, vector<22x128xf32>
    %c13_223 = arith.constant 13 : index
    %c0_224 = arith.constant 0 : index
    %212 = vector.load %arg10[%c13_223, %c0_224] : memref<40x128xf32, #tpu.memory_space<vmem>>, vector<22x128xf32>
    %c14_225 = arith.constant 14 : index
    %c0_226 = arith.constant 0 : index
    %213 = vector.load %arg10[%c14_225, %c0_226] : memref<40x128xf32, #tpu.memory_space<vmem>>, vector<22x128xf32>
    %214 = tpu.concatenate %205, %206, %207, %208, %209, %210, %211, %212, %213 in 1 : vector<22x128xf32>, vector<22x128xf32>, vector<22x128xf32>, vector<22x128xf32>, vector<22x128xf32>, vector<22x128xf32>, vector<22x128xf32>, vector<22x128xf32>, vector<22x128xf32> -> vector<22x1152xf32>
    %c4 = arith.constant 4 : index
    %c0_227 = arith.constant 0 : index
    %c0_228 = arith.constant 0 : index
    %215 = vector.load %arg2[%c4, %c0_227, %c0_228] : memref<6x1152x128xf32, #tpu.memory_space<vmem>>, vector<1x1152x128xf32>
    %216 = vector.shape_cast %215 : vector<1x1152x128xf32> to vector<1152x128xf32>
    %cst_229 = arith.constant dense<0.000000e+00> : vector<22x128xf32>
    %217 = tpu.matmul %214, %216, %cst_229 {dimension_numbers = #tpu.dot_dimension_numbers<[1], [0], [0], [1], [0, 0, 1, 1], [], []>} : vector<22x1152xf32>, vector<1152x128xf32>, vector<22x128xf32> -> vector<22x128xf32>
    %c4_230 = arith.constant 4 : index
    %c0_231 = arith.constant 0 : index
    %218 = vector.load %arg3[%c4_230, %c0_231] : memref<6x128xf32, #tpu.memory_space<vmem>>, vector<1x128xf32>
    %219 = vector.broadcast %218 : vector<1x128xf32> to vector<22x128xf32>
    %220 = arith.addf %217, %219 : vector<22x128xf32>
    %c0_232 = arith.constant 0 : index
    %c0_233 = arith.constant 0 : index
    %221 = vector.load %arg12[%c0_232, %c0_233] : memref<288x128xf32, #tpu.memory_space<vmem>>, vector<22x128xf32>
    tpu.vector_store %arg12[%c0_232, %c0_233], %220 {strides = array<i32>} : memref<288x128xf32, #tpu.memory_space<vmem>>, vector<22x128xf32>,
    %c0_234 = arith.constant 0 : index
    %c0_235 = arith.constant 0 : index
    %222 = vector.load %arg12[%c0_234, %c0_235] : memref<288x128xf32, #tpu.memory_space<vmem>>, vector<4x128xf32>
    %223 = vector.extract_strided_slice %222 {offsets = [0, 0], sizes = [1, 128], strides = [1, 1]} : vector<4x128xf32> to vector<1x128xf32>
    %224 = vector.extract_strided_slice %222 {offsets = [1, 0], sizes = [1, 128], strides = [1, 1]} : vector<4x128xf32> to vector<1x128xf32>
    %225 = vector.extract_strided_slice %222 {offsets = [2, 0], sizes = [1, 128], strides = [1, 1]} : vector<4x128xf32> to vector<1x128xf32>
    %226 = arith.maximumf %224, %225 : vector<1x128xf32>
    %227 = vector.extract_strided_slice %222 {offsets = [3, 0], sizes = [1, 128], strides = [1, 1]} : vector<4x128xf32> to vector<1x128xf32>
    %228 = tpu.concatenate %223, %226, %227 in 0 : vector<1x128xf32>, vector<1x128xf32>, vector<1x128xf32> -> vector<3x128xf32>
    %c6_236 = arith.constant 6 : index
    %c0_237 = arith.constant 0 : index
    %229 = vector.load %arg11[%c6_236, %c0_237] : memref<32x128xf32, #tpu.memory_space<vmem>>, vector<3x128xf32>
    tpu.vector_store %arg11[%c6_236, %c0_237], %228 {strides = array<i32>} : memref<32x128xf32, #tpu.memory_space<vmem>>, vector<3x128xf32>,
    %c6_238 = arith.constant 6 : index
    %c0_239 = arith.constant 0 : index
    %230 = vector.load %arg12[%c6_238, %c0_239] : memref<288x128xf32, #tpu.memory_space<vmem>>, vector<4x128xf32>
    %c12_240 = arith.constant 12 : index
    %c0_241 = arith.constant 0 : index
    %231 = vector.load %arg12[%c12_240, %c0_241] : memref<288x128xf32, #tpu.memory_space<vmem>>, vector<4x128xf32>
    %232 = arith.maximumf %230, %231 : vector<4x128xf32>
    %233 = vector.extract_strided_slice %232 {offsets = [0, 0], sizes = [1, 128], strides = [1, 1]} : vector<4x128xf32> to vector<1x128xf32>
    %234 = vector.extract_strided_slice %232 {offsets = [1, 0], sizes = [1, 128], strides = [1, 1]} : vector<4x128xf32> to vector<1x128xf32>
    %235 = vector.extract_strided_slice %232 {offsets = [2, 0], sizes = [1, 128], strides = [1, 1]} : vector<4x128xf32> to vector<1x128xf32>
    %236 = arith.maximumf %234, %235 : vector<1x128xf32>
    %237 = vector.extract_strided_slice %232 {offsets = [3, 0], sizes = [1, 128], strides = [1, 1]} : vector<4x128xf32> to vector<1x128xf32>
    %238 = tpu.concatenate %233, %236, %237 in 0 : vector<1x128xf32>, vector<1x128xf32>, vector<1x128xf32> -> vector<3x128xf32>
    %c11_242 = arith.constant 11 : index
    %c0_243 = arith.constant 0 : index
    %239 = vector.load %arg11[%c11_242, %c0_243] : memref<32x128xf32, #tpu.memory_space<vmem>>, vector<3x128xf32>
    tpu.vector_store %arg11[%c11_242, %c0_243], %238 {strides = array<i32>} : memref<32x128xf32, #tpu.memory_space<vmem>>, vector<3x128xf32>,
    %c18_244 = arith.constant 18 : index
    %c0_245 = arith.constant 0 : index
    %240 = vector.load %arg12[%c18_244, %c0_245] : memref<288x128xf32, #tpu.memory_space<vmem>>, vector<4x128xf32>
    %241 = vector.extract_strided_slice %240 {offsets = [0, 0], sizes = [1, 128], strides = [1, 1]} : vector<4x128xf32> to vector<1x128xf32>
    %242 = vector.extract_strided_slice %240 {offsets = [1, 0], sizes = [1, 128], strides = [1, 1]} : vector<4x128xf32> to vector<1x128xf32>
    %243 = vector.extract_strided_slice %240 {offsets = [2, 0], sizes = [1, 128], strides = [1, 1]} : vector<4x128xf32> to vector<1x128xf32>
    %244 = arith.maximumf %242, %243 : vector<1x128xf32>
    %245 = vector.extract_strided_slice %240 {offsets = [3, 0], sizes = [1, 128], strides = [1, 1]} : vector<4x128xf32> to vector<1x128xf32>
    %246 = tpu.concatenate %241, %244, %245 in 0 : vector<1x128xf32>, vector<1x128xf32>, vector<1x128xf32> -> vector<3x128xf32>
    %c16 = arith.constant 16 : index
    %c0_246 = arith.constant 0 : index
    %247 = vector.load %arg11[%c16, %c0_246] : memref<32x128xf32, #tpu.memory_space<vmem>>, vector<3x128xf32>
    tpu.vector_store %arg11[%c16, %c0_246], %246 {strides = array<i32>} : memref<32x128xf32, #tpu.memory_space<vmem>>, vector<3x128xf32>,
    %c0_247 = arith.constant 0 : index
    %c0_248 = arith.constant 0 : index
    %248 = vector.load %arg11[%c0_247, %c0_248] : memref<32x128xf32, #tpu.memory_space<vmem>>, vector<13x128xf32>
    %c1_249 = arith.constant 1 : index
    %c0_250 = arith.constant 0 : index
    %249 = vector.load %arg11[%c1_249, %c0_250] : memref<32x128xf32, #tpu.memory_space<vmem>>, vector<13x128xf32>
    %c2_251 = arith.constant 2 : index
    %c0_252 = arith.constant 0 : index
    %250 = vector.load %arg11[%c2_251, %c0_252] : memref<32x128xf32, #tpu.memory_space<vmem>>, vector<13x128xf32>
    %c5 = arith.constant 5 : index
    %c0_253 = arith.constant 0 : index
    %251 = vector.load %arg11[%c5, %c0_253] : memref<32x128xf32, #tpu.memory_space<vmem>>, vector<13x128xf32>
    %c6_254 = arith.constant 6 : index
    %c0_255 = arith.constant 0 : index
    %252 = vector.load %arg11[%c6_254, %c0_255] : memref<32x128xf32, #tpu.memory_space<vmem>>, vector<13x128xf32>
    %c7_256 = arith.constant 7 : index
    %c0_257 = arith.constant 0 : index
    %253 = vector.load %arg11[%c7_256, %c0_257] : memref<32x128xf32, #tpu.memory_space<vmem>>, vector<13x128xf32>
    %c10_258 = arith.constant 10 : index
    %c0_259 = arith.constant 0 : index
    %254 = vector.load %arg11[%c10_258, %c0_259] : memref<32x128xf32, #tpu.memory_space<vmem>>, vector<13x128xf32>
    %c11_260 = arith.constant 11 : index
    %c0_261 = arith.constant 0 : index
    %255 = vector.load %arg11[%c11_260, %c0_261] : memref<32x128xf32, #tpu.memory_space<vmem>>, vector<13x128xf32>
    %c12_262 = arith.constant 12 : index
    %c0_263 = arith.constant 0 : index
    %256 = vector.load %arg11[%c12_262, %c0_263] : memref<32x128xf32, #tpu.memory_space<vmem>>, vector<13x128xf32>
    %257 = tpu.concatenate %248, %249, %250, %251, %252, %253, %254, %255, %256 in 1 : vector<13x128xf32>, vector<13x128xf32>, vector<13x128xf32>, vector<13x128xf32>, vector<13x128xf32>, vector<13x128xf32>, vector<13x128xf32>, vector<13x128xf32>, vector<13x128xf32> -> vector<13x1152xf32>
    %c5_264 = arith.constant 5 : index
    %c0_265 = arith.constant 0 : index
    %c0_266 = arith.constant 0 : index
    %258 = vector.load %arg2[%c5_264, %c0_265, %c0_266] : memref<6x1152x128xf32, #tpu.memory_space<vmem>>, vector<1x1152x128xf32>
    %259 = vector.shape_cast %258 : vector<1x1152x128xf32> to vector<1152x128xf32>
    %cst_267 = arith.constant dense<0.000000e+00> : vector<13x128xf32>
    %260 = tpu.matmul %257, %259, %cst_267 {dimension_numbers = #tpu.dot_dimension_numbers<[1], [0], [0], [1], [0, 0, 1, 1], [], []>} : vector<13x1152xf32>, vector<1152x128xf32>, vector<13x128xf32> -> vector<13x128xf32>
    %c5_268 = arith.constant 5 : index
    %c0_269 = arith.constant 0 : index
    %261 = vector.load %arg3[%c5_268, %c0_269] : memref<6x128xf32, #tpu.memory_space<vmem>>, vector<1x128xf32>
    %262 = vector.broadcast %261 : vector<1x128xf32> to vector<13x128xf32>
    %263 = arith.addf %260, %262 : vector<13x128xf32>
    %264 = vector.extract_strided_slice %263 {offsets = [0, 0], sizes = [3, 128], strides = [1, 1]} : vector<13x128xf32> to vector<3x128xf32>
    %265 = vector.extract_strided_slice %263 {offsets = [5, 0], sizes = [3, 128], strides = [1, 1]} : vector<13x128xf32> to vector<3x128xf32>
    %266 = arith.maximumf %264, %265 : vector<3x128xf32>
    %267 = vector.extract_strided_slice %263 {offsets = [10, 0], sizes = [3, 128], strides = [1, 1]} : vector<13x128xf32> to vector<3x128xf32>
    %268 = arith.maximumf %266, %267 : vector<3x128xf32>
    %cst_270 = arith.constant dense<0xFF800000> : vector<128xf32>
    %269 = vector.multi_reduction <maximumf>, %268, %cst_270 [0] : vector<3x128xf32> to vector<128xf32>
    %270 = vector.shape_cast %269 : vector<128xf32> to vector<1x128xf32>
    %c0_271 = arith.constant 0 : index
    %c0_272 = arith.constant 0 : index
    %c0_273 = arith.constant 0 : index
    %271 = vector.load %arg4[%c0_271, %c0_272, %c0_273] : memref<3x128x128xf32, #tpu.memory_space<vmem>>, vector<1x128x128xf32>
    %272 = vector.shape_cast %271 : vector<1x128x128xf32> to vector<128x128xf32>
    %cst_274 = arith.constant dense<0.000000e+00> : vector<1x128xf32>
    %273 = tpu.matmul %270, %272, %cst_274 {dimension_numbers = #tpu.dot_dimension_numbers<[1], [0], [0], [1], [0, 0, 1, 1], [], []>} : vector<1x128xf32>, vector<128x128xf32>, vector<1x128xf32> -> vector<1x128xf32>
    %c0_275 = arith.constant 0 : index
    %c0_276 = arith.constant 0 : index
    %274 = vector.load %arg5[%c0_275, %c0_276] : memref<3x128xf32, #tpu.memory_space<vmem>>, vector<1x128xf32>
    %275 = arith.addf %273, %274 : vector<1x128xf32>
    %cst_277 = arith.constant 0.000000e+00 : f32
    %276 = vector.broadcast %cst_277 : f32 to vector<1x128xf32>
    %277 = arith.maximumf %275, %276 : vector<1x128xf32>
    %c1_278 = arith.constant 1 : index
    %c0_279 = arith.constant 0 : index
    %c0_280 = arith.constant 0 : index
    %278 = vector.load %arg4[%c1_278, %c0_279, %c0_280] : memref<3x128x128xf32, #tpu.memory_space<vmem>>, vector<1x128x128xf32>
    %279 = vector.shape_cast %278 : vector<1x128x128xf32> to vector<128x128xf32>
    %cst_281 = arith.constant dense<0.000000e+00> : vector<1x128xf32>
    %280 = tpu.matmul %277, %279, %cst_281 {dimension_numbers = #tpu.dot_dimension_numbers<[1], [0], [0], [1], [0, 0, 1, 1], [], []>} : vector<1x128xf32>, vector<128x128xf32>, vector<1x128xf32> -> vector<1x128xf32>
    %c1_282 = arith.constant 1 : index
    %c0_283 = arith.constant 0 : index
    %281 = vector.load %arg5[%c1_282, %c0_283] : memref<3x128xf32, #tpu.memory_space<vmem>>, vector<1x128xf32>
    %282 = arith.addf %280, %281 : vector<1x128xf32>
    %cst_284 = arith.constant 0.000000e+00 : f32
    %283 = vector.broadcast %cst_284 : f32 to vector<1x128xf32>
    %284 = arith.maximumf %282, %283 : vector<1x128xf32>
    %c2_285 = arith.constant 2 : index
    %c0_286 = arith.constant 0 : index
    %c0_287 = arith.constant 0 : index
    %285 = vector.load %arg4[%c2_285, %c0_286, %c0_287] : memref<3x128x128xf32, #tpu.memory_space<vmem>>, vector<1x128x128xf32>
    %286 = vector.shape_cast %285 : vector<1x128x128xf32> to vector<128x128xf32>
    %cst_288 = arith.constant dense<0.000000e+00> : vector<1x128xf32>
    %287 = tpu.matmul %284, %286, %cst_288 {dimension_numbers = #tpu.dot_dimension_numbers<[1], [0], [0], [1], [0, 0, 1, 1], [], []>} : vector<1x128xf32>, vector<128x128xf32>, vector<1x128xf32> -> vector<1x128xf32>
    %c2_289 = arith.constant 2 : index
    %c0_290 = arith.constant 0 : index
    %288 = vector.load %arg5[%c2_289, %c0_290] : memref<3x128xf32, #tpu.memory_space<vmem>>, vector<1x128xf32>
    %289 = arith.addf %287, %288 : vector<1x128xf32>
    %c0_291 = arith.constant 0 : index
    %c0_292 = arith.constant 0 : index
    %c0_293 = arith.constant 0 : index
    %290 = vector.load %arg6[%c0_291, %c0_292, %c0_293] : memref<1x1x128xf32, #tpu.memory_space<vmem>>, vector<1x1x128xf32>
    %291 = vector.shape_cast %290 : vector<1x1x128xf32> to vector<1x128xf32>
    %292 = vector.shape_cast %289 : vector<1x128xf32> to vector<1x1x128xf32>
    tpu.vector_store %arg6[%c0_291, %c0_292, %c0_293], %292 {strides = array<i32>} : memref<1x1x128xf32, #tpu.memory_space<vmem>>, vector<1x1x128xf32>,
    return
  }
  func.func @transform_0(%arg0: i32) -> (i32, i32, i32) {
    %c0_i32 = arith.constant 0 : i32
    %c0_i32_0 = arith.constant 0 : i32
    %c0_i32_1 = arith.constant 0 : i32
    return %arg0, %c0_i32, %c0_i32_0 : i32, i32, i32
  }
  func.func @transform_1(%arg0: i32) -> (i32, i32, i32) {
    %c0_i32 = arith.constant 0 : i32
    %c0_i32_0 = arith.constant 0 : i32
    %c0_i32_1 = arith.constant 0 : i32
    %c0_i32_2 = arith.constant 0 : i32
    return %c0_i32, %c0_i32_0, %c0_i32_1 : i32, i32, i32
  }
  func.func @transform_2(%arg0: i32) -> (i32, i32) {
    %c0_i32 = arith.constant 0 : i32
    %c0_i32_0 = arith.constant 0 : i32
    %c0_i32_1 = arith.constant 0 : i32
    return %c0_i32, %c0_i32_0 : i32, i32
  }
  func.func @transform_3(%arg0: i32) -> (i32, i32, i32) {
    %c0_i32 = arith.constant 0 : i32
    %c0_i32_0 = arith.constant 0 : i32
    %c0_i32_1 = arith.constant 0 : i32
    %c0_i32_2 = arith.constant 0 : i32
    return %c0_i32, %c0_i32_0, %c0_i32_1 : i32, i32, i32
  }
  func.func @transform_4(%arg0: i32) -> (i32, i32) {
    %c0_i32 = arith.constant 0 : i32
    %c0_i32_0 = arith.constant 0 : i32
    %c0_i32_1 = arith.constant 0 : i32
    return %c0_i32, %c0_i32_0 : i32, i32
  }
  func.func @transform_5(%arg0: i32) -> (i32, i32, i32) {
    %c0_i32 = arith.constant 0 : i32
    %c0_i32_0 = arith.constant 0 : i32
    %c0_i32_1 = arith.constant 0 : i32
    return %arg0, %c0_i32, %c0_i32_0 : i32, i32, i32
  }
}

</mosaic_0001>

<llo_original>
// kernel: kazunet_forward.1
$region0: #{kazunet_forward.1}
  #allocation0 [shape = 'u32[]', space=smem, size = 0x4, offset = 0x4, fixed_abs, tag = 'smem constant byte address 0x4 - core index']
  #allocation1 [shape = 'u32[144,128]{1,0:T(1,128)}', space=vmem, size = 0x12000, scoped, tag = 'internal scratch']
  #allocation2 [shape = 'f32[104,128]{1,0:T(8,128)}', space=vmem, size = 0xd000, scoped, tag = 'scratch operand']
  #allocation3 [shape = 'f32[104,128]{1,0:T(8,128)}', space=vmem, size = 0xd000, scoped, tag = 'scratch operand']
  #allocation4 [shape = 'f32[40,128]{1,0:T(8,128)}', space=vmem, size = 0x5000, scoped, tag = 'scratch operand']
  #allocation5 [shape = 'f32[40,128]{1,0:T(8,128)}', space=vmem, size = 0x5000, scoped, tag = 'scratch operand']
  #allocation6 [shape = 'f32[32,128]{1,0:T(8,128)}', space=vmem, size = 0x4000, scoped, tag = 'scratch operand']
  #allocation7 [shape = 'f32[288,128]{1,0:T(8,128)}', space=vmem, size = 0x24000, scoped, tag = 'scratch operand']
  %s0 = inlined_call_operand.vmem [shape: f32[2,324,128], index: 0, kind: input, shape index: {}]
  %s1 = inlined_call_operand.vmem [shape: f32[6,1152,128], index: 1, kind: input, shape index: {}]
  %s2 = inlined_call_operand.vmem [shape: f32[6,128], index: 2, kind: input, shape index: {}]
  %s3 = inlined_call_operand.vmem [shape: f32[3,128,128], index: 3, kind: input, shape index: {}]
  %s4 = inlined_call_operand.vmem [shape: f32[3,128], index: 4, kind: input, shape index: {}]
  %s5 = inlined_call_operand.hbm [shape: f32[2,1,128], index: 5, kind: output, shape index: {}]
  %s6 = sld [smem:[#allocation0]]
  $region53: #{kazunet_forward.1} parent=0
    _
  %s8 = ssub.s32 1, %s6
  %s9 = scalar_select 0, %s8, %s6
  $region1: #{kazunet_forward.1} parent=0
    #allocation8 [shape = 'u8[1024]{0}', space=vmem, size = 0x400, scoped, tag = 'output window, operand 0']
    #allocation9 [shape = 's32[2]{0}', space=sflag, size = 0x8, scoped, tag = 'scoped memory for kazunet_forward.1']
    %10 = vsyncpa [#allocation9], 0
    %s11 = scalar_lea.sflag [#allocation9], 1
    %12 = vsyncpa %s11, 0
    loop: start=0, step=1, limit=4
    $region2: #{kazunet_forward.1} parent=1 // loop_pre_header
      _
    $region3: #{kazunet_forward.1} parent=1 // loop_header
      %s14 = sphi 0, %s18
      %p15 = scmp.ge.s32.totalorder %s14, 4
      %s24 = sphi 0, %s26
      %s27 = sphi 0, %s24
      %s28 = sphi 0, %s27
      %s44 = sphi 0, %s28
      %s48 = sphi 0, %s48
      %s50 = sphi 0, %s48
      %s51 = sphi 0, %s50
      %s65 = sphi 0, %s51
      %s69 = sphi 0, %s69
      %s71 = sphi 0, %s69
      %s72 = sphi 0, %s71
      %s86 = sphi 0, %s72
      %s90 = sphi 0, %s90
      %s92 = sphi 0, %s90
      %s93 = sphi 0, %s92
      %s107 = sphi 0, %s93
      %s111 = sphi 0, %s111
      %s113 = sphi 0, %s111
      %s114 = sphi 0, %s113
      %s128 = sphi 0, %s114
      %s134 = sphi 0, %s136
      %s137 = sphi 0, %s134
      %s138 = sphi 0, %s137
      %s154 = sphi 0, %s138
    $region4: #{kazunet_forward.1} parent=1 // loop_header_branch
      %17 = sbr.rel (%p15) target = $region8
    $region5: #{kazunet_forward.1} parent=1 // loop_body
      %s19 = ssub.s32 %s14, 1
      %s20 = ssub.s32 %s14, 2
      %s21 = sadd.s32 %s14, 1
      %s22 = ssub.s32 %s14, %s21
      %p23 = scmp.eq.s32.totalorder %s22, 0
      %s25 = sadd.s32 %s24, 1
      %s26 = scalar_select %p23, %s24, %s25
      %p29 = pneg %p23
      %p30 = scmp.eq.s32.totalorder %s14, 1
      %p31 = por %p29, %p30
      %p32 = scmp.ne.s32.totalorder %s24, %s27
      %p33 = scmp.eq.s32.totalorder %s14, 0
      %p34 = por %p32, %p33
      %p35 = scmp.ne.s32.totalorder %s24, %s27
      %p36 = scmp.eq.s32.totalorder %s19, 1
      %p37 = por %p35, %p36
      %p38 = scmp.ne.s32.totalorder %s27, %s28
      %p39 = scmp.eq.s32.totalorder %s19, 0
      %p40 = por %p38, %p39
      %p41 = scmp.ne.s32.totalorder %s27, %s28
      %p42 = scmp.eq.s32.totalorder %s20, 1
      %p43 = por %p41, %p42
      %p45 = scmp.ne.s32.totalorder %s28, %s44
      %p46 = scmp.eq.s32.totalorder %s20, 0
      %p47 = por %p45, %p46
      %s49 = sadd.s32 %s48, 1
      %p52 = scmp.eq.s32.totalorder %s14, 1
      %p53 = scmp.ne.s32.totalorder %s48, %s50
      %p54 = scmp.eq.s32.totalorder %s14, 0
      %p55 = por %p53, %p54
      %p56 = scmp.ne.s32.totalorder %s48, %s50
      %p57 = scmp.eq.s32.totalorder %s19, 1
      %p58 = por %p56, %p57
      %p59 = scmp.ne.s32.totalorder %s50, %s51
      %p60 = scmp.eq.s32.totalorder %s19, 0
      %p61 = por %p59, %p60
      %p62 = scmp.ne.s32.totalorder %s50, %s51
      %p63 = scmp.eq.s32.totalorder %s20, 1
      %p64 = por %p62, %p63
      %p66 = scmp.ne.s32.totalorder %s51, %s65
      %p67 = scmp.eq.s32.totalorder %s20, 0
      %p68 = por %p66, %p67
      %s70 = sadd.s32 %s69, 1
      %p73 = scmp.eq.s32.totalorder %s14, 1
      %p74 = scmp.ne.s32.totalorder %s69, %s71
      %p75 = scmp.eq.s32.totalorder %s14, 0
      %p76 = por %p74, %p75
      %p77 = scmp.ne.s32.totalorder %s69, %s71
      %p78 = scmp.eq.s32.totalorder %s19, 1
      %p79 = por %p77, %p78
      %p80 = scmp.ne.s32.totalorder %s71, %s72
      %p81 = scmp.eq.s32.totalorder %s19, 0
      %p82 = por %p80, %p81
      %p83 = scmp.ne.s32.totalorder %s71, %s72
      %p84 = scmp.eq.s32.totalorder %s20, 1
      %p85 = por %p83, %p84
      %p87 = scmp.ne.s32.totalorder %s72, %s86
      %p88 = scmp.eq.s32.totalorder %s20, 0
      %p89 = por %p87, %p88
      %s91 = sadd.s32 %s90, 1
      %p94 = scmp.eq.s32.totalorder %s14, 1
      %p95 = scmp.ne.s32.totalorder %s90, %s92
      %p96 = scmp.eq.s32.totalorder %s14, 0
      %p97 = por %p95, %p96
      %p98 = scmp.ne.s32.totalorder %s90, %s92
      %p99 = scmp.eq.s32.totalorder %s19, 1
      %p100 = por %p98, %p99
      %p101 = scmp.ne.s32.totalorder %s92, %s93
      %p102 = scmp.eq.s32.totalorder %s19, 0
      %p103 = por %p101, %p102
      %p104 = scmp.ne.s32.totalorder %s92, %s93
      %p105 = scmp.eq.s32.totalorder %s20, 1
      %p106 = por %p104, %p105
      %p108 = scmp.ne.s32.totalorder %s93, %s107
      %p109 = scmp.eq.s32.totalorder %s20, 0
      %p110 = por %p108, %p109
      %s112 = sadd.s32 %s111, 1
      %p115 = scmp.eq.s32.totalorder %s14, 1
      %p116 = scmp.ne.s32.totalorder %s111, %s113
      %p117 = scmp.eq.s32.totalorder %s14, 0
      %p118 = por %p116, %p117
      %p119 = scmp.ne.s32.totalorder %s111, %s113
      %p120 = scmp.eq.s32.totalorder %s19, 1
      %p121 = por %p119, %p120
      %p122 = scmp.ne.s32.totalorder %s113, %s114
      %p123 = scmp.eq.s32.totalorder %s19, 0
      %p124 = por %p122, %p123
      %p125 = scmp.ne.s32.totalorder %s113, %s114
      %p126 = scmp.eq.s32.totalorder %s20, 1
      %p127 = por %p125, %p126
      %p129 = scmp.ne.s32.totalorder %s114, %s128
      %p130 = scmp.eq.s32.totalorder %s20, 0
      %p131 = por %p129, %p130
      %s132 = ssub.s32 %s14, %s21
      %p133 = scmp.eq.s32.totalorder %s132, 0
      %s135 = sadd.s32 %s134, 1
      %s136 = scalar_select %p133, %s134, %s135
      %p139 = pneg %p133
      %p140 = scmp.eq.s32.totalorder %s14, 1
      %p141 = por %p139, %p140
      %p142 = scmp.ne.s32.totalorder %s134, %s137
      %p143 = scmp.eq.s32.totalorder %s14, 0
      %p144 = por %p142, %p143
      %p145 = scmp.ne.s32.totalorder %s134, %s137
      %p146 = scmp.eq.s32.totalorder %s19, 1
      %p147 = por %p145, %p146
      %p148 = scmp.ne.s32.totalorder %s137, %s138
      %p149 = scmp.eq.s32.totalorder %s19, 0
      %p150 = por %p148, %p149
      %p151 = scmp.ne.s32.totalorder %s137, %s138
      %p152 = scmp.eq.s32.totalorder %s20, 1
      %p153 = por %p151, %p152
      %p155 = scmp.ne.s32.totalorder %s138, %s154
      %p156 = scmp.eq.s32.totalorder %s20, 0
      %p157 = por %p155, %p156
      %p158 = scmp.le.s32.totalorder 1, %s14
      %p159 = scmp.lt.s32.totalorder %s14, 3
      %p160 = pnand %p158, %p159
      %p161 = pneg %p160
      // Predicated region
      $region9: #{kazunet_forward.1} parent=5 // pred_check
        _
      $region10: #{kazunet_forward.1} parent=5 // pred_check_branch
        %163 = sbr.rel (%p160) target = $region12
      $region11: #{kazunet_forward.1} parent=5 // pred_region
        %s164 = ssub.s32 %s14, 1
        // Predicated region
        $region13: #{kazunet_forward.1} parent=11 // pred_check
          %p165 = pneg %p61
        $region14: #{kazunet_forward.1} parent=11 // pred_check_branch
          %167 = sbr.rel (%p165) target = $region16
        $region15: #{kazunet_forward.1} parent=11 // pred_region
          _
        $region16: #{kazunet_forward.1} parent=11 // pred_fallthru
          _
        // Predicated region
        $region17: #{kazunet_forward.1} parent=11 // pred_check
          %p168 = pneg %p82
        $region18: #{kazunet_forward.1} parent=11 // pred_check_branch
          %170 = sbr.rel (%p168) target = $region20
        $region19: #{kazunet_forward.1} parent=11 // pred_region
          _
        $region20: #{kazunet_forward.1} parent=11 // pred_fallthru
          _
        // Predicated region
        $region21: #{kazunet_forward.1} parent=11 // pred_check
          %p171 = pneg %p103
        $region22: #{kazunet_forward.1} parent=11 // pred_check_branch
          %173 = sbr.rel (%p171) target = $region24
        $region23: #{kazunet_forward.1} parent=11 // pred_region
          _
        $region24: #{kazunet_forward.1} parent=11 // pred_fallthru
          _
        // Predicated region
        $region25: #{kazunet_forward.1} parent=11 // pred_check
          %p174 = pneg %p124
        $region26: #{kazunet_forward.1} parent=11 // pred_check_branch
          %176 = sbr.rel (%p174) target = $region28
        $region27: #{kazunet_forward.1} parent=11 // pred_region
          _
        $region28: #{kazunet_forward.1} parent=11 // pred_fallthru
          _
      $region12: #{kazunet_forward.1} parent=5 // pred_fallthru
        _
      %p177 = scmp.lt.s32.totalorder %s14, 2
      // Predicated region
      $region29: #{kazunet_forward.1} parent=5 // pred_check
        %p178 = pneg %p177
      $region30: #{kazunet_forward.1} parent=5 // pred_check_branch
        %180 = sbr.rel (%p178) target = $region32
      $region31: #{kazunet_forward.1} parent=5 // pred_region
        // Predicated region
        $region33: #{kazunet_forward.1} parent=31 // pred_check
          %p181 = pneg %p34
        $region34: #{kazunet_forward.1} parent=31 // pred_check_branch
          %183 = sbr.rel (%p181) target = $region36
        $region35: #{kazunet_forward.1} parent=31 // pred_region
          %p184 = scmp.lt.s32.totalorder %s14, 1
          %s185 = scalar_select %p184, %s14, 1
          %s186 = smul.addr %s185, 41
          %s187 = smul.addr %s186, 8
          %s188 = scalar_lea.vmem %s0, %s187
        $region36: #{kazunet_forward.1} parent=31 // pred_fallthru
          _
      $region32: #{kazunet_forward.1} parent=5 // pred_fallthru
        _
      %p189 = scmp.le.s32.totalorder 1, %s14
      %p190 = scmp.lt.s32.totalorder %s14, 3
      %p191 = pnand %p189, %p190
      %p192 = pneg %p191
      // Predicated region
      $region37: #{kazunet_forward.1} parent=5 // pred_check
        _
      $region38: #{kazunet_forward.1} parent=5 // pred_check_branch
        %194 = sbr.rel (%p191) target = $region40
      $region39: #{kazunet_forward.1} parent=5 // pred_region
        %s195 = ssub.s32 %s14, 1
        %p196 = scmp.lt.s32.totalorder %s19, 1
        %s197 = scalar_select %p196, %s19, 1
        %s198 = smul.addr %s197, 41
        %s199 = smul.addr %s198, 8
        %s200 = scalar_lea.vmem %s0, %s199
        %p201 = pneg %p40
        %p202 = pneg %p37
        %p203 = pneg %p61
        %p204 = pneg %p58
        %p205 = pneg %p82
        %p206 = pneg %p79
        %p207 = pneg %p103
        %p208 = pneg %p100
        %p209 = pneg %p124
        %p210 = pneg %p121
        %p211 = pneg %p150
        %p212 = pneg %p147
        %s213 = sand.u32 %s137, 1
        %s214 = scalar_lea.sflag [#allocation9], %s213
        %s215 = sand.u32 %s137, 1
        %s216 = scalar_lea.vmem [#allocation8], %s215
        %p217 = scmp.lt.s32.totalorder %s19, 1
        %s218 = scalar_select %p217, %s19, 1
        %s219 = smul.addr %s218, 41
        %s220 = smul.addr %s219, 8
        %s221 = scalar_lea.vmem %s0, %s220
        %222 = vst [vmem:[#allocation2] sm:$0xff] 0.0
        %223 = vst [vmem:[#allocation2 + $0x8] sm:$0xff] 0.0
        %224 = vst [vmem:[#allocation2 + $0x10] sm:$0xff] 0.0
        %225 = vst [vmem:[#allocation2 + $0x18] sm:$0xff] 0.0
        %226 = vst [vmem:[#allocation2 + $0x20] sm:$0xff] 0.0
        %227 = vst [vmem:[#allocation2 + $0x28] sm:$0xff] 0.0
        %228 = vst [vmem:[#allocation2 + $0x30] sm:$0xff] 0.0
        %229 = vst [vmem:[#allocation2 + $0x38] sm:$0xff] 0.0
        %230 = vst [vmem:[#allocation2 + $0x40] sm:$0xff] 0.0
        %231 = vst [vmem:[#allocation2 + $0x48] sm:$0xff] 0.0
        %232 = vst [vmem:[#allocation2 + $0x50] sm:$0xff] 0.0
        %233 = vst [vmem:[#allocation2 + $0x58] sm:$0xff] 0.0
        %234 = vst [vmem:[#allocation2 + $0x60] sm:$0xff] 0.0
        %235 = vst [vmem:[#allocation3] sm:$0xff] 0.0
        %236 = vst [vmem:[#allocation3 + $0x8] sm:$0xff] 0.0
        %237 = vst [vmem:[#allocation3 + $0x10] sm:$0xff] 0.0
        %238 = vst [vmem:[#allocation3 + $0x18] sm:$0xff] 0.0
        %239 = vst [vmem:[#allocation3 + $0x20] sm:$0xff] 0.0
        %240 = vst [vmem:[#allocation3 + $0x28] sm:$0xff] 0.0
        %241 = vst [vmem:[#allocation3 + $0x30] sm:$0xff] 0.0
        %242 = vst [vmem:[#allocation3 + $0x38] sm:$0xff] 0.0
        %243 = vst [vmem:[#allocation3 + $0x40] sm:$0xff] 0.0
        %244 = vst [vmem:[#allocation3 + $0x48] sm:$0xff] 0.0
        %245 = vst [vmem:[#allocation3 + $0x50] sm:$0xff] 0.0
        %246 = vst [vmem:[#allocation3 + $0x58] sm:$0xff] 0.0
        %247 = vst [vmem:[#allocation3 + $0x60] sm:$0xff] 0.0
        %248 = vst [vmem:[#allocation4] sm:$0xff] 0.0
        %249 = vst [vmem:[#allocation4 + $0x8] sm:$0xff] 0.0
        %250 = vst [vmem:[#allocation4 + $0x10] sm:$0xff] 0.0
        %251 = vst [vmem:[#allocation4 + $0x18] sm:$0xff] 0.0
        %252 = vst [vmem:[#allocation4 + $0x20] sm:$0xff] 0.0
        %253 = vst [vmem:[#allocation5] sm:$0xff] 0.0
        %254 = vst [vmem:[#allocation5 + $0x8] sm:$0xff] 0.0
        %255 = vst [vmem:[#allocation5 + $0x10] sm:$0xff] 0.0
        %256 = vst [vmem:[#allocation5 + $0x18] sm:$0xff] 0.0
        %257 = vst [vmem:[#allocation5 + $0x20] sm:$0xff] 0.0
        %258 = vst [vmem:[#allocation6] sm:$0xff] 0.0
        %259 = vst [vmem:[#allocation6 + $0x8] sm:$0xff] 0.0
        %260 = vst [vmem:[#allocation6 + $0x10] sm:$0xff] 0.0
        %261 = vst [vmem:[#allocation6 + $0x18] sm:$0xff] 0.0
        %v262 = vld [vmem:[%s221] sm:$0xff]
        %v263 = vld [vmem:[%s221 + $0x8] sm:$0xff]
        %v264 = vld [vmem:[%s221 + $0x10] sm:$0xff]
        %v265 = vld [vmem:[%s221 + $0x18] sm:$0xff]
        %v266 = vld [vmem:[%s221 + $0x20] sm:$0xff]
        %v267 = vld [vmem:[%s221 + $0x28] sm:$0xff]
        %v268 = vld [vmem:[%s221 + $0x30] sm:$0xff]
        %v269 = vld [vmem:[%s221 + $0x38] sm:$0xff]
        %v270 = vld [vmem:[%s221 + $0x40] sm:$0xff]
        %v271 = vld [vmem:[%s221 + $0x48] sm:$0xff]
        %v272 = vld [vmem:[%s221 + $0x50] sm:$0xff]
        %v273 = vld [vmem:[%s221 + $0x58] sm:$0xff]
        %v274 = vld [vmem:[%s221 + $0x60] sm:$0xff]
        %v275 = vld [vmem:[%s221 + $0x68] sm:$0xff]
        %v276 = vld [vmem:[%s221 + $0x70] sm:$0xff]
        %v277 = vld [vmem:[%s221 + $0x78] sm:$0xff]
        %v278 = vld [vmem:[%s221 + $0x80] sm:$0xff]
        %v279 = vld [vmem:[%s221 + $0x88] sm:$0xff]
        %v280 = vld [vmem:[%s221 + $0x90] sm:$0xff]
        %v281 = vld [vmem:[%s221 + $0x98] sm:$0xff]
        %v282 = vld [vmem:[%s221 + $0xa0] sm:$0xff]
        %v283 = vld [vmem:[%s221 + $0xa8] sm:$0xff]
        %v284 = vld [vmem:[%s221 + $0xb0] sm:$0xff]
        %v285 = vld [vmem:[%s221 + $0xb8] sm:$0xff]
        %v286 = vld [vmem:[%s221 + $0xc0] sm:$0xff]
        %v287 = vld [vmem:[%s221 + $0xc8] sm:$0xff]
        %v288 = vld [vmem:[%s221 + $0xd0] sm:$0xff]
        %v289 = vld [vmem:[%s221 + $0xd8] sm:$0xff]
        %v290 = vld [vmem:[%s221 + $0xe0] sm:$0xff]
        %v291 = vld [vmem:[%s221 + $0xe8] sm:$0xff]
        %v292 = vld [vmem:[%s221 + $0xf0] sm:$0xff]
        %v293 = vld [vmem:[%s221 + $0xf8] sm:$0xff]
        %v294 = vld [vmem:[%s221 + $0x100] sm:$0xff]
        %v295 = vld [vmem:[%s221 + $0x108] sm:$0xff]
        %v296 = vld [vmem:[%s221 + $0x110] sm:$0xff]
        %v297 = vld [vmem:[%s221 + $0x118] sm:$0x3f]
        %v298 = vld [vmem:[%s221 + $0x1] sm:$0xff]
        %v299 = vld [vmem:[%s221 + $0x9] sm:$0xff]
        %v300 = vld [vmem:[%s221 + $0x11] sm:$0xff]
        %v301 = vld [vmem:[%s221 + $0x19] sm:$0xff]
        %v302 = vld [vmem:[%s221 + $0x21] sm:$0xff]
        %v303 = vld [vmem:[%s221 + $0x29] sm:$0xff]
        %v304 = vld [vmem:[%s221 + $0x31] sm:$0xff]
        %v305 = vld [vmem:[%s221 + $0x39] sm:$0xff]
        %v306 = vld [vmem:[%s221 + $0x41] sm:$0xff]
        %v307 = vld [vmem:[%s221 + $0x49] sm:$0xff]
        %v308 = vld [vmem:[%s221 + $0x51] sm:$0xff]
        %v309 = vld [vmem:[%s221 + $0x59] sm:$0xff]
        %v310 = vld [vmem:[%s221 + $0x61] sm:$0xff]
        %v311 = vld [vmem:[%s221 + $0x69] sm:$0xff]
        %v312 = vld [vmem:[%s221 + $0x71] sm:$0xff]
        %v313 = vld [vmem:[%s221 + $0x79] sm:$0xff]
        %v314 = vld [vmem:[%s221 + $0x81] sm:$0xff]
        %v315 = vld [vmem:[%s221 + $0x89] sm:$0xff]
        %v316 = vld [vmem:[%s221 + $0x91] sm:$0xff]
        %v317 = vld [vmem:[%s221 + $0x99] sm:$0xff]
        %v318 = vld [vmem:[%s221 + $0xa1] sm:$0xff]
        %v319 = vld [vmem:[%s221 + $0xa9] sm:$0xff]
        %v320 = vld [vmem:[%s221 + $0xb1] sm:$0xff]
        %v321 = vld [vmem:[%s221 + $0xb9] sm:$0xff]
        %v322 = vld [vmem:[%s221 + $0xc1] sm:$0xff]
        %v323 = vld [vmem:[%s221 + $0xc9] sm:$0xff]
        %v324 = vld [vmem:[%s221 + $0xd1] sm:$0xff]
        %v325 = vld [vmem:[%s221 + $0xd9] sm:$0xff]
        %v326 = vld [vmem:[%s221 + $0xe1] sm:$0xff]
        %v327 = vld [vmem:[%s221 + $0xe9] sm:$0xff]
        %v328 = vld [vmem:[%s221 + $0xf1] sm:$0xff]
        %v329 = vld [vmem:[%s221 + $0xf9] sm:$0xff]
        %v330 = vld [vmem:[%s221 + $0x101] sm:$0xff]
        %v331 = vld [vmem:[%s221 + $0x109] sm:$0xff]
        %v332 = vld [vmem:[%s221 + $0x111] sm:$0xff]
        %v333 = vld [vmem:[%s221 + $0x119] sm:$0x3f]
        %v334 = vld [vmem:[%s221 + $0x2] sm:$0xff]
        %v335 = vld [vmem:[%s221 + $0xa] sm:$0xff]
        %v336 = vld [vmem:[%s221 + $0x12] sm:$0xff]
        %v337 = vld [vmem:[%s221 + $0x1a] sm:$0xff]
        %v338 = vld [vmem:[%s221 + $0x22] sm:$0xff]
        %v339 = vld [vmem:[%s221 + $0x2a] sm:$0xff]
        %v340 = vld [vmem:[%s221 + $0x32] sm:$0xff]
        %v341 = vld [vmem:[%s221 + $0x3a] sm:$0xff]
        %v342 = vld [vmem:[%s221 + $0x42] sm:$0xff]
        %v343 = vld [vmem:[%s221 + $0x4a] sm:$0xff]
        %v344 = vld [vmem:[%s221 + $0x52] sm:$0xff]
        %v345 = vld [vmem:[%s221 + $0x5a] sm:$0xff]
        %v346 = vld [vmem:[%s221 + $0x62] sm:$0xff]
        %v347 = vld [vmem:[%s221 + $0x6a] sm:$0xff]
        %v348 = vld [vmem:[%s221 + $0x72] sm:$0xff]
        %v349 = vld [vmem:[%s221 + $0x7a] sm:$0xff]
        %v350 = vld [vmem:[%s221 + $0x82] sm:$0xff]
        %v351 = vld [vmem:[%s221 + $0x8a] sm:$0xff]
        %v352 = vld [vmem:[%s221 + $0x92] sm:$0xff]
        %v353 = vld [vmem:[%s221 + $0x9a] sm:$0xff]
        %v354 = vld [vmem:[%s221 + $0xa2] sm:$0xff]
        %v355 = vld [vmem:[%s221 + $0xaa] sm:$0xff]
        %v356 = vld [vmem:[%s221 + $0xb2] sm:$0xff]
        %v357 = vld [vmem:[%s221 + $0xba] sm:$0xff]
        %v358 = vld [vmem:[%s221 + $0xc2] sm:$0xff]
        %v359 = vld [vmem:[%s221 + $0xca] sm:$0xff]
        %v360 = vld [vmem:[%s221 + $0xd2] sm:$0xff]
        %v361 = vld [vmem:[%s221 + $0xda] sm:$0xff]
        %v362 = vld [vmem:[%s221 + $0xe2] sm:$0xff]
        %v363 = vld [vmem:[%s221 + $0xea] sm:$0xff]
        %v364 = vld [vmem:[%s221 + $0xf2] sm:$0xff]
        %v365 = vld [vmem:[%s221 + $0xfa] sm:$0xff]
        %v366 = vld [vmem:[%s221 + $0x102] sm:$0xff]
        %v367 = vld [vmem:[%s221 + $0x10a] sm:$0xff]
        %v368 = vld [vmem:[%s221 + $0x112] sm:$0xff]
        %v369 = vld [vmem:[%s221 + $0x11a] sm:$0x3f]
        %v370 = vld [vmem:[%s221 + $0x11a] sm:$0xff]
        %v371 = vld [vmem:[%s221 + $0x122] sm:$0xff]
        %v372 = vld [vmem:[%s221 + $0x12a] sm:$0x3f]
        %v373 = vld [vmem:[%s221 + $0x13] sm:$0xff]
        %v374 = vld [vmem:[%s221 + $0x1b] sm:$0xff]
        %v375 = vld [vmem:[%s221 + $0x23] sm:$0xff]
        %v376 = vld [vmem:[%s221 + $0x2b] sm:$0xff]
        %v377 = vld [vmem:[%s221 + $0x33] sm:$0xff]
        %v378 = vld [vmem:[%s221 + $0x3b] sm:$0xff]
        %v379 = vld [vmem:[%s221 + $0x43] sm:$0xff]
        %v380 = vld [vmem:[%s221 + $0x4b] sm:$0xff]
        %v381 = vld [vmem:[%s221 + $0x53] sm:$0xff]
        %v382 = vld [vmem:[%s221 + $0x5b] sm:$0xff]
        %v383 = vld [vmem:[%s221 + $0x63] sm:$0xff]
        %v384 = vld [vmem:[%s221 + $0x6b] sm:$0xff]
        %v385 = vld [vmem:[%s221 + $0x73] sm:$0xff]
        %v386 = vld [vmem:[%s221 + $0x7b] sm:$0xff]
        %v387 = vld [vmem:[%s221 + $0x83] sm:$0xff]
        %v388 = vld [vmem:[%s221 + $0x8b] sm:$0xff]
        %v389 = vld [vmem:[%s221 + $0x93] sm:$0xff]
        %v390 = vld [vmem:[%s221 + $0x9b] sm:$0xff]
        %v391 = vld [vmem:[%s221 + $0xa3] sm:$0xff]
        %v392 = vld [vmem:[%s221 + $0xab] sm:$0xff]
        %v393 = vld [vmem:[%s221 + $0xb3] sm:$0xff]
        %v394 = vld [vmem:[%s221 + $0xbb] sm:$0xff]
        %v395 = vld [vmem:[%s221 + $0xc3] sm:$0xff]
        %v396 = vld [vmem:[%s221 + $0xcb] sm:$0xff]
        %v397 = vld [vmem:[%s221 + $0xd3] sm:$0xff]
        %v398 = vld [vmem:[%s221 + $0xdb] sm:$0xff]
        %v399 = vld [vmem:[%s221 + $0xe3] sm:$0xff]
        %v400 = vld [vmem:[%s221 + $0xeb] sm:$0xff]
        %v401 = vld [vmem:[%s221 + $0xf3] sm:$0xff]
        %v402 = vld [vmem:[%s221 + $0xfb] sm:$0xff]
        %v403 = vld [vmem:[%s221 + $0x103] sm:$0xff]
        %v404 = vld [vmem:[%s221 + $0x10b] sm:$0xff]
        %v405 = vld [vmem:[%s221 + $0x113] sm:$0xff]
        %v406 = vld [vmem:[%s221 + $0x11b] sm:$0xff]
        %v407 = vld [vmem:[%s221 + $0x123] sm:$0xff]
        %v408 = vld [vmem:[%s221 + $0x12b] sm:$0x3f]
        %v409 = vld [vmem:[%s221 + $0x14] sm:$0xff]
        %v410 = vld [vmem:[%s221 + $0x1c] sm:$0xff]
        %v411 = vld [vmem:[%s221 + $0x24] sm:$0xff]
        %v412 = vld [vmem:[%s221 + $0x2c] sm:$0xff]
        %v413 = vld [vmem:[%s221 + $0x34] sm:$0xff]
        %v414 = vld [vmem:[%s221 + $0x3c] sm:$0xff]
        %v415 = vld [vmem:[%s221 + $0x44] sm:$0xff]
        %v416 = vld [vmem:[%s221 + $0x4c] sm:$0xff]
        %v417 = vld [vmem:[%s221 + $0x54] sm:$0xff]
        %v418 = vld [vmem:[%s221 + $0x5c] sm:$0xff]
        %v419 = vld [vmem:[%s221 + $0x64] sm:$0xff]
        %v420 = vld [vmem:[%s221 + $0x6c] sm:$0xff]
        %v421 = vld [vmem:[%s221 + $0x74] sm:$0xff]
        %v422 = vld [vmem:[%s221 + $0x7c] sm:$0xff]
        %v423 = vld [vmem:[%s221 + $0x84] sm:$0xff]
        %v424 = vld [vmem:[%s221 + $0x8c] sm:$0xff]
        %v425 = vld [vmem:[%s221 + $0x94] sm:$0xff]
        %v426 = vld [vmem:[%s221 + $0x9c] sm:$0xff]
        %v427 = vld [vmem:[%s221 + $0xa4] sm:$0xff]
        %v428 = vld [vmem:[%s221 + $0xac] sm:$0xff]
        %v429 = vld [vmem:[%s221 + $0xb4] sm:$0xff]
        %v430 = vld [vmem:[%s221 + $0xbc] sm:$0xff]
        %v431 = vld [vmem:[%s221 + $0xc4] sm:$0xff]
        %v432 = vld [vmem:[%s221 + $0xcc] sm:$0xff]
        %v433 = vld [vmem:[%s221 + $0xd4] sm:$0xff]
        %v434 = vld [vmem:[%s221 + $0xdc] sm:$0xff]
        %v435 = vld [vmem:[%s221 + $0xe4] sm:$0xff]
        %v436 = vld [vmem:[%s221 + $0xec] sm:$0xff]
        %v437 = vld [vmem:[%s221 + $0xf4] sm:$0xff]
        %v438 = vld [vmem:[%s221 + $0xfc] sm:$0xff]
        %v439 = vld [vmem:[%s221 + $0x104] sm:$0xff]
        %v440 = vld [vmem:[%s221 + $0x10c] sm:$0xff]
        %v441 = vld [vmem:[%s221 + $0x114] sm:$0xff]
        %v442 = vld [vmem:[%s221 + $0x11c] sm:$0xff]
        %v443 = vld [vmem:[%s221 + $0x124] sm:$0xff]
        %v444 = vld [vmem:[%s221 + $0x12c] sm:$0x3f]
        %v445 = vld [vmem:[%s221 + $0x12c] sm:$0xff]
        %v446 = vld [vmem:[%s221 + $0x134] sm:$0xff]
        %v447 = vld [vmem:[%s221 + $0x13c] sm:$0x3f]
        %v448 = vld [vmem:[%s221 + $0x25] sm:$0xff]
        %v449 = vld [vmem:[%s221 + $0x2d] sm:$0xff]
        %v450 = vld [vmem:[%s221 + $0x35] sm:$0xff]
        %v451 = vld [vmem:[%s221 + $0x3d] sm:$0xff]
        %v452 = vld [vmem:[%s221 + $0x45] sm:$0xff]
        %v453 = vld [vmem:[%s221 + $0x4d] sm:$0xff]
        %v454 = vld [vmem:[%s221 + $0x55] sm:$0xff]
        %v455 = vld [vmem:[%s221 + $0x5d] sm:$0xff]
        %v456 = vld [vmem:[%s221 + $0x65] sm:$0xff]
        %v457 = vld [vmem:[%s221 + $0x6d] sm:$0xff]
        %v458 = vld [vmem:[%s221 + $0x75] sm:$0xff]
        %v459 = vld [vmem:[%s221 + $0x7d] sm:$0xff]
        %v460 = vld [vmem:[%s221 + $0x85] sm:$0xff]
        %v461 = vld [vmem:[%s221 + $0x8d] sm:$0xff]
        %v462 = vld [vmem:[%s221 + $0x95] sm:$0xff]
        %v463 = vld [vmem:[%s221 + $0x9d] sm:$0xff]
        %v464 = vld [vmem:[%s221 + $0xa5] sm:$0xff]
        %v465 = vld [vmem:[%s221 + $0xad] sm:$0xff]
        %v466 = vld [vmem:[%s221 + $0xb5] sm:$0xff]
        %v467 = vld [vmem:[%s221 + $0xbd] sm:$0xff]
        %v468 = vld [vmem:[%s221 + $0xc5] sm:$0xff]
        %v469 = vld [vmem:[%s221 + $0xcd] sm:$0xff]
        %v470 = vld [vmem:[%s221 + $0xd5] sm:$0xff]
        %v471 = vld [vmem:[%s221 + $0xdd] sm:$0xff]
        %v472 = vld [vmem:[%s221 + $0xe5] sm:$0xff]
        %v473 = vld [vmem:[%s221 + $0xed] sm:$0xff]
        %v474 = vld [vmem:[%s221 + $0xf5] sm:$0xff]
        %v475 = vld [vmem:[%s221 + $0xfd] sm:$0xff]
        %v476 = vld [vmem:[%s221 + $0x105] sm:$0xff]
        %v477 = vld [vmem:[%s221 + $0x10d] sm:$0xff]
        %v478 = vld [vmem:[%s221 + $0x115] sm:$0xff]
        %v479 = vld [vmem:[%s221 + $0x11d] sm:$0xff]
        %v480 = vld [vmem:[%s221 + $0x125] sm:$0xff]
        %v481 = vld [vmem:[%s221 + $0x12d] sm:$0xff]
        %v482 = vld [vmem:[%s221 + $0x135] sm:$0xff]
        %v483 = vld [vmem:[%s221 + $0x13d] sm:$0x3f]
        %v484 = vld [vmem:[%s221 + $0x26] sm:$0xff]
        %v485 = vld [vmem:[%s221 + $0x2e] sm:$0xff]
        %v486 = vld [vmem:[%s221 + $0x36] sm:$0xff]
        %v487 = vld [vmem:[%s221 + $0x3e] sm:$0xff]
        %v488 = vld [vmem:[%s221 + $0x46] sm:$0xff]
        %v489 = vld [vmem:[%s221 + $0x4e] sm:$0xff]
        %v490 = vld [vmem:[%s221 + $0x56] sm:$0xff]
        %v491 = vld [vmem:[%s221 + $0x5e] sm:$0xff]
        %v492 = vld [vmem:[%s221 + $0x66] sm:$0xff]
        %v493 = vld [vmem:[%s221 + $0x6e] sm:$0xff]
        %v494 = vld [vmem:[%s221 + $0x76] sm:$0xff]
        %v495 = vld [vmem:[%s221 + $0x7e] sm:$0xff]
        %v496 = vld [vmem:[%s221 + $0x86] sm:$0xff]
        %v497 = vld [vmem:[%s221 + $0x8e] sm:$0xff]
        %v498 = vld [vmem:[%s221 + $0x96] sm:$0xff]
        %v499 = vld [vmem:[%s221 + $0x9e] sm:$0xff]
        %v500 = vld [vmem:[%s221 + $0xa6] sm:$0xff]
        %v501 = vld [vmem:[%s221 + $0xae] sm:$0xff]
        %v502 = vld [vmem:[%s221 + $0xb6] sm:$0xff]
        %v503 = vld [vmem:[%s221 + $0xbe] sm:$0xff]
        %v504 = vld [vmem:[%s221 + $0xc6] sm:$0xff]
        %v505 = vld [vmem:[%s221 + $0xce] sm:$0xff]
        %v506 = vld [vmem:[%s221 + $0xd6] sm:$0xff]
        %v507 = vld [vmem:[%s221 + $0xde] sm:$0xff]
        %v508 = vld [vmem:[%s221 + $0xe6] sm:$0xff]
        %v509 = vld [vmem:[%s221 + $0xee] sm:$0xff]
        %v510 = vld [vmem:[%s221 + $0xf6] sm:$0xff]
        %v511 = vld [vmem:[%s221 + $0xfe] sm:$0xff]
        %v512 = vld [vmem:[%s221 + $0x106] sm:$0xff]
        %v513 = vld [vmem:[%s221 + $0x10e] sm:$0xff]
        %v514 = vld [vmem:[%s221 + $0x116] sm:$0xff]
        %v515 = vld [vmem:[%s221 + $0x11e] sm:$0xff]
        %v516 = vld [vmem:[%s221 + $0x126] sm:$0xff]
        %v517 = vld [vmem:[%s221 + $0x12e] sm:$0xff]
        %v518 = vld [vmem:[%s221 + $0x136] sm:$0xff]
        %v519 = vld [vmem:[%s221 + $0x13e] sm:$0x3f]
        %v520 = vld [vmem:[%s1] sm:$0xff]
        %v521 = vld [vmem:[%s1 + $0x8] sm:$0xff]
        %v522 = vld [vmem:[%s1 + $0x10] sm:$0xff]
        %v523 = vld [vmem:[%s1 + $0x18] sm:$0xff]
        %v524 = vld [vmem:[%s1 + $0x20] sm:$0xff]
        %v525 = vld [vmem:[%s1 + $0x28] sm:$0xff]
        %v526 = vld [vmem:[%s1 + $0x30] sm:$0xff]
        %v527 = vld [vmem:[%s1 + $0x38] sm:$0xff]
        %v528 = vld [vmem:[%s1 + $0x40] sm:$0xff]
        %v529 = vld [vmem:[%s1 + $0x48] sm:$0xff]
        %v530 = vld [vmem:[%s1 + $0x50] sm:$0xff]
        %v531 = vld [vmem:[%s1 + $0x58] sm:$0xff]
        %v532 = vld [vmem:[%s1 + $0x60] sm:$0xff]
        %v533 = vld [vmem:[%s1 + $0x68] sm:$0xff]
        %v534 = vld [vmem:[%s1 + $0x70] sm:$0xff]
        %v535 = vld [vmem:[%s1 + $0x78] sm:$0xff]
        %v536 = vld [vmem:[%s1 + $0x80] sm:$0xff]
        %v537 = vld [vmem:[%s1 + $0x88] sm:$0xff]
        %v538 = vld [vmem:[%s1 + $0x90] sm:$0xff]
        %v539 = vld [vmem:[%s1 + $0x98] sm:$0xff]
        %v540 = vld [vmem:[%s1 + $0xa0] sm:$0xff]
        %v541 = vld [vmem:[%s1 + $0xa8] sm:$0xff]
        %v542 = vld [vmem:[%s1 + $0xb0] sm:$0xff]
        %v543 = vld [vmem:[%s1 + $0xb8] sm:$0xff]
        %v544 = vld [vmem:[%s1 + $0xc0] sm:$0xff]
        %v545 = vld [vmem:[%s1 + $0xc8] sm:$0xff]
        %v546 = vld [vmem:[%s1 + $0xd0] sm:$0xff]
        %v547 = vld [vmem:[%s1 + $0xd8] sm:$0xff]
        %v548 = vld [vmem:[%s1 + $0xe0] sm:$0xff]
        %v549 = vld [vmem:[%s1 + $0xe8] sm:$0xff]
        %v550 = vld [vmem:[%s1 + $0xf0] sm:$0xff]
        %v551 = vld [vmem:[%s1 + $0xf8] sm:$0xff]
        %v552 = vld [vmem:[%s1 + $0x100] sm:$0xff]
        %v553 = vld [vmem:[%s1 + $0x108] sm:$0xff]
        %v554 = vld [vmem:[%s1 + $0x110] sm:$0xff]
        %v555 = vld [vmem:[%s1 + $0x118] sm:$0xff]
        %v556 = vld [vmem:[%s1 + $0x120] sm:$0xff]
        %v557 = vld [vmem:[%s1 + $0x128] sm:$0xff]
        %v558 = vld [vmem:[%s1 + $0x130] sm:$0xff]
        %v559 = vld [vmem:[%s1 + $0x138] sm:$0xff]
        %v560 = vld [vmem:[%s1 + $0x140] sm:$0xff]
        %v561 = vld [vmem:[%s1 + $0x148] sm:$0xff]
        %v562 = vld [vmem:[%s1 + $0x150] sm:$0xff]
        %v563 = vld [vmem:[%s1 + $0x158] sm:$0xff]
        %v564 = vld [vmem:[%s1 + $0x160] sm:$0xff]
        %v565 = vld [vmem:[%s1 + $0x168] sm:$0xff]
        %v566 = vld [vmem:[%s1 + $0x170] sm:$0xff]
        %v567 = vld [vmem:[%s1 + $0x178] sm:$0xff]
        %v568 = vld [vmem:[%s1 + $0x180] sm:$0xff]
        %v569 = vld [vmem:[%s1 + $0x188] sm:$0xff]
        %v570 = vld [vmem:[%s1 + $0x190] sm:$0xff]
        %v571 = vld [vmem:[%s1 + $0x198] sm:$0xff]
        %v572 = vld [vmem:[%s1 + $0x1a0] sm:$0xff]
        %v573 = vld [vmem:[%s1 + $0x1a8] sm:$0xff]
        %v574 = vld [vmem:[%s1 + $0x1b0] sm:$0xff]
        %v575 = vld [vmem:[%s1 + $0x1b8] sm:$0xff]
        %v576 = vld [vmem:[%s1 + $0x1c0] sm:$0xff]
        %v577 = vld [vmem:[%s1 + $0x1c8] sm:$0xff]
        %v578 = vld [vmem:[%s1 + $0x1d0] sm:$0xff]
        %v579 = vld [vmem:[%s1 + $0x1d8] sm:$0xff]
        %v580 = vld [vmem:[%s1 + $0x1e0] sm:$0xff]
        %v581 = vld [vmem:[%s1 + $0x1e8] sm:$0xff]
        %v582 = vld [vmem:[%s1 + $0x1f0] sm:$0xff]
        %v583 = vld [vmem:[%s1 + $0x1f8] sm:$0xff]
        %v584 = vld [vmem:[%s1 + $0x200] sm:$0xff]
        %v585 = vld [vmem:[%s1 + $0x208] sm:$0xff]
        %v586 = vld [vmem:[%s1 + $0x210] sm:$0xff]
        %v587 = vld [vmem:[%s1 + $0x218] sm:$0xff]
        %v588 = vld [vmem:[%s1 + $0x220] sm:$0xff]
        %v589 = vld [vmem:[%s1 + $0x228] sm:$0xff]
        %v590 = vld [vmem:[%s1 + $0x230] sm:$0xff]
        %v591 = vld [vmem:[%s1 + $0x238] sm:$0xff]
        %v592 = vld [vmem:[%s1 + $0x240] sm:$0xff]
        %v593 = vld [vmem:[%s1 + $0x248] sm:$0xff]
        %v594 = vld [vmem:[%s1 + $0x250] sm:$0xff]
        %v595 = vld [vmem:[%s1 + $0x258] sm:$0xff]
        %v596 = vld [vmem:[%s1 + $0x260] sm:$0xff]
        %v597 = vld [vmem:[%s1 + $0x268] sm:$0xff]
        %v598 = vld [vmem:[%s1 + $0x270] sm:$0xff]
        %v599 = vld [vmem:[%s1 + $0x278] sm:$0xff]
        %v600 = vld [vmem:[%s1 + $0x280] sm:$0xff]
        %v601 = vld [vmem:[%s1 + $0x288] sm:$0xff]
        %v602 = vld [vmem:[%s1 + $0x290] sm:$0xff]
        %v603 = vld [vmem:[%s1 + $0x298] sm:$0xff]
        %v604 = vld [vmem:[%s1 + $0x2a0] sm:$0xff]
        %v605 = vld [vmem:[%s1 + $0x2a8] sm:$0xff]
        %v606 = vld [vmem:[%s1 + $0x2b0] sm:$0xff]
        %v607 = vld [vmem:[%s1 + $0x2b8] sm:$0xff]
        %v608 = vld [vmem:[%s1 + $0x2c0] sm:$0xff]
        %v609 = vld [vmem:[%s1 + $0x2c8] sm:$0xff]
        %v610 = vld [vmem:[%s1 + $0x2d0] sm:$0xff]
        %v611 = vld [vmem:[%s1 + $0x2d8] sm:$0xff]
        %v612 = vld [vmem:[%s1 + $0x2e0] sm:$0xff]
        %v613 = vld [vmem:[%s1 + $0x2e8] sm:$0xff]
        %v614 = vld [vmem:[%s1 + $0x2f0] sm:$0xff]
        %v615 = vld [vmem:[%s1 + $0x2f8] sm:$0xff]
        %v616 = vld [vmem:[%s1 + $0x300] sm:$0xff]
        %v617 = vld [vmem:[%s1 + $0x308] sm:$0xff]
        %v618 = vld [vmem:[%s1 + $0x310] sm:$0xff]
        %v619 = vld [vmem:[%s1 + $0x318] sm:$0xff]
        %v620 = vld [vmem:[%s1 + $0x320] sm:$0xff]
        %v621 = vld [vmem:[%s1 + $0x328] sm:$0xff]
        %v622 = vld [vmem:[%s1 + $0x330] sm:$0xff]
        %v623 = vld [vmem:[%s1 + $0x338] sm:$0xff]
        %v624 = vld [vmem:[%s1 + $0x340] sm:$0xff]
        %v625 = vld [vmem:[%s1 + $0x348] sm:$0xff]
        %v626 = vld [vmem:[%s1 + $0x350] sm:$0xff]
        %v627 = vld [vmem:[%s1 + $0x358] sm:$0xff]
        %v628 = vld [vmem:[%s1 + $0x360] sm:$0xff]
        %v629 = vld [vmem:[%s1 + $0x368] sm:$0xff]
        %v630 = vld [vmem:[%s1 + $0x370] sm:$0xff]
        %v631 = vld [vmem:[%s1 + $0x378] sm:$0xff]
        %v632 = vld [vmem:[%s1 + $0x380] sm:$0xff]
        %v633 = vld [vmem:[%s1 + $0x388] sm:$0xff]
        %v634 = vld [vmem:[%s1 + $0x390] sm:$0xff]
        %v635 = vld [vmem:[%s1 + $0x398] sm:$0xff]
        %v636 = vld [vmem:[%s1 + $0x3a0] sm:$0xff]
        %v637 = vld [vmem:[%s1 + $0x3a8] sm:$0xff]
        %v638 = vld [vmem:[%s1 + $0x3b0] sm:$0xff]
        %v639 = vld [vmem:[%s1 + $0x3b8] sm:$0xff]
        %v640 = vld [vmem:[%s1 + $0x3c0] sm:$0xff]
        %v641 = vld [vmem:[%s1 + $0x3c8] sm:$0xff]
        %v642 = vld [vmem:[%s1 + $0x3d0] sm:$0xff]
        %v643 = vld [vmem:[%s1 + $0x3d8] sm:$0xff]
        %v644 = vld [vmem:[%s1 + $0x3e0] sm:$0xff]
        %v645 = vld [vmem:[%s1 + $0x3e8] sm:$0xff]
        %v646 = vld [vmem:[%s1 + $0x3f0] sm:$0xff]
        %v647 = vld [vmem:[%s1 + $0x3f8] sm:$0xff]
        %v648 = vld [vmem:[%s1 + $0x400] sm:$0xff]
        %v649 = vld [vmem:[%s1 + $0x408] sm:$0xff]
        %v650 = vld [vmem:[%s1 + $0x410] sm:$0xff]
        %v651 = vld [vmem:[%s1 + $0x418] sm:$0xff]
        %v652 = vld [vmem:[%s1 + $0x420] sm:$0xff]
        %v653 = vld [vmem:[%s1 + $0x428] sm:$0xff]
        %v654 = vld [vmem:[%s1 + $0x430] sm:$0xff]
        %v655 = vld [vmem:[%s1 + $0x438] sm:$0xff]
        %v656 = vld [vmem:[%s1 + $0x440] sm:$0xff]
        %v657 = vld [vmem:[%s1 + $0x448] sm:$0xff]
        %v658 = vld [vmem:[%s1 + $0x450] sm:$0xff]
        %v659 = vld [vmem:[%s1 + $0x458] sm:$0xff]
        %v660 = vld [vmem:[%s1 + $0x460] sm:$0xff]
        %v661 = vld [vmem:[%s1 + $0x468] sm:$0xff]
        %v662 = vld [vmem:[%s1 + $0x470] sm:$0xff]
        %v663 = vld [vmem:[%s1 + $0x478] sm:$0xff]
        %v664 = vld [vmem:[%s2] sm:$0x1]
        %v665 = vlaneseq
        %v666 = vshrl.u32 %v665, 7
        %v667 = vsub.s32 0, %v666
        %v668 = vrot.slane %v664, %v667
        %669 = vmatprep.subr.mxu0 0.0
        %670 = vmatpush1.msra.mxu0 %v520
        %671 = vmatprep.subr.mxu0 0.0
        %672 = vmatpush1.msra.mxu0 %v521
        %673 = vmatprep.subr.mxu0 0.0
        %674 = vmatpush1.msra.mxu0 %v522
        %675 = vmatprep.subr.mxu0 0.0
        %676 = vmatpush1.msra.mxu0 %v523
        %677 = vmatprep.subr.mxu0 0.0
        %678 = vmatpush1.msra.mxu0 %v524
        %679 = vmatprep.subr.mxu0 0.0
        %680 = vmatpush1.msra.mxu0 %v525
        %681 = vmatprep.subr.mxu0 0.0
        %682 = vmatpush1.msra.mxu0 %v526
        %683 = vmatprep.subr.mxu0 0.0
        %684 = vmatpush1.msra.mxu0 %v527
        %685 = vmatprep.subr.mxu0 0.0
        %686 = vmatpush1.msra.mxu0 %v528
        %687 = vmatprep.subr.mxu0 0.0
        %688 = vmatpush1.msra.mxu0 %v529
        %689 = vmatprep.subr.mxu0 0.0
        %690 = vmatpush1.msra.mxu0 %v530
        %691 = vmatprep.subr.mxu0 0.0
        %692 = vmatpush1.msra.mxu0 %v531
        %693 = vmatprep.subr.mxu0 0.0
        %694 = vmatpush1.msra.mxu0 %v532
        %695 = vmatprep.subr.mxu0 0.0
        %696 = vmatpush1.msra.mxu0 %v533
        %697 = vmatprep.subr.mxu0 0.0
        %698 = vmatpush1.msra.mxu0 %v534
        %699 = vmatprep.subr.mxu0 0.0
        %700 = vmatpush1.msra.mxu0 %v535
        %701 = vmatprep.subr.mxu0 0.0
        %702 = vmatpush1.msra.mxu0 %v536
        %703 = vmatprep.subr.mxu0 0.0
        %704 = vmatpush1.msra.mxu0 %v537
        %705 = vmatprep.subr.mxu0 0.0
        %706 = vmatpush1.msra.mxu0 %v538
        %707 = vmatprep.subr.mxu0 0.0
        %708 = vmatpush1.msra.mxu0 %v539
        %709 = vmatprep.subr.mxu0 0.0
        %710 = vmatpush1.msra.mxu0 %v540
        %711 = vmatprep.subr.mxu0 0.0
        %712 = vmatpush1.msra.mxu0 %v541
        %713 = vmatprep.subr.mxu0 0.0
        %714 = vmatpush1.msra.mxu0 %v542
        %715 = vmatprep.subr.mxu0 0.0
        %716 = vmatpush1.msra.mxu0 %v543
        %717 = vmatprep.subr.mxu0 0.0
        %718 = vmatpush1.msra.mxu0 %v544
        %719 = vmatprep.subr.mxu0 0.0
        %720 = vmatpush1.msra.mxu0 %v545
        %721 = vmatprep.subr.mxu0 0.0
        %722 = vmatpush1.msra.mxu0 %v546
        %723 = vmatprep.subr.mxu0 0.0
        %724 = vmatpush1.msra.mxu0 %v547
        %725 = vmatprep.subr.mxu0 0.0
        %726 = vmatpush1.msra.mxu0 %v548
        %727 = vmatprep.subr.mxu0 0.0
        %728 = vmatpush1.msra.mxu0 %v549
        %729 = vmatprep.subr.mxu0 0.0
        %730 = vmatpush1.msra.mxu0 %v550
        %731 = vmatprep.subr.mxu0 0.0
        %732 = vmatpush1.msra.mxu0 %v551
        %733 = vmatprep.mubr.f32.mxu0 %v298
        %734 = vmatmul.mubr.f32.gmra.mrb[0].mxu0 %v262
        %v735 = vpop.f32.mrb[0].mxu0
        %v736 = vadd.f32 %v668, %v735
        %v737 = vpop.f32.mrb[0].mxu0
        %738 = vmatprep.mubr.f32.mxu0 %v299
        %739 = vmatmul.mubr.f32.gmra.mrb[0].mxu0 %v263
        %v740 = vpop.f32.mrb[0].mxu0
        %v741 = vadd.f32 %v668, %v740
        %v742 = vpop.f32.mrb[0].mxu0
        %743 = vmatprep.mubr.f32.mxu0 %v300
        %744 = vmatmul.mubr.f32.gmra.mrb[0].mxu0 %v264
        %v745 = vpop.f32.mrb[0].mxu0
        %v746 = vadd.f32 %v668, %v745
        %v747 = vpop.f32.mrb[0].mxu0
        %748 = vmatprep.mubr.f32.mxu0 %v301
        %749 = vmatmul.mubr.f32.gmra.mrb[0].mxu0 %v265
        %v750 = vpop.f32.mrb[0].mxu0
        %v751 = vadd.f32 %v668, %v750
        %v752 = vpop.f32.mrb[0].mxu0
        %753 = vmatprep.mubr.f32.mxu0 %v302
        %754 = vmatmul.mubr.f32.gmra.mrb[0].mxu0 %v266
        %v755 = vpop.f32.mrb[0].mxu0
        %v756 = vadd.f32 %v668, %v755
        %v757 = vpop.f32.mrb[0].mxu0
        %758 = vmatprep.mubr.f32.mxu0 %v303
        %759 = vmatmul.mubr.f32.gmra.mrb[0].mxu0 %v267
        %v760 = vpop.f32.mrb[0].mxu0
        %v761 = vadd.f32 %v668, %v760
        %v762 = vpop.f32.mrb[0].mxu0
        %763 = vmatprep.mubr.f32.mxu0 %v304
        %764 = vmatmul.mubr.f32.gmra.mrb[0].mxu0 %v268
        %v765 = vpop.f32.mrb[0].mxu0
        %v766 = vadd.f32 %v668, %v765
        %v767 = vpop.f32.mrb[0].mxu0
        %768 = vmatprep.mubr.f32.mxu0 %v305
        %769 = vmatmul.mubr.f32.gmra.mrb[0].mxu0 %v269
        %v770 = vpop.f32.mrb[0].mxu0
        %v771 = vadd.f32 %v668, %v770
        %v772 = vpop.f32.mrb[0].mxu0
        %773 = vmatprep.mubr.f32.mxu0 %v306
        %774 = vmatmul.mubr.f32.gmra.mrb[0].mxu0 %v270
        %v775 = vpop.f32.mrb[0].mxu0
        %v776 = vadd.f32 %v668, %v775
        %v777 = vpop.f32.mrb[0].mxu0
        %778 = vmatprep.mubr.f32.mxu0 %v307
        %779 = vmatmul.mubr.f32.gmra.mrb[0].mxu0 %v271
        %v780 = vpop.f32.mrb[0].mxu0
        %v781 = vadd.f32 %v668, %v780
        %v782 = vpop.f32.mrb[0].mxu0
        %783 = vmatprep.mubr.f32.mxu0 %v308
        %784 = vmatmul.mubr.f32.gmra.mrb[0].mxu0 %v272
        %v785 = vpop.f32.mrb[0].mxu0
        %v786 = vadd.f32 %v668, %v785
        %v787 = vpop.f32.mrb[0].mxu0
        %788 = vmatprep.mubr.f32.mxu0 %v309
        %789 = vmatmul.mubr.f32.gmra.mrb[0].mxu0 %v273
        %v790 = vpop.f32.mrb[0].mxu0
        %v791 = vadd.f32 %v668, %v790
        %v792 = vpop.f32.mrb[0].mxu0
        %793 = vmatprep.mubr.f32.mxu0 %v310
        %794 = vmatmul.mubr.f32.gmra.mrb[0].mxu0 %v274
        %v795 = vpop.f32.mrb[0].mxu0
        %v796 = vadd.f32 %v668, %v795
        %v797 = vpop.f32.mrb[0].mxu0
        %798 = vmatprep.mubr.f32.mxu0 %v311
        %799 = vmatmul.mubr.f32.gmra.mrb[0].mxu0 %v275
        %v800 = vpop.f32.mrb[0].mxu0
        %v801 = vadd.f32 %v668, %v800
        %v802 = vpop.f32.mrb[0].mxu0
        %803 = vmatprep.mubr.f32.mxu0 %v312
        %804 = vmatmul.mubr.f32.gmra.mrb[0].mxu0 %v276
        %v805 = vpop.f32.mrb[0].mxu0
        %v806 = vadd.f32 %v668, %v805
        %v807 = vpop.f32.mrb[0].mxu0
        %808 = vmatprep.mubr.f32.mxu0 %v313
        %809 = vmatmul.mubr.f32.gmra.mrb[0].mxu0 %v277
        %v810 = vpop.f32.mrb[0].mxu0
        %v811 = vadd.f32 %v668, %v810
        %v812 = vpop.f32.mrb[0].mxu0
        %813 = vmatprep.mubr.f32.mxu0 %v314
        %814 = vmatmul.mubr.f32.gmra.mrb[0].mxu0 %v278
        %v815 = vpop.f32.mrb[0].mxu0
        %v816 = vadd.f32 %v668, %v815
        %v817 = vpop.f32.mrb[0].mxu0
        %818 = vmatprep.mubr.f32.mxu0 %v315
        %819 = vmatmul.mubr.f32.gmra.mrb[0].mxu0 %v279
        %v820 = vpop.f32.mrb[0].mxu0
        %v821 = vadd.f32 %v668, %v820
        %v822 = vpop.f32.mrb[0].mxu0
        %823 = vmatprep.mubr.f32.mxu0 %v316
        %824 = vmatmul.mubr.f32.gmra.mrb[0].mxu0 %v280
        %v825 = vpop.f32.mrb[0].mxu0
        %v826 = vadd.f32 %v668, %v825
        %v827 = vpop.f32.mrb[0].mxu0
        %828 = vmatprep.mubr.f32.mxu0 %v317
        %829 = vmatmul.mubr.f32.gmra.mrb[0].mxu0 %v281
        %v830 = vpop.f32.mrb[0].mxu0
        %v831 = vadd.f32 %v668, %v830
        %v832 = vpop.f32.mrb[0].mxu0
        %833 = vmatprep.mubr.f32.mxu0 %v318
        %834 = vmatmul.mubr.f32.gmra.mrb[0].mxu0 %v282
        %v835 = vpop.f32.mrb[0].mxu0
        %v836 = vadd.f32 %v668, %v835
        %v837 = vpop.f32.mrb[0].mxu0
        %838 = vmatprep.mubr.f32.mxu0 %v319
        %839 = vmatmul.mubr.f32.gmra.mrb[0].mxu0 %v283
        %v840 = vpop.f32.mrb[0].mxu0
        %v841 = vadd.f32 %v668, %v840
        %v842 = vpop.f32.mrb[0].mxu0
        %843 = vmatprep.mubr.f32.mxu0 %v320
        %844 = vmatmul.mubr.f32.gmra.mrb[0].mxu0 %v284
        %v845 = vpop.f32.mrb[0].mxu0
        %v846 = vadd.f32 %v668, %v845
        %v847 = vpop.f32.mrb[0].mxu0
        %848 = vmatprep.mubr.f32.mxu0 %v321
        %849 = vmatmul.mubr.f32.gmra.mrb[0].mxu0 %v285
        %v850 = vpop.f32.mrb[0].mxu0
        %v851 = vadd.f32 %v668, %v850
        %v852 = vpop.f32.mrb[0].mxu0
        %853 = vmatprep.mubr.f32.mxu0 %v322
        %854 = vmatmul.mubr.f32.gmra.mrb[0].mxu0 %v286
        %v855 = vpop.f32.mrb[0].mxu0
        %v856 = vadd.f32 %v668, %v855
        %v857 = vpop.f32.mrb[0].mxu0
        %858 = vmatprep.mubr.f32.mxu0 %v323
        %859 = vmatmul.mubr.f32.gmra.mrb[0].mxu0 %v287
        %v860 = vpop.f32.mrb[0].mxu0
        %v861 = vadd.f32 %v668, %v860
        %v862 = vpop.f32.mrb[0].mxu0
        %863 = vmatprep.mubr.f32.mxu0 %v324
        %864 = vmatmul.mubr.f32.gmra.mrb[0].mxu0 %v288
        %v865 = vpop.f32.mrb[0].mxu0
        %v866 = vadd.f32 %v668, %v865
        %v867 = vpop.f32.mrb[0].mxu0
        %868 = vmatprep.mubr.f32.mxu0 %v325
        %869 = vmatmul.mubr.f32.gmra.mrb[0].mxu0 %v289
        %v870 = vpop.f32.mrb[0].mxu0
        %v871 = vadd.f32 %v668, %v870
        %v872 = vpop.f32.mrb[0].mxu0
        %873 = vmatprep.mubr.f32.mxu0 %v326
        %874 = vmatmul.mubr.f32.gmra.mrb[0].mxu0 %v290
        %v875 = vpop.f32.mrb[0].mxu0
        %v876 = vadd.f32 %v668, %v875
        %v877 = vpop.f32.mrb[0].mxu0
        %878 = vmatprep.mubr.f32.mxu0 %v327
        %879 = vmatmul.mubr.f32.gmra.mrb[0].mxu0 %v291
        %v880 = vpop.f32.mrb[0].mxu0
        %v881 = vadd.f32 %v668, %v880
        %v882 = vpop.f32.mrb[0].mxu0
        %883 = vmatprep.mubr.f32.mxu0 %v328
        %884 = vmatmul.mubr.f32.gmra.mrb[0].mxu0 %v292
        %v885 = vpop.f32.mrb[0].mxu0
        %v886 = vadd.f32 %v668, %v885
        %v887 = vpop.f32.mrb[0].mxu0
        %888 = vmatprep.mubr.f32.mxu0 %v329
        %889 = vmatmul.mubr.f32.gmra.mrb[0].mxu0 %v293
        %v890 = vpop.f32.mrb[0].mxu0
        %v891 = vadd.f32 %v668, %v890
        %v892 = vpop.f32.mrb[0].mxu0
        %893 = vmatprep.mubr.f32.mxu0 %v330
        %894 = vmatmul.mubr.f32.gmra.mrb[0].mxu0 %v294
        %v895 = vpop.f32.mrb[0].mxu0
        %v896 = vadd.f32 %v668, %v895
        %v897 = vpop.f32.mrb[0].mxu0
        %898 = vmatprep.mubr.f32.mxu0 %v331
        %899 = vmatmul.mubr.f32.gmra.mrb[0].mxu0 %v295
        %v900 = vpop.f32.mrb[0].mxu0
        %v901 = vadd.f32 %v668, %v900
        %v902 = vpop.f32.mrb[0].mxu0
        %903 = vmatprep.mubr.f32.mxu0 %v332
        %904 = vmatmul.mubr.f32.gmra.mrb[0].mxu0 %v296
        %v905 = vpop.f32.mrb[0].mxu0
        %v906 = vadd.f32 %v668, %v905
        %v907 = vpop.f32.mrb[0].mxu0
        %908 = vmatprep.mubr.f32.mxu0 %v333
        %909 = vmatmul.mubr.f32.gmra.mrb[0].mxu0 %v297
        %v910 = vpop.f32.mrb[0].mxu0
        %v911 = vadd.f32 %v668, %v910
        %v912 = vpop.f32.mrb[0].mxu0
        %913 = vdwg.mxu0
        %914 = vmatprep.subr.mxu0 0.0
        %915 = vmatpush1.msra.mxu0 %v552
        %916 = vmatprep.subr.mxu0 0.0
        %917 = vmatpush1.msra.mxu0 %v553
        %918 = vmatprep.subr.mxu0 0.0
        %919 = vmatpush1.msra.mxu0 %v554
        %920 = vmatprep.subr.mxu0 0.0
        %921 = vmatpush1.msra.mxu0 %v555
        %922 = vmatprep.subr.mxu0 0.0
        %923 = vmatpush1.msra.mxu0 %v556
        %924 = vmatprep.subr.mxu0 0.0
        %925 = vmatpush1.msra.mxu0 %v557
        %926 = vmatprep.subr.mxu0 0.0
        %927 = vmatpush1.msra.mxu0 %v558
        %928 = vmatprep.subr.mxu0 0.0
        %929 = vmatpush1.msra.mxu0 %v559
        %930 = vmatprep.subr.mxu0 0.0
        %931 = vmatpush1.msra.mxu0 %v560
        %932 = vmatprep.subr.mxu0 0.0
        %933 = vmatpush1.msra.mxu0 %v561
        %934 = vmatprep.subr.mxu0 0.0
        %935 = vmatpush1.msra.mxu0 %v562
        %936 = vmatprep.subr.mxu0 0.0
        %937 = vmatpush1.msra.mxu0 %v563
        %938 = vmatprep.subr.mxu0 0.0
        %939 = vmatpush1.msra.mxu0 %v564
        %940 = vmatprep.subr.mxu0 0.0
        %941 = vmatpush1.msra.mxu0 %v565
        %942 = vmatprep.subr.mxu0 0.0
        %943 = vmatpush1.msra.mxu0 %v566
        %944 = vmatprep.subr.mxu0 0.0
        %945 = vmatpush1.msra.mxu0 %v567
        %946 = vmatprep.subr.mxu0 0.0
        %947 = vmatpush1.msra.mxu0 %v568
        %948 = vmatprep.subr.mxu0 0.0
        %949 = vmatpush1.msra.mxu0 %v569
        %950 = vmatprep.subr.mxu0 0.0
        %951 = vmatpush1.msra.mxu0 %v570
        %952 = vmatprep.subr.mxu0 0.0
        %953 = vmatpush1.msra.mxu0 %v571
        %954 = vmatprep.subr.mxu0 0.0
        %955 = vmatpush1.msra.mxu0 %v572
        %956 = vmatprep.subr.mxu0 0.0
        %957 = vmatpush1.msra.mxu0 %v573
        %958 = vmatprep.subr.mxu0 0.0
        %959 = vmatpush1.msra.mxu0 %v574
        %960 = vmatprep.subr.mxu0 0.0
        %961 = vmatpush1.msra.mxu0 %v575
        %962 = vmatprep.subr.mxu0 0.0
        %963 = vmatpush1.msra.mxu0 %v576
        %964 = vmatprep.subr.mxu0 0.0
        %965 = vmatpush1.msra.mxu0 %v577
        %966 = vmatprep.subr.mxu0 0.0
        %967 = vmatpush1.msra.mxu0 %v578
        %968 = vmatprep.subr.mxu0 0.0
        %969 = vmatpush1.msra.mxu0 %v579
        %970 = vmatprep.subr.mxu0 0.0
        %971 = vmatpush1.msra.mxu0 %v580
        %972 = vmatprep.subr.mxu0 0.0
        %973 = vmatpush1.msra.mxu0 %v581
        %974 = vmatprep.subr.mxu0 0.0
        %975 = vmatpush1.msra.mxu0 %v582
        %976 = vmatprep.subr.mxu0 0.0
        %977 = vmatpush1.msra.mxu0 %v583
        %978 = vmatprep.mubr.f32.mxu0 %v336
        %979 = vmatmul.mubr.f32.gmra.mrb[0].mxu0 %v334
        %v980 = vpop.f32.mrb[0].mxu0
        %v981 = vadd.f32 %v736, %v980
        %v982 = vpop.f32.mrb[0].mxu0
        %983 = vmatprep.mubr.f32.mxu0 %v337
        %984 = vmatmul.mubr.f32.gmra.mrb[0].mxu0 %v335
        %v985 = vpop.f32.mrb[0].mxu0
        %v986 = vadd.f32 %v741, %v985
        %v987 = vpop.f32.mrb[0].mxu0
        %988 = vmatprep.mubr.f32.mxu0 %v338
        %989 = vmatmul.mubr.f32.gmra.mrb[0].mxu0 %v336
        %v990 = vpop.f32.mrb[0].mxu0
        %v991 = vadd.f32 %v746, %v990
        %v992 = vpop.f32.mrb[0].mxu0
        %993 = vmatprep.mubr.f32.mxu0 %v339
        %994 = vmatmul.mubr.f32.gmra.mrb[0].mxu0 %v337
        %v995 = vpop.f32.mrb[0].mxu0
        %v996 = vadd.f32 %v751, %v995
        %v997 = vpop.f32.mrb[0].mxu0
        %998 = vmatprep.mubr.f32.mxu0 %v340
        %999 = vmatmul.mubr.f32.gmra.mrb[0].mxu0 %v338
        %v1000 = vpop.f32.mrb[0].mxu0
        %v1001 = vadd.f32 %v756, %v1000
        %v1002 = vpop.f32.mrb[0].mxu0
        %1003 = vmatprep.mubr.f32.mxu0 %v341
        %1004 = vmatmul.mubr.f32.gmra.mrb[0].mxu0 %v339
        %v1005 = vpop.f32.mrb[0].mxu0
        %v1006 = vadd.f32 %v761, %v1005
        %v1007 = vpop.f32.mrb[0].mxu0
        %1008 = vmatprep.mubr.f32.mxu0 %v342
        %1009 = vmatmul.mubr.f32.gmra.mrb[0].mxu0 %v340
        %v1010 = vpop.f32.mrb[0].mxu0
        %v1011 = vadd.f32 %v766, %v1010
        %v1012 = vpop.f32.mrb[0].mxu0
        %1013 = vmatprep.mubr.f32.mxu0 %v343
        %1014 = vmatmul.mubr.f32.gmra.mrb[0].mxu0 %v341
        %v1015 = vpop.f32.mrb[0].mxu0
        %v1016 = vadd.f32 %v771, %v1015
        %v1017 = vpop.f32.mrb[0].mxu0
        %1018 = vmatprep.mubr.f32.mxu0 %v344
        %1019 = vmatmul.mubr.f32.gmra.mrb[0].mxu0 %v342
        %v1020 = vpop.f32.mrb[0].mxu0
        %v1021 = vadd.f32 %v776, %v1020
        %v1022 = vpop.f32.mrb[0].mxu0
        %1023 = vmatprep.mubr.f32.mxu0 %v345
        %1024 = vmatmul.mubr.f32.gmra.mrb[0].mxu0 %v343
        %v1025 = vpop.f32.mrb[0].mxu0
        %v1026 = vadd.f32 %v781, %v1025
        %v1027 = vpop.f32.mrb[0].mxu0
        %1028 = vmatprep.mubr.f32.mxu0 %v346
        %1029 = vmatmul.mubr.f32.gmra.mrb[0].mxu0 %v344
        %v1030 = vpop.f32.mrb[0].mxu0
        %v1031 = vadd.f32 %v786, %v1030
        %v1032 = vpop.f32.mrb[0].mxu0
        %1033 = vmatprep.mubr.f32.mxu0 %v347
        %1034 = vmatmul.mubr.f32.gmra.mrb[0].mxu0 %v345
        %v1035 = vpop.f32.mrb[0].mxu0
        %v1036 = vadd.f32 %v791, %v1035
        %v1037 = vpop.f32.mrb[0].mxu0
        %1038 = vmatprep.mubr.f32.mxu0 %v348
        %1039 = vmatmul.mubr.f32.gmra.mrb[0].mxu0 %v346
        %v1040 = vpop.f32.mrb[0].mxu0
        %v1041 = vadd.f32 %v796, %v1040
        %v1042 = vpop.f32.mrb[0].mxu0
        %1043 = vmatprep.mubr.f32.mxu0 %v349
        %1044 = vmatmul.mubr.f32.gmra.mrb[0].mxu0 %v347
        %v1045 = vpop.f32.mrb[0].mxu0
        %v1046 = vadd.f32 %v801, %v1045
        %v1047 = vpop.f32.mrb[0].mxu0
        %1048 = vmatprep.mubr.f32.mxu0 %v350
        %1049 = vmatmul.mubr.f32.gmra.mrb[0].mxu0 %v348
        %v1050 = vpop.f32.mrb[0].mxu0
        %v1051 = vadd.f32 %v806, %v1050
        %v1052 = vpop.f32.mrb[0].mxu0
        %1053 = vmatprep.mubr.f32.mxu0 %v351
        %1054 = vmatmul.mubr.f32.gmra.mrb[0].mxu0 %v349
        %v1055 = vpop.f32.mrb[0].mxu0
        %v1056 = vadd.f32 %v811, %v1055
        %v1057 = vpop.f32.mrb[0].mxu0
        %1058 = vmatprep.mubr.f32.mxu0 %v352
        %1059 = vmatmul.mubr.f32.gmra.mrb[0].mxu0 %v350
        %v1060 = vpop.f32.mrb[0].mxu0
        %v1061 = vadd.f32 %v816, %v1060
        %v1062 = vpop.f32.mrb[0].mxu0
        %1063 = vmatprep.mubr.f32.mxu0 %v353
        %1064 = vmatmul.mubr.f32.gmra.mrb[0].mxu0 %v351
        %v1065 = vpop.f32.mrb[0].mxu0
        %v1066 = vadd.f32 %v821, %v1065
        %v1067 = vpop.f32.mrb[0].mxu0
        %1068 = vmatprep.mubr.f32.mxu0 %v354
        %1069 = vmatmul.mubr.f32.gmra.mrb[0].mxu0 %v352
        %v1070 = vpop.f32.mrb[0].mxu0
        %v1071 = vadd.f32 %v826, %v1070
        %v1072 = vpop.f32.mrb[0].mxu0
        %1073 = vmatprep.mubr.f32.mxu0 %v355
        %1074 = vmatmul.mubr.f32.gmra.mrb[0].mxu0 %v353
        %v1075 = vpop.f32.mrb[0].mxu0
        %v1076 = vadd.f32 %v831, %v1075
        %v1077 = vpop.f32.mrb[0].mxu0
        %1078 = vmatprep.mubr.f32.mxu0 %v356
        %1079 = vmatmul.mubr.f32.gmra.mrb[0].mxu0 %v354
        %v1080 = vpop.f32.mrb[0].mxu0
        %v1081 = vadd.f32 %v836, %v1080
        %v1082 = vpop.f32.mrb[0].mxu0
        %1083 = vmatprep.mubr.f32.mxu0 %v357
        %1084 = vmatmul.mubr.f32.gmra.mrb[0].mxu0 %v355
        %v1085 = vpop.f32.mrb[0].mxu0
        %v1086 = vadd.f32 %v841, %v1085
        %v1087 = vpop.f32.mrb[0].mxu0
        %1088 = vmatprep.mubr.f32.mxu0 %v358
        %1089 = vmatmul.mubr.f32.gmra.mrb[0].mxu0 %v356
        %v1090 = vpop.f32.mrb[0].mxu0
        %v1091 = vadd.f32 %v846, %v1090
        %v1092 = vpop.f32.mrb[0].mxu0
        %1093 = vmatprep.mubr.f32.mxu0 %v359
        %1094 = vmatmul.mubr.f32.gmra.mrb[0].mxu0 %v357
        %v1095 = vpop.f32.mrb[0].mxu0
        %v1096 = vadd.f32 %v851, %v1095
        %v1097 = vpop.f32.mrb[0].mxu0
        %1098 = vmatprep.mubr.f32.mxu0 %v360
        %1099 = vmatmul.mubr.f32.gmra.mrb[0].mxu0 %v358
        %v1100 = vpop.f32.mrb[0].mxu0
        %v1101 = vadd.f32 %v856, %v1100
        %v1102 = vpop.f32.mrb[0].mxu0
        %1103 = vmatprep.mubr.f32.mxu0 %v361
        %1104 = vmatmul.mubr.f32.gmra.mrb[0].mxu0 %v359
        %v1105 = vpop.f32.mrb[0].mxu0
        %v1106 = vadd.f32 %v861, %v1105
        %v1107 = vpop.f32.mrb[0].mxu0
        %1108 = vmatprep.mubr.f32.mxu0 %v362
        %1109 = vmatmul.mubr.f32.gmra.mrb[0].mxu0 %v360
        %v1110 = vpop.f32.mrb[0].mxu0
        %v1111 = vadd.f32 %v866, %v1110
        %v1112 = vpop.f32.mrb[0].mxu0
        %1113 = vmatprep.mubr.f32.mxu0 %v363
        %1114 = vmatmul.mubr.f32.gmra.mrb[0].mxu0 %v361
        %v1115 = vpop.f32.mrb[0].mxu0
        %v1116 = vadd.f32 %v871, %v1115
        %v1117 = vpop.f32.mrb[0].mxu0
        %1118 = vmatprep.mubr.f32.mxu0 %v364
        %1119 = vmatmul.mubr.f32.gmra.mrb[0].mxu0 %v362
        %v1120 = vpop.f32.mrb[0].mxu0
        %v1121 = vadd.f32 %v876, %v1120
        %v1122 = vpop.f32.mrb[0].mxu0
        %1123 = vmatprep.mubr.f32.mxu0 %v365
        %1124 = vmatmul.mubr.f32.gmra.mrb[0].mxu0 %v363
        %v1125 = vpop.f32.mrb[0].mxu0
        %v1126 = vadd.f32 %v881, %v1125
        %v1127 = vpop.f32.mrb[0].mxu0
        %1128 = vmatprep.mubr.f32.mxu0 %v366
        %1129 = vmatmul.mubr.f32.gmra.mrb[0].mxu0 %v364
        %v1130 = vpop.f32.mrb[0].mxu0
        %v1131 = vadd.f32 %v886, %v1130
        %v1132 = vpop.f32.mrb[0].mxu0
        %1133 = vmatprep.mubr.f32.mxu0 %v367
        %1134 = vmatmul.mubr.f32.gmra.mrb[0].mxu0 %v365
        %v1135 = vpop.f32.mrb[0].mxu0
        %v1136 = vadd.f32 %v891, %v1135
        %v1137 = vpop.f32.mrb[0].mxu0
        %1138 = vmatprep.mubr.f32.mxu0 %v368
        %1139 = vmatmul.mubr.f32.gmra.mrb[0].mxu0 %v366
        %v1140 = vpop.f32.mrb[0].mxu0
        %v1141 = vadd.f32 %v896, %v1140
        %v1142 = vpop.f32.mrb[0].mxu0
        %1143 = vmatprep.mubr.f32.mxu0 %v370
        %1144 = vmatmul.mubr.f32.gmra.mrb[0].mxu0 %v367
        %v1145 = vpop.f32.mrb[0].mxu0
        %v1146 = vadd.f32 %v901, %v1145
        %v1147 = vpop.f32.mrb[0].mxu0
        %1148 = vmatprep.mubr.f32.mxu0 %v371
        %1149 = vmatmul.mubr.f32.gmra.mrb[0].mxu0 %v368
        %v1150 = vpop.f32.mrb[0].mxu0
        %v1151 = vadd.f32 %v906, %v1150
        %v1152 = vpop.f32.mrb[0].mxu0
        %1153 = vmatprep.mubr.f32.mxu0 %v372
        %1154 = vmatmul.mubr.f32.gmra.mrb[0].mxu0 %v369
        %v1155 = vpop.f32.mrb[0].mxu0
        %v1156 = vadd.f32 %v911, %v1155
        %v1157 = vpop.f32.mrb[0].mxu0
        %1158 = vdwg.mxu0
        %1159 = vmatprep.subr.mxu0 0.0
        %1160 = vmatpush1.msra.mxu0 %v584
        %1161 = vmatprep.subr.mxu0 0.0
        %1162 = vmatpush1.msra.mxu0 %v585
        %1163 = vmatprep.subr.mxu0 0.0
        %1164 = vmatpush1.msra.mxu0 %v586
        %1165 = vmatprep.subr.mxu0 0.0
        %1166 = vmatpush1.msra.mxu0 %v587
        %1167 = vmatprep.subr.mxu0 0.0
        %1168 = vmatpush1.msra.mxu0 %v588
        %1169 = vmatprep.subr.mxu0 0.0
        %1170 = vmatpush1.msra.mxu0 %v589
        %1171 = vmatprep.subr.mxu0 0.0
        %1172 = vmatpush1.msra.mxu0 %v590
        %1173 = vmatprep.subr.mxu0 0.0
        %1174 = vmatpush1.msra.mxu0 %v591
        %1175 = vmatprep.subr.mxu0 0.0
        %1176 = vmatpush1.msra.mxu0 %v592
        %1177 = vmatprep.subr.mxu0 0.0
        %1178 = vmatpush1.msra.mxu0 %v593
        %1179 = vmatprep.subr.mxu0 0.0
        %1180 = vmatpush1.msra.mxu0 %v594
        %1181 = vmatprep.subr.mxu0 0.0
        %1182 = vmatpush1.msra.mxu0 %v595
        %1183 = vmatprep.subr.mxu0 0.0
        %1184 = vmatpush1.msra.mxu0 %v596
        %1185 = vmatprep.subr.mxu0 0.0
        %1186 = vmatpush1.msra.mxu0 %v597
        %1187 = vmatprep.subr.mxu0 0.0
        %1188 = vmatpush1.msra.mxu0 %v598
        %1189 = vmatprep.subr.mxu0 0.0
        %1190 = vmatpush1.msra.mxu0 %v599
        %1191 = vmatprep.subr.mxu0 0.0
        %1192 = vmatpush1.msra.mxu0 %v600
        %1193 = vmatprep.subr.mxu0 0.0
        %1194 = vmatpush1.msra.mxu0 %v601
        %1195 = vmatprep.subr.mxu0 0.0
        %1196 = vmatpush1.msra.mxu0 %v602
        %1197 = vmatprep.subr.mxu0 0.0
        %1198 = vmatpush1.msra.mxu0 %v603
        %1199 = vmatprep.subr.mxu0 0.0
        %1200 = vmatpush1.msra.mxu0 %v604
        %1201 = vmatprep.subr.mxu0 0.0
        %1202 = vmatpush1.msra.mxu0 %v605
        %1203 = vmatprep.subr.mxu0 0.0
        %1204 = vmatpush1.msra.mxu0 %v606
        %1205 = vmatprep.subr.mxu0 0.0
        %1206 = vmatpush1.msra.mxu0 %v607
        %1207 = vmatprep.subr.mxu0 0.0
        %1208 = vmatpush1.msra.mxu0 %v608
        %1209 = vmatprep.subr.mxu0 0.0
        %1210 = vmatpush1.msra.mxu0 %v609
        %1211 = vmatprep.subr.mxu0 0.0
        %1212 = vmatpush1.msra.mxu0 %v610
        %1213 = vmatprep.subr.mxu0 0.0
        %1214 = vmatpush1.msra.mxu0 %v611
        %1215 = vmatprep.subr.mxu0 0.0
        %1216 = vmatpush1.msra.mxu0 %v612
        %1217 = vmatprep.subr.mxu0 0.0
        %1218 = vmatpush1.msra.mxu0 %v613
        %1219 = vmatprep.subr.mxu0 0.0
        %1220 = vmatpush1.msra.mxu0 %v614
        %1221 = vmatprep.subr.mxu0 0.0
        %1222 = vmatpush1.msra.mxu0 %v615
        %1223 = vmatprep.mubr.f32.mxu0 %v409
        %1224 = vmatmul.mubr.f32.gmra.mrb[0].mxu0 %v373
        %v1225 = vpop.f32.mrb[0].mxu0
        %v1226 = vadd.f32 %v981, %v1225
        %v1227 = vpop.f32.mrb[0].mxu0
        %1228 = vmatprep.mubr.f32.mxu0 %v410
        %1229 = vmatmul.mubr.f32.gmra.mrb[0].mxu0 %v374
        %v1230 = vpop.f32.mrb[0].mxu0
        %v1231 = vadd.f32 %v986, %v1230
        %v1232 = vpop.f32.mrb[0].mxu0
        %1233 = vmatprep.mubr.f32.mxu0 %v411
        %1234 = vmatmul.mubr.f32.gmra.mrb[0].mxu0 %v375
        %v1235 = vpop.f32.mrb[0].mxu0
        %v1236 = vadd.f32 %v991, %v1235
        %v1237 = vpop.f32.mrb[0].mxu0
        %1238 = vmatprep.mubr.f32.mxu0 %v412
        %1239 = vmatmul.mubr.f32.gmra.mrb[0].mxu0 %v376
        %v1240 = vpop.f32.mrb[0].mxu0
        %v1241 = vadd.f32 %v996, %v1240
        %v1242 = vpop.f32.mrb[0].mxu0
        %1243 = vmatprep.mubr.f32.mxu0 %v413
        %1244 = vmatmul.mubr.f32.gmra.mrb[0].mxu0 %v377
        %v1245 = vpop.f32.mrb[0].mxu0
        %v1246 = vadd.f32 %v1001, %v1245
        %v1247 = vpop.f32.mrb[0].mxu0
        %1248 = vmatprep.mubr.f32.mxu0 %v414
        %1249 = vmatmul.mubr.f32.gmra.mrb[0].mxu0 %v378
        %v1250 = vpop.f32.mrb[0].mxu0
        %v1251 = vadd.f32 %v1006, %v1250
        %v1252 = vpop.f32.mrb[0].mxu0
        %1253 = vmatprep.mubr.f32.mxu0 %v415
        %1254 = vmatmul.mubr.f32.gmra.mrb[0].mxu0 %v379
        %v1255 = vpop.f32.mrb[0].mxu0
        %v1256 = vadd.f32 %v1011, %v1255
        %v1257 = vpop.f32.mrb[0].mxu0
        %1258 = vmatprep.mubr.f32.mxu0 %v416
        %1259 = vmatmul.mubr.f32.gmra.mrb[0].mxu0 %v380
        %v1260 = vpop.f32.mrb[0].mxu0
        %v1261 = vadd.f32 %v1016, %v1260
        %v1262 = vpop.f32.mrb[0].mxu0
        %1263 = vmatprep.mubr.f32.mxu0 %v417
        %1264 = vmatmul.mubr.f32.gmra.mrb[0].mxu0 %v381
        %v1265 = vpop.f32.mrb[0].mxu0
        %v1266 = vadd.f32 %v1021, %v1265
        %v1267 = vpop.f32.mrb[0].mxu0
        %1268 = vmatprep.mubr.f32.mxu0 %v418
        %1269 = vmatmul.mubr.f32.gmra.mrb[0].mxu0 %v382
        %v1270 = vpop.f32.mrb[0].mxu0
        %v1271 = vadd.f32 %v1026, %v1270
        %v1272 = vpop.f32.mrb[0].mxu0
        %1273 = vmatprep.mubr.f32.mxu0 %v419
        %1274 = vmatmul.mubr.f32.gmra.mrb[0].mxu0 %v383
        %v1275 = vpop.f32.mrb[0].mxu0
        %v1276 = vadd.f32 %v1031, %v1275
        %v1277 = vpop.f32.mrb[0].mxu0
        %1278 = vmatprep.mubr.f32.mxu0 %v420
        %1279 = vmatmul.mubr.f32.gmra.mrb[0].mxu0 %v384
        %v1280 = vpop.f32.mrb[0].mxu0
        %v1281 = vadd.f32 %v1036, %v1280
        %v1282 = vpop.f32.mrb[0].mxu0
        %1283 = vmatprep.mubr.f32.mxu0 %v421
        %1284 = vmatmul.mubr.f32.gmra.mrb[0].mxu0 %v385
        %v1285 = vpop.f32.mrb[0].mxu0
        %v1286 = vadd.f32 %v1041, %v1285
        %v1287 = vpop.f32.mrb[0].mxu0
        %1288 = vmatprep.mubr.f32.mxu0 %v422
        %1289 = vmatmul.mubr.f32.gmra.mrb[0].mxu0 %v386
        %v1290 = vpop.f32.mrb[0].mxu0
        %v1291 = vadd.f32 %v1046, %v1290
        %v1292 = vpop.f32.mrb[0].mxu0
        %1293 = vmatprep.mubr.f32.mxu0 %v423
        %1294 = vmatmul.mubr.f32.gmra.mrb[0].mxu0 %v387
        %v1295 = vpop.f32.mrb[0].mxu0
        %v1296 = vadd.f32 %v1051, %v1295
        %v1297 = vpop.f32.mrb[0].mxu0
        %1298 = vmatprep.mubr.f32.mxu0 %v424
        %1299 = vmatmul.mubr.f32.gmra.mrb[0].mxu0 %v388
        %v1300 = vpop.f32.mrb[0].mxu0
        %v1301 = vadd.f32 %v1056, %v1300
        %v1302 = vpop.f32.mrb[0].mxu0
        %1303 = vmatprep.mubr.f32.mxu0 %v425
        %1304 = vmatmul.mubr.f32.gmra.mrb[0].mxu0 %v389
        %v1305 = vpop.f32.mrb[0].mxu0
        %v1306 = vadd.f32 %v1061, %v1305
        %v1307 = vpop.f32.mrb[0].mxu0
        %1308 = vmatprep.mubr.f32.mxu0 %v426
        %1309 = vmatmul.mubr.f32.gmra.mrb[0].mxu0 %v390
        %v1310 = vpop.f32.mrb[0].mxu0
        %v1311 = vadd.f32 %v1066, %v1310
        %v1312 = vpop.f32.mrb[0].mxu0
        %1313 = vmatprep.mubr.f32.mxu0 %v427
        %1314 = vmatmul.mubr.f32.gmra.mrb[0].mxu0 %v391
        %v1315 = vpop.f32.mrb[0].mxu0
        %v1316 = vadd.f32 %v1071, %v1315
        %v1317 = vpop.f32.mrb[0].mxu0
        %1318 = vmatprep.mubr.f32.mxu0 %v428
        %1319 = vmatmul.mubr.f32.gmra.mrb[0].mxu0 %v392
        %v1320 = vpop.f32.mrb[0].mxu0
        %v1321 = vadd.f32 %v1076, %v1320
        %v1322 = vpop.f32.mrb[0].mxu0
        %1323 = vmatprep.mubr.f32.mxu0 %v429
        %1324 = vmatmul.mubr.f32.gmra.mrb[0].mxu0 %v393
        %v1325 = vpop.f32.mrb[0].mxu0
        %v1326 = vadd.f32 %v1081, %v1325
        %v1327 = vpop.f32.mrb[0].mxu0
        %1328 = vmatprep.mubr.f32.mxu0 %v430
        %1329 = vmatmul.mubr.f32.gmra.mrb[0].mxu0 %v394
        %v1330 = vpop.f32.mrb[0].mxu0
        %v1331 = vadd.f32 %v1086, %v1330
        %v1332 = vpop.f32.mrb[0].mxu0
        %1333 = vmatprep.mubr.f32.mxu0 %v431
        %1334 = vmatmul.mubr.f32.gmra.mrb[0].mxu0 %v395
        %v1335 = vpop.f32.mrb[0].mxu0
        %v1336 = vadd.f32 %v1091, %v1335
        %v1337 = vpop.f32.mrb[0].mxu0
        %1338 = vmatprep.mubr.f32.mxu0 %v432
        %1339 = vmatmul.mubr.f32.gmra.mrb[0].mxu0 %v396
        %v1340 = vpop.f32.mrb[0].mxu0
        %v1341 = vadd.f32 %v1096, %v1340
        %v1342 = vpop.f32.mrb[0].mxu0
        %1343 = vmatprep.mubr.f32.mxu0 %v433
        %1344 = vmatmul.mubr.f32.gmra.mrb[0].mxu0 %v397
        %v1345 = vpop.f32.mrb[0].mxu0
        %v1346 = vadd.f32 %v1101, %v1345
        %v1347 = vpop.f32.mrb[0].mxu0
        %1348 = vmatprep.mubr.f32.mxu0 %v434
        %1349 = vmatmul.mubr.f32.gmra.mrb[0].mxu0 %v398
        %v1350 = vpop.f32.mrb[0].mxu0
        %v1351 = vadd.f32 %v1106, %v1350
        %v1352 = vpop.f32.mrb[0].mxu0
        %1353 = vmatprep.mubr.f32.mxu0 %v435
        %1354 = vmatmul.mubr.f32.gmra.mrb[0].mxu0 %v399
        %v1355 = vpop.f32.mrb[0].mxu0
        %v1356 = vadd.f32 %v1111, %v1355
        %v1357 = vpop.f32.mrb[0].mxu0
        %1358 = vmatprep.mubr.f32.mxu0 %v436
        %1359 = vmatmul.mubr.f32.gmra.mrb[0].mxu0 %v400
        %v1360 = vpop.f32.mrb[0].mxu0
        %v1361 = vadd.f32 %v1116, %v1360
        %v1362 = vpop.f32.mrb[0].mxu0
        %1363 = vmatprep.mubr.f32.mxu0 %v437
        %1364 = vmatmul.mubr.f32.gmra.mrb[0].mxu0 %v401
        %v1365 = vpop.f32.mrb[0].mxu0
        %v1366 = vadd.f32 %v1121, %v1365
        %v1367 = vpop.f32.mrb[0].mxu0
        %1368 = vmatprep.mubr.f32.mxu0 %v438
        %1369 = vmatmul.mubr.f32.gmra.mrb[0].mxu0 %v402
        %v1370 = vpop.f32.mrb[0].mxu0
        %v1371 = vadd.f32 %v1126, %v1370
        %v1372 = vpop.f32.mrb[0].mxu0
        %1373 = vmatprep.mubr.f32.mxu0 %v439
        %1374 = vmatmul.mubr.f32.gmra.mrb[0].mxu0 %v403
        %v1375 = vpop.f32.mrb[0].mxu0
        %v1376 = vadd.f32 %v1131, %v1375
        %v1377 = vpop.f32.mrb[0].mxu0
        %1378 = vmatprep.mubr.f32.mxu0 %v440
        %1379 = vmatmul.mubr.f32.gmra.mrb[0].mxu0 %v404
        %v1380 = vpop.f32.mrb[0].mxu0
        %v1381 = vadd.f32 %v1136, %v1380
        %v1382 = vpop.f32.mrb[0].mxu0
        %1383 = vmatprep.mubr.f32.mxu0 %v441
        %1384 = vmatmul.mubr.f32.gmra.mrb[0].mxu0 %v405
        %v1385 = vpop.f32.mrb[0].mxu0
        %v1386 = vadd.f32 %v1141, %v1385
        %v1387 = vpop.f32.mrb[0].mxu0
        %1388 = vmatprep.mubr.f32.mxu0 %v442
        %1389 = vmatmul.mubr.f32.gmra.mrb[0].mxu0 %v406
        %v1390 = vpop.f32.mrb[0].mxu0
        %v1391 = vadd.f32 %v1146, %v1390
        %v1392 = vpop.f32.mrb[0].mxu0
        %1393 = vmatprep.mubr.f32.mxu0 %v443
        %1394 = vmatmul.mubr.f32.gmra.mrb[0].mxu0 %v407
        %v1395 = vpop.f32.mrb[0].mxu0
        %v1396 = vadd.f32 %v1151, %v1395
        %v1397 = vpop.f32.mrb[0].mxu0
        %1398 = vmatprep.mubr.f32.mxu0 %v444
        %1399 = vmatmul.mubr.f32.gmra.mrb[0].mxu0 %v408
        %v1400 = vpop.f32.mrb[0].mxu0
        %v1401 = vadd.f32 %v1156, %v1400
        %v1402 = vpop.f32.mrb[0].mxu0
        %1403 = vdwg.mxu0
        %1404 = vmatprep.subr.mxu0 0.0
        %1405 = vmatpush1.msra.mxu0 %v616
        %1406 = vmatprep.subr.mxu0 0.0
        %1407 = vmatpush1.msra.mxu0 %v617
        %1408 = vmatprep.subr.mxu0 0.0
        %1409 = vmatpush1.msra.mxu0 %v618
        %1410 = vmatprep.subr.mxu0 0.0
        %1411 = vmatpush1.msra.mxu0 %v619
        %1412 = vmatprep.subr.mxu0 0.0
        %1413 = vmatpush1.msra.mxu0 %v620
        %1414 = vmatprep.subr.mxu0 0.0
        %1415 = vmatpush1.msra.mxu0 %v621
        %1416 = vmatprep.subr.mxu0 0.0
        %1417 = vmatpush1.msra.mxu0 %v622
        %1418 = vmatprep.subr.mxu0 0.0
        %1419 = vmatpush1.msra.mxu0 %v623
        %1420 = vmatprep.subr.mxu0 0.0
        %1421 = vmatpush1.msra.mxu0 %v624
        %1422 = vmatprep.subr.mxu0 0.0
        %1423 = vmatpush1.msra.mxu0 %v625
        %1424 = vmatprep.subr.mxu0 0.0
        %1425 = vmatpush1.msra.mxu0 %v626
        %1426 = vmatprep.subr.mxu0 0.0
        %1427 = vmatpush1.msra.mxu0 %v627
        %1428 = vmatprep.subr.mxu0 0.0
        %1429 = vmatpush1.msra.mxu0 %v628
        %1430 = vmatprep.subr.mxu0 0.0
        %1431 = vmatpush1.msra.mxu0 %v629
        %1432 = vmatprep.subr.mxu0 0.0
        %1433 = vmatpush1.msra.mxu0 %v630
        %1434 = vmatprep.subr.mxu0 0.0
        %1435 = vmatpush1.msra.mxu0 %v631
        %1436 = vmatprep.subr.mxu0 0.0
        %1437 = vmatpush1.msra.mxu0 %v632
        %1438 = vmatprep.subr.mxu0 0.0
        %1439 = vmatpush1.msra.mxu0 %v633
        %1440 = vmatprep.subr.mxu0 0.0
        %1441 = vmatpush1.msra.mxu0 %v634
        %1442 = vmatprep.subr.mxu0 0.0
        %1443 = vmatpush1.msra.mxu0 %v635
        %1444 = vmatprep.subr.mxu0 0.0
        %1445 = vmatpush1.msra.mxu0 %v636
        %1446 = vmatprep.subr.mxu0 0.0
        %1447 = vmatpush1.msra.mxu0 %v637
        %1448 = vmatprep.subr.mxu0 0.0
        %1449 = vmatpush1.msra.mxu0 %v638
        %1450 = vmatprep.subr.mxu0 0.0
        %1451 = vmatpush1.msra.mxu0 %v639
        %1452 = vmatprep.subr.mxu0 0.0
        %1453 = vmatpush1.msra.mxu0 %v640
        %1454 = vmatprep.subr.mxu0 0.0
        %1455 = vmatpush1.msra.mxu0 %v641
        %1456 = vmatprep.subr.mxu0 0.0
        %1457 = vmatpush1.msra.mxu0 %v642
        %1458 = vmatprep.subr.mxu0 0.0
        %1459 = vmatpush1.msra.mxu0 %v643
        %1460 = vmatprep.subr.mxu0 0.0
        %1461 = vmatpush1.msra.mxu0 %v644
        %1462 = vmatprep.subr.mxu0 0.0
        %1463 = vmatpush1.msra.mxu0 %v645
        %1464 = vmatprep.subr.mxu0 0.0
        %1465 = vmatpush1.msra.mxu0 %v646
        %1466 = vmatprep.subr.mxu0 0.0
        %1467 = vmatpush1.msra.mxu0 %v647
        %1468 = vmatprep.mubr.f32.mxu0 %v448
        %1469 = vmatmul.mubr.f32.gmra.mrb[0].mxu0 %v411
        %v1470 = vpop.f32.mrb[0].mxu0
        %v1471 = vadd.f32 %v1226, %v1470
        %v1472 = vpop.f32.mrb[0].mxu0
        %1473 = vmatprep.mubr.f32.mxu0 %v449
        %1474 = vmatmul.mubr.f32.gmra.mrb[0].mxu0 %v412
        %v1475 = vpop.f32.mrb[0].mxu0
        %v1476 = vadd.f32 %v1231, %v1475
        %v1477 = vpop.f32.mrb[0].mxu0
        %1478 = vmatprep.mubr.f32.mxu0 %v450
        %1479 = vmatmul.mubr.f32.gmra.mrb[0].mxu0 %v413
        %v1480 = vpop.f32.mrb[0].mxu0
        %v1481 = vadd.f32 %v1236, %v1480
        %v1482 = vpop.f32.mrb[0].mxu0
        %1483 = vmatprep.mubr.f32.mxu0 %v451
        %1484 = vmatmul.mubr.f32.gmra.mrb[0].mxu0 %v414
        %v1485 = vpop.f32.mrb[0].mxu0
        %v1486 = vadd.f32 %v1241, %v1485
        %v1487 = vpop.f32.mrb[0].mxu0
        %1488 = vmatprep.mubr.f32.mxu0 %v452
        %1489 = vmatmul.mubr.f32.gmra.mrb[0].mxu0 %v415
        %v1490 = vpop.f32.mrb[0].mxu0
        %v1491 = vadd.f32 %v1246, %v1490
        %v1492 = vpop.f32.mrb[0].mxu0
        %1493 = vmatprep.mubr.f32.mxu0 %v453
        %1494 = vmatmul.mubr.f32.gmra.mrb[0].mxu0 %v416
        %v1495 = vpop.f32.mrb[0].mxu0
        %v1496 = vadd.f32 %v1251, %v1495
        %v1497 = vpop.f32.mrb[0].mxu0
        %1498 = vmatprep.mubr.f32.mxu0 %v454
        %1499 = vmatmul.mubr.f32.gmra.mrb[0].mxu0 %v417
        %v1500 = vpop.f32.mrb[0].mxu0
        %v1501 = vadd.f32 %v1256, %v1500
        %v1502 = vpop.f32.mrb[0].mxu0
        %1503 = vmatprep.mubr.f32.mxu0 %v455
        %1504 = vmatmul.mubr.f32.gmra.mrb[0].mxu0 %v418
        %v1505 = vpop.f32.mrb[0].mxu0
        %v1506 = vadd.f32 %v1261, %v1505
        %v1507 = vpop.f32.mrb[0].mxu0
        %1508 = vmatprep.mubr.f32.mxu0 %v456
        %1509 = vmatmul.mubr.f32.gmra.mrb[0].mxu0 %v419
        %v1510 = vpop.f32.mrb[0].mxu0
        %v1511 = vadd.f32 %v1266, %v1510
        %v1512 = vpop.f32.mrb[0].mxu0
        %1513 = vmatprep.mubr.f32.mxu0 %v457
        %1514 = vmatmul.mubr.f32.gmra.mrb[0].mxu0 %v420
        %v1515 = vpop.f32.mrb[0].mxu0
        %v1516 = vadd.f32 %v1271, %v1515
        %v1517 = vpop.f32.mrb[0].mxu0
        %1518 = vmatprep.mubr.f32.mxu0 %v458
        %1519 = vmatmul.mubr.f32.gmra.mrb[0].mxu0 %v421
        %v1520 = vpop.f32.mrb[0].mxu0
        %v1521 = vadd.f32 %v1276, %v1520
        %v1522 = vpop.f32.mrb[0].mxu0
        %1523 = vmatprep.mubr.f32.mxu0 %v459
        %1524 = vmatmul.mubr.f32.gmra.mrb[0].mxu0 %v422
        %v1525 = vpop.f32.mrb[0].mxu0
        %v1526 = vadd.f32 %v1281, %v1525
        %v1527 = vpop.f32.mrb[0].mxu0
        %1528 = vmatprep.mubr.f32.mxu0 %v460
        %1529 = vmatmul.mubr.f32.gmra.mrb[0].mxu0 %v423
        %v1530 = vpop.f32.mrb[0].mxu0
        %v1531 = vadd.f32 %v1286, %v1530
        %v1532 = vpop.f32.mrb[0].mxu0
        %1533 = vmatprep.mubr.f32.mxu0 %v461
        %1534 = vmatmul.mubr.f32.gmra.mrb[0].mxu0 %v424
        %v1535 = vpop.f32.mrb[0].mxu0
        %v1536 = vadd.f32 %v1291, %v1535
        %v1537 = vpop.f32.mrb[0].mxu0
        %1538 = vmatprep.mubr.f32.mxu0 %v462
        %1539 = vmatmul.mubr.f32.gmra.mrb[0].mxu0 %v425
        %v1540 = vpop.f32.mrb[0].mxu0
        %v1541 = vadd.f32 %v1296, %v1540
        %v1542 = vpop.f32.mrb[0].mxu0
        %1543 = vmatprep.mubr.f32.mxu0 %v463
        %1544 = vmatmul.mubr.f32.gmra.mrb[0].mxu0 %v426
        %v1545 = vpop.f32.mrb[0].mxu0
        %v1546 = vadd.f32 %v1301, %v1545
        %v1547 = vpop.f32.mrb[0].mxu0
        %1548 = vmatprep.mubr.f32.mxu0 %v464
        %1549 = vmatmul.mubr.f32.gmra.mrb[0].mxu0 %v427
        %v1550 = vpop.f32.mrb[0].mxu0
        %v1551 = vadd.f32 %v1306, %v1550
        %v1552 = vpop.f32.mrb[0].mxu0
        %1553 = vmatprep.mubr.f32.mxu0 %v465
        %1554 = vmatmul.mubr.f32.gmra.mrb[0].mxu0 %v428
        %v1555 = vpop.f32.mrb[0].mxu0
        %v1556 = vadd.f32 %v1311, %v1555
        %v1557 = vpop.f32.mrb[0].mxu0
        %1558 = vmatprep.mubr.f32.mxu0 %v466
        %1559 = vmatmul.mubr.f32.gmra.mrb[0].mxu0 %v429
        %v1560 = vpop.f32.mrb[0].mxu0
        %v1561 = vadd.f32 %v1316, %v1560
        %v1562 = vpop.f32.mrb[0].mxu0
        %1563 = vmatprep.mubr.f32.mxu0 %v467
        %1564 = vmatmul.mubr.f32.gmra.mrb[0].mxu0 %v430
        %v1565 = vpop.f32.mrb[0].mxu0
        %v1566 = vadd.f32 %v1321, %v1565
        %v1567 = vpop.f32.mrb[0].mxu0
        %1568 = vmatprep.mubr.f32.mxu0 %v468
        %1569 = vmatmul.mubr.f32.gmra.mrb[0].mxu0 %v431
        %v1570 = vpop.f32.mrb[0].mxu0
        %v1571 = vadd.f32 %v1326, %v1570
        %v1572 = vpop.f32.mrb[0].mxu0
        %1573 = vmatprep.mubr.f32.mxu0 %v469
        %1574 = vmatmul.mubr.f32.gmra.mrb[0].mxu0 %v432
        %v1575 = vpop.f32.mrb[0].mxu0
        %v1576 = vadd.f32 %v1331, %v1575
        %v1577 = vpop.f32.mrb[0].mxu0
        %1578 = vmatprep.mubr.f32.mxu0 %v470
        %1579 = vmatmul.mubr.f32.gmra.mrb[0].mxu0 %v433
        %v1580 = vpop.f32.mrb[0].mxu0
        %v1581 = vadd.f32 %v1336, %v1580
        %v1582 = vpop.f32.mrb[0].mxu0
        %1583 = vmatprep.mubr.f32.mxu0 %v471
        %1584 = vmatmul.mubr.f32.gmra.mrb[0].mxu0 %v434
        %v1585 = vpop.f32.mrb[0].mxu0
        %v1586 = vadd.f32 %v1341, %v1585
        %v1587 = vpop.f32.mrb[0].mxu0
        %1588 = vmatprep.mubr.f32.mxu0 %v472
        %1589 = vmatmul.mubr.f32.gmra.mrb[0].mxu0 %v435
        %v1590 = vpop.f32.mrb[0].mxu0
        %v1591 = vadd.f32 %v1346, %v1590
        %v1592 = vpop.f32.mrb[0].mxu0
        %1593 = vmatprep.mubr.f32.mxu0 %v473
        %1594 = vmatmul.mubr.f32.gmra.mrb[0].mxu0 %v436
        %v1595 = vpop.f32.mrb[0].mxu0
        %v1596 = vadd.f32 %v1351, %v1595
        %v1597 = vpop.f32.mrb[0].mxu0
        %1598 = vmatprep.mubr.f32.mxu0 %v474
        %1599 = vmatmul.mubr.f32.gmra.mrb[0].mxu0 %v437
        %v1600 = vpop.f32.mrb[0].mxu0
        %v1601 = vadd.f32 %v1356, %v1600
        %v1602 = vpop.f32.mrb[0].mxu0
        %1603 = vmatprep.mubr.f32.mxu0 %v475
        %1604 = vmatmul.mubr.f32.gmra.mrb[0].mxu0 %v438
        %v1605 = vpop.f32.mrb[0].mxu0
        %v1606 = vadd.f32 %v1361, %v1605
        %v1607 = vpop.f32.mrb[0].mxu0
        %1608 = vmatprep.mubr.f32.mxu0 %v476
        %1609 = vmatmul.mubr.f32.gmra.mrb[0].mxu0 %v439
        %v1610 = vpop.f32.mrb[0].mxu0
        %v1611 = vadd.f32 %v1366, %v1610
        %v1612 = vpop.f32.mrb[0].mxu0
        %1613 = vmatprep.mubr.f32.mxu0 %v477
        %1614 = vmatmul.mubr.f32.gmra.mrb[0].mxu0 %v440
        %v1615 = vpop.f32.mrb[0].mxu0
        %v1616 = vadd.f32 %v1371, %v1615
        %v1617 = vpop.f32.mrb[0].mxu0
        %1618 = vmatprep.mubr.f32.mxu0 %v478
        %1619 = vmatmul.mubr.f32.gmra.mrb[0].mxu0 %v441
        %v1620 = vpop.f32.mrb[0].mxu0
        %v1621 = vadd.f32 %v1376, %v1620
        %v1622 = vpop.f32.mrb[0].mxu0
        %1623 = vmatprep.mubr.f32.mxu0 %v479
        %1624 = vmatmul.mubr.f32.gmra.mrb[0].mxu0 %v442
        %v1625 = vpop.f32.mrb[0].mxu0
        %v1626 = vadd.f32 %v1381, %v1625
        %v1627 = vpop.f32.mrb[0].mxu0
        %1628 = vmatprep.mubr.f32.mxu0 %v480
        %1629 = vmatmul.mubr.f32.gmra.mrb[0].mxu0 %v443
        %v1630 = vpop.f32.mrb[0].mxu0
        %v1631 = vadd.f32 %v1386, %v1630
        %v1632 = vpop.f32.mrb[0].mxu0
        %1633 = vmatprep.mubr.f32.mxu0 %v481
        %1634 = vmatmul.mubr.f32.gmra.mrb[0].mxu0 %v445
        %v1635 = vpop.f32.mrb[0].mxu0
        %v1636 = vadd.f32 %v1391, %v1635
        %v1637 = vpop.f32.mrb[0].mxu0
        %1638 = vmatprep.mubr.f32.mxu0 %v482
        %1639 = vmatmul.mubr.f32.gmra.mrb[0].mxu0 %v446
        %v1640 = vpop.f32.mrb[0].mxu0
        %v1641 = vadd.f32 %v1396, %v1640
        %v1642 = vpop.f32.mrb[0].mxu0
        %1643 = vmatprep.mubr.f32.mxu0 %v483
        %1644 = vmatmul.mubr.f32.gmra.mrb[0].mxu0 %v447
        %v1645 = vpop.f32.mrb[0].mxu0
        %v1646 = vadd.f32 %v1401, %v1645
        %v1647 = vpop.f32.mrb[0].mxu0
        %1648 = vdwg.mxu0
        %1649 = vmatprep.subr.mxu0 0.0
        %1650 = vmatpush1.msra.mxu0 %v648
        %1651 = vmatprep.subr.mxu0 0.0
        %1652 = vmatpush1.msra.mxu0 %v649
        %1653 = vmatprep.subr.mxu0 0.0
        %1654 = vmatpush1.msra.mxu0 %v650
        %1655 = vmatprep.subr.mxu0 0.0
        %1656 = vmatpush1.msra.mxu0 %v651
        %1657 = vmatprep.subr.mxu0 0.0
        %1658 = vmatpush1.msra.mxu0 %v652
        %1659 = vmatprep.subr.mxu0 0.0
        %1660 = vmatpush1.msra.mxu0 %v653
        %1661 = vmatprep.subr.mxu0 0.0
        %1662 = vmatpush1.msra.mxu0 %v654
        %1663 = vmatprep.subr.mxu0 0.0
        %1664 = vmatpush1.msra.mxu0 %v655
        %1665 = vmatprep.subr.mxu0 0.0
        %1666 = vmatpush1.msra.mxu0 %v656
        %1667 = vmatprep.subr.mxu0 0.0
        %1668 = vmatpush1.msra.mxu0 %v657
        %1669 = vmatprep.subr.mxu0 0.0
        %1670 = vmatpush1.msra.mxu0 %v658
        %1671 = vmatprep.subr.mxu0 0.0
        %1672 = vmatpush1.msra.mxu0 %v659
        %1673 = vmatprep.subr.mxu0 0.0
        %1674 = vmatpush1.msra.mxu0 %v660
        %1675 = vmatprep.subr.mxu0 0.0
        %1676 = vmatpush1.msra.mxu0 %v661
        %1677 = vmatprep.subr.mxu0 0.0
        %1678 = vmatpush1.msra.mxu0 %v662
        %1679 = vmatprep.subr.mxu0 0.0
        %1680 = vmatpush1.msra.mxu0 %v663
        %1681 = vmatprep.subr.mxu0 0.0
        %1682 = vmatpush1.msra.mxu0 0.0
        %1683 = vmatprep.subr.mxu0 0.0
        %1684 = vmatpush1.msra.mxu0 0.0
        %1685 = vmatprep.subr.mxu0 0.0
        %1686 = vmatpush1.msra.mxu0 0.0
        %1687 = vmatprep.subr.mxu0 0.0
        %1688 = vmatpush1.msra.mxu0 0.0
        %1689 = vmatprep.subr.mxu0 0.0
        %1690 = vmatpush1.msra.mxu0 0.0
        %1691 = vmatprep.subr.mxu0 0.0
        %1692 = vmatpush1.msra.mxu0 0.0
        %1693 = vmatprep.subr.mxu0 0.0
        %1694 = vmatpush1.msra.mxu0 0.0
        %1695 = vmatprep.subr.mxu0 0.0
        %1696 = vmatpush1.msra.mxu0 0.0
        %1697 = vmatprep.subr.mxu0 0.0
        %1698 = vmatpush1.msra.mxu0 0.0
        %1699 = vmatprep.subr.mxu0 0.0
        %1700 = vmatpush1.msra.mxu0 0.0
        %1701 = vmatprep.subr.mxu0 0.0
        %1702 = vmatpush1.msra.mxu0 0.0
        %1703 = vmatprep.subr.mxu0 0.0
        %1704 = vmatpush1.msra.mxu0 0.0
        %1705 = vmatprep.subr.mxu0 0.0
        %1706 = vmatpush1.msra.mxu0 0.0
        %1707 = vmatprep.subr.mxu0 0.0
        %1708 = vmatpush1.msra.mxu0 0.0
        %1709 = vmatprep.subr.mxu0 0.0
        %1710 = vmatpush1.msra.mxu0 0.0
        %1711 = vmatprep.subr.mxu0 0.0
        %1712 = vmatpush1.msra.mxu0 0.0
        %1713 = vmatprep.mubr.f32.mxu0 0.0
        %1714 = vmatmul.mubr.f32.gmra.mrb[0].mxu0 %v484
        %v1715 = vpop.f32.mrb[0].mxu0
        %v1716 = vadd.f32 %v1471, %v1715
        %v1717 = vpop.f32.mrb[0].mxu0
        %1718 = vmatprep.mubr.f32.mxu0 0.0
        %1719 = vmatmul.mubr.f32.gmra.mrb[0].mxu0 %v485
        %v1720 = vpop.f32.mrb[0].mxu0
        %v1721 = vadd.f32 %v1476, %v1720
        %v1722 = vpop.f32.mrb[0].mxu0
        %1723 = vmatprep.mubr.f32.mxu0 0.0
        %1724 = vmatmul.mubr.f32.gmra.mrb[0].mxu0 %v486
        %v1725 = vpop.f32.mrb[0].mxu0
        %v1726 = vadd.f32 %v1481, %v1725
        %v1727 = vpop.f32.mrb[0].mxu0
        %1728 = vmatprep.mubr.f32.mxu0 0.0
        %1729 = vmatmul.mubr.f32.gmra.mrb[0].mxu0 %v487
        %v1730 = vpop.f32.mrb[0].mxu0
        %v1731 = vadd.f32 %v1486, %v1730
        %v1732 = vpop.f32.mrb[0].mxu0
        %1733 = vmatprep.mubr.f32.mxu0 0.0
        %1734 = vmatmul.mubr.f32.gmra.mrb[0].mxu0 %v488
        %v1735 = vpop.f32.mrb[0].mxu0
        %v1736 = vadd.f32 %v1491, %v1735
        %v1737 = vpop.f32.mrb[0].mxu0
        %1738 = vmatprep.mubr.f32.mxu0 0.0
        %1739 = vmatmul.mubr.f32.gmra.mrb[0].mxu0 %v489
        %v1740 = vpop.f32.mrb[0].mxu0
        %v1741 = vadd.f32 %v1496, %v1740
        %v1742 = vpop.f32.mrb[0].mxu0
        %1743 = vmatprep.mubr.f32.mxu0 0.0
        %1744 = vmatmul.mubr.f32.gmra.mrb[0].mxu0 %v490
        %v1745 = vpop.f32.mrb[0].mxu0
        %v1746 = vadd.f32 %v1501, %v1745
        %v1747 = vpop.f32.mrb[0].mxu0
        %1748 = vmatprep.mubr.f32.mxu0 0.0
        %1749 = vmatmul.mubr.f32.gmra.mrb[0].mxu0 %v491
        %v1750 = vpop.f32.mrb[0].mxu0
        %v1751 = vadd.f32 %v1506, %v1750
        %v1752 = vpop.f32.mrb[0].mxu0
        %1753 = vmatprep.mubr.f32.mxu0 0.0
        %1754 = vmatmul.mubr.f32.gmra.mrb[0].mxu0 %v492
        %v1755 = vpop.f32.mrb[0].mxu0
        %v1756 = vadd.f32 %v1511, %v1755
        %v1757 = vpop.f32.mrb[0].mxu0
        %1758 = vmatprep.mubr.f32.mxu0 0.0
        %1759 = vmatmul.mubr.f32.gmra.mrb[0].mxu0 %v493
        %v1760 = vpop.f32.mrb[0].mxu0
        %v1761 = vadd.f32 %v1516, %v1760
        %v1762 = vpop.f32.mrb[0].mxu0
        %1763 = vmatprep.mubr.f32.mxu0 0.0
        %1764 = vmatmul.mubr.f32.gmra.mrb[0].mxu0 %v494
        %v1765 = vpop.f32.mrb[0].mxu0
        %v1766 = vadd.f32 %v1521, %v1765
        %v1767 = vpop.f32.mrb[0].mxu0
        %1768 = vmatprep.mubr.f32.mxu0 0.0
        %1769 = vmatmul.mubr.f32.gmra.mrb[0].mxu0 %v495
        %v1770 = vpop.f32.mrb[0].mxu0
        %v1771 = vadd.f32 %v1526, %v1770
        %v1772 = vpop.f32.mrb[0].mxu0
        %1773 = vmatprep.mubr.f32.mxu0 0.0
        %1774 = vmatmul.mubr.f32.gmra.mrb[0].mxu0 %v496
        %v1775 = vpop.f32.mrb[0].mxu0
        %v1776 = vadd.f32 %v1531, %v1775
        %v1777 = vpop.f32.mrb[0].mxu0
        %1778 = vmatprep.mubr.f32.mxu0 0.0
        %1779 = vmatmul.mubr.f32.gmra.mrb[0].mxu0 %v497
        %v1780 = vpop.f32.mrb[0].mxu0
        %v1781 = vadd.f32 %v1536, %v1780
        %v1782 = vpop.f32.mrb[0].mxu0
        %1783 = vmatprep.mubr.f32.mxu0 0.0
        %1784 = vmatmul.mubr.f32.gmra.mrb[0].mxu0 %v498
        %v1785 = vpop.f32.mrb[0].mxu0
        %v1786 = vadd.f32 %v1541, %v1785
        %v1787 = vpop.f32.mrb[0].mxu0
        %1788 = vmatprep.mubr.f32.mxu0 0.0
        %1789 = vmatmul.mubr.f32.gmra.mrb[0].mxu0 %v499
        %v1790 = vpop.f32.mrb[0].mxu0
        %v1791 = vadd.f32 %v1546, %v1790
        %v1792 = vpop.f32.mrb[0].mxu0
        %1793 = vmatprep.mubr.f32.mxu0 0.0
        %1794 = vmatmul.mubr.f32.gmra.mrb[0].mxu0 %v500
        %v1795 = vpop.f32.mrb[0].mxu0
        %v1796 = vadd.f32 %v1551, %v1795
        %v1797 = vpop.f32.mrb[0].mxu0
        %1798 = vmatprep.mubr.f32.mxu0 0.0
        %1799 = vmatmul.mubr.f32.gmra.mrb[0].mxu0 %v501
        %v1800 = vpop.f32.mrb[0].mxu0
        %v1801 = vadd.f32 %v1556, %v1800
        %v1802 = vpop.f32.mrb[0].mxu0
        %1803 = vmatprep.mubr.f32.mxu0 0.0
        %1804 = vmatmul.mubr.f32.gmra.mrb[0].mxu0 %v502
        %v1805 = vpop.f32.mrb[0].mxu0
        %v1806 = vadd.f32 %v1561, %v1805
        %v1807 = vpop.f32.mrb[0].mxu0
        %1808 = vmatprep.mubr.f32.mxu0 0.0
        %1809 = vmatmul.mubr.f32.gmra.mrb[0].mxu0 %v503
        %v1810 = vpop.f32.mrb[0].mxu0
        %v1811 = vadd.f32 %v1566, %v1810
        %v1812 = vpop.f32.mrb[0].mxu0
        %1813 = vmatprep.mubr.f32.mxu0 0.0
        %1814 = vmatmul.mubr.f32.gmra.mrb[0].mxu0 %v504
        %v1815 = vpop.f32.mrb[0].mxu0
        %v1816 = vadd.f32 %v1571, %v1815
        %v1817 = vpop.f32.mrb[0].mxu0
        %1818 = vmatprep.mubr.f32.mxu0 0.0
        %1819 = vmatmul.mubr.f32.gmra.mrb[0].mxu0 %v505
        %v1820 = vpop.f32.mrb[0].mxu0
        %v1821 = vadd.f32 %v1576, %v1820
        %v1822 = vpop.f32.mrb[0].mxu0
        %1823 = vmatprep.mubr.f32.mxu0 0.0
        %1824 = vmatmul.mubr.f32.gmra.mrb[0].mxu0 %v506
        %v1825 = vpop.f32.mrb[0].mxu0
        %v1826 = vadd.f32 %v1581, %v1825
        %v1827 = vpop.f32.mrb[0].mxu0
        %1828 = vmatprep.mubr.f32.mxu0 0.0
        %1829 = vmatmul.mubr.f32.gmra.mrb[0].mxu0 %v507
        %v1830 = vpop.f32.mrb[0].mxu0
        %v1831 = vadd.f32 %v1586, %v1830
        %v1832 = vpop.f32.mrb[0].mxu0
        %1833 = vmatprep.mubr.f32.mxu0 0.0
        %1834 = vmatmul.mubr.f32.gmra.mrb[0].mxu0 %v508
        %v1835 = vpop.f32.mrb[0].mxu0
        %v1836 = vadd.f32 %v1591, %v1835
        %v1837 = vpop.f32.mrb[0].mxu0
        %1838 = vmatprep.mubr.f32.mxu0 0.0
        %1839 = vmatmul.mubr.f32.gmra.mrb[0].mxu0 %v509
        %v1840 = vpop.f32.mrb[0].mxu0
        %v1841 = vadd.f32 %v1596, %v1840
        %v1842 = vpop.f32.mrb[0].mxu0
        %1843 = vmatprep.mubr.f32.mxu0 0.0
        %1844 = vmatmul.mubr.f32.gmra.mrb[0].mxu0 %v510
        %v1845 = vpop.f32.mrb[0].mxu0
        %v1846 = vadd.f32 %v1601, %v1845
        %v1847 = vpop.f32.mrb[0].mxu0
        %1848 = vmatprep.mubr.f32.mxu0 0.0
        %1849 = vmatmul.mubr.f32.gmra.mrb[0].mxu0 %v511
        %v1850 = vpop.f32.mrb[0].mxu0
        %v1851 = vadd.f32 %v1606, %v1850
        %v1852 = vpop.f32.mrb[0].mxu0
        %1853 = vmatprep.mubr.f32.mxu0 0.0
        %1854 = vmatmul.mubr.f32.gmra.mrb[0].mxu0 %v512
        %v1855 = vpop.f32.mrb[0].mxu0
        %v1856 = vadd.f32 %v1611, %v1855
        %v1857 = vpop.f32.mrb[0].mxu0
        %1858 = vmatprep.mubr.f32.mxu0 0.0
        %1859 = vmatmul.mubr.f32.gmra.mrb[0].mxu0 %v513
        %v1860 = vpop.f32.mrb[0].mxu0
        %v1861 = vadd.f32 %v1616, %v1860
        %v1862 = vpop.f32.mrb[0].mxu0
        %1863 = vmatprep.mubr.f32.mxu0 0.0
        %1864 = vmatmul.mubr.f32.gmra.mrb[0].mxu0 %v514
        %v1865 = vpop.f32.mrb[0].mxu0
        %v1866 = vadd.f32 %v1621, %v1865
        %v1867 = vpop.f32.mrb[0].mxu0
        %1868 = vmatprep.mubr.f32.mxu0 0.0
        %1869 = vmatmul.mubr.f32.gmra.mrb[0].mxu0 %v515
        %v1870 = vpop.f32.mrb[0].mxu0
        %v1871 = vadd.f32 %v1626, %v1870
        %v1872 = vpop.f32.mrb[0].mxu0
        %1873 = vmatprep.mubr.f32.mxu0 0.0
        %1874 = vmatmul.mubr.f32.gmra.mrb[0].mxu0 %v516
        %v1875 = vpop.f32.mrb[0].mxu0
        %v1876 = vadd.f32 %v1631, %v1875
        %v1877 = vpop.f32.mrb[0].mxu0
        %1878 = vmatprep.mubr.f32.mxu0 0.0
        %1879 = vmatmul.mubr.f32.gmra.mrb[0].mxu0 %v517
        %v1880 = vpop.f32.mrb[0].mxu0
        %v1881 = vadd.f32 %v1636, %v1880
        %v1882 = vpop.f32.mrb[0].mxu0
        %1883 = vmatprep.mubr.f32.mxu0 0.0
        %1884 = vmatmul.mubr.f32.gmra.mrb[0].mxu0 %v518
        %v1885 = vpop.f32.mrb[0].mxu0
        %v1886 = vadd.f32 %v1641, %v1885
        %v1887 = vpop.f32.mrb[0].mxu0
        %1888 = vmatprep.mubr.f32.mxu0 0.0
        %1889 = vmatmul.mubr.f32.gmra.mrb[0].mxu0 %v519
        %v1890 = vpop.f32.mrb[0].mxu0
        %v1891 = vadd.f32 %v1646, %v1890
        %v1892 = vpop.f32.mrb[0].mxu0
        %1893 = vdwg.mxu0
        %1894 = vst [vmem:[#allocation7] sm:$0xff] %v1716
        %1895 = vst [vmem:[#allocation7 + $0x8] sm:$0xff] %v1721
        %1896 = vst [vmem:[#allocation7 + $0x10] sm:$0xff] %v1726
        %1897 = vst [vmem:[#allocation7 + $0x18] sm:$0xff] %v1731
        %1898 = vst [vmem:[#allocation7 + $0x20] sm:$0xff] %v1736
        %1899 = vst [vmem:[#allocation7 + $0x28] sm:$0xff] %v1741
        %1900 = vst [vmem:[#allocation7 + $0x30] sm:$0xff] %v1746
        %1901 = vst [vmem:[#allocation7 + $0x38] sm:$0xff] %v1751
        %1902 = vst [vmem:[#allocation7 + $0x40] sm:$0xff] %v1756
        %1903 = vst [vmem:[#allocation7 + $0x48] sm:$0xff] %v1761
        %1904 = vst [vmem:[#allocation7 + $0x50] sm:$0xff] %v1766
        %1905 = vst [vmem:[#allocation7 + $0x58] sm:$0xff] %v1771
        %1906 = vst [vmem:[#allocation7 + $0x60] sm:$0xff] %v1776
        %1907 = vst [vmem:[#allocation7 + $0x68] sm:$0xff] %v1781
        %1908 = vst [vmem:[#allocation7 + $0x70] sm:$0xff] %v1786
        %1909 = vst [vmem:[#allocation7 + $0x78] sm:$0xff] %v1791
        %1910 = vst [vmem:[#allocation7 + $0x80] sm:$0xff] %v1796
        %1911 = vst [vmem:[#allocation7 + $0x88] sm:$0xff] %v1801
        %1912 = vst [vmem:[#allocation7 + $0x90] sm:$0xff] %v1806
        %1913 = vst [vmem:[#allocation7 + $0x98] sm:$0xff] %v1811
        %1914 = vst [vmem:[#allocation7 + $0xa0] sm:$0xff] %v1816
        %1915 = vst [vmem:[#allocation7 + $0xa8] sm:$0xff] %v1821
        %1916 = vst [vmem:[#allocation7 + $0xb0] sm:$0xff] %v1826
        %1917 = vst [vmem:[#allocation7 + $0xb8] sm:$0xff] %v1831
        %1918 = vst [vmem:[#allocation7 + $0xc0] sm:$0xff] %v1836
        %1919 = vst [vmem:[#allocation7 + $0xc8] sm:$0xff] %v1841
        %1920 = vst [vmem:[#allocation7 + $0xd0] sm:$0xff] %v1846
        %1921 = vst [vmem:[#allocation7 + $0xd8] sm:$0xff] %v1851
        %1922 = vst [vmem:[#allocation7 + $0xe0] sm:$0xff] %v1856
        %1923 = vst [vmem:[#allocation7 + $0xe8] sm:$0xff] %v1861
        %1924 = vst [vmem:[#allocation7 + $0xf0] sm:$0xff] %v1866
        %1925 = vst [vmem:[#allocation7 + $0xf8] sm:$0xff] %v1871
        %1926 = vst [vmem:[#allocation7 + $0x100] sm:$0xff] %v1876
        %1927 = vst [vmem:[#allocation7 + $0x108] sm:$0xff] %v1881
        %1928 = vst [vmem:[#allocation7 + $0x110] sm:$0xff] %v1886
        %1929 = vst [vmem:[#allocation7 + $0x118] sm:$0x3f] %v1891
        %v1930 = vld [vmem:[#allocation7] ss:$2 sm:$0xff]
        %s1931 = scalar_lea.vmem [#allocation7], 1
        %v1932 = vld [vmem:[%s1931] ss:$2 sm:$0xff]
        %v1933 = vmax.f32 %v1930, %v1932
        %s1934 = scalar_lea.vmem [#allocation7], 18
        %v1935 = vld [vmem:[%s1934] ss:$2 sm:$0xff]
        %s1936 = scalar_lea.vmem [#allocation7], 19
        %v1937 = vld [vmem:[%s1936] ss:$2 sm:$0xff]
        %v1938 = vmax.f32 %v1935, %v1937
        %v1939 = vmax.f32 %v1933, %v1938
        %1940 = vst [vmem:[#allocation2 + $0xb] sm:$0xff] %v1939
        %s1941 = scalar_lea.vmem [#allocation7], 36
        %v1942 = vld [vmem:[%s1941] ss:$2 sm:$0xff]
        %s1943 = scalar_lea.vmem [#allocation7], 37
        %v1944 = vld [vmem:[%s1943] ss:$2 sm:$0xff]
        %v1945 = vmax.f32 %v1942, %v1944
        %s1946 = scalar_lea.vmem [#allocation7], 54
        %v1947 = vld [vmem:[%s1946] ss:$2 sm:$0xff]
        %s1948 = scalar_lea.vmem [#allocation7], 55
        %v1949 = vld [vmem:[%s1948] ss:$2 sm:$0xff]
        %v1950 = vmax.f32 %v1947, %v1949
        %v1951 = vmax.f32 %v1945, %v1950
        %1952 = vst [vmem:[#allocation2 + $0x15] sm:$0xff] %v1951
        %s1953 = scalar_lea.vmem [#allocation7], 72
        %v1954 = vld [vmem:[%s1953] ss:$2 sm:$0xff]
        %s1955 = scalar_lea.vmem [#allocation7], 73
        %v1956 = vld [vmem:[%s1955] ss:$2 sm:$0xff]
        %v1957 = vmax.f32 %v1954, %v1956
        %s1958 = scalar_lea.vmem [#allocation7], 90
        %v1959 = vld [vmem:[%s1958] ss:$2 sm:$0xff]
        %s1960 = scalar_lea.vmem [#allocation7], 91
        %v1961 = vld [vmem:[%s1960] ss:$2 sm:$0xff]
        %v1962 = vmax.f32 %v1959, %v1961
        %v1963 = vmax.f32 %v1957, %v1962
        %1964 = vst [vmem:[#allocation2 + $0x1f] sm:$0xff] %v1963
        %s1965 = scalar_lea.vmem [#allocation7], 108
        %v1966 = vld [vmem:[%s1965] ss:$2 sm:$0xff]
        %s1967 = scalar_lea.vmem [#allocation7], 109
        %v1968 = vld [vmem:[%s1967] ss:$2 sm:$0xff]
        %v1969 = vmax.f32 %v1966, %v1968
        %s1970 = scalar_lea.vmem [#allocation7], 126
        %v1971 = vld [vmem:[%s1970] ss:$2 sm:$0xff]
        %s1972 = scalar_lea.vmem [#allocation7], 127
        %v1973 = vld [vmem:[%s1972] ss:$2 sm:$0xff]
        %v1974 = vmax.f32 %v1971, %v1973
        %v1975 = vmax.f32 %v1969, %v1974
        %1976 = vst [vmem:[#allocation2 + $0x29] sm:$0xff] %v1975
        %s1977 = scalar_lea.vmem [#allocation7], 144
        %v1978 = vld [vmem:[%s1977] ss:$2 sm:$0xff]
        %s1979 = scalar_lea.vmem [#allocation7], 145
        %v1980 = vld [vmem:[%s1979] ss:$2 sm:$0xff]
        %v1981 = vmax.f32 %v1978, %v1980
        %s1982 = scalar_lea.vmem [#allocation7], 162
        %v1983 = vld [vmem:[%s1982] ss:$2 sm:$0xff]
        %s1984 = scalar_lea.vmem [#allocation7], 163
        %v1985 = vld [vmem:[%s1984] ss:$2 sm:$0xff]
        %v1986 = vmax.f32 %v1983, %v1985
        %v1987 = vmax.f32 %v1981, %v1986
        %1988 = vst [vmem:[#allocation2 + $0x33] sm:$0xff] %v1987
        %s1989 = scalar_lea.vmem [#allocation7], 180
        %v1990 = vld [vmem:[%s1989] ss:$2 sm:$0xff]
        %s1991 = scalar_lea.vmem [#allocation7], 181
        %v1992 = vld [vmem:[%s1991] ss:$2 sm:$0xff]
        %v1993 = vmax.f32 %v1990, %v1992
        %s1994 = scalar_lea.vmem [#allocation7], 198
        %v1995 = vld [vmem:[%s1994] ss:$2 sm:$0xff]
        %s1996 = scalar_lea.vmem [#allocation7], 199
        %v1997 = vld [vmem:[%s1996] ss:$2 sm:$0xff]
        %v1998 = vmax.f32 %v1995, %v1997
        %v1999 = vmax.f32 %v1993, %v1998
        %2000 = vst [vmem:[#allocation2 + $0x3d] sm:$0xff] %v1999
        %s2001 = scalar_lea.vmem [#allocation7], 216
        %v2002 = vld [vmem:[%s2001] ss:$2 sm:$0xff]
        %s2003 = scalar_lea.vmem [#allocation7], 217
        %v2004 = vld [vmem:[%s2003] ss:$2 sm:$0xff]
        %v2005 = vmax.f32 %v2002, %v2004
        %s2006 = scalar_lea.vmem [#allocation7], 234
        %v2007 = vld [vmem:[%s2006] ss:$2 sm:$0xff]
        %s2008 = scalar_lea.vmem [#allocation7], 235
        %v2009 = vld [vmem:[%s2008] ss:$2 sm:$0xff]
        %v2010 = vmax.f32 %v2007, %v2009
        %v2011 = vmax.f32 %v2005, %v2010
        %2012 = vst [vmem:[#allocation2 + $0x47] sm:$0xff] %v2011
        %s2013 = scalar_lea.vmem [#allocation7], 252
        %v2014 = vld [vmem:[%s2013] ss:$2 sm:$0xff]
        %s2015 = scalar_lea.vmem [#allocation7], 253
        %v2016 = vld [vmem:[%s2015] ss:$2 sm:$0xff]
        %v2017 = vmax.f32 %v2014, %v2016
        %s2018 = scalar_lea.vmem [#allocation7], 270
        %v2019 = vld [vmem:[%s2018] ss:$2 sm:$0xff]
        %s2020 = scalar_lea.vmem [#allocation7], 271
        %v2021 = vld [vmem:[%s2020] ss:$2 sm:$0xff]
        %v2022 = vmax.f32 %v2019, %v2021
        %v2023 = vmax.f32 %v2017, %v2022
        %2024 = vst [vmem:[#allocation2 + $0x51] sm:$0xff] %v2023
        %v2025 = vld [vmem:[#allocation2] sm:$0xff]
        %v2026 = vld [vmem:[#allocation2 + $0x8] sm:$0xff]
        %v2027 = vld [vmem:[#allocation2 + $0x10] sm:$0xff]
        %v2028 = vld [vmem:[#allocation2 + $0x18] sm:$0xff]
        %v2029 = vld [vmem:[#allocation2 + $0x20] sm:$0xff]
        %v2030 = vld [vmem:[#allocation2 + $0x28] sm:$0xff]
        %v2031 = vld [vmem:[#allocation2 + $0x30] sm:$0xff]
        %v2032 = vld [vmem:[#allocation2 + $0x38] sm:$0xff]
        %v2033 = vld [vmem:[#allocation2 + $0x40] sm:$0xff]
        %v2034 = vld [vmem:[#allocation2 + $0x48] sm:$0x3f]
        %v2035 = vld [vmem:[#allocation2 + $0x1] sm:$0xff]
        %v2036 = vld [vmem:[#allocation2 + $0x9] sm:$0xff]
        %v2037 = vld [vmem:[#allocation2 + $0x11] sm:$0xff]
        %v2038 = vld [vmem:[#allocation2 + $0x19] sm:$0xff]
        %v2039 = vld [vmem:[#allocation2 + $0x21] sm:$0xff]
        %v2040 = vld [vmem:[#allocation2 + $0x29] sm:$0xff]
        %v2041 = vld [vmem:[#allocation2 + $0x31] sm:$0xff]
        %v2042 = vld [vmem:[#allocation2 + $0x39] sm:$0xff]
        %v2043 = vld [vmem:[#allocation2 + $0x41] sm:$0xff]
        %v2044 = vld [vmem:[#allocation2 + $0x49] sm:$0x3f]
        %v2045 = vld [vmem:[#allocation2 + $0x2] sm:$0xff]
        %v2046 = vld [vmem:[#allocation2 + $0xa] sm:$0xff]
        %v2047 = vld [vmem:[#allocation2 + $0x12] sm:$0xff]
        %v2048 = vld [vmem:[#allocation2 + $0x1a] sm:$0xff]
        %v2049 = vld [vmem:[#allocation2 + $0x22] sm:$0xff]
        %v2050 = vld [vmem:[#allocation2 + $0x2a] sm:$0xff]
        %v2051 = vld [vmem:[#allocation2 + $0x32] sm:$0xff]
        %v2052 = vld [vmem:[#allocation2 + $0x3a] sm:$0xff]
        %v2053 = vld [vmem:[#allocation2 + $0x42] sm:$0xff]
        %v2054 = vld [vmem:[#allocation2 + $0x4a] sm:$0x3f]
        %v2055 = vld [vmem:[#allocation2 + $0x4a] sm:$0xff]
        %v2056 = vld [vmem:[#allocation2 + $0x52] sm:$0x3f]
        %v2057 = vld [vmem:[#allocation2 + $0xb] sm:$0xff]
        %v2058 = vld [vmem:[#allocation2 + $0x13] sm:$0xff]
        %v2059 = vld [vmem:[#allocation2 + $0x1b] sm:$0xff]
        %v2060 = vld [vmem:[#allocation2 + $0x23] sm:$0xff]
        %v2061 = vld [vmem:[#allocation2 + $0x2b] sm:$0xff]
        %v2062 = vld [vmem:[#allocation2 + $0x33] sm:$0xff]
        %v2063 = vld [vmem:[#allocation2 + $0x3b] sm:$0xff]
        %v2064 = vld [vmem:[#allocation2 + $0x43] sm:$0xff]
        %v2065 = vld [vmem:[#allocation2 + $0x4b] sm:$0xff]
        %v2066 = vld [vmem:[#allocation2 + $0x53] sm:$0x3f]
        %v2067 = vld [vmem:[#allocation2 + $0xc] sm:$0xff]
        %v2068 = vld [vmem:[#allocation2 + $0x14] sm:$0xff]
        %v2069 = vld [vmem:[#allocation2 + $0x1c] sm:$0xff]
        %v2070 = vld [vmem:[#allocation2 + $0x24] sm:$0xff]
        %v2071 = vld [vmem:[#allocation2 + $0x2c] sm:$0xff]
        %v2072 = vld [vmem:[#allocation2 + $0x34] sm:$0xff]
        %v2073 = vld [vmem:[#allocation2 + $0x3c] sm:$0xff]
        %v2074 = vld [vmem:[#allocation2 + $0x44] sm:$0xff]
        %v2075 = vld [vmem:[#allocation2 + $0x4c] sm:$0xff]
        %v2076 = vld [vmem:[#allocation2 + $0x54] sm:$0x3f]
        %v2077 = vld [vmem:[#allocation2 + $0x54] sm:$0xff]
        %v2078 = vld [vmem:[#allocation2 + $0x5c] sm:$0x3f]
        %v2079 = vld [vmem:[#allocation2 + $0x15] sm:$0xff]
        %v2080 = vld [vmem:[#allocation2 + $0x1d] sm:$0xff]
        %v2081 = vld [vmem:[#allocation2 + $0x25] sm:$0xff]
        %v2082 = vld [vmem:[#allocation2 + $0x2d] sm:$0xff]
        %v2083 = vld [vmem:[#allocation2 + $0x35] sm:$0xff]
        %v2084 = vld [vmem:[#allocation2 + $0x3d] sm:$0xff]
        %v2085 = vld [vmem:[#allocation2 + $0x45] sm:$0xff]
        %v2086 = vld [vmem:[#allocation2 + $0x4d] sm:$0xff]
        %v2087 = vld [vmem:[#allocation2 + $0x55] sm:$0xff]
        %v2088 = vld [vmem:[#allocation2 + $0x5d] sm:$0x3f]
        %v2089 = vld [vmem:[#allocation2 + $0x16] sm:$0xff]
        %v2090 = vld [vmem:[#allocation2 + $0x1e] sm:$0xff]
        %v2091 = vld [vmem:[#allocation2 + $0x26] sm:$0xff]
        %v2092 = vld [vmem:[#allocation2 + $0x2e] sm:$0xff]
        %v2093 = vld [vmem:[#allocation2 + $0x36] sm:$0xff]
        %v2094 = vld [vmem:[#allocation2 + $0x3e] sm:$0xff]
        %v2095 = vld [vmem:[#allocation2 + $0x46] sm:$0xff]
        %v2096 = vld [vmem:[#allocation2 + $0x4e] sm:$0xff]
        %v2097 = vld [vmem:[#allocation2 + $0x56] sm:$0xff]
        %v2098 = vld [vmem:[#allocation2 + $0x5e] sm:$0x3f]
        %s2099 = scalar_lea.vmem %s1, 1152
        %v2100 = vld [vmem:[%s2099] sm:$0xff]
        %v2101 = vld [vmem:[%s2099 + $0x8] sm:$0xff]
        %v2102 = vld [vmem:[%s2099 + $0x10] sm:$0xff]
        %v2103 = vld [vmem:[%s2099 + $0x18] sm:$0xff]
        %v2104 = vld [vmem:[%s2099 + $0x20] sm:$0xff]
        %v2105 = vld [vmem:[%s2099 + $0x28] sm:$0xff]
        %v2106 = vld [vmem:[%s2099 + $0x30] sm:$0xff]
        %v2107 = vld [vmem:[%s2099 + $0x38] sm:$0xff]
        %v2108 = vld [vmem:[%s2099 + $0x40] sm:$0xff]
        %v2109 = vld [vmem:[%s2099 + $0x48] sm:$0xff]
        %v2110 = vld [vmem:[%s2099 + $0x50] sm:$0xff]
        %v2111 = vld [vmem:[%s2099 + $0x58] sm:$0xff]
        %v2112 = vld [vmem:[%s2099 + $0x60] sm:$0xff]
        %v2113 = vld [vmem:[%s2099 + $0x68] sm:$0xff]
        %v2114 = vld [vmem:[%s2099 + $0x70] sm:$0xff]
        %v2115 = vld [vmem:[%s2099 + $0x78] sm:$0xff]
        %v2116 = vld [vmem:[%s2099 + $0x80] sm:$0xff]
        %v2117 = vld [vmem:[%s2099 + $0x88] sm:$0xff]
        %v2118 = vld [vmem:[%s2099 + $0x90] sm:$0xff]
        %v2119 = vld [vmem:[%s2099 + $0x98] sm:$0xff]
        %v2120 = vld [vmem:[%s2099 + $0xa0] sm:$0xff]
        %v2121 = vld [vmem:[%s2099 + $0xa8] sm:$0xff]
        %v2122 = vld [vmem:[%s2099 + $0xb0] sm:$0xff]
        %v2123 = vld [vmem:[%s2099 + $0xb8] sm:$0xff]
        %v2124 = vld [vmem:[%s2099 + $0xc0] sm:$0xff]
        %v2125 = vld [vmem:[%s2099 + $0xc8] sm:$0xff]
        %v2126 = vld [vmem:[%s2099 + $0xd0] sm:$0xff]
        %v2127 = vld [vmem:[%s2099 + $0xd8] sm:$0xff]
        %v2128 = vld [vmem:[%s2099 + $0xe0] sm:$0xff]
        %v2129 = vld [vmem:[%s2099 + $0xe8] sm:$0xff]
        %v2130 = vld [vmem:[%s2099 + $0xf0] sm:$0xff]
        %v2131 = vld [vmem:[%s2099 + $0xf8] sm:$0xff]
        %v2132 = vld [vmem:[%s2099 + $0x100] sm:$0xff]
        %v2133 = vld [vmem:[%s2099 + $0x108] sm:$0xff]
        %v2134 = vld [vmem:[%s2099 + $0x110] sm:$0xff]
        %v2135 = vld [vmem:[%s2099 + $0x118] sm:$0xff]
        %v2136 = vld [vmem:[%s2099 + $0x120] sm:$0xff]
        %v2137 = vld [vmem:[%s2099 + $0x128] sm:$0xff]
        %v2138 = vld [vmem:[%s2099 + $0x130] sm:$0xff]
        %v2139 = vld [vmem:[%s2099 + $0x138] sm:$0xff]
        %v2140 = vld [vmem:[%s2099 + $0x140] sm:$0xff]
        %v2141 = vld [vmem:[%s2099 + $0x148] sm:$0xff]
        %v2142 = vld [vmem:[%s2099 + $0x150] sm:$0xff]
        %v2143 = vld [vmem:[%s2099 + $0x158] sm:$0xff]
        %v2144 = vld [vmem:[%s2099 + $0x160] sm:$0xff]
        %v2145 = vld [vmem:[%s2099 + $0x168] sm:$0xff]
        %v2146 = vld [vmem:[%s2099 + $0x170] sm:$0xff]
        %v2147 = vld [vmem:[%s2099 + $0x178] sm:$0xff]
        %v2148 = vld [vmem:[%s2099 + $0x180] sm:$0xff]
        %v2149 = vld [vmem:[%s2099 + $0x188] sm:$0xff]
        %v2150 = vld [vmem:[%s2099 + $0x190] sm:$0xff]
        %v2151 = vld [vmem:[%s2099 + $0x198] sm:$0xff]
        %v2152 = vld [vmem:[%s2099 + $0x1a0] sm:$0xff]
        %v2153 = vld [vmem:[%s2099 + $0x1a8] sm:$0xff]
        %v2154 = vld [vmem:[%s2099 + $0x1b0] sm:$0xff]
        %v2155 = vld [vmem:[%s2099 + $0x1b8] sm:$0xff]
        %v2156 = vld [vmem:[%s2099 + $0x1c0] sm:$0xff]
        %v2157 = vld [vmem:[%s2099 + $0x1c8] sm:$0xff]
        %v2158 = vld [vmem:[%s2099 + $0x1d0] sm:$0xff]
        %v2159 = vld [vmem:[%s2099 + $0x1d8] sm:$0xff]
        %v2160 = vld [vmem:[%s2099 + $0x1e0] sm:$0xff]
        %v2161 = vld [vmem:[%s2099 + $0x1e8] sm:$0xff]
        %v2162 = vld [vmem:[%s2099 + $0x1f0] sm:$0xff]
        %v2163 = vld [vmem:[%s2099 + $0x1f8] sm:$0xff]
        %v2164 = vld [vmem:[%s2099 + $0x200] sm:$0xff]
        %v2165 = vld [vmem:[%s2099 + $0x208] sm:$0xff]
        %v2166 = vld [vmem:[%s2099 + $0x210] sm:$0xff]
        %v2167 = vld [vmem:[%s2099 + $0x218] sm:$0xff]
        %v2168 = vld [vmem:[%s2099 + $0x220] sm:$0xff]
        %v2169 = vld [vmem:[%s2099 + $0x228] sm:$0xff]
        %v2170 = vld [vmem:[%s2099 + $0x230] sm:$0xff]
        %v2171 = vld [vmem:[%s2099 + $0x238] sm:$0xff]
        %v2172 = vld [vmem:[%s2099 + $0x240] sm:$0xff]
        %v2173 = vld [vmem:[%s2099 + $0x248] sm:$0xff]
        %v2174 = vld [vmem:[%s2099 + $0x250] sm:$0xff]
        %v2175 = vld [vmem:[%s2099 + $0x258] sm:$0xff]
        %v2176 = vld [vmem:[%s2099 + $0x260] sm:$0xff]
        %v2177 = vld [vmem:[%s2099 + $0x268] sm:$0xff]
        %v2178 = vld [vmem:[%s2099 + $0x270] sm:$0xff]
        %v2179 = vld [vmem:[%s2099 + $0x278] sm:$0xff]
        %v2180 = vld [vmem:[%s2099 + $0x280] sm:$0xff]
        %v2181 = vld [vmem:[%s2099 + $0x288] sm:$0xff]
        %v2182 = vld [vmem:[%s2099 + $0x290] sm:$0xff]
        %v2183 = vld [vmem:[%s2099 + $0x298] sm:$0xff]
        %v2184 = vld [vmem:[%s2099 + $0x2a0] sm:$0xff]
        %v2185 = vld [vmem:[%s2099 + $0x2a8] sm:$0xff]
        %v2186 = vld [vmem:[%s2099 + $0x2b0] sm:$0xff]
        %v2187 = vld [vmem:[%s2099 + $0x2b8] sm:$0xff]
        %v2188 = vld [vmem:[%s2099 + $0x2c0] sm:$0xff]
        %v2189 = vld [vmem:[%s2099 + $0x2c8] sm:$0xff]
        %v2190 = vld [vmem:[%s2099 + $0x2d0] sm:$0xff]
        %v2191 = vld [vmem:[%s2099 + $0x2d8] sm:$0xff]
        %v2192 = vld [vmem:[%s2099 + $0x2e0] sm:$0xff]
        %v2193 = vld [vmem:[%s2099 + $0x2e8] sm:$0xff]
        %v2194 = vld [vmem:[%s2099 + $0x2f0] sm:$0xff]
        %v2195 = vld [vmem:[%s2099 + $0x2f8] sm:$0xff]
        %v2196 = vld [vmem:[%s2099 + $0x300] sm:$0xff]
        %v2197 = vld [vmem:[%s2099 + $0x308] sm:$0xff]
        %v2198 = vld [vmem:[%s2099 + $0x310] sm:$0xff]
        %v2199 = vld [vmem:[%s2099 + $0x318] sm:$0xff]
        %v2200 = vld [vmem:[%s2099 + $0x320] sm:$0xff]
        %v2201 = vld [vmem:[%s2099 + $0x328] sm:$0xff]
        %v2202 = vld [vmem:[%s2099 + $0x330] sm:$0xff]
        %v2203 = vld [vmem:[%s2099 + $0x338] sm:$0xff]
        %v2204 = vld [vmem:[%s2099 + $0x340] sm:$0xff]
        %v2205 = vld [vmem:[%s2099 + $0x348] sm:$0xff]
        %v2206 = vld [vmem:[%s2099 + $0x350] sm:$0xff]
        %v2207 = vld [vmem:[%s2099 + $0x358] sm:$0xff]
        %v2208 = vld [vmem:[%s2099 + $0x360] sm:$0xff]
        %v2209 = vld [vmem:[%s2099 + $0x368] sm:$0xff]
        %v2210 = vld [vmem:[%s2099 + $0x370] sm:$0xff]
        %v2211 = vld [vmem:[%s2099 + $0x378] sm:$0xff]
        %v2212 = vld [vmem:[%s2099 + $0x380] sm:$0xff]
        %v2213 = vld [vmem:[%s2099 + $0x388] sm:$0xff]
        %v2214 = vld [vmem:[%s2099 + $0x390] sm:$0xff]
        %v2215 = vld [vmem:[%s2099 + $0x398] sm:$0xff]
        %v2216 = vld [vmem:[%s2099 + $0x3a0] sm:$0xff]
        %v2217 = vld [vmem:[%s2099 + $0x3a8] sm:$0xff]
        %v2218 = vld [vmem:[%s2099 + $0x3b0] sm:$0xff]
        %v2219 = vld [vmem:[%s2099 + $0x3b8] sm:$0xff]
        %v2220 = vld [vmem:[%s2099 + $0x3c0] sm:$0xff]
        %v2221 = vld [vmem:[%s2099 + $0x3c8] sm:$0xff]
        %v2222 = vld [vmem:[%s2099 + $0x3d0] sm:$0xff]
        %v2223 = vld [vmem:[%s2099 + $0x3d8] sm:$0xff]
        %v2224 = vld [vmem:[%s2099 + $0x3e0] sm:$0xff]
        %v2225 = vld [vmem:[%s2099 + $0x3e8] sm:$0xff]
        %v2226 = vld [vmem:[%s2099 + $0x3f0] sm:$0xff]
        %v2227 = vld [vmem:[%s2099 + $0x3f8] sm:$0xff]
        %v2228 = vld [vmem:[%s2099 + $0x400] sm:$0xff]
        %v2229 = vld [vmem:[%s2099 + $0x408] sm:$0xff]
        %v2230 = vld [vmem:[%s2099 + $0x410] sm:$0xff]
        %v2231 = vld [vmem:[%s2099 + $0x418] sm:$0xff]
        %v2232 = vld [vmem:[%s2099 + $0x420] sm:$0xff]
        %v2233 = vld [vmem:[%s2099 + $0x428] sm:$0xff]
        %v2234 = vld [vmem:[%s2099 + $0x430] sm:$0xff]
        %v2235 = vld [vmem:[%s2099 + $0x438] sm:$0xff]
        %v2236 = vld [vmem:[%s2099 + $0x440] sm:$0xff]
        %v2237 = vld [vmem:[%s2099 + $0x448] sm:$0xff]
        %v2238 = vld [vmem:[%s2099 + $0x450] sm:$0xff]
        %v2239 = vld [vmem:[%s2099 + $0x458] sm:$0xff]
        %v2240 = vld [vmem:[%s2099 + $0x460] sm:$0xff]
        %v2241 = vld [vmem:[%s2099 + $0x468] sm:$0xff]
        %v2242 = vld [vmem:[%s2099 + $0x470] sm:$0xff]
        %v2243 = vld [vmem:[%s2099 + $0x478] sm:$0xff]
        %v2244 = vld [vmem:[%s2 + $0x1] sm:$0x1]
        %v2245 = vlaneseq
        %v2246 = vshrl.u32 %v2245, 7
        %v2247 = vsub.s32 0, %v2246
        %v2248 = vrot.slane %v2244, %v2247
        %2249 = vmatprep.subr.mxu0 0.0
        %2250 = vmatpush1.msra.mxu0 %v2100
        %2251 = vmatprep.subr.mxu0 0.0
        %2252 = vmatpush1.msra.mxu0 %v2101
        %2253 = vmatprep.subr.mxu0 0.0
        %2254 = vmatpush1.msra.mxu0 %v2102
        %2255 = vmatprep.subr.mxu0 0.0
        %2256 = vmatpush1.msra.mxu0 %v2103
        %2257 = vmatprep.subr.mxu0 0.0
        %2258 = vmatpush1.msra.mxu0 %v2104
        %2259 = vmatprep.subr.mxu0 0.0
        %2260 = vmatpush1.msra.mxu0 %v2105
        %2261 = vmatprep.subr.mxu0 0.0
        %2262 = vmatpush1.msra.mxu0 %v2106
        %2263 = vmatprep.subr.mxu0 0.0
        %2264 = vmatpush1.msra.mxu0 %v2107
        %2265 = vmatprep.subr.mxu0 0.0
        %2266 = vmatpush1.msra.mxu0 %v2108
        %2267 = vmatprep.subr.mxu0 0.0
        %2268 = vmatpush1.msra.mxu0 %v2109
        %2269 = vmatprep.subr.mxu0 0.0
        %2270 = vmatpush1.msra.mxu0 %v2110
        %2271 = vmatprep.subr.mxu0 0.0
        %2272 = vmatpush1.msra.mxu0 %v2111
        %2273 = vmatprep.subr.mxu0 0.0
        %2274 = vmatpush1.msra.mxu0 %v2112
        %2275 = vmatprep.subr.mxu0 0.0
        %2276 = vmatpush1.msra.mxu0 %v2113
        %2277 = vmatprep.subr.mxu0 0.0
        %2278 = vmatpush1.msra.mxu0 %v2114
        %2279 = vmatprep.subr.mxu0 0.0
        %2280 = vmatpush1.msra.mxu0 %v2115
        %2281 = vmatprep.subr.mxu0 0.0
        %2282 = vmatpush1.msra.mxu0 %v2116
        %2283 = vmatprep.subr.mxu0 0.0
        %2284 = vmatpush1.msra.mxu0 %v2117
        %2285 = vmatprep.subr.mxu0 0.0
        %2286 = vmatpush1.msra.mxu0 %v2118
        %2287 = vmatprep.subr.mxu0 0.0
        %2288 = vmatpush1.msra.mxu0 %v2119
        %2289 = vmatprep.subr.mxu0 0.0
        %2290 = vmatpush1.msra.mxu0 %v2120
        %2291 = vmatprep.subr.mxu0 0.0
        %2292 = vmatpush1.msra.mxu0 %v2121
        %2293 = vmatprep.subr.mxu0 0.0
        %2294 = vmatpush1.msra.mxu0 %v2122
        %2295 = vmatprep.subr.mxu0 0.0
        %2296 = vmatpush1.msra.mxu0 %v2123
        %2297 = vmatprep.subr.mxu0 0.0
        %2298 = vmatpush1.msra.mxu0 %v2124
        %2299 = vmatprep.subr.mxu0 0.0
        %2300 = vmatpush1.msra.mxu0 %v2125
        %2301 = vmatprep.subr.mxu0 0.0
        %2302 = vmatpush1.msra.mxu0 %v2126
        %2303 = vmatprep.subr.mxu0 0.0
        %2304 = vmatpush1.msra.mxu0 %v2127
        %2305 = vmatprep.subr.mxu0 0.0
        %2306 = vmatpush1.msra.mxu0 %v2128
        %2307 = vmatprep.subr.mxu0 0.0
        %2308 = vmatpush1.msra.mxu0 %v2129
        %2309 = vmatprep.subr.mxu0 0.0
        %2310 = vmatpush1.msra.mxu0 %v2130
        %2311 = vmatprep.subr.mxu0 0.0
        %2312 = vmatpush1.msra.mxu0 %v2131
        %2313 = vmatprep.mubr.f32.mxu0 %v2035
        %2314 = vmatmul.mubr.f32.gmra.mrb[0].mxu0 %v2025
        %v2315 = vpop.f32.mrb[0].mxu0
        %v2316 = vadd.f32 %v2248, %v2315
        %v2317 = vpop.f32.mrb[0].mxu0
        %2318 = vmatprep.mubr.f32.mxu0 %v2036
        %2319 = vmatmul.mubr.f32.gmra.mrb[0].mxu0 %v2026
        %v2320 = vpop.f32.mrb[0].mxu0
        %v2321 = vadd.f32 %v2248, %v2320
        %v2322 = vpop.f32.mrb[0].mxu0
        %2323 = vmatprep.mubr.f32.mxu0 %v2037
        %2324 = vmatmul.mubr.f32.gmra.mrb[0].mxu0 %v2027
        %v2325 = vpop.f32.mrb[0].mxu0
        %v2326 = vadd.f32 %v2248, %v2325
        %v2327 = vpop.f32.mrb[0].mxu0
        %2328 = vmatprep.mubr.f32.mxu0 %v2038
        %2329 = vmatmul.mubr.f32.gmra.mrb[0].mxu0 %v2028
        %v2330 = vpop.f32.mrb[0].mxu0
        %v2331 = vadd.f32 %v2248, %v2330
        %v2332 = vpop.f32.mrb[0].mxu0
        %2333 = vmatprep.mubr.f32.mxu0 %v2039
        %2334 = vmatmul.mubr.f32.gmra.mrb[0].mxu0 %v2029
        %v2335 = vpop.f32.mrb[0].mxu0
        %v2336 = vadd.f32 %v2248, %v2335
        %v2337 = vpop.f32.mrb[0].mxu0
        %2338 = vmatprep.mubr.f32.mxu0 %v2040
        %2339 = vmatmul.mubr.f32.gmra.mrb[0].mxu0 %v2030
        %v2340 = vpop.f32.mrb[0].mxu0
        %v2341 = vadd.f32 %v2248, %v2340
        %v2342 = vpop.f32.mrb[0].mxu0
        %2343 = vmatprep.mubr.f32.mxu0 %v2041
        %2344 = vmatmul.mubr.f32.gmra.mrb[0].mxu0 %v2031
        %v2345 = vpop.f32.mrb[0].mxu0
        %v2346 = vadd.f32 %v2248, %v2345
        %v2347 = vpop.f32.mrb[0].mxu0
        %2348 = vmatprep.mubr.f32.mxu0 %v2042
        %2349 = vmatmul.mubr.f32.gmra.mrb[0].mxu0 %v2032
        %v2350 = vpop.f32.mrb[0].mxu0
        %v2351 = vadd.f32 %v2248, %v2350
        %v2352 = vpop.f32.mrb[0].mxu0
        %2353 = vmatprep.mubr.f32.mxu0 %v2043
        %2354 = vmatmul.mubr.f32.gmra.mrb[0].mxu0 %v2033
        %v2355 = vpop.f32.mrb[0].mxu0
        %v2356 = vadd.f32 %v2248, %v2355
        %v2357 = vpop.f32.mrb[0].mxu0
        %2358 = vmatprep.mubr.f32.mxu0 %v2044
        %2359 = vmatmul.mubr.f32.gmra.mrb[0].mxu0 %v2034
        %v2360 = vpop.f32.mrb[0].mxu0
        %v2361 = vadd.f32 %v2248, %v2360
        %v2362 = vpop.f32.mrb[0].mxu0
        %2363 = vdwg.mxu0
        %2364 = vmatprep.subr.mxu0 0.0
        %2365 = vmatpush1.msra.mxu0 %v2132
        %2366 = vmatprep.subr.mxu0 0.0
        %2367 = vmatpush1.msra.mxu0 %v2133
        %2368 = vmatprep.subr.mxu0 0.0
        %2369 = vmatpush1.msra.mxu0 %v2134
        %2370 = vmatprep.subr.mxu0 0.0
        %2371 = vmatpush1.msra.mxu0 %v2135
        %2372 = vmatprep.subr.mxu0 0.0
        %2373 = vmatpush1.msra.mxu0 %v2136
        %2374 = vmatprep.subr.mxu0 0.0
        %2375 = vmatpush1.msra.mxu0 %v2137
        %2376 = vmatprep.subr.mxu0 0.0
        %2377 = vmatpush1.msra.mxu0 %v2138
        %2378 = vmatprep.subr.mxu0 0.0
        %2379 = vmatpush1.msra.mxu0 %v2139
        %2380 = vmatprep.subr.mxu0 0.0
        %2381 = vmatpush1.msra.mxu0 %v2140
        %2382 = vmatprep.subr.mxu0 0.0
        %2383 = vmatpush1.msra.mxu0 %v2141
        %2384 = vmatprep.subr.mxu0 0.0
        %2385 = vmatpush1.msra.mxu0 %v2142
        %2386 = vmatprep.subr.mxu0 0.0
        %2387 = vmatpush1.msra.mxu0 %v2143
        %2388 = vmatprep.subr.mxu0 0.0
        %2389 = vmatpush1.msra.mxu0 %v2144
        %2390 = vmatprep.subr.mxu0 0.0
        %2391 = vmatpush1.msra.mxu0 %v2145
        %2392 = vmatprep.subr.mxu0 0.0
        %2393 = vmatpush1.msra.mxu0 %v2146
        %2394 = vmatprep.subr.mxu0 0.0
        %2395 = vmatpush1.msra.mxu0 %v2147
        %2396 = vmatprep.subr.mxu0 0.0
        %2397 = vmatpush1.msra.mxu0 %v2148
        %2398 = vmatprep.subr.mxu0 0.0
        %2399 = vmatpush1.msra.mxu0 %v2149
        %2400 = vmatprep.subr.mxu0 0.0
        %2401 = vmatpush1.msra.mxu0 %v2150
        %2402 = vmatprep.subr.mxu0 0.0
        %2403 = vmatpush1.msra.mxu0 %v2151
        %2404 = vmatprep.subr.mxu0 0.0
        %2405 = vmatpush1.msra.mxu0 %v2152
        %2406 = vmatprep.subr.mxu0 0.0
        %2407 = vmatpush1.msra.mxu0 %v2153
        %2408 = vmatprep.subr.mxu0 0.0
        %2409 = vmatpush1.msra.mxu0 %v2154
        %2410 = vmatprep.subr.mxu0 0.0
        %2411 = vmatpush1.msra.mxu0 %v2155
        %2412 = vmatprep.subr.mxu0 0.0
        %2413 = vmatpush1.msra.mxu0 %v2156
        %2414 = vmatprep.subr.mxu0 0.0
        %2415 = vmatpush1.msra.mxu0 %v2157
        %2416 = vmatprep.subr.mxu0 0.0
        %2417 = vmatpush1.msra.mxu0 %v2158
        %2418 = vmatprep.subr.mxu0 0.0
        %2419 = vmatpush1.msra.mxu0 %v2159
        %2420 = vmatprep.subr.mxu0 0.0
        %2421 = vmatpush1.msra.mxu0 %v2160
        %2422 = vmatprep.subr.mxu0 0.0
        %2423 = vmatpush1.msra.mxu0 %v2161
        %2424 = vmatprep.subr.mxu0 0.0
        %2425 = vmatpush1.msra.mxu0 %v2162
        %2426 = vmatprep.subr.mxu0 0.0
        %2427 = vmatpush1.msra.mxu0 %v2163
        %2428 = vmatprep.mubr.f32.mxu0 %v2046
        %2429 = vmatmul.mubr.f32.gmra.mrb[0].mxu0 %v2045
        %v2430 = vpop.f32.mrb[0].mxu0
        %v2431 = vadd.f32 %v2316, %v2430
        %v2432 = vpop.f32.mrb[0].mxu0
        %2433 = vmatprep.mubr.f32.mxu0 %v2047
        %2434 = vmatmul.mubr.f32.gmra.mrb[0].mxu0 %v2046
        %v2435 = vpop.f32.mrb[0].mxu0
        %v2436 = vadd.f32 %v2321, %v2435
        %v2437 = vpop.f32.mrb[0].mxu0
        %2438 = vmatprep.mubr.f32.mxu0 %v2048
        %2439 = vmatmul.mubr.f32.gmra.mrb[0].mxu0 %v2047
        %v2440 = vpop.f32.mrb[0].mxu0
        %v2441 = vadd.f32 %v2326, %v2440
        %v2442 = vpop.f32.mrb[0].mxu0
        %2443 = vmatprep.mubr.f32.mxu0 %v2049
        %2444 = vmatmul.mubr.f32.gmra.mrb[0].mxu0 %v2048
        %v2445 = vpop.f32.mrb[0].mxu0
        %v2446 = vadd.f32 %v2331, %v2445
        %v2447 = vpop.f32.mrb[0].mxu0
        %2448 = vmatprep.mubr.f32.mxu0 %v2050
        %2449 = vmatmul.mubr.f32.gmra.mrb[0].mxu0 %v2049
        %v2450 = vpop.f32.mrb[0].mxu0
        %v2451 = vadd.f32 %v2336, %v2450
        %v2452 = vpop.f32.mrb[0].mxu0
        %2453 = vmatprep.mubr.f32.mxu0 %v2051
        %2454 = vmatmul.mubr.f32.gmra.mrb[0].mxu0 %v2050
        %v2455 = vpop.f32.mrb[0].mxu0
        %v2456 = vadd.f32 %v2341, %v2455
        %v2457 = vpop.f32.mrb[0].mxu0
        %2458 = vmatprep.mubr.f32.mxu0 %v2052
        %2459 = vmatmul.mubr.f32.gmra.mrb[0].mxu0 %v2051
        %v2460 = vpop.f32.mrb[0].mxu0
        %v2461 = vadd.f32 %v2346, %v2460
        %v2462 = vpop.f32.mrb[0].mxu0
        %2463 = vmatprep.mubr.f32.mxu0 %v2053
        %2464 = vmatmul.mubr.f32.gmra.mrb[0].mxu0 %v2052
        %v2465 = vpop.f32.mrb[0].mxu0
        %v2466 = vadd.f32 %v2351, %v2465
        %v2467 = vpop.f32.mrb[0].mxu0
        %2468 = vmatprep.mubr.f32.mxu0 %v2055
        %2469 = vmatmul.mubr.f32.gmra.mrb[0].mxu0 %v2053
        %v2470 = vpop.f32.mrb[0].mxu0
        %v2471 = vadd.f32 %v2356, %v2470
        %v2472 = vpop.f32.mrb[0].mxu0
        %2473 = vmatprep.mubr.f32.mxu0 %v2056
        %2474 = vmatmul.mubr.f32.gmra.mrb[0].mxu0 %v2054
        %v2475 = vpop.f32.mrb[0].mxu0
        %v2476 = vadd.f32 %v2361, %v2475
        %v2477 = vpop.f32.mrb[0].mxu0
        %2478 = vdwg.mxu0
        %2479 = vmatprep.subr.mxu0 0.0
        %2480 = vmatpush1.msra.mxu0 %v2164
        %2481 = vmatprep.subr.mxu0 0.0
        %2482 = vmatpush1.msra.mxu0 %v2165
        %2483 = vmatprep.subr.mxu0 0.0
        %2484 = vmatpush1.msra.mxu0 %v2166
        %2485 = vmatprep.subr.mxu0 0.0
        %2486 = vmatpush1.msra.mxu0 %v2167
        %2487 = vmatprep.subr.mxu0 0.0
        %2488 = vmatpush1.msra.mxu0 %v2168
        %2489 = vmatprep.subr.mxu0 0.0
        %2490 = vmatpush1.msra.mxu0 %v2169
        %2491 = vmatprep.subr.mxu0 0.0
        %2492 = vmatpush1.msra.mxu0 %v2170
        %2493 = vmatprep.subr.mxu0 0.0
        %2494 = vmatpush1.msra.mxu0 %v2171
        %2495 = vmatprep.subr.mxu0 0.0
        %2496 = vmatpush1.msra.mxu0 %v2172
        %2497 = vmatprep.subr.mxu0 0.0
        %2498 = vmatpush1.msra.mxu0 %v2173
        %2499 = vmatprep.subr.mxu0 0.0
        %2500 = vmatpush1.msra.mxu0 %v2174
        %2501 = vmatprep.subr.mxu0 0.0
        %2502 = vmatpush1.msra.mxu0 %v2175
        %2503 = vmatprep.subr.mxu0 0.0
        %2504 = vmatpush1.msra.mxu0 %v2176
        %2505 = vmatprep.subr.mxu0 0.0
        %2506 = vmatpush1.msra.mxu0 %v2177
        %2507 = vmatprep.subr.mxu0 0.0
        %2508 = vmatpush1.msra.mxu0 %v2178
        %2509 = vmatprep.subr.mxu0 0.0
        %2510 = vmatpush1.msra.mxu0 %v2179
        %2511 = vmatprep.subr.mxu0 0.0
        %2512 = vmatpush1.msra.mxu0 %v2180
        %2513 = vmatprep.subr.mxu0 0.0
        %2514 = vmatpush1.msra.mxu0 %v2181
        %2515 = vmatprep.subr.mxu0 0.0
        %2516 = vmatpush1.msra.mxu0 %v2182
        %2517 = vmatprep.subr.mxu0 0.0
        %2518 = vmatpush1.msra.mxu0 %v2183
        %2519 = vmatprep.subr.mxu0 0.0
        %2520 = vmatpush1.msra.mxu0 %v2184
        %2521 = vmatprep.subr.mxu0 0.0
        %2522 = vmatpush1.msra.mxu0 %v2185
        %2523 = vmatprep.subr.mxu0 0.0
        %2524 = vmatpush1.msra.mxu0 %v2186
        %2525 = vmatprep.subr.mxu0 0.0
        %2526 = vmatpush1.msra.mxu0 %v2187
        %2527 = vmatprep.subr.mxu0 0.0
        %2528 = vmatpush1.msra.mxu0 %v2188
        %2529 = vmatprep.subr.mxu0 0.0
        %2530 = vmatpush1.msra.mxu0 %v2189
        %2531 = vmatprep.subr.mxu0 0.0
        %2532 = vmatpush1.msra.mxu0 %v2190
        %2533 = vmatprep.subr.mxu0 0.0
        %2534 = vmatpush1.msra.mxu0 %v2191
        %2535 = vmatprep.subr.mxu0 0.0
        %2536 = vmatpush1.msra.mxu0 %v2192
        %2537 = vmatprep.subr.mxu0 0.0
        %2538 = vmatpush1.msra.mxu0 %v2193
        %2539 = vmatprep.subr.mxu0 0.0
        %2540 = vmatpush1.msra.mxu0 %v2194
        %2541 = vmatprep.subr.mxu0 0.0
        %2542 = vmatpush1.msra.mxu0 %v2195
        %2543 = vmatprep.mubr.f32.mxu0 %v2067
        %2544 = vmatmul.mubr.f32.gmra.mrb[0].mxu0 %v2057
        %v2545 = vpop.f32.mrb[0].mxu0
        %v2546 = vadd.f32 %v2431, %v2545
        %v2547 = vpop.f32.mrb[0].mxu0
        %2548 = vmatprep.mubr.f32.mxu0 %v2068
        %2549 = vmatmul.mubr.f32.gmra.mrb[0].mxu0 %v2058
        %v2550 = vpop.f32.mrb[0].mxu0
        %v2551 = vadd.f32 %v2436, %v2550
        %v2552 = vpop.f32.mrb[0].mxu0
        %2553 = vmatprep.mubr.f32.mxu0 %v2069
        %2554 = vmatmul.mubr.f32.gmra.mrb[0].mxu0 %v2059
        %v2555 = vpop.f32.mrb[0].mxu0
        %v2556 = vadd.f32 %v2441, %v2555
        %v2557 = vpop.f32.mrb[0].mxu0
        %2558 = vmatprep.mubr.f32.mxu0 %v2070
        %2559 = vmatmul.mubr.f32.gmra.mrb[0].mxu0 %v2060
        %v2560 = vpop.f32.mrb[0].mxu0
        %v2561 = vadd.f32 %v2446, %v2560
        %v2562 = vpop.f32.mrb[0].mxu0
        %2563 = vmatprep.mubr.f32.mxu0 %v2071
        %2564 = vmatmul.mubr.f32.gmra.mrb[0].mxu0 %v2061
        %v2565 = vpop.f32.mrb[0].mxu0
        %v2566 = vadd.f32 %v2451, %v2565
        %v2567 = vpop.f32.mrb[0].mxu0
        %2568 = vmatprep.mubr.f32.mxu0 %v2072
        %2569 = vmatmul.mubr.f32.gmra.mrb[0].mxu0 %v2062
        %v2570 = vpop.f32.mrb[0].mxu0
        %v2571 = vadd.f32 %v2456, %v2570
        %v2572 = vpop.f32.mrb[0].mxu0
        %2573 = vmatprep.mubr.f32.mxu0 %v2073
        %2574 = vmatmul.mubr.f32.gmra.mrb[0].mxu0 %v2063
        %v2575 = vpop.f32.mrb[0].mxu0
        %v2576 = vadd.f32 %v2461, %v2575
        %v2577 = vpop.f32.mrb[0].mxu0
        %2578 = vmatprep.mubr.f32.mxu0 %v2074
        %2579 = vmatmul.mubr.f32.gmra.mrb[0].mxu0 %v2064
        %v2580 = vpop.f32.mrb[0].mxu0
        %v2581 = vadd.f32 %v2466, %v2580
        %v2582 = vpop.f32.mrb[0].mxu0
        %2583 = vmatprep.mubr.f32.mxu0 %v2075
        %2584 = vmatmul.mubr.f32.gmra.mrb[0].mxu0 %v2065
        %v2585 = vpop.f32.mrb[0].mxu0
        %v2586 = vadd.f32 %v2471, %v2585
        %v2587 = vpop.f32.mrb[0].mxu0
        %2588 = vmatprep.mubr.f32.mxu0 %v2076
        %2589 = vmatmul.mubr.f32.gmra.mrb[0].mxu0 %v2066
        %v2590 = vpop.f32.mrb[0].mxu0
        %v2591 = vadd.f32 %v2476, %v2590
        %v2592 = vpop.f32.mrb[0].mxu0
        %2593 = vdwg.mxu0
        %2594 = vmatprep.subr.mxu0 0.0
        %2595 = vmatpush1.msra.mxu0 %v2196
        %2596 = vmatprep.subr.mxu0 0.0
        %2597 = vmatpush1.msra.mxu0 %v2197
        %2598 = vmatprep.subr.mxu0 0.0
        %2599 = vmatpush1.msra.mxu0 %v2198
        %2600 = vmatprep.subr.mxu0 0.0
        %2601 = vmatpush1.msra.mxu0 %v2199
        %2602 = vmatprep.subr.mxu0 0.0
        %2603 = vmatpush1.msra.mxu0 %v2200
        %2604 = vmatprep.subr.mxu0 0.0
        %2605 = vmatpush1.msra.mxu0 %v2201
        %2606 = vmatprep.subr.mxu0 0.0
        %2607 = vmatpush1.msra.mxu0 %v2202
        %2608 = vmatprep.subr.mxu0 0.0
        %2609 = vmatpush1.msra.mxu0 %v2203
        %2610 = vmatprep.subr.mxu0 0.0
        %2611 = vmatpush1.msra.mxu0 %v2204
        %2612 = vmatprep.subr.mxu0 0.0
        %2613 = vmatpush1.msra.mxu0 %v2205
        %2614 = vmatprep.subr.mxu0 0.0
        %2615 = vmatpush1.msra.mxu0 %v2206
        %2616 = vmatprep.subr.mxu0 0.0
        %2617 = vmatpush1.msra.mxu0 %v2207
        %2618 = vmatprep.subr.mxu0 0.0
        %2619 = vmatpush1.msra.mxu0 %v2208
        %2620 = vmatprep.subr.mxu0 0.0
        %2621 = vmatpush1.msra.mxu0 %v2209
        %2622 = vmatprep.subr.mxu0 0.0
        %2623 = vmatpush1.msra.mxu0 %v2210
        %2624 = vmatprep.subr.mxu0 0.0
        %2625 = vmatpush1.msra.mxu0 %v2211
        %2626 = vmatprep.subr.mxu0 0.0
        %2627 = vmatpush1.msra.mxu0 %v2212
        %2628 = vmatprep.subr.mxu0 0.0
        %2629 = vmatpush1.msra.mxu0 %v2213
        %2630 = vmatprep.subr.mxu0 0.0
        %2631 = vmatpush1.msra.mxu0 %v2214
        %2632 = vmatprep.subr.mxu0 0.0
        %2633 = vmatpush1.msra.mxu0 %v2215
        %2634 = vmatprep.subr.mxu0 0.0
        %2635 = vmatpush1.msra.mxu0 %v2216
        %2636 = vmatprep.subr.mxu0 0.0
        %2637 = vmatpush1.msra.mxu0 %v2217
        %2638 = vmatprep.subr.mxu0 0.0
        %2639 = vmatpush1.msra.mxu0 %v2218
        %2640 = vmatprep.subr.mxu0 0.0
        %2641 = vmatpush1.msra.mxu0 %v2219
        %2642 = vmatprep.subr.mxu0 0.0
        %2643 = vmatpush1.msra.mxu0 %v2220
        %2644 = vmatprep.subr.mxu0 0.0
        %2645 = vmatpush1.msra.mxu0 %v2221
        %2646 = vmatprep.subr.mxu0 0.0
        %2647 = vmatpush1.msra.mxu0 %v2222
        %2648 = vmatprep.subr.mxu0 0.0
        %2649 = vmatpush1.msra.mxu0 %v2223
        %2650 = vmatprep.subr.mxu0 0.0
        %2651 = vmatpush1.msra.mxu0 %v2224
        %2652 = vmatprep.subr.mxu0 0.0
        %2653 = vmatpush1.msra.mxu0 %v2225
        %2654 = vmatprep.subr.mxu0 0.0
        %2655 = vmatpush1.msra.mxu0 %v2226
        %2656 = vmatprep.subr.mxu0 0.0
        %2657 = vmatpush1.msra.mxu0 %v2227
        %2658 = vmatprep.mubr.f32.mxu0 %v2079
        %2659 = vmatmul.mubr.f32.gmra.mrb[0].mxu0 %v2068
        %v2660 = vpop.f32.mrb[0].mxu0
        %v2661 = vadd.f32 %v2546, %v2660
        %v2662 = vpop.f32.mrb[0].mxu0
        %2663 = vmatprep.mubr.f32.mxu0 %v2080
        %2664 = vmatmul.mubr.f32.gmra.mrb[0].mxu0 %v2069
        %v2665 = vpop.f32.mrb[0].mxu0
        %v2666 = vadd.f32 %v2551, %v2665
        %v2667 = vpop.f32.mrb[0].mxu0
        %2668 = vmatprep.mubr.f32.mxu0 %v2081
        %2669 = vmatmul.mubr.f32.gmra.mrb[0].mxu0 %v2070
        %v2670 = vpop.f32.mrb[0].mxu0
        %v2671 = vadd.f32 %v2556, %v2670
        %v2672 = vpop.f32.mrb[0].mxu0
        %2673 = vmatprep.mubr.f32.mxu0 %v2082
        %2674 = vmatmul.mubr.f32.gmra.mrb[0].mxu0 %v2071
        %v2675 = vpop.f32.mrb[0].mxu0
        %v2676 = vadd.f32 %v2561, %v2675
        %v2677 = vpop.f32.mrb[0].mxu0
        %2678 = vmatprep.mubr.f32.mxu0 %v2083
        %2679 = vmatmul.mubr.f32.gmra.mrb[0].mxu0 %v2072
        %v2680 = vpop.f32.mrb[0].mxu0
        %v2681 = vadd.f32 %v2566, %v2680
        %v2682 = vpop.f32.mrb[0].mxu0
        %2683 = vmatprep.mubr.f32.mxu0 %v2084
        %2684 = vmatmul.mubr.f32.gmra.mrb[0].mxu0 %v2073
        %v2685 = vpop.f32.mrb[0].mxu0
        %v2686 = vadd.f32 %v2571, %v2685
        %v2687 = vpop.f32.mrb[0].mxu0
        %2688 = vmatprep.mubr.f32.mxu0 %v2085
        %2689 = vmatmul.mubr.f32.gmra.mrb[0].mxu0 %v2074
        %v2690 = vpop.f32.mrb[0].mxu0
        %v2691 = vadd.f32 %v2576, %v2690
        %v2692 = vpop.f32.mrb[0].mxu0
        %2693 = vmatprep.mubr.f32.mxu0 %v2086
        %2694 = vmatmul.mubr.f32.gmra.mrb[0].mxu0 %v2075
        %v2695 = vpop.f32.mrb[0].mxu0
        %v2696 = vadd.f32 %v2581, %v2695
        %v2697 = vpop.f32.mrb[0].mxu0
        %2698 = vmatprep.mubr.f32.mxu0 %v2087
        %2699 = vmatmul.mubr.f32.gmra.mrb[0].mxu0 %v2077
        %v2700 = vpop.f32.mrb[0].mxu0
        %v2701 = vadd.f32 %v2586, %v2700
        %v2702 = vpop.f32.mrb[0].mxu0
        %2703 = vmatprep.mubr.f32.mxu0 %v2088
        %2704 = vmatmul.mubr.f32.gmra.mrb[0].mxu0 %v2078
        %v2705 = vpop.f32.mrb[0].mxu0
        %v2706 = vadd.f32 %v2591, %v2705
        %v2707 = vpop.f32.mrb[0].mxu0
        %2708 = vdwg.mxu0
        %2709 = vmatprep.subr.mxu0 0.0
        %2710 = vmatpush1.msra.mxu0 %v2228
        %2711 = vmatprep.subr.mxu0 0.0
        %2712 = vmatpush1.msra.mxu0 %v2229
        %2713 = vmatprep.subr.mxu0 0.0
        %2714 = vmatpush1.msra.mxu0 %v2230
        %2715 = vmatprep.subr.mxu0 0.0
        %2716 = vmatpush1.msra.mxu0 %v2231
        %2717 = vmatprep.subr.mxu0 0.0
        %2718 = vmatpush1.msra.mxu0 %v2232
        %2719 = vmatprep.subr.mxu0 0.0
        %2720 = vmatpush1.msra.mxu0 %v2233
        %2721 = vmatprep.subr.mxu0 0.0
        %2722 = vmatpush1.msra.mxu0 %v2234
        %2723 = vmatprep.subr.mxu0 0.0
        %2724 = vmatpush1.msra.mxu0 %v2235
        %2725 = vmatprep.subr.mxu0 0.0
        %2726 = vmatpush1.msra.mxu0 %v2236
        %2727 = vmatprep.subr.mxu0 0.0
        %2728 = vmatpush1.msra.mxu0 %v2237
        %2729 = vmatprep.subr.mxu0 0.0
        %2730 = vmatpush1.msra.mxu0 %v2238
        %2731 = vmatprep.subr.mxu0 0.0
        %2732 = vmatpush1.msra.mxu0 %v2239
        %2733 = vmatprep.subr.mxu0 0.0
        %2734 = vmatpush1.msra.mxu0 %v2240
        %2735 = vmatprep.subr.mxu0 0.0
        %2736 = vmatpush1.msra.mxu0 %v2241
        %2737 = vmatprep.subr.mxu0 0.0
        %2738 = vmatpush1.msra.mxu0 %v2242
        %2739 = vmatprep.subr.mxu0 0.0
        %2740 = vmatpush1.msra.mxu0 %v2243
        %2741 = vmatprep.subr.mxu0 0.0
        %2742 = vmatpush1.msra.mxu0 0.0
        %2743 = vmatprep.subr.mxu0 0.0
        %2744 = vmatpush1.msra.mxu0 0.0
        %2745 = vmatprep.subr.mxu0 0.0
        %2746 = vmatpush1.msra.mxu0 0.0
        %2747 = vmatprep.subr.mxu0 0.0
        %2748 = vmatpush1.msra.mxu0 0.0
        %2749 = vmatprep.subr.mxu0 0.0
        %2750 = vmatpush1.msra.mxu0 0.0
        %2751 = vmatprep.subr.mxu0 0.0
        %2752 = vmatpush1.msra.mxu0 0.0
        %2753 = vmatprep.subr.mxu0 0.0
        %2754 = vmatpush1.msra.mxu0 0.0
        %2755 = vmatprep.subr.mxu0 0.0
        %2756 = vmatpush1.msra.mxu0 0.0
        %2757 = vmatprep.subr.mxu0 0.0
        %2758 = vmatpush1.msra.mxu0 0.0
        %2759 = vmatprep.subr.mxu0 0.0
        %2760 = vmatpush1.msra.mxu0 0.0
        %2761 = vmatprep.subr.mxu0 0.0
        %2762 = vmatpush1.msra.mxu0 0.0
        %2763 = vmatprep.subr.mxu0 0.0
        %2764 = vmatpush1.msra.mxu0 0.0
        %2765 = vmatprep.subr.mxu0 0.0
        %2766 = vmatpush1.msra.mxu0 0.0
        %2767 = vmatprep.subr.mxu0 0.0
        %2768 = vmatpush1.msra.mxu0 0.0
        %2769 = vmatprep.subr.mxu0 0.0
        %2770 = vmatpush1.msra.mxu0 0.0
        %2771 = vmatprep.subr.mxu0 0.0
        %2772 = vmatpush1.msra.mxu0 0.0
        %2773 = vmatprep.mubr.f32.mxu0 0.0
        %2774 = vmatmul.mubr.f32.gmra.mrb[0].mxu0 %v2089
        %v2775 = vpop.f32.mrb[0].mxu0
        %v2776 = vadd.f32 %v2661, %v2775
        %v2777 = vpop.f32.mrb[0].mxu0
        %2778 = vmatprep.mubr.f32.mxu0 0.0
        %2779 = vmatmul.mubr.f32.gmra.mrb[0].mxu0 %v2090
        %v2780 = vpop.f32.mrb[0].mxu0
        %v2781 = vadd.f32 %v2666, %v2780
        %v2782 = vpop.f32.mrb[0].mxu0
        %2783 = vmatprep.mubr.f32.mxu0 0.0
        %2784 = vmatmul.mubr.f32.gmra.mrb[0].mxu0 %v2091
        %v2785 = vpop.f32.mrb[0].mxu0
        %v2786 = vadd.f32 %v2671, %v2785
        %v2787 = vpop.f32.mrb[0].mxu0
        %2788 = vmatprep.mubr.f32.mxu0 0.0
        %2789 = vmatmul.mubr.f32.gmra.mrb[0].mxu0 %v2092
        %v2790 = vpop.f32.mrb[0].mxu0
        %v2791 = vadd.f32 %v2676, %v2790
        %v2792 = vpop.f32.mrb[0].mxu0
        %2793 = vmatprep.mubr.f32.mxu0 0.0
        %2794 = vmatmul.mubr.f32.gmra.mrb[0].mxu0 %v2093
        %v2795 = vpop.f32.mrb[0].mxu0
        %v2796 = vadd.f32 %v2681, %v2795
        %v2797 = vpop.f32.mrb[0].mxu0
        %2798 = vmatprep.mubr.f32.mxu0 0.0
        %2799 = vmatmul.mubr.f32.gmra.mrb[0].mxu0 %v2094
        %v2800 = vpop.f32.mrb[0].mxu0
        %v2801 = vadd.f32 %v2686, %v2800
        %v2802 = vpop.f32.mrb[0].mxu0
        %2803 = vmatprep.mubr.f32.mxu0 0.0
        %2804 = vmatmul.mubr.f32.gmra.mrb[0].mxu0 %v2095
        %v2805 = vpop.f32.mrb[0].mxu0
        %v2806 = vadd.f32 %v2691, %v2805
        %v2807 = vpop.f32.mrb[0].mxu0
        %2808 = vmatprep.mubr.f32.mxu0 0.0
        %2809 = vmatmul.mubr.f32.gmra.mrb[0].mxu0 %v2096
        %v2810 = vpop.f32.mrb[0].mxu0
        %v2811 = vadd.f32 %v2696, %v2810
        %v2812 = vpop.f32.mrb[0].mxu0
        %2813 = vmatprep.mubr.f32.mxu0 0.0
        %2814 = vmatmul.mubr.f32.gmra.mrb[0].mxu0 %v2097
        %v2815 = vpop.f32.mrb[0].mxu0
        %v2816 = vadd.f32 %v2701, %v2815
        %v2817 = vpop.f32.mrb[0].mxu0
        %2818 = vmatprep.mubr.f32.mxu0 0.0
        %2819 = vmatmul.mubr.f32.gmra.mrb[0].mxu0 %v2098
        %v2820 = vpop.f32.mrb[0].mxu0
        %v2821 = vadd.f32 %v2706, %v2820
        %v2822 = vpop.f32.mrb[0].mxu0
        %2823 = vdwg.mxu0
        %2824 = vst [vmem:[#allocation3 + $0xb] sm:$0xff] %v2776
        %2825 = vst [vmem:[#allocation3 + $0x13] sm:$0xfc] %v2781
        %2826 = vst [vmem:[#allocation3 + $0x1b] sm:$0x3] %v2786
        %2827 = vst [vmem:[#allocation3 + $0x1b] sm:$0xf0] %v2786
        %2828 = vst [vmem:[#allocation3 + $0x23] sm:$0xf] %v2791
        %2829 = vst [vmem:[#allocation3 + $0x23] sm:$0xc0] %v2791
        %2830 = vst [vmem:[#allocation3 + $0x2b] sm:$0x3f] %v2796
        %2831 = vst [vmem:[#allocation3 + $0x33] sm:$0xff] %v2801
        %2832 = vst [vmem:[#allocation3 + $0x3b] sm:$0xfc] %v2806
        %2833 = vst [vmem:[#allocation3 + $0x43] sm:$0x3] %v2811
        %2834 = vst [vmem:[#allocation3 + $0x43] sm:$0xf0] %v2811
        %2835 = vst [vmem:[#allocation3 + $0x4b] sm:$0xf] %v2816
        %2836 = vst [vmem:[#allocation3 + $0x4b] sm:$0xc0] %v2816
        %2837 = vst [vmem:[#allocation3 + $0x53] sm:$0x3f] %v2821
        %v2838 = vld [vmem:[#allocation3] sm:$0xff]
        %v2839 = vld [vmem:[#allocation3 + $0x8] sm:$0xff]
        %v2840 = vld [vmem:[#allocation3 + $0x10] sm:$0xff]
        %v2841 = vld [vmem:[#allocation3 + $0x18] sm:$0xff]
        %v2842 = vld [vmem:[#allocation3 + $0x20] sm:$0xff]
        %v2843 = vld [vmem:[#allocation3 + $0x28] sm:$0xff]
        %v2844 = vld [vmem:[#allocation3 + $0x30] sm:$0xff]
        %v2845 = vld [vmem:[#allocation3 + $0x38] sm:$0xff]
        %v2846 = vld [vmem:[#allocation3 + $0x40] sm:$0xff]
        %v2847 = vld [vmem:[#allocation3 + $0x48] sm:$0x3f]
        %v2848 = vld [vmem:[#allocation3 + $0x1] sm:$0xff]
        %v2849 = vld [vmem:[#allocation3 + $0x9] sm:$0xff]
        %v2850 = vld [vmem:[#allocation3 + $0x11] sm:$0xff]
        %v2851 = vld [vmem:[#allocation3 + $0x19] sm:$0xff]
        %v2852 = vld [vmem:[#allocation3 + $0x21] sm:$0xff]
        %v2853 = vld [vmem:[#allocation3 + $0x29] sm:$0xff]
        %v2854 = vld [vmem:[#allocation3 + $0x31] sm:$0xff]
        %v2855 = vld [vmem:[#allocation3 + $0x39] sm:$0xff]
        %v2856 = vld [vmem:[#allocation3 + $0x41] sm:$0xff]
        %v2857 = vld [vmem:[#allocation3 + $0x49] sm:$0x3f]
        %v2858 = vld [vmem:[#allocation3 + $0x2] sm:$0xff]
        %v2859 = vld [vmem:[#allocation3 + $0xa] sm:$0xff]
        %v2860 = vld [vmem:[#allocation3 + $0x12] sm:$0xff]
        %v2861 = vld [vmem:[#allocation3 + $0x1a] sm:$0xff]
        %v2862 = vld [vmem:[#allocation3 + $0x22] sm:$0xff]
        %v2863 = vld [vmem:[#allocation3 + $0x2a] sm:$0xff]
        %v2864 = vld [vmem:[#allocation3 + $0x32] sm:$0xff]
        %v2865 = vld [vmem:[#allocation3 + $0x3a] sm:$0xff]
        %v2866 = vld [vmem:[#allocation3 + $0x42] sm:$0xff]
        %v2867 = vld [vmem:[#allocation3 + $0x4a] sm:$0x3f]
        %v2868 = vld [vmem:[#allocation3 + $0x4a] sm:$0xff]
        %v2869 = vld [vmem:[#allocation3 + $0x52] sm:$0x3f]
        %v2870 = vld [vmem:[#allocation3 + $0xb] sm:$0xff]
        %v2871 = vld [vmem:[#allocation3 + $0x13] sm:$0xff]
        %v2872 = vld [vmem:[#allocation3 + $0x1b] sm:$0xff]
        %v2873 = vld [vmem:[#allocation3 + $0x23] sm:$0xff]
        %v2874 = vld [vmem:[#allocation3 + $0x2b] sm:$0xff]
        %v2875 = vld [vmem:[#allocation3 + $0x33] sm:$0xff]
        %v2876 = vld [vmem:[#allocation3 + $0x3b] sm:$0xff]
        %v2877 = vld [vmem:[#allocation3 + $0x43] sm:$0xff]
        %v2878 = vld [vmem:[#allocation3 + $0x4b] sm:$0xff]
        %v2879 = vld [vmem:[#allocation3 + $0x53] sm:$0x3f]
        %v2880 = vld [vmem:[#allocation3 + $0xc] sm:$0xff]
        %v2881 = vld [vmem:[#allocation3 + $0x14] sm:$0xff]
        %v2882 = vld [vmem:[#allocation3 + $0x1c] sm:$0xff]
        %v2883 = vld [vmem:[#allocation3 + $0x24] sm:$0xff]
        %v2884 = vld [vmem:[#allocation3 + $0x2c] sm:$0xff]
        %v2885 = vld [vmem:[#allocation3 + $0x34] sm:$0xff]
        %v2886 = vld [vmem:[#allocation3 + $0x3c] sm:$0xff]
        %v2887 = vld [vmem:[#allocation3 + $0x44] sm:$0xff]
        %v2888 = vld [vmem:[#allocation3 + $0x4c] sm:$0xff]
        %v2889 = vld [vmem:[#allocation3 + $0x54] sm:$0x3f]
        %v2890 = vld [vmem:[#allocation3 + $0x54] sm:$0xff]
        %v2891 = vld [vmem:[#allocation3 + $0x5c] sm:$0x3f]
        %v2892 = vld [vmem:[#allocation3 + $0x15] sm:$0xff]
        %v2893 = vld [vmem:[#allocation3 + $0x1d] sm:$0xff]
        %v2894 = vld [vmem:[#allocation3 + $0x25] sm:$0xff]
        %v2895 = vld [vmem:[#allocation3 + $0x2d] sm:$0xff]
        %v2896 = vld [vmem:[#allocation3 + $0x35] sm:$0xff]
        %v2897 = vld [vmem:[#allocation3 + $0x3d] sm:$0xff]
        %v2898 = vld [vmem:[#allocation3 + $0x45] sm:$0xff]
        %v2899 = vld [vmem:[#allocation3 + $0x4d] sm:$0xff]
        %v2900 = vld [vmem:[#allocation3 + $0x55] sm:$0xff]
        %v2901 = vld [vmem:[#allocation3 + $0x5d] sm:$0x3f]
        %v2902 = vld [vmem:[#allocation3 + $0x16] sm:$0xff]
        %v2903 = vld [vmem:[#allocation3 + $0x1e] sm:$0xff]
        %v2904 = vld [vmem:[#allocation3 + $0x26] sm:$0xff]
        %v2905 = vld [vmem:[#allocation3 + $0x2e] sm:$0xff]
        %v2906 = vld [vmem:[#allocation3 + $0x36] sm:$0xff]
        %v2907 = vld [vmem:[#allocation3 + $0x3e] sm:$0xff]
        %v2908 = vld [vmem:[#allocation3 + $0x46] sm:$0xff]
        %v2909 = vld [vmem:[#allocation3 + $0x4e] sm:$0xff]
        %v2910 = vld [vmem:[#allocation3 + $0x56] sm:$0xff]
        %v2911 = vld [vmem:[#allocation3 + $0x5e] sm:$0x3f]
        %s2912 = scalar_lea.vmem %s1, 2304
        %v2913 = vld [vmem:[%s2912] sm:$0xff]
        %v2914 = vld [vmem:[%s2912 + $0x8] sm:$0xff]
        %v2915 = vld [vmem:[%s2912 + $0x10] sm:$0xff]
        %v2916 = vld [vmem:[%s2912 + $0x18] sm:$0xff]
        %v2917 = vld [vmem:[%s2912 + $0x20] sm:$0xff]
        %v2918 = vld [vmem:[%s2912 + $0x28] sm:$0xff]
        %v2919 = vld [vmem:[%s2912 + $0x30] sm:$0xff]
        %v2920 = vld [vmem:[%s2912 + $0x38] sm:$0xff]
        %v2921 = vld [vmem:[%s2912 + $0x40] sm:$0xff]
        %v2922 = vld [vmem:[%s2912 + $0x48] sm:$0xff]
        %v2923 = vld [vmem:[%s2912 + $0x50] sm:$0xff]
        %v2924 = vld [vmem:[%s2912 + $0x58] sm:$0xff]
        %v2925 = vld [vmem:[%s2912 + $0x60] sm:$0xff]
        %v2926 = vld [vmem:[%s2912 + $0x68] sm:$0xff]
        %v2927 = vld [vmem:[%s2912 + $0x70] sm:$0xff]
        %v2928 = vld [vmem:[%s2912 + $0x78] sm:$0xff]
        %v2929 = vld [vmem:[%s2912 + $0x80] sm:$0xff]
        %v2930 = vld [vmem:[%s2912 + $0x88] sm:$0xff]
        %v2931 = vld [vmem:[%s2912 + $0x90] sm:$0xff]
        %v2932 = vld [vmem:[%s2912 + $0x98] sm:$0xff]
        %v2933 = vld [vmem:[%s2912 + $0xa0] sm:$0xff]
        %v2934 = vld [vmem:[%s2912 + $0xa8] sm:$0xff]
        %v2935 = vld [vmem:[%s2912 + $0xb0] sm:$0xff]
        %v2936 = vld [vmem:[%s2912 + $0xb8] sm:$0xff]
        %v2937 = vld [vmem:[%s2912 + $0xc0] sm:$0xff]
        %v2938 = vld [vmem:[%s2912 + $0xc8] sm:$0xff]
        %v2939 = vld [vmem:[%s2912 + $0xd0] sm:$0xff]
        %v2940 = vld [vmem:[%s2912 + $0xd8] sm:$0xff]
        %v2941 = vld [vmem:[%s2912 + $0xe0] sm:$0xff]
        %v2942 = vld [vmem:[%s2912 + $0xe8] sm:$0xff]
        %v2943 = vld [vmem:[%s2912 + $0xf0] sm:$0xff]
        %v2944 = vld [vmem:[%s2912 + $0xf8] sm:$0xff]
        %v2945 = vld [vmem:[%s2912 + $0x100] sm:$0xff]
        %v2946 = vld [vmem:[%s2912 + $0x108] sm:$0xff]
        %v2947 = vld [vmem:[%s2912 + $0x110] sm:$0xff]
        %v2948 = vld [vmem:[%s2912 + $0x118] sm:$0xff]
        %v2949 = vld [vmem:[%s2912 + $0x120] sm:$0xff]
        %v2950 = vld [vmem:[%s2912 + $0x128] sm:$0xff]
        %v2951 = vld [vmem:[%s2912 + $0x130] sm:$0xff]
        %v2952 = vld [vmem:[%s2912 + $0x138] sm:$0xff]
        %v2953 = vld [vmem:[%s2912 + $0x140] sm:$0xff]
        %v2954 = vld [vmem:[%s2912 + $0x148] sm:$0xff]
        %v2955 = vld [vmem:[%s2912 + $0x150] sm:$0xff]
        %v2956 = vld [vmem:[%s2912 + $0x158] sm:$0xff]
        %v2957 = vld [vmem:[%s2912 + $0x160] sm:$0xff]
        %v2958 = vld [vmem:[%s2912 + $0x168] sm:$0xff]
        %v2959 = vld [vmem:[%s2912 + $0x170] sm:$0xff]
        %v2960 = vld [vmem:[%s2912 + $0x178] sm:$0xff]
        %v2961 = vld [vmem:[%s2912 + $0x180] sm:$0xff]
        %v2962 = vld [vmem:[%s2912 + $0x188] sm:$0xff]
        %v2963 = vld [vmem:[%s2912 + $0x190] sm:$0xff]
        %v2964 = vld [vmem:[%s2912 + $0x198] sm:$0xff]
        %v2965 = vld [vmem:[%s2912 + $0x1a0] sm:$0xff]
        %v2966 = vld [vmem:[%s2912 + $0x1a8] sm:$0xff]
        %v2967 = vld [vmem:[%s2912 + $0x1b0] sm:$0xff]
        %v2968 = vld [vmem:[%s2912 + $0x1b8] sm:$0xff]
        %v2969 = vld [vmem:[%s2912 + $0x1c0] sm:$0xff]
        %v2970 = vld [vmem:[%s2912 + $0x1c8] sm:$0xff]
        %v2971 = vld [vmem:[%s2912 + $0x1d0] sm:$0xff]
        %v2972 = vld [vmem:[%s2912 + $0x1d8] sm:$0xff]
        %v2973 = vld [vmem:[%s2912 + $0x1e0] sm:$0xff]
        %v2974 = vld [vmem:[%s2912 + $0x1e8] sm:$0xff]
        %v2975 = vld [vmem:[%s2912 + $0x1f0] sm:$0xff]
        %v2976 = vld [vmem:[%s2912 + $0x1f8] sm:$0xff]
        %v2977 = vld [vmem:[%s2912 + $0x200] sm:$0xff]
        %v2978 = vld [vmem:[%s2912 + $0x208] sm:$0xff]
        %v2979 = vld [vmem:[%s2912 + $0x210] sm:$0xff]
        %v2980 = vld [vmem:[%s2912 + $0x218] sm:$0xff]
        %v2981 = vld [vmem:[%s2912 + $0x220] sm:$0xff]
        %v2982 = vld [vmem:[%s2912 + $0x228] sm:$0xff]
        %v2983 = vld [vmem:[%s2912 + $0x230] sm:$0xff]
        %v2984 = vld [vmem:[%s2912 + $0x238] sm:$0xff]
        %v2985 = vld [vmem:[%s2912 + $0x240] sm:$0xff]
        %v2986 = vld [vmem:[%s2912 + $0x248] sm:$0xff]
        %v2987 = vld [vmem:[%s2912 + $0x250] sm:$0xff]
        %v2988 = vld [vmem:[%s2912 + $0x258] sm:$0xff]
        %v2989 = vld [vmem:[%s2912 + $0x260] sm:$0xff]
        %v2990 = vld [vmem:[%s2912 + $0x268] sm:$0xff]
        %v2991 = vld [vmem:[%s2912 + $0x270] sm:$0xff]
        %v2992 = vld [vmem:[%s2912 + $0x278] sm:$0xff]
        %v2993 = vld [vmem:[%s2912 + $0x280] sm:$0xff]
        %v2994 = vld [vmem:[%s2912 + $0x288] sm:$0xff]
        %v2995 = vld [vmem:[%s2912 + $0x290] sm:$0xff]
        %v2996 = vld [vmem:[%s2912 + $0x298] sm:$0xff]
        %v2997 = vld [vmem:[%s2912 + $0x2a0] sm:$0xff]
        %v2998 = vld [vmem:[%s2912 + $0x2a8] sm:$0xff]
        %v2999 = vld [vmem:[%s2912 + $0x2b0] sm:$0xff]
        %v3000 = vld [vmem:[%s2912 + $0x2b8] sm:$0xff]
        %v3001 = vld [vmem:[%s2912 + $0x2c0] sm:$0xff]
        %v3002 = vld [vmem:[%s2912 + $0x2c8] sm:$0xff]
        %v3003 = vld [vmem:[%s2912 + $0x2d0] sm:$0xff]
        %v3004 = vld [vmem:[%s2912 + $0x2d8] sm:$0xff]
        %v3005 = vld [vmem:[%s2912 + $0x2e0] sm:$0xff]
        %v3006 = vld [vmem:[%s2912 + $0x2e8] sm:$0xff]
        %v3007 = vld [vmem:[%s2912 + $0x2f0] sm:$0xff]
        %v3008 = vld [vmem:[%s2912 + $0x2f8] sm:$0xff]
        %v3009 = vld [vmem:[%s2912 + $0x300] sm:$0xff]
        %v3010 = vld [vmem:[%s2912 + $0x308] sm:$0xff]
        %v3011 = vld [vmem:[%s2912 + $0x310] sm:$0xff]
        %v3012 = vld [vmem:[%s2912 + $0x318] sm:$0xff]
        %v3013 = vld [vmem:[%s2912 + $0x320] sm:$0xff]
        %v3014 = vld [vmem:[%s2912 + $0x328] sm:$0xff]
        %v3015 = vld [vmem:[%s2912 + $0x330] sm:$0xff]
        %v3016 = vld [vmem:[%s2912 + $0x338] sm:$0xff]
        %v3017 = vld [vmem:[%s2912 + $0x340] sm:$0xff]
        %v3018 = vld [vmem:[%s2912 + $0x348] sm:$0xff]
        %v3019 = vld [vmem:[%s2912 + $0x350] sm:$0xff]
        %v3020 = vld [vmem:[%s2912 + $0x358] sm:$0xff]
        %v3021 = vld [vmem:[%s2912 + $0x360] sm:$0xff]
        %v3022 = vld [vmem:[%s2912 + $0x368] sm:$0xff]
        %v3023 = vld [vmem:[%s2912 + $0x370] sm:$0xff]
        %v3024 = vld [vmem:[%s2912 + $0x378] sm:$0xff]
        %v3025 = vld [vmem:[%s2912 + $0x380] sm:$0xff]
        %v3026 = vld [vmem:[%s2912 + $0x388] sm:$0xff]
        %v3027 = vld [vmem:[%s2912 + $0x390] sm:$0xff]
        %v3028 = vld [vmem:[%s2912 + $0x398] sm:$0xff]
        %v3029 = vld [vmem:[%s2912 + $0x3a0] sm:$0xff]
        %v3030 = vld [vmem:[%s2912 + $0x3a8] sm:$0xff]
        %v3031 = vld [vmem:[%s2912 + $0x3b0] sm:$0xff]
        %v3032 = vld [vmem:[%s2912 + $0x3b8] sm:$0xff]
        %v3033 = vld [vmem:[%s2912 + $0x3c0] sm:$0xff]
        %v3034 = vld [vmem:[%s2912 + $0x3c8] sm:$0xff]
        %v3035 = vld [vmem:[%s2912 + $0x3d0] sm:$0xff]
        %v3036 = vld [vmem:[%s2912 + $0x3d8] sm:$0xff]
        %v3037 = vld [vmem:[%s2912 + $0x3e0] sm:$0xff]
        %v3038 = vld [vmem:[%s2912 + $0x3e8] sm:$0xff]
        %v3039 = vld [vmem:[%s2912 + $0x3f0] sm:$0xff]
        %v3040 = vld [vmem:[%s2912 + $0x3f8] sm:$0xff]
        %v3041 = vld [vmem:[%s2912 + $0x400] sm:$0xff]
        %v3042 = vld [vmem:[%s2912 + $0x408] sm:$0xff]
        %v3043 = vld [vmem:[%s2912 + $0x410] sm:$0xff]
        %v3044 = vld [vmem:[%s2912 + $0x418] sm:$0xff]
        %v3045 = vld [vmem:[%s2912 + $0x420] sm:$0xff]
        %v3046 = vld [vmem:[%s2912 + $0x428] sm:$0xff]
        %v3047 = vld [vmem:[%s2912 + $0x430] sm:$0xff]
        %v3048 = vld [vmem:[%s2912 + $0x438] sm:$0xff]
        %v3049 = vld [vmem:[%s2912 + $0x440] sm:$0xff]
        %v3050 = vld [vmem:[%s2912 + $0x448] sm:$0xff]
        %v3051 = vld [vmem:[%s2912 + $0x450] sm:$0xff]
        %v3052 = vld [vmem:[%s2912 + $0x458] sm:$0xff]
        %v3053 = vld [vmem:[%s2912 + $0x460] sm:$0xff]
        %v3054 = vld [vmem:[%s2912 + $0x468] sm:$0xff]
        %v3055 = vld [vmem:[%s2912 + $0x470] sm:$0xff]
        %v3056 = vld [vmem:[%s2912 + $0x478] sm:$0xff]
        %v3057 = vld [vmem:[%s2 + $0x2] sm:$0x1]
        %v3058 = vlaneseq
        %v3059 = vshrl.u32 %v3058, 7
        %v3060 = vsub.s32 0, %v3059
        %v3061 = vrot.slane %v3057, %v3060
        %3062 = vmatprep.subr.mxu0 0.0
        %3063 = vmatpush1.msra.mxu0 %v2913
        %3064 = vmatprep.subr.mxu0 0.0
        %3065 = vmatpush1.msra.mxu0 %v2914
        %3066 = vmatprep.subr.mxu0 0.0
        %3067 = vmatpush1.msra.mxu0 %v2915
        %3068 = vmatprep.subr.mxu0 0.0
        %3069 = vmatpush1.msra.mxu0 %v2916
        %3070 = vmatprep.subr.mxu0 0.0
        %3071 = vmatpush1.msra.mxu0 %v2917
        %3072 = vmatprep.subr.mxu0 0.0
        %3073 = vmatpush1.msra.mxu0 %v2918
        %3074 = vmatprep.subr.mxu0 0.0
        %3075 = vmatpush1.msra.mxu0 %v2919
        %3076 = vmatprep.subr.mxu0 0.0
        %3077 = vmatpush1.msra.mxu0 %v2920
        %3078 = vmatprep.subr.mxu0 0.0
        %3079 = vmatpush1.msra.mxu0 %v2921
        %3080 = vmatprep.subr.mxu0 0.0
        %3081 = vmatpush1.msra.mxu0 %v2922
        %3082 = vmatprep.subr.mxu0 0.0
        %3083 = vmatpush1.msra.mxu0 %v2923
        %3084 = vmatprep.subr.mxu0 0.0
        %3085 = vmatpush1.msra.mxu0 %v2924
        %3086 = vmatprep.subr.mxu0 0.0
        %3087 = vmatpush1.msra.mxu0 %v2925
        %3088 = vmatprep.subr.mxu0 0.0
        %3089 = vmatpush1.msra.mxu0 %v2926
        %3090 = vmatprep.subr.mxu0 0.0
        %3091 = vmatpush1.msra.mxu0 %v2927
        %3092 = vmatprep.subr.mxu0 0.0
        %3093 = vmatpush1.msra.mxu0 %v2928
        %3094 = vmatprep.subr.mxu0 0.0
        %3095 = vmatpush1.msra.mxu0 %v2929
        %3096 = vmatprep.subr.mxu0 0.0
        %3097 = vmatpush1.msra.mxu0 %v2930
        %3098 = vmatprep.subr.mxu0 0.0
        %3099 = vmatpush1.msra.mxu0 %v2931
        %3100 = vmatprep.subr.mxu0 0.0
        %3101 = vmatpush1.msra.mxu0 %v2932
        %3102 = vmatprep.subr.mxu0 0.0
        %3103 = vmatpush1.msra.mxu0 %v2933
        %3104 = vmatprep.subr.mxu0 0.0
        %3105 = vmatpush1.msra.mxu0 %v2934
        %3106 = vmatprep.subr.mxu0 0.0
        %3107 = vmatpush1.msra.mxu0 %v2935
        %3108 = vmatprep.subr.mxu0 0.0
        %3109 = vmatpush1.msra.mxu0 %v2936
        %3110 = vmatprep.subr.mxu0 0.0
        %3111 = vmatpush1.msra.mxu0 %v2937
        %3112 = vmatprep.subr.mxu0 0.0
        %3113 = vmatpush1.msra.mxu0 %v2938
        %3114 = vmatprep.subr.mxu0 0.0
        %3115 = vmatpush1.msra.mxu0 %v2939
        %3116 = vmatprep.subr.mxu0 0.0
        %3117 = vmatpush1.msra.mxu0 %v2940
        %3118 = vmatprep.subr.mxu0 0.0
        %3119 = vmatpush1.msra.mxu0 %v2941
        %3120 = vmatprep.subr.mxu0 0.0
        %3121 = vmatpush1.msra.mxu0 %v2942
        %3122 = vmatprep.subr.mxu0 0.0
        %3123 = vmatpush1.msra.mxu0 %v2943
        %3124 = vmatprep.subr.mxu0 0.0
        %3125 = vmatpush1.msra.mxu0 %v2944
        %3126 = vmatprep.mubr.f32.mxu0 %v2848
        %3127 = vmatmul.mubr.f32.gmra.mrb[0].mxu0 %v2838
        %v3128 = vpop.f32.mrb[0].mxu0
        %v3129 = vadd.f32 %v3061, %v3128
        %v3130 = vpop.f32.mrb[0].mxu0
        %3131 = vmatprep.mubr.f32.mxu0 %v2849
        %3132 = vmatmul.mubr.f32.gmra.mrb[0].mxu0 %v2839
        %v3133 = vpop.f32.mrb[0].mxu0
        %v3134 = vadd.f32 %v3061, %v3133
        %v3135 = vpop.f32.mrb[0].mxu0
        %3136 = vmatprep.mubr.f32.mxu0 %v2850
        %3137 = vmatmul.mubr.f32.gmra.mrb[0].mxu0 %v2840
        %v3138 = vpop.f32.mrb[0].mxu0
        %v3139 = vadd.f32 %v3061, %v3138
        %v3140 = vpop.f32.mrb[0].mxu0
        %3141 = vmatprep.mubr.f32.mxu0 %v2851
        %3142 = vmatmul.mubr.f32.gmra.mrb[0].mxu0 %v2841
        %v3143 = vpop.f32.mrb[0].mxu0
        %v3144 = vadd.f32 %v3061, %v3143
        %v3145 = vpop.f32.mrb[0].mxu0
        %3146 = vmatprep.mubr.f32.mxu0 %v2852
        %3147 = vmatmul.mubr.f32.gmra.mrb[0].mxu0 %v2842
        %v3148 = vpop.f32.mrb[0].mxu0
        %v3149 = vadd.f32 %v3061, %v3148
        %v3150 = vpop.f32.mrb[0].mxu0
        %3151 = vmatprep.mubr.f32.mxu0 %v2853
        %3152 = vmatmul.mubr.f32.gmra.mrb[0].mxu0 %v2843
        %v3153 = vpop.f32.mrb[0].mxu0
        %v3154 = vadd.f32 %v3061, %v3153
        %v3155 = vpop.f32.mrb[0].mxu0
        %3156 = vmatprep.mubr.f32.mxu0 %v2854
        %3157 = vmatmul.mubr.f32.gmra.mrb[0].mxu0 %v2844
        %v3158 = vpop.f32.mrb[0].mxu0
        %v3159 = vadd.f32 %v3061, %v3158
        %v3160 = vpop.f32.mrb[0].mxu0
        %3161 = vmatprep.mubr.f32.mxu0 %v2855
        %3162 = vmatmul.mubr.f32.gmra.mrb[0].mxu0 %v2845
        %v3163 = vpop.f32.mrb[0].mxu0
        %v3164 = vadd.f32 %v3061, %v3163
        %v3165 = vpop.f32.mrb[0].mxu0
        %3166 = vmatprep.mubr.f32.mxu0 %v2856
        %3167 = vmatmul.mubr.f32.gmra.mrb[0].mxu0 %v2846
        %v3168 = vpop.f32.mrb[0].mxu0
        %v3169 = vadd.f32 %v3061, %v3168
        %v3170 = vpop.f32.mrb[0].mxu0
        %3171 = vmatprep.mubr.f32.mxu0 %v2857
        %3172 = vmatmul.mubr.f32.gmra.mrb[0].mxu0 %v2847
        %v3173 = vpop.f32.mrb[0].mxu0
        %v3174 = vadd.f32 %v3061, %v3173
        %v3175 = vpop.f32.mrb[0].mxu0
        %3176 = vdwg.mxu0
        %3177 = vmatprep.subr.mxu0 0.0
        %3178 = vmatpush1.msra.mxu0 %v2945
        %3179 = vmatprep.subr.mxu0 0.0
        %3180 = vmatpush1.msra.mxu0 %v2946
        %3181 = vmatprep.subr.mxu0 0.0
        %3182 = vmatpush1.msra.mxu0 %v2947
        %3183 = vmatprep.subr.mxu0 0.0
        %3184 = vmatpush1.msra.mxu0 %v2948
        %3185 = vmatprep.subr.mxu0 0.0
        %3186 = vmatpush1.msra.mxu0 %v2949
        %3187 = vmatprep.subr.mxu0 0.0
        %3188 = vmatpush1.msra.mxu0 %v2950
        %3189 = vmatprep.subr.mxu0 0.0
        %3190 = vmatpush1.msra.mxu0 %v2951
        %3191 = vmatprep.subr.mxu0 0.0
        %3192 = vmatpush1.msra.mxu0 %v2952
        %3193 = vmatprep.subr.mxu0 0.0
        %3194 = vmatpush1.msra.mxu0 %v2953
        %3195 = vmatprep.subr.mxu0 0.0
        %3196 = vmatpush1.msra.mxu0 %v2954
        %3197 = vmatprep.subr.mxu0 0.0
        %3198 = vmatpush1.msra.mxu0 %v2955
        %3199 = vmatprep.subr.mxu0 0.0
        %3200 = vmatpush1.msra.mxu0 %v2956
        %3201 = vmatprep.subr.mxu0 0.0
        %3202 = vmatpush1.msra.mxu0 %v2957
        %3203 = vmatprep.subr.mxu0 0.0
        %3204 = vmatpush1.msra.mxu0 %v2958
        %3205 = vmatprep.subr.mxu0 0.0
        %3206 = vmatpush1.msra.mxu0 %v2959
        %3207 = vmatprep.subr.mxu0 0.0
        %3208 = vmatpush1.msra.mxu0 %v2960
        %3209 = vmatprep.subr.mxu0 0.0
        %3210 = vmatpush1.msra.mxu0 %v2961
        %3211 = vmatprep.subr.mxu0 0.0
        %3212 = vmatpush1.msra.mxu0 %v2962
        %3213 = vmatprep.subr.mxu0 0.0
        %3214 = vmatpush1.msra.mxu0 %v2963
        %3215 = vmatprep.subr.mxu0 0.0
        %3216 = vmatpush1.msra.mxu0 %v2964
        %3217 = vmatprep.subr.mxu0 0.0
        %3218 = vmatpush1.msra.mxu0 %v2965
        %3219 = vmatprep.subr.mxu0 0.0
        %3220 = vmatpush1.msra.mxu0 %v2966
        %3221 = vmatprep.subr.mxu0 0.0
        %3222 = vmatpush1.msra.mxu0 %v2967
        %3223 = vmatprep.subr.mxu0 0.0
        %3224 = vmatpush1.msra.mxu0 %v2968
        %3225 = vmatprep.subr.mxu0 0.0
        %3226 = vmatpush1.msra.mxu0 %v2969
        %3227 = vmatprep.subr.mxu0 0.0
        %3228 = vmatpush1.msra.mxu0 %v2970
        %3229 = vmatprep.subr.mxu0 0.0
        %3230 = vmatpush1.msra.mxu0 %v2971
        %3231 = vmatprep.subr.mxu0 0.0
        %3232 = vmatpush1.msra.mxu0 %v2972
        %3233 = vmatprep.subr.mxu0 0.0
        %3234 = vmatpush1.msra.mxu0 %v2973
        %3235 = vmatprep.subr.mxu0 0.0
        %3236 = vmatpush1.msra.mxu0 %v2974
        %3237 = vmatprep.subr.mxu0 0.0
        %3238 = vmatpush1.msra.mxu0 %v2975
        %3239 = vmatprep.subr.mxu0 0.0
        %3240 = vmatpush1.msra.mxu0 %v2976
        %3241 = vmatprep.mubr.f32.mxu0 %v2859
        %3242 = vmatmul.mubr.f32.gmra.mrb[0].mxu0 %v2858
        %v3243 = vpop.f32.mrb[0].mxu0
        %v3244 = vadd.f32 %v3129, %v3243
        %v3245 = vpop.f32.mrb[0].mxu0
        %3246 = vmatprep.mubr.f32.mxu0 %v2860
        %3247 = vmatmul.mubr.f32.gmra.mrb[0].mxu0 %v2859
        %v3248 = vpop.f32.mrb[0].mxu0
        %v3249 = vadd.f32 %v3134, %v3248
        %v3250 = vpop.f32.mrb[0].mxu0
        %3251 = vmatprep.mubr.f32.mxu0 %v2861
        %3252 = vmatmul.mubr.f32.gmra.mrb[0].mxu0 %v2860
        %v3253 = vpop.f32.mrb[0].mxu0
        %v3254 = vadd.f32 %v3139, %v3253
        %v3255 = vpop.f32.mrb[0].mxu0
        %3256 = vmatprep.mubr.f32.mxu0 %v2862
        %3257 = vmatmul.mubr.f32.gmra.mrb[0].mxu0 %v2861
        %v3258 = vpop.f32.mrb[0].mxu0
        %v3259 = vadd.f32 %v3144, %v3258
        %v3260 = vpop.f32.mrb[0].mxu0
        %3261 = vmatprep.mubr.f32.mxu0 %v2863
        %3262 = vmatmul.mubr.f32.gmra.mrb[0].mxu0 %v2862
        %v3263 = vpop.f32.mrb[0].mxu0
        %v3264 = vadd.f32 %v3149, %v3263
        %v3265 = vpop.f32.mrb[0].mxu0
        %3266 = vmatprep.mubr.f32.mxu0 %v2864
        %3267 = vmatmul.mubr.f32.gmra.mrb[0].mxu0 %v2863
        %v3268 = vpop.f32.mrb[0].mxu0
        %v3269 = vadd.f32 %v3154, %v3268
        %v3270 = vpop.f32.mrb[0].mxu0
        %3271 = vmatprep.mubr.f32.mxu0 %v2865
        %3272 = vmatmul.mubr.f32.gmra.mrb[0].mxu0 %v2864
        %v3273 = vpop.f32.mrb[0].mxu0
        %v3274 = vadd.f32 %v3159, %v3273
        %v3275 = vpop.f32.mrb[0].mxu0
        %3276 = vmatprep.mubr.f32.mxu0 %v2866
        %3277 = vmatmul.mubr.f32.gmra.mrb[0].mxu0 %v2865
        %v3278 = vpop.f32.mrb[0].mxu0
        %v3279 = vadd.f32 %v3164, %v3278
        %v3280 = vpop.f32.mrb[0].mxu0
        %3281 = vmatprep.mubr.f32.mxu0 %v2868
        %3282 = vmatmul.mubr.f32.gmra.mrb[0].mxu0 %v2866
        %v3283 = vpop.f32.mrb[0].mxu0
        %v3284 = vadd.f32 %v3169, %v3283
        %v3285 = vpop.f32.mrb[0].mxu0
        %3286 = vmatprep.mubr.f32.mxu0 %v2869
        %3287 = vmatmul.mubr.f32.gmra.mrb[0].mxu0 %v2867
        %v3288 = vpop.f32.mrb[0].mxu0
        %v3289 = vadd.f32 %v3174, %v3288
        %v3290 = vpop.f32.mrb[0].mxu0
        %3291 = vdwg.mxu0
        %3292 = vmatprep.subr.mxu0 0.0
        %3293 = vmatpush1.msra.mxu0 %v2977
        %3294 = vmatprep.subr.mxu0 0.0
        %3295 = vmatpush1.msra.mxu0 %v2978
        %3296 = vmatprep.subr.mxu0 0.0
        %3297 = vmatpush1.msra.mxu0 %v2979
        %3298 = vmatprep.subr.mxu0 0.0
        %3299 = vmatpush1.msra.mxu0 %v2980
        %3300 = vmatprep.subr.mxu0 0.0
        %3301 = vmatpush1.msra.mxu0 %v2981
        %3302 = vmatprep.subr.mxu0 0.0
        %3303 = vmatpush1.msra.mxu0 %v2982
        %3304 = vmatprep.subr.mxu0 0.0
        %3305 = vmatpush1.msra.mxu0 %v2983
        %3306 = vmatprep.subr.mxu0 0.0
        %3307 = vmatpush1.msra.mxu0 %v2984
        %3308 = vmatprep.subr.mxu0 0.0
        %3309 = vmatpush1.msra.mxu0 %v2985
        %3310 = vmatprep.subr.mxu0 0.0
        %3311 = vmatpush1.msra.mxu0 %v2986
        %3312 = vmatprep.subr.mxu0 0.0
        %3313 = vmatpush1.msra.mxu0 %v2987
        %3314 = vmatprep.subr.mxu0 0.0
        %3315 = vmatpush1.msra.mxu0 %v2988
        %3316 = vmatprep.subr.mxu0 0.0
        %3317 = vmatpush1.msra.mxu0 %v2989
        %3318 = vmatprep.subr.mxu0 0.0
        %3319 = vmatpush1.msra.mxu0 %v2990
        %3320 = vmatprep.subr.mxu0 0.0
        %3321 = vmatpush1.msra.mxu0 %v2991
        %3322 = vmatprep.subr.mxu0 0.0
        %3323 = vmatpush1.msra.mxu0 %v2992
        %3324 = vmatprep.subr.mxu0 0.0
        %3325 = vmatpush1.msra.mxu0 %v2993
        %3326 = vmatprep.subr.mxu0 0.0
        %3327 = vmatpush1.msra.mxu0 %v2994
        %3328 = vmatprep.subr.mxu0 0.0
        %3329 = vmatpush1.msra.mxu0 %v2995
        %3330 = vmatprep.subr.mxu0 0.0
        %3331 = vmatpush1.msra.mxu0 %v2996
        %3332 = vmatprep.subr.mxu0 0.0
        %3333 = vmatpush1.msra.mxu0 %v2997
        %3334 = vmatprep.subr.mxu0 0.0
        %3335 = vmatpush1.msra.mxu0 %v2998
        %3336 = vmatprep.subr.mxu0 0.0
        %3337 = vmatpush1.msra.mxu0 %v2999
        %3338 = vmatprep.subr.mxu0 0.0
        %3339 = vmatpush1.msra.mxu0 %v3000
        %3340 = vmatprep.subr.mxu0 0.0
        %3341 = vmatpush1.msra.mxu0 %v3001
        %3342 = vmatprep.subr.mxu0 0.0
        %3343 = vmatpush1.msra.mxu0 %v3002
        %3344 = vmatprep.subr.mxu0 0.0
        %3345 = vmatpush1.msra.mxu0 %v3003
        %3346 = vmatprep.subr.mxu0 0.0
        %3347 = vmatpush1.msra.mxu0 %v3004
        %3348 = vmatprep.subr.mxu0 0.0
        %3349 = vmatpush1.msra.mxu0 %v3005
        %3350 = vmatprep.subr.mxu0 0.0
        %3351 = vmatpush1.msra.mxu0 %v3006
        %3352 = vmatprep.subr.mxu0 0.0
        %3353 = vmatpush1.msra.mxu0 %v3007
        %3354 = vmatprep.subr.mxu0 0.0
        %3355 = vmatpush1.msra.mxu0 %v3008
        %3356 = vmatprep.mubr.f32.mxu0 %v2880
        %3357 = vmatmul.mubr.f32.gmra.mrb[0].mxu0 %v2870
        %v3358 = vpop.f32.mrb[0].mxu0
        %v3359 = vadd.f32 %v3244, %v3358
        %v3360 = vpop.f32.mrb[0].mxu0
        %3361 = vmatprep.mubr.f32.mxu0 %v2881
        %3362 = vmatmul.mubr.f32.gmra.mrb[0].mxu0 %v2871
        %v3363 = vpop.f32.mrb[0].mxu0
        %v3364 = vadd.f32 %v3249, %v3363
        %v3365 = vpop.f32.mrb[0].mxu0
        %3366 = vmatprep.mubr.f32.mxu0 %v2882
        %3367 = vmatmul.mubr.f32.gmra.mrb[0].mxu0 %v2872
        %v3368 = vpop.f32.mrb[0].mxu0
        %v3369 = vadd.f32 %v3254, %v3368
        %v3370 = vpop.f32.mrb[0].mxu0
        %3371 = vmatprep.mubr.f32.mxu0 %v2883
        %3372 = vmatmul.mubr.f32.gmra.mrb[0].mxu0 %v2873
        %v3373 = vpop.f32.mrb[0].mxu0
        %v3374 = vadd.f32 %v3259, %v3373
        %v3375 = vpop.f32.mrb[0].mxu0
        %3376 = vmatprep.mubr.f32.mxu0 %v2884
        %3377 = vmatmul.mubr.f32.gmra.mrb[0].mxu0 %v2874
        %v3378 = vpop.f32.mrb[0].mxu0
        %v3379 = vadd.f32 %v3264, %v3378
        %v3380 = vpop.f32.mrb[0].mxu0
        %3381 = vmatprep.mubr.f32.mxu0 %v2885
        %3382 = vmatmul.mubr.f32.gmra.mrb[0].mxu0 %v2875
        %v3383 = vpop.f32.mrb[0].mxu0
        %v3384 = vadd.f32 %v3269, %v3383
        %v3385 = vpop.f32.mrb[0].mxu0
        %3386 = vmatprep.mubr.f32.mxu0 %v2886
        %3387 = vmatmul.mubr.f32.gmra.mrb[0].mxu0 %v2876
        %v3388 = vpop.f32.mrb[0].mxu0
        %v3389 = vadd.f32 %v3274, %v3388
        %v3390 = vpop.f32.mrb[0].mxu0
        %3391 = vmatprep.mubr.f32.mxu0 %v2887
        %3392 = vmatmul.mubr.f32.gmra.mrb[0].mxu0 %v2877
        %v3393 = vpop.f32.mrb[0].mxu0
        %v3394 = vadd.f32 %v3279, %v3393
        %v3395 = vpop.f32.mrb[0].mxu0
        %3396 = vmatprep.mubr.f32.mxu0 %v2888
        %3397 = vmatmul.mubr.f32.gmra.mrb[0].mxu0 %v2878
        %v3398 = vpop.f32.mrb[0].mxu0
        %v3399 = vadd.f32 %v3284, %v3398
        %v3400 = vpop.f32.mrb[0].mxu0
        %3401 = vmatprep.mubr.f32.mxu0 %v2889
        %3402 = vmatmul.mubr.f32.gmra.mrb[0].mxu0 %v2879
        %v3403 = vpop.f32.mrb[0].mxu0
        %v3404 = vadd.f32 %v3289, %v3403
        %v3405 = vpop.f32.mrb[0].mxu0
        %3406 = vdwg.mxu0
        %3407 = vmatprep.subr.mxu0 0.0
        %3408 = vmatpush1.msra.mxu0 %v3009
        %3409 = vmatprep.subr.mxu0 0.0
        %3410 = vmatpush1.msra.mxu0 %v3010
        %3411 = vmatprep.subr.mxu0 0.0
        %3412 = vmatpush1.msra.mxu0 %v3011
        %3413 = vmatprep.subr.mxu0 0.0
        %3414 = vmatpush1.msra.mxu0 %v3012
        %3415 = vmatprep.subr.mxu0 0.0
        %3416 = vmatpush1.msra.mxu0 %v3013
        %3417 = vmatprep.subr.mxu0 0.0
        %3418 = vmatpush1.msra.mxu0 %v3014
        %3419 = vmatprep.subr.mxu0 0.0
        %3420 = vmatpush1.msra.mxu0 %v3015
        %3421 = vmatprep.subr.mxu0 0.0
        %3422 = vmatpush1.msra.mxu0 %v3016
        %3423 = vmatprep.subr.mxu0 0.0
        %3424 = vmatpush1.msra.mxu0 %v3017
        %3425 = vmatprep.subr.mxu0 0.0
        %3426 = vmatpush1.msra.mxu0 %v3018
        %3427 = vmatprep.subr.mxu0 0.0
        %3428 = vmatpush1.msra.mxu0 %v3019
        %3429 = vmatprep.subr.mxu0 0.0
        %3430 = vmatpush1.msra.mxu0 %v3020
        %3431 = vmatprep.subr.mxu0 0.0
        %3432 = vmatpush1.msra.mxu0 %v3021
        %3433 = vmatprep.subr.mxu0 0.0
        %3434 = vmatpush1.msra.mxu0 %v3022
        %3435 = vmatprep.subr.mxu0 0.0
        %3436 = vmatpush1.msra.mxu0 %v3023
        %3437 = vmatprep.subr.mxu0 0.0
        %3438 = vmatpush1.msra.mxu0 %v3024
        %3439 = vmatprep.subr.mxu0 0.0
        %3440 = vmatpush1.msra.mxu0 %v3025
        %3441 = vmatprep.subr.mxu0 0.0
        %3442 = vmatpush1.msra.mxu0 %v3026
        %3443 = vmatprep.subr.mxu0 0.0
        %3444 = vmatpush1.msra.mxu0 %v3027
        %3445 = vmatprep.subr.mxu0 0.0
        %3446 = vmatpush1.msra.mxu0 %v3028
        %3447 = vmatprep.subr.mxu0 0.0
        %3448 = vmatpush1.msra.mxu0 %v3029
        %3449 = vmatprep.subr.mxu0 0.0
        %3450 = vmatpush1.msra.mxu0 %v3030
        %3451 = vmatprep.subr.mxu0 0.0
        %3452 = vmatpush1.msra.mxu0 %v3031
        %3453 = vmatprep.subr.mxu0 0.0
        %3454 = vmatpush1.msra.mxu0 %v3032
        %3455 = vmatprep.subr.mxu0 0.0
        %3456 = vmatpush1.msra.mxu0 %v3033
        %3457 = vmatprep.subr.mxu0 0.0
        %3458 = vmatpush1.msra.mxu0 %v3034
        %3459 = vmatprep.subr.mxu0 0.0
        %3460 = vmatpush1.msra.mxu0 %v3035
        %3461 = vmatprep.subr.mxu0 0.0
        %3462 = vmatpush1.msra.mxu0 %v3036
        %3463 = vmatprep.subr.mxu0 0.0
        %3464 = vmatpush1.msra.mxu0 %v3037
        %3465 = vmatprep.subr.mxu0 0.0
        %3466 = vmatpush1.msra.mxu0 %v3038
        %3467 = vmatprep.subr.mxu0 0.0
        %3468 = vmatpush1.msra.mxu0 %v3039
        %3469 = vmatprep.subr.mxu0 0.0
        %3470 = vmatpush1.msra.mxu0 %v3040
        %3471 = vmatprep.mubr.f32.mxu0 %v2892
        %3472 = vmatmul.mubr.f32.gmra.mrb[0].mxu0 %v2881
        %v3473 = vpop.f32.mrb[0].mxu0
        %v3474 = vadd.f32 %v3359, %v3473
        %v3475 = vpop.f32.mrb[0].mxu0
        %3476 = vmatprep.mubr.f32.mxu0 %v2893
        %3477 = vmatmul.mubr.f32.gmra.mrb[0].mxu0 %v2882
        %v3478 = vpop.f32.mrb[0].mxu0
        %v3479 = vadd.f32 %v3364, %v3478
        %v3480 = vpop.f32.mrb[0].mxu0
        %3481 = vmatprep.mubr.f32.mxu0 %v2894
        %3482 = vmatmul.mubr.f32.gmra.mrb[0].mxu0 %v2883
        %v3483 = vpop.f32.mrb[0].mxu0
        %v3484 = vadd.f32 %v3369, %v3483
        %v3485 = vpop.f32.mrb[0].mxu0
        %3486 = vmatprep.mubr.f32.mxu0 %v2895
        %3487 = vmatmul.mubr.f32.gmra.mrb[0].mxu0 %v2884
        %v3488 = vpop.f32.mrb[0].mxu0
        %v3489 = vadd.f32 %v3374, %v3488
        %v3490 = vpop.f32.mrb[0].mxu0
        %3491 = vmatprep.mubr.f32.mxu0 %v2896
        %3492 = vmatmul.mubr.f32.gmra.mrb[0].mxu0 %v2885
        %v3493 = vpop.f32.mrb[0].mxu0
        %v3494 = vadd.f32 %v3379, %v3493
        %v3495 = vpop.f32.mrb[0].mxu0
        %3496 = vmatprep.mubr.f32.mxu0 %v2897
        %3497 = vmatmul.mubr.f32.gmra.mrb[0].mxu0 %v2886
        %v3498 = vpop.f32.mrb[0].mxu0
        %v3499 = vadd.f32 %v3384, %v3498
        %v3500 = vpop.f32.mrb[0].mxu0
        %3501 = vmatprep.mubr.f32.mxu0 %v2898
        %3502 = vmatmul.mubr.f32.gmra.mrb[0].mxu0 %v2887
        %v3503 = vpop.f32.mrb[0].mxu0
        %v3504 = vadd.f32 %v3389, %v3503
        %v3505 = vpop.f32.mrb[0].mxu0
        %3506 = vmatprep.mubr.f32.mxu0 %v2899
        %3507 = vmatmul.mubr.f32.gmra.mrb[0].mxu0 %v2888
        %v3508 = vpop.f32.mrb[0].mxu0
        %v3509 = vadd.f32 %v3394, %v3508
        %v3510 = vpop.f32.mrb[0].mxu0
        %3511 = vmatprep.mubr.f32.mxu0 %v2900
        %3512 = vmatmul.mubr.f32.gmra.mrb[0].mxu0 %v2890
        %v3513 = vpop.f32.mrb[0].mxu0
        %v3514 = vadd.f32 %v3399, %v3513
        %v3515 = vpop.f32.mrb[0].mxu0
        %3516 = vmatprep.mubr.f32.mxu0 %v2901
        %3517 = vmatmul.mubr.f32.gmra.mrb[0].mxu0 %v2891
        %v3518 = vpop.f32.mrb[0].mxu0
        %v3519 = vadd.f32 %v3404, %v3518
        %v3520 = vpop.f32.mrb[0].mxu0
        %3521 = vdwg.mxu0
        %3522 = vmatprep.subr.mxu0 0.0
        %3523 = vmatpush1.msra.mxu0 %v3041
        %3524 = vmatprep.subr.mxu0 0.0
        %3525 = vmatpush1.msra.mxu0 %v3042
        %3526 = vmatprep.subr.mxu0 0.0
        %3527 = vmatpush1.msra.mxu0 %v3043
        %3528 = vmatprep.subr.mxu0 0.0
        %3529 = vmatpush1.msra.mxu0 %v3044
        %3530 = vmatprep.subr.mxu0 0.0
        %3531 = vmatpush1.msra.mxu0 %v3045
        %3532 = vmatprep.subr.mxu0 0.0
        %3533 = vmatpush1.msra.mxu0 %v3046
        %3534 = vmatprep.subr.mxu0 0.0
        %3535 = vmatpush1.msra.mxu0 %v3047
        %3536 = vmatprep.subr.mxu0 0.0
        %3537 = vmatpush1.msra.mxu0 %v3048
        %3538 = vmatprep.subr.mxu0 0.0
        %3539 = vmatpush1.msra.mxu0 %v3049
        %3540 = vmatprep.subr.mxu0 0.0
        %3541 = vmatpush1.msra.mxu0 %v3050
        %3542 = vmatprep.subr.mxu0 0.0
        %3543 = vmatpush1.msra.mxu0 %v3051
        %3544 = vmatprep.subr.mxu0 0.0
        %3545 = vmatpush1.msra.mxu0 %v3052
        %3546 = vmatprep.subr.mxu0 0.0
        %3547 = vmatpush1.msra.mxu0 %v3053
        %3548 = vmatprep.subr.mxu0 0.0
        %3549 = vmatpush1.msra.mxu0 %v3054
        %3550 = vmatprep.subr.mxu0 0.0
        %3551 = vmatpush1.msra.mxu0 %v3055
        %3552 = vmatprep.subr.mxu0 0.0
        %3553 = vmatpush1.msra.mxu0 %v3056
        %3554 = vmatprep.subr.mxu0 0.0
        %3555 = vmatpush1.msra.mxu0 0.0
        %3556 = vmatprep.subr.mxu0 0.0
        %3557 = vmatpush1.msra.mxu0 0.0
        %3558 = vmatprep.subr.mxu0 0.0
        %3559 = vmatpush1.msra.mxu0 0.0
        %3560 = vmatprep.subr.mxu0 0.0
        %3561 = vmatpush1.msra.mxu0 0.0
        %3562 = vmatprep.subr.mxu0 0.0
        %3563 = vmatpush1.msra.mxu0 0.0
        %3564 = vmatprep.subr.mxu0 0.0
        %3565 = vmatpush1.msra.mxu0 0.0
        %3566 = vmatprep.subr.mxu0 0.0
        %3567 = vmatpush1.msra.mxu0 0.0
        %3568 = vmatprep.subr.mxu0 0.0
        %3569 = vmatpush1.msra.mxu0 0.0
        %3570 = vmatprep.subr.mxu0 0.0
        %3571 = vmatpush1.msra.mxu0 0.0
        %3572 = vmatprep.subr.mxu0 0.0
        %3573 = vmatpush1.msra.mxu0 0.0
        %3574 = vmatprep.subr.mxu0 0.0
        %3575 = vmatpush1.msra.mxu0 0.0
        %3576 = vmatprep.subr.mxu0 0.0
        %3577 = vmatpush1.msra.mxu0 0.0
        %3578 = vmatprep.subr.mxu0 0.0
        %3579 = vmatpush1.msra.mxu0 0.0
        %3580 = vmatprep.subr.mxu0 0.0
        %3581 = vmatpush1.msra.mxu0 0.0
        %3582 = vmatprep.subr.mxu0 0.0
        %3583 = vmatpush1.msra.mxu0 0.0
        %3584 = vmatprep.subr.mxu0 0.0
        %3585 = vmatpush1.msra.mxu0 0.0
        %3586 = vmatprep.mubr.f32.mxu0 0.0
        %3587 = vmatmul.mubr.f32.gmra.mrb[0].mxu0 %v2902
        %v3588 = vpop.f32.mrb[0].mxu0
        %v3589 = vadd.f32 %v3474, %v3588
        %v3590 = vpop.f32.mrb[0].mxu0
        %3591 = vmatprep.mubr.f32.mxu0 0.0
        %3592 = vmatmul.mubr.f32.gmra.mrb[0].mxu0 %v2903
        %v3593 = vpop.f32.mrb[0].mxu0
        %v3594 = vadd.f32 %v3479, %v3593
        %v3595 = vpop.f32.mrb[0].mxu0
        %3596 = vmatprep.mubr.f32.mxu0 0.0
        %3597 = vmatmul.mubr.f32.gmra.mrb[0].mxu0 %v2904
        %v3598 = vpop.f32.mrb[0].mxu0
        %v3599 = vadd.f32 %v3484, %v3598
        %v3600 = vpop.f32.mrb[0].mxu0
        %3601 = vmatprep.mubr.f32.mxu0 0.0
        %3602 = vmatmul.mubr.f32.gmra.mrb[0].mxu0 %v2905
        %v3603 = vpop.f32.mrb[0].mxu0
        %v3604 = vadd.f32 %v3489, %v3603
        %v3605 = vpop.f32.mrb[0].mxu0
        %3606 = vmatprep.mubr.f32.mxu0 0.0
        %3607 = vmatmul.mubr.f32.gmra.mrb[0].mxu0 %v2906
        %v3608 = vpop.f32.mrb[0].mxu0
        %v3609 = vadd.f32 %v3494, %v3608
        %v3610 = vpop.f32.mrb[0].mxu0
        %3611 = vmatprep.mubr.f32.mxu0 0.0
        %3612 = vmatmul.mubr.f32.gmra.mrb[0].mxu0 %v2907
        %v3613 = vpop.f32.mrb[0].mxu0
        %v3614 = vadd.f32 %v3499, %v3613
        %v3615 = vpop.f32.mrb[0].mxu0
        %3616 = vmatprep.mubr.f32.mxu0 0.0
        %3617 = vmatmul.mubr.f32.gmra.mrb[0].mxu0 %v2908
        %v3618 = vpop.f32.mrb[0].mxu0
        %v3619 = vadd.f32 %v3504, %v3618
        %v3620 = vpop.f32.mrb[0].mxu0
        %3621 = vmatprep.mubr.f32.mxu0 0.0
        %3622 = vmatmul.mubr.f32.gmra.mrb[0].mxu0 %v2909
        %v3623 = vpop.f32.mrb[0].mxu0
        %v3624 = vadd.f32 %v3509, %v3623
        %v3625 = vpop.f32.mrb[0].mxu0
        %3626 = vmatprep.mubr.f32.mxu0 0.0
        %3627 = vmatmul.mubr.f32.gmra.mrb[0].mxu0 %v2910
        %v3628 = vpop.f32.mrb[0].mxu0
        %v3629 = vadd.f32 %v3514, %v3628
        %v3630 = vpop.f32.mrb[0].mxu0
        %3631 = vmatprep.mubr.f32.mxu0 0.0
        %3632 = vmatmul.mubr.f32.gmra.mrb[0].mxu0 %v2911
        %v3633 = vpop.f32.mrb[0].mxu0
        %v3634 = vadd.f32 %v3519, %v3633
        %v3635 = vpop.f32.mrb[0].mxu0
        %3636 = vdwg.mxu0
        %3637 = vst [vmem:[#allocation7] sm:$0xff] %v3589
        %3638 = vst [vmem:[#allocation7 + $0x8] sm:$0xff] %v3594
        %3639 = vst [vmem:[#allocation7 + $0x10] sm:$0xff] %v3599
        %3640 = vst [vmem:[#allocation7 + $0x18] sm:$0xff] %v3604
        %3641 = vst [vmem:[#allocation7 + $0x20] sm:$0xff] %v3609
        %3642 = vst [vmem:[#allocation7 + $0x28] sm:$0xff] %v3614
        %3643 = vst [vmem:[#allocation7 + $0x30] sm:$0xff] %v3619
        %3644 = vst [vmem:[#allocation7 + $0x38] sm:$0xff] %v3624
        %3645 = vst [vmem:[#allocation7 + $0x40] sm:$0xff] %v3629
        %3646 = vst [vmem:[#allocation7 + $0x48] sm:$0x3f] %v3634
        %v3647 = vld [vmem:[#allocation7] ss:$2 sm:$0xf]
        %v3648 = vld [vmem:[%s1931] ss:$2 sm:$0xf]
        %v3649 = vmax.f32 %v3647, %v3648
        %s3650 = scalar_lea.vmem [#allocation7], 10
        %v3651 = vld [vmem:[%s3650] ss:$2 sm:$0xf]
        %s3652 = scalar_lea.vmem [#allocation7], 11
        %v3653 = vld [vmem:[%s3652] ss:$2 sm:$0xf]
        %v3654 = vmax.f32 %v3651, %v3653
        %v3655 = vmax.f32 %v3649, %v3654
        %3656 = vst [vmem:[#allocation4 + $0x7] sm:$0xf] %v3655
        %s3657 = scalar_lea.vmem [#allocation7], 20
        %v3658 = vld [vmem:[%s3657] ss:$2 sm:$0xf]
        %s3659 = scalar_lea.vmem [#allocation7], 21
        %v3660 = vld [vmem:[%s3659] ss:$2 sm:$0xf]
        %v3661 = vmax.f32 %v3658, %v3660
        %s3662 = scalar_lea.vmem [#allocation7], 30
        %v3663 = vld [vmem:[%s3662] ss:$2 sm:$0xf]
        %s3664 = scalar_lea.vmem [#allocation7], 31
        %v3665 = vld [vmem:[%s3664] ss:$2 sm:$0xf]
        %v3666 = vmax.f32 %v3663, %v3665
        %v3667 = vmax.f32 %v3661, %v3666
        %3668 = vst [vmem:[#allocation4 + $0xd] sm:$0xf] %v3667
        %s3669 = scalar_lea.vmem [#allocation7], 40
        %v3670 = vld [vmem:[%s3669] ss:$2 sm:$0xf]
        %s3671 = scalar_lea.vmem [#allocation7], 41
        %v3672 = vld [vmem:[%s3671] ss:$2 sm:$0xf]
        %v3673 = vmax.f32 %v3670, %v3672
        %s3674 = scalar_lea.vmem [#allocation7], 50
        %v3675 = vld [vmem:[%s3674] ss:$2 sm:$0xf]
        %s3676 = scalar_lea.vmem [#allocation7], 51
        %v3677 = vld [vmem:[%s3676] ss:$2 sm:$0xf]
        %v3678 = vmax.f32 %v3675, %v3677
        %v3679 = vmax.f32 %v3673, %v3678
        %3680 = vst [vmem:[#allocation4 + $0x13] sm:$0xf] %v3679
        %s3681 = scalar_lea.vmem [#allocation7], 60
        %v3682 = vld [vmem:[%s3681] ss:$2 sm:$0xf]
        %s3683 = scalar_lea.vmem [#allocation7], 61
        %v3684 = vld [vmem:[%s3683] ss:$2 sm:$0xf]
        %v3685 = vmax.f32 %v3682, %v3684
        %s3686 = scalar_lea.vmem [#allocation7], 70
        %v3687 = vld [vmem:[%s3686] ss:$2 sm:$0xf]
        %s3688 = scalar_lea.vmem [#allocation7], 71
        %v3689 = vld [vmem:[%s3688] ss:$2 sm:$0xf]
        %v3690 = vmax.f32 %v3687, %v3689
        %v3691 = vmax.f32 %v3685, %v3690
        %3692 = vst [vmem:[#allocation4 + $0x19] sm:$0xf] %v3691
        %v3693 = vld [vmem:[#allocation4] sm:$0xff]
        %v3694 = vld [vmem:[#allocation4 + $0x8] sm:$0xff]
        %v3695 = vld [vmem:[#allocation4 + $0x10] sm:$0x3f]
        %v3696 = vld [vmem:[#allocation4 + $0x1] sm:$0xff]
        %v3697 = vld [vmem:[#allocation4 + $0x9] sm:$0xff]
        %v3698 = vld [vmem:[#allocation4 + $0x11] sm:$0x3f]
        %v3699 = vld [vmem:[#allocation4 + $0x2] sm:$0xff]
        %v3700 = vld [vmem:[#allocation4 + $0xa] sm:$0xff]
        %v3701 = vld [vmem:[#allocation4 + $0x12] sm:$0x3f]
        %v3702 = vld [vmem:[#allocation4 + $0x6] sm:$0xff]
        %v3703 = vld [vmem:[#allocation4 + $0xe] sm:$0xff]
        %v3704 = vld [vmem:[#allocation4 + $0x16] sm:$0x3f]
        %v3705 = vld [vmem:[#allocation4 + $0x7] sm:$0xff]
        %v3706 = vld [vmem:[#allocation4 + $0xf] sm:$0xff]
        %v3707 = vld [vmem:[#allocation4 + $0x17] sm:$0x3f]
        %v3708 = vld [vmem:[#allocation4 + $0x10] sm:$0xff]
        %v3709 = vld [vmem:[#allocation4 + $0x18] sm:$0x3f]
        %v3710 = vld [vmem:[#allocation4 + $0xc] sm:$0xff]
        %v3711 = vld [vmem:[#allocation4 + $0x14] sm:$0xff]
        %v3712 = vld [vmem:[#allocation4 + $0x1c] sm:$0x3f]
        %v3713 = vld [vmem:[#allocation4 + $0xd] sm:$0xff]
        %v3714 = vld [vmem:[#allocation4 + $0x15] sm:$0xff]
        %v3715 = vld [vmem:[#allocation4 + $0x1d] sm:$0x3f]
        %v3716 = vld [vmem:[#allocation4 + $0x16] sm:$0xff]
        %v3717 = vld [vmem:[#allocation4 + $0x1e] sm:$0x3f]
        %s3718 = scalar_lea.vmem %s1, 3456
        %v3719 = vld [vmem:[%s3718] sm:$0xff]
        %v3720 = vld [vmem:[%s3718 + $0x8] sm:$0xff]
        %v3721 = vld [vmem:[%s3718 + $0x10] sm:$0xff]
        %v3722 = vld [vmem:[%s3718 + $0x18] sm:$0xff]
        %v3723 = vld [vmem:[%s3718 + $0x20] sm:$0xff]
        %v3724 = vld [vmem:[%s3718 + $0x28] sm:$0xff]
        %v3725 = vld [vmem:[%s3718 + $0x30] sm:$0xff]
        %v3726 = vld [vmem:[%s3718 + $0x38] sm:$0xff]
        %v3727 = vld [vmem:[%s3718 + $0x40] sm:$0xff]
        %v3728 = vld [vmem:[%s3718 + $0x48] sm:$0xff]
        %v3729 = vld [vmem:[%s3718 + $0x50] sm:$0xff]
        %v3730 = vld [vmem:[%s3718 + $0x58] sm:$0xff]
        %v3731 = vld [vmem:[%s3718 + $0x60] sm:$0xff]
        %v3732 = vld [vmem:[%s3718 + $0x68] sm:$0xff]
        %v3733 = vld [vmem:[%s3718 + $0x70] sm:$0xff]
        %v3734 = vld [vmem:[%s3718 + $0x78] sm:$0xff]
        %v3735 = vld [vmem:[%s3718 + $0x80] sm:$0xff]
        %v3736 = vld [vmem:[%s3718 + $0x88] sm:$0xff]
        %v3737 = vld [vmem:[%s3718 + $0x90] sm:$0xff]
        %v3738 = vld [vmem:[%s3718 + $0x98] sm:$0xff]
        %v3739 = vld [vmem:[%s3718 + $0xa0] sm:$0xff]
        %v3740 = vld [vmem:[%s3718 + $0xa8] sm:$0xff]
        %v3741 = vld [vmem:[%s3718 + $0xb0] sm:$0xff]
        %v3742 = vld [vmem:[%s3718 + $0xb8] sm:$0xff]
        %v3743 = vld [vmem:[%s3718 + $0xc0] sm:$0xff]
        %v3744 = vld [vmem:[%s3718 + $0xc8] sm:$0xff]
        %v3745 = vld [vmem:[%s3718 + $0xd0] sm:$0xff]
        %v3746 = vld [vmem:[%s3718 + $0xd8] sm:$0xff]
        %v3747 = vld [vmem:[%s3718 + $0xe0] sm:$0xff]
        %v3748 = vld [vmem:[%s3718 + $0xe8] sm:$0xff]
        %v3749 = vld [vmem:[%s3718 + $0xf0] sm:$0xff]
        %v3750 = vld [vmem:[%s3718 + $0xf8] sm:$0xff]
        %v3751 = vld [vmem:[%s3718 + $0x100] sm:$0xff]
        %v3752 = vld [vmem:[%s3718 + $0x108] sm:$0xff]
        %v3753 = vld [vmem:[%s3718 + $0x110] sm:$0xff]
        %v3754 = vld [vmem:[%s3718 + $0x118] sm:$0xff]
        %v3755 = vld [vmem:[%s3718 + $0x120] sm:$0xff]
        %v3756 = vld [vmem:[%s3718 + $0x128] sm:$0xff]
        %v3757 = vld [vmem:[%s3718 + $0x130] sm:$0xff]
        %v3758 = vld [vmem:[%s3718 + $0x138] sm:$0xff]
        %v3759 = vld [vmem:[%s3718 + $0x140] sm:$0xff]
        %v3760 = vld [vmem:[%s3718 + $0x148] sm:$0xff]
        %v3761 = vld [vmem:[%s3718 + $0x150] sm:$0xff]
        %v3762 = vld [vmem:[%s3718 + $0x158] sm:$0xff]
        %v3763 = vld [vmem:[%s3718 + $0x160] sm:$0xff]
        %v3764 = vld [vmem:[%s3718 + $0x168] sm:$0xff]
        %v3765 = vld [vmem:[%s3718 + $0x170] sm:$0xff]
        %v3766 = vld [vmem:[%s3718 + $0x178] sm:$0xff]
        %v3767 = vld [vmem:[%s3718 + $0x180] sm:$0xff]
        %v3768 = vld [vmem:[%s3718 + $0x188] sm:$0xff]
        %v3769 = vld [vmem:[%s3718 + $0x190] sm:$0xff]
        %v3770 = vld [vmem:[%s3718 + $0x198] sm:$0xff]
        %v3771 = vld [vmem:[%s3718 + $0x1a0] sm:$0xff]
        %v3772 = vld [vmem:[%s3718 + $0x1a8] sm:$0xff]
        %v3773 = vld [vmem:[%s3718 + $0x1b0] sm:$0xff]
        %v3774 = vld [vmem:[%s3718 + $0x1b8] sm:$0xff]
        %v3775 = vld [vmem:[%s3718 + $0x1c0] sm:$0xff]
        %v3776 = vld [vmem:[%s3718 + $0x1c8] sm:$0xff]
        %v3777 = vld [vmem:[%s3718 + $0x1d0] sm:$0xff]
        %v3778 = vld [vmem:[%s3718 + $0x1d8] sm:$0xff]
        %v3779 = vld [vmem:[%s3718 + $0x1e0] sm:$0xff]
        %v3780 = vld [vmem:[%s3718 + $0x1e8] sm:$0xff]
        %v3781 = vld [vmem:[%s3718 + $0x1f0] sm:$0xff]
        %v3782 = vld [vmem:[%s3718 + $0x1f8] sm:$0xff]
        %v3783 = vld [vmem:[%s3718 + $0x200] sm:$0xff]
        %v3784 = vld [vmem:[%s3718 + $0x208] sm:$0xff]
        %v3785 = vld [vmem:[%s3718 + $0x210] sm:$0xff]
        %v3786 = vld [vmem:[%s3718 + $0x218] sm:$0xff]
        %v3787 = vld [vmem:[%s3718 + $0x220] sm:$0xff]
        %v3788 = vld [vmem:[%s3718 + $0x228] sm:$0xff]
        %v3789 = vld [vmem:[%s3718 + $0x230] sm:$0xff]
        %v3790 = vld [vmem:[%s3718 + $0x238] sm:$0xff]
        %v3791 = vld [vmem:[%s3718 + $0x240] sm:$0xff]
        %v3792 = vld [vmem:[%s3718 + $0x248] sm:$0xff]
        %v3793 = vld [vmem:[%s3718 + $0x250] sm:$0xff]
        %v3794 = vld [vmem:[%s3718 + $0x258] sm:$0xff]
        %v3795 = vld [vmem:[%s3718 + $0x260] sm:$0xff]
        %v3796 = vld [vmem:[%s3718 + $0x268] sm:$0xff]
        %v3797 = vld [vmem:[%s3718 + $0x270] sm:$0xff]
        %v3798 = vld [vmem:[%s3718 + $0x278] sm:$0xff]
        %v3799 = vld [vmem:[%s3718 + $0x280] sm:$0xff]
        %v3800 = vld [vmem:[%s3718 + $0x288] sm:$0xff]
        %v3801 = vld [vmem:[%s3718 + $0x290] sm:$0xff]
        %v3802 = vld [vmem:[%s3718 + $0x298] sm:$0xff]
        %v3803 = vld [vmem:[%s3718 + $0x2a0] sm:$0xff]
        %v3804 = vld [vmem:[%s3718 + $0x2a8] sm:$0xff]
        %v3805 = vld [vmem:[%s3718 + $0x2b0] sm:$0xff]
        %v3806 = vld [vmem:[%s3718 + $0x2b8] sm:$0xff]
        %v3807 = vld [vmem:[%s3718 + $0x2c0] sm:$0xff]
        %v3808 = vld [vmem:[%s3718 + $0x2c8] sm:$0xff]
        %v3809 = vld [vmem:[%s3718 + $0x2d0] sm:$0xff]
        %v3810 = vld [vmem:[%s3718 + $0x2d8] sm:$0xff]
        %v3811 = vld [vmem:[%s3718 + $0x2e0] sm:$0xff]
        %v3812 = vld [vmem:[%s3718 + $0x2e8] sm:$0xff]
        %v3813 = vld [vmem:[%s3718 + $0x2f0] sm:$0xff]
        %v3814 = vld [vmem:[%s3718 + $0x2f8] sm:$0xff]
        %v3815 = vld [vmem:[%s3718 + $0x300] sm:$0xff]
        %v3816 = vld [vmem:[%s3718 + $0x308] sm:$0xff]
        %v3817 = vld [vmem:[%s3718 + $0x310] sm:$0xff]
        %v3818 = vld [vmem:[%s3718 + $0x318] sm:$0xff]
        %v3819 = vld [vmem:[%s3718 + $0x320] sm:$0xff]
        %v3820 = vld [vmem:[%s3718 + $0x328] sm:$0xff]
        %v3821 = vld [vmem:[%s3718 + $0x330] sm:$0xff]
        %v3822 = vld [vmem:[%s3718 + $0x338] sm:$0xff]
        %v3823 = vld [vmem:[%s3718 + $0x340] sm:$0xff]
        %v3824 = vld [vmem:[%s3718 + $0x348] sm:$0xff]
        %v3825 = vld [vmem:[%s3718 + $0x350] sm:$0xff]
        %v3826 = vld [vmem:[%s3718 + $0x358] sm:$0xff]
        %v3827 = vld [vmem:[%s3718 + $0x360] sm:$0xff]
        %v3828 = vld [vmem:[%s3718 + $0x368] sm:$0xff]
        %v3829 = vld [vmem:[%s3718 + $0x370] sm:$0xff]
        %v3830 = vld [vmem:[%s3718 + $0x378] sm:$0xff]
        %v3831 = vld [vmem:[%s3718 + $0x380] sm:$0xff]
        %v3832 = vld [vmem:[%s3718 + $0x388] sm:$0xff]
        %v3833 = vld [vmem:[%s3718 + $0x390] sm:$0xff]
        %v3834 = vld [vmem:[%s3718 + $0x398] sm:$0xff]
        %v3835 = vld [vmem:[%s3718 + $0x3a0] sm:$0xff]
        %v3836 = vld [vmem:[%s3718 + $0x3a8] sm:$0xff]
        %v3837 = vld [vmem:[%s3718 + $0x3b0] sm:$0xff]
        %v3838 = vld [vmem:[%s3718 + $0x3b8] sm:$0xff]
        %v3839 = vld [vmem:[%s3718 + $0x3c0] sm:$0xff]
        %v3840 = vld [vmem:[%s3718 + $0x3c8] sm:$0xff]
        %v3841 = vld [vmem:[%s3718 + $0x3d0] sm:$0xff]
        %v3842 = vld [vmem:[%s3718 + $0x3d8] sm:$0xff]
        %v3843 = vld [vmem:[%s3718 + $0x3e0] sm:$0xff]
        %v3844 = vld [vmem:[%s3718 + $0x3e8] sm:$0xff]
        %v3845 = vld [vmem:[%s3718 + $0x3f0] sm:$0xff]
        %v3846 = vld [vmem:[%s3718 + $0x3f8] sm:$0xff]
        %v3847 = vld [vmem:[%s3718 + $0x400] sm:$0xff]
        %v3848 = vld [vmem:[%s3718 + $0x408] sm:$0xff]
        %v3849 = vld [vmem:[%s3718 + $0x410] sm:$0xff]
        %v3850 = vld [vmem:[%s3718 + $0x418] sm:$0xff]
        %v3851 = vld [vmem:[%s3718 + $0x420] sm:$0xff]
        %v3852 = vld [vmem:[%s3718 + $0x428] sm:$0xff]
        %v3853 = vld [vmem:[%s3718 + $0x430] sm:$0xff]
        %v3854 = vld [vmem:[%s3718 + $0x438] sm:$0xff]
        %v3855 = vld [vmem:[%s3718 + $0x440] sm:$0xff]
        %v3856 = vld [vmem:[%s3718 + $0x448] sm:$0xff]
        %v3857 = vld [vmem:[%s3718 + $0x450] sm:$0xff]
        %v3858 = vld [vmem:[%s3718 + $0x458] sm:$0xff]
        %v3859 = vld [vmem:[%s3718 + $0x460] sm:$0xff]
        %v3860 = vld [vmem:[%s3718 + $0x468] sm:$0xff]
        %v3861 = vld [vmem:[%s3718 + $0x470] sm:$0xff]
        %v3862 = vld [vmem:[%s3718 + $0x478] sm:$0xff]
        %v3863 = vld [vmem:[%s2 + $0x3] sm:$0x1]
        %v3864 = vlaneseq
        %v3865 = vshrl.u32 %v3864, 7
        %v3866 = vsub.s32 0, %v3865
        %v3867 = vrot.slane %v3863, %v3866
        %3868 = vmatprep.subr.mxu0 0.0
        %3869 = vmatpush1.msra.mxu0 %v3719
        %3870 = vmatprep.subr.mxu0 0.0
        %3871 = vmatpush1.msra.mxu0 %v3720
        %3872 = vmatprep.subr.mxu0 0.0
        %3873 = vmatpush1.msra.mxu0 %v3721
        %3874 = vmatprep.subr.mxu0 0.0
        %3875 = vmatpush1.msra.mxu0 %v3722
        %3876 = vmatprep.subr.mxu0 0.0
        %3877 = vmatpush1.msra.mxu0 %v3723
        %3878 = vmatprep.subr.mxu0 0.0
        %3879 = vmatpush1.msra.mxu0 %v3724
        %3880 = vmatprep.subr.mxu0 0.0
        %3881 = vmatpush1.msra.mxu0 %v3725
        %3882 = vmatprep.subr.mxu0 0.0
        %3883 = vmatpush1.msra.mxu0 %v3726
        %3884 = vmatprep.subr.mxu0 0.0
        %3885 = vmatpush1.msra.mxu0 %v3727
        %3886 = vmatprep.subr.mxu0 0.0
        %3887 = vmatpush1.msra.mxu0 %v3728
        %3888 = vmatprep.subr.mxu0 0.0
        %3889 = vmatpush1.msra.mxu0 %v3729
        %3890 = vmatprep.subr.mxu0 0.0
        %3891 = vmatpush1.msra.mxu0 %v3730
        %3892 = vmatprep.subr.mxu0 0.0
        %3893 = vmatpush1.msra.mxu0 %v3731
        %3894 = vmatprep.subr.mxu0 0.0
        %3895 = vmatpush1.msra.mxu0 %v3732
        %3896 = vmatprep.subr.mxu0 0.0
        %3897 = vmatpush1.msra.mxu0 %v3733
        %3898 = vmatprep.subr.mxu0 0.0
        %3899 = vmatpush1.msra.mxu0 %v3734
        %3900 = vmatprep.subr.mxu0 0.0
        %3901 = vmatpush1.msra.mxu0 %v3735
        %3902 = vmatprep.subr.mxu0 0.0
        %3903 = vmatpush1.msra.mxu0 %v3736
        %3904 = vmatprep.subr.mxu0 0.0
        %3905 = vmatpush1.msra.mxu0 %v3737
        %3906 = vmatprep.subr.mxu0 0.0
        %3907 = vmatpush1.msra.mxu0 %v3738
        %3908 = vmatprep.subr.mxu0 0.0
        %3909 = vmatpush1.msra.mxu0 %v3739
        %3910 = vmatprep.subr.mxu0 0.0
        %3911 = vmatpush1.msra.mxu0 %v3740
        %3912 = vmatprep.subr.mxu0 0.0
        %3913 = vmatpush1.msra.mxu0 %v3741
        %3914 = vmatprep.subr.mxu0 0.0
        %3915 = vmatpush1.msra.mxu0 %v3742
        %3916 = vmatprep.subr.mxu0 0.0
        %3917 = vmatpush1.msra.mxu0 %v3743
        %3918 = vmatprep.subr.mxu0 0.0
        %3919 = vmatpush1.msra.mxu0 %v3744
        %3920 = vmatprep.subr.mxu0 0.0
        %3921 = vmatpush1.msra.mxu0 %v3745
        %3922 = vmatprep.subr.mxu0 0.0
        %3923 = vmatpush1.msra.mxu0 %v3746
        %3924 = vmatprep.subr.mxu0 0.0
        %3925 = vmatpush1.msra.mxu0 %v3747
        %3926 = vmatprep.subr.mxu0 0.0
        %3927 = vmatpush1.msra.mxu0 %v3748
        %3928 = vmatprep.subr.mxu0 0.0
        %3929 = vmatpush1.msra.mxu0 %v3749
        %3930 = vmatprep.subr.mxu0 0.0
        %3931 = vmatpush1.msra.mxu0 %v3750
        %3932 = vmatprep.mubr.f32.mxu0 %v3696
        %3933 = vmatmul.mubr.f32.gmra.mrb[0].mxu0 %v3693
        %v3934 = vpop.f32.mrb[0].mxu0
        %v3935 = vadd.f32 %v3867, %v3934
        %v3936 = vpop.f32.mrb[0].mxu0
        %3937 = vmatprep.mubr.f32.mxu0 %v3697
        %3938 = vmatmul.mubr.f32.gmra.mrb[0].mxu0 %v3694
        %v3939 = vpop.f32.mrb[0].mxu0
        %v3940 = vadd.f32 %v3867, %v3939
        %v3941 = vpop.f32.mrb[0].mxu0
        %3942 = vmatprep.mubr.f32.mxu0 %v3698
        %3943 = vmatmul.mubr.f32.gmra.mrb[0].mxu0 %v3695
        %v3944 = vpop.f32.mrb[0].mxu0
        %v3945 = vadd.f32 %v3867, %v3944
        %v3946 = vpop.f32.mrb[0].mxu0
        %3947 = vdwg.mxu0
        %3948 = vmatprep.subr.mxu0 0.0
        %3949 = vmatpush1.msra.mxu0 %v3751
        %3950 = vmatprep.subr.mxu0 0.0
        %3951 = vmatpush1.msra.mxu0 %v3752
        %3952 = vmatprep.subr.mxu0 0.0
        %3953 = vmatpush1.msra.mxu0 %v3753
        %3954 = vmatprep.subr.mxu0 0.0
        %3955 = vmatpush1.msra.mxu0 %v3754
        %3956 = vmatprep.subr.mxu0 0.0
        %3957 = vmatpush1.msra.mxu0 %v3755
        %3958 = vmatprep.subr.mxu0 0.0
        %3959 = vmatpush1.msra.mxu0 %v3756
        %3960 = vmatprep.subr.mxu0 0.0
        %3961 = vmatpush1.msra.mxu0 %v3757
        %3962 = vmatprep.subr.mxu0 0.0
        %3963 = vmatpush1.msra.mxu0 %v3758
        %3964 = vmatprep.subr.mxu0 0.0
        %3965 = vmatpush1.msra.mxu0 %v3759
        %3966 = vmatprep.subr.mxu0 0.0
        %3967 = vmatpush1.msra.mxu0 %v3760
        %3968 = vmatprep.subr.mxu0 0.0
        %3969 = vmatpush1.msra.mxu0 %v3761
        %3970 = vmatprep.subr.mxu0 0.0
        %3971 = vmatpush1.msra.mxu0 %v3762
        %3972 = vmatprep.subr.mxu0 0.0
        %3973 = vmatpush1.msra.mxu0 %v3763
        %3974 = vmatprep.subr.mxu0 0.0
        %3975 = vmatpush1.msra.mxu0 %v3764
        %3976 = vmatprep.subr.mxu0 0.0
        %3977 = vmatpush1.msra.mxu0 %v3765
        %3978 = vmatprep.subr.mxu0 0.0
        %3979 = vmatpush1.msra.mxu0 %v3766
        %3980 = vmatprep.subr.mxu0 0.0
        %3981 = vmatpush1.msra.mxu0 %v3767
        %3982 = vmatprep.subr.mxu0 0.0
        %3983 = vmatpush1.msra.mxu0 %v3768
        %3984 = vmatprep.subr.mxu0 0.0
        %3985 = vmatpush1.msra.mxu0 %v3769
        %3986 = vmatprep.subr.mxu0 0.0
        %3987 = vmatpush1.msra.mxu0 %v3770
        %3988 = vmatprep.subr.mxu0 0.0
        %3989 = vmatpush1.msra.mxu0 %v3771
        %3990 = vmatprep.subr.mxu0 0.0
        %3991 = vmatpush1.msra.mxu0 %v3772
        %3992 = vmatprep.subr.mxu0 0.0
        %3993 = vmatpush1.msra.mxu0 %v3773
        %3994 = vmatprep.subr.mxu0 0.0
        %3995 = vmatpush1.msra.mxu0 %v3774
        %3996 = vmatprep.subr.mxu0 0.0
        %3997 = vmatpush1.msra.mxu0 %v3775
        %3998 = vmatprep.subr.mxu0 0.0
        %3999 = vmatpush1.msra.mxu0 %v3776
        %4000 = vmatprep.subr.mxu0 0.0
        %4001 = vmatpush1.msra.mxu0 %v3777
        %4002 = vmatprep.subr.mxu0 0.0
        %4003 = vmatpush1.msra.mxu0 %v3778
        %4004 = vmatprep.subr.mxu0 0.0
        %4005 = vmatpush1.msra.mxu0 %v3779
        %4006 = vmatprep.subr.mxu0 0.0
        %4007 = vmatpush1.msra.mxu0 %v3780
        %4008 = vmatprep.subr.mxu0 0.0
        %4009 = vmatpush1.msra.mxu0 %v3781
        %4010 = vmatprep.subr.mxu0 0.0
        %4011 = vmatpush1.msra.mxu0 %v3782
        %4012 = vmatprep.mubr.f32.mxu0 %v3702
        %4013 = vmatmul.mubr.f32.gmra.mrb[0].mxu0 %v3699
        %v4014 = vpop.f32.mrb[0].mxu0
        %v4015 = vadd.f32 %v3935, %v4014
        %v4016 = vpop.f32.mrb[0].mxu0
        %4017 = vmatprep.mubr.f32.mxu0 %v3703
        %4018 = vmatmul.mubr.f32.gmra.mrb[0].mxu0 %v3700
        %v4019 = vpop.f32.mrb[0].mxu0
        %v4020 = vadd.f32 %v3940, %v4019
        %v4021 = vpop.f32.mrb[0].mxu0
        %4022 = vmatprep.mubr.f32.mxu0 %v3704
        %4023 = vmatmul.mubr.f32.gmra.mrb[0].mxu0 %v3701
        %v4024 = vpop.f32.mrb[0].mxu0
        %v4025 = vadd.f32 %v3945, %v4024
        %v4026 = vpop.f32.mrb[0].mxu0
        %4027 = vdwg.mxu0
        %4028 = vmatprep.subr.mxu0 0.0
        %4029 = vmatpush1.msra.mxu0 %v3783
        %4030 = vmatprep.subr.mxu0 0.0
        %4031 = vmatpush1.msra.mxu0 %v3784
        %4032 = vmatprep.subr.mxu0 0.0
        %4033 = vmatpush1.msra.mxu0 %v3785
        %4034 = vmatprep.subr.mxu0 0.0
        %4035 = vmatpush1.msra.mxu0 %v3786
        %4036 = vmatprep.subr.mxu0 0.0
        %4037 = vmatpush1.msra.mxu0 %v3787
        %4038 = vmatprep.subr.mxu0 0.0
        %4039 = vmatpush1.msra.mxu0 %v3788
        %4040 = vmatprep.subr.mxu0 0.0
        %4041 = vmatpush1.msra.mxu0 %v3789
        %4042 = vmatprep.subr.mxu0 0.0
        %4043 = vmatpush1.msra.mxu0 %v3790
        %4044 = vmatprep.subr.mxu0 0.0
        %4045 = vmatpush1.msra.mxu0 %v3791
        %4046 = vmatprep.subr.mxu0 0.0
        %4047 = vmatpush1.msra.mxu0 %v3792
        %4048 = vmatprep.subr.mxu0 0.0
        %4049 = vmatpush1.msra.mxu0 %v3793
        %4050 = vmatprep.subr.mxu0 0.0
        %4051 = vmatpush1.msra.mxu0 %v3794
        %4052 = vmatprep.subr.mxu0 0.0
        %4053 = vmatpush1.msra.mxu0 %v3795
        %4054 = vmatprep.subr.mxu0 0.0
        %4055 = vmatpush1.msra.mxu0 %v3796
        %4056 = vmatprep.subr.mxu0 0.0
        %4057 = vmatpush1.msra.mxu0 %v3797
        %4058 = vmatprep.subr.mxu0 0.0
        %4059 = vmatpush1.msra.mxu0 %v3798
        %4060 = vmatprep.subr.mxu0 0.0
        %4061 = vmatpush1.msra.mxu0 %v3799
        %4062 = vmatprep.subr.mxu0 0.0
        %4063 = vmatpush1.msra.mxu0 %v3800
        %4064 = vmatprep.subr.mxu0 0.0
        %4065 = vmatpush1.msra.mxu0 %v3801
        %4066 = vmatprep.subr.mxu0 0.0
        %4067 = vmatpush1.msra.mxu0 %v3802
        %4068 = vmatprep.subr.mxu0 0.0
        %4069 = vmatpush1.msra.mxu0 %v3803
        %4070 = vmatprep.subr.mxu0 0.0
        %4071 = vmatpush1.msra.mxu0 %v3804
        %4072 = vmatprep.subr.mxu0 0.0
        %4073 = vmatpush1.msra.mxu0 %v3805
        %4074 = vmatprep.subr.mxu0 0.0
        %4075 = vmatpush1.msra.mxu0 %v3806
        %4076 = vmatprep.subr.mxu0 0.0
        %4077 = vmatpush1.msra.mxu0 %v3807
        %4078 = vmatprep.subr.mxu0 0.0
        %4079 = vmatpush1.msra.mxu0 %v3808
        %4080 = vmatprep.subr.mxu0 0.0
        %4081 = vmatpush1.msra.mxu0 %v3809
        %4082 = vmatprep.subr.mxu0 0.0
        %4083 = vmatpush1.msra.mxu0 %v3810
        %4084 = vmatprep.subr.mxu0 0.0
        %4085 = vmatpush1.msra.mxu0 %v3811
        %4086 = vmatprep.subr.mxu0 0.0
        %4087 = vmatpush1.msra.mxu0 %v3812
        %4088 = vmatprep.subr.mxu0 0.0
        %4089 = vmatpush1.msra.mxu0 %v3813
        %4090 = vmatprep.subr.mxu0 0.0
        %4091 = vmatpush1.msra.mxu0 %v3814
        %4092 = vmatprep.mubr.f32.mxu0 %v3694
        %4093 = vmatmul.mubr.f32.gmra.mrb[0].mxu0 %v3705
        %v4094 = vpop.f32.mrb[0].mxu0
        %v4095 = vadd.f32 %v4015, %v4094
        %v4096 = vpop.f32.mrb[0].mxu0
        %4097 = vmatprep.mubr.f32.mxu0 %v3708
        %4098 = vmatmul.mubr.f32.gmra.mrb[0].mxu0 %v3706
        %v4099 = vpop.f32.mrb[0].mxu0
        %v4100 = vadd.f32 %v4020, %v4099
        %v4101 = vpop.f32.mrb[0].mxu0
        %4102 = vmatprep.mubr.f32.mxu0 %v3709
        %4103 = vmatmul.mubr.f32.gmra.mrb[0].mxu0 %v3707
        %v4104 = vpop.f32.mrb[0].mxu0
        %v4105 = vadd.f32 %v4025, %v4104
        %v4106 = vpop.f32.mrb[0].mxu0
        %4107 = vdwg.mxu0
        %4108 = vmatprep.subr.mxu0 0.0
        %4109 = vmatpush1.msra.mxu0 %v3815
        %4110 = vmatprep.subr.mxu0 0.0
        %4111 = vmatpush1.msra.mxu0 %v3816
        %4112 = vmatprep.subr.mxu0 0.0
        %4113 = vmatpush1.msra.mxu0 %v3817
        %4114 = vmatprep.subr.mxu0 0.0
        %4115 = vmatpush1.msra.mxu0 %v3818
        %4116 = vmatprep.subr.mxu0 0.0
        %4117 = vmatpush1.msra.mxu0 %v3819
        %4118 = vmatprep.subr.mxu0 0.0
        %4119 = vmatpush1.msra.mxu0 %v3820
        %4120 = vmatprep.subr.mxu0 0.0
        %4121 = vmatpush1.msra.mxu0 %v3821
        %4122 = vmatprep.subr.mxu0 0.0
        %4123 = vmatpush1.msra.mxu0 %v3822
        %4124 = vmatprep.subr.mxu0 0.0
        %4125 = vmatpush1.msra.mxu0 %v3823
        %4126 = vmatprep.subr.mxu0 0.0
        %4127 = vmatpush1.msra.mxu0 %v3824
        %4128 = vmatprep.subr.mxu0 0.0
        %4129 = vmatpush1.msra.mxu0 %v3825
        %4130 = vmatprep.subr.mxu0 0.0
        %4131 = vmatpush1.msra.mxu0 %v3826
        %4132 = vmatprep.subr.mxu0 0.0
        %4133 = vmatpush1.msra.mxu0 %v3827
        %4134 = vmatprep.subr.mxu0 0.0
        %4135 = vmatpush1.msra.mxu0 %v3828
        %4136 = vmatprep.subr.mxu0 0.0
        %4137 = vmatpush1.msra.mxu0 %v3829
        %4138 = vmatprep.subr.mxu0 0.0
        %4139 = vmatpush1.msra.mxu0 %v3830
        %4140 = vmatprep.subr.mxu0 0.0
        %4141 = vmatpush1.msra.mxu0 %v3831
        %4142 = vmatprep.subr.mxu0 0.0
        %4143 = vmatpush1.msra.mxu0 %v3832
        %4144 = vmatprep.subr.mxu0 0.0
        %4145 = vmatpush1.msra.mxu0 %v3833
        %4146 = vmatprep.subr.mxu0 0.0
        %4147 = vmatpush1.msra.mxu0 %v3834
        %4148 = vmatprep.subr.mxu0 0.0
        %4149 = vmatpush1.msra.mxu0 %v3835
        %4150 = vmatprep.subr.mxu0 0.0
        %4151 = vmatpush1.msra.mxu0 %v3836
        %4152 = vmatprep.subr.mxu0 0.0
        %4153 = vmatpush1.msra.mxu0 %v3837
        %4154 = vmatprep.subr.mxu0 0.0
        %4155 = vmatpush1.msra.mxu0 %v3838
        %4156 = vmatprep.subr.mxu0 0.0
        %4157 = vmatpush1.msra.mxu0 %v3839
        %4158 = vmatprep.subr.mxu0 0.0
        %4159 = vmatpush1.msra.mxu0 %v3840
        %4160 = vmatprep.subr.mxu0 0.0
        %4161 = vmatpush1.msra.mxu0 %v3841
        %4162 = vmatprep.subr.mxu0 0.0
        %4163 = vmatpush1.msra.mxu0 %v3842
        %4164 = vmatprep.subr.mxu0 0.0
        %4165 = vmatpush1.msra.mxu0 %v3843
        %4166 = vmatprep.subr.mxu0 0.0
        %4167 = vmatpush1.msra.mxu0 %v3844
        %4168 = vmatprep.subr.mxu0 0.0
        %4169 = vmatpush1.msra.mxu0 %v3845
        %4170 = vmatprep.subr.mxu0 0.0
        %4171 = vmatpush1.msra.mxu0 %v3846
        %4172 = vmatprep.mubr.f32.mxu0 %v3713
        %4173 = vmatmul.mubr.f32.gmra.mrb[0].mxu0 %v3710
        %v4174 = vpop.f32.mrb[0].mxu0
        %v4175 = vadd.f32 %v4095, %v4174
        %v4176 = vpop.f32.mrb[0].mxu0
        %4177 = vmatprep.mubr.f32.mxu0 %v3714
        %4178 = vmatmul.mubr.f32.gmra.mrb[0].mxu0 %v3711
        %v4179 = vpop.f32.mrb[0].mxu0
        %v4180 = vadd.f32 %v4100, %v4179
        %v4181 = vpop.f32.mrb[0].mxu0
        %4182 = vmatprep.mubr.f32.mxu0 %v3715
        %4183 = vmatmul.mubr.f32.gmra.mrb[0].mxu0 %v3712
        %v4184 = vpop.f32.mrb[0].mxu0
        %v4185 = vadd.f32 %v4105, %v4184
        %v4186 = vpop.f32.mrb[0].mxu0
        %4187 = vdwg.mxu0
        %4188 = vmatprep.subr.mxu0 0.0
        %4189 = vmatpush1.msra.mxu0 %v3847
        %4190 = vmatprep.subr.mxu0 0.0
        %4191 = vmatpush1.msra.mxu0 %v3848
        %4192 = vmatprep.subr.mxu0 0.0
        %4193 = vmatpush1.msra.mxu0 %v3849
        %4194 = vmatprep.subr.mxu0 0.0
        %4195 = vmatpush1.msra.mxu0 %v3850
        %4196 = vmatprep.subr.mxu0 0.0
        %4197 = vmatpush1.msra.mxu0 %v3851
        %4198 = vmatprep.subr.mxu0 0.0
        %4199 = vmatpush1.msra.mxu0 %v3852
        %4200 = vmatprep.subr.mxu0 0.0
        %4201 = vmatpush1.msra.mxu0 %v3853
        %4202 = vmatprep.subr.mxu0 0.0
        %4203 = vmatpush1.msra.mxu0 %v3854
        %4204 = vmatprep.subr.mxu0 0.0
        %4205 = vmatpush1.msra.mxu0 %v3855
        %4206 = vmatprep.subr.mxu0 0.0
        %4207 = vmatpush1.msra.mxu0 %v3856
        %4208 = vmatprep.subr.mxu0 0.0
        %4209 = vmatpush1.msra.mxu0 %v3857
        %4210 = vmatprep.subr.mxu0 0.0
        %4211 = vmatpush1.msra.mxu0 %v3858
        %4212 = vmatprep.subr.mxu0 0.0
        %4213 = vmatpush1.msra.mxu0 %v3859
        %4214 = vmatprep.subr.mxu0 0.0
        %4215 = vmatpush1.msra.mxu0 %v3860
        %4216 = vmatprep.subr.mxu0 0.0
        %4217 = vmatpush1.msra.mxu0 %v3861
        %4218 = vmatprep.subr.mxu0 0.0
        %4219 = vmatpush1.msra.mxu0 %v3862
        %4220 = vmatprep.subr.mxu0 0.0
        %4221 = vmatpush1.msra.mxu0 0.0
        %4222 = vmatprep.subr.mxu0 0.0
        %4223 = vmatpush1.msra.mxu0 0.0
        %4224 = vmatprep.subr.mxu0 0.0
        %4225 = vmatpush1.msra.mxu0 0.0
        %4226 = vmatprep.subr.mxu0 0.0
        %4227 = vmatpush1.msra.mxu0 0.0
        %4228 = vmatprep.subr.mxu0 0.0
        %4229 = vmatpush1.msra.mxu0 0.0
        %4230 = vmatprep.subr.mxu0 0.0
        %4231 = vmatpush1.msra.mxu0 0.0
        %4232 = vmatprep.subr.mxu0 0.0
        %4233 = vmatpush1.msra.mxu0 0.0
        %4234 = vmatprep.subr.mxu0 0.0
        %4235 = vmatpush1.msra.mxu0 0.0
        %4236 = vmatprep.subr.mxu0 0.0
        %4237 = vmatpush1.msra.mxu0 0.0
        %4238 = vmatprep.subr.mxu0 0.0
        %4239 = vmatpush1.msra.mxu0 0.0
        %4240 = vmatprep.subr.mxu0 0.0
        %4241 = vmatpush1.msra.mxu0 0.0
        %4242 = vmatprep.subr.mxu0 0.0
        %4243 = vmatpush1.msra.mxu0 0.0
        %4244 = vmatprep.subr.mxu0 0.0
        %4245 = vmatpush1.msra.mxu0 0.0
        %4246 = vmatprep.subr.mxu0 0.0
        %4247 = vmatpush1.msra.mxu0 0.0
        %4248 = vmatprep.subr.mxu0 0.0
        %4249 = vmatpush1.msra.mxu0 0.0
        %4250 = vmatprep.subr.mxu0 0.0
        %4251 = vmatpush1.msra.mxu0 0.0
        %4252 = vmatprep.mubr.f32.mxu0 0.0
        %4253 = vmatmul.mubr.f32.gmra.mrb[0].mxu0 %v3703
        %v4254 = vpop.f32.mrb[0].mxu0
        %v4255 = vadd.f32 %v4175, %v4254
        %v4256 = vpop.f32.mrb[0].mxu0
        %4257 = vmatprep.mubr.f32.mxu0 0.0
        %4258 = vmatmul.mubr.f32.gmra.mrb[0].mxu0 %v3716
        %v4259 = vpop.f32.mrb[0].mxu0
        %v4260 = vadd.f32 %v4180, %v4259
        %v4261 = vpop.f32.mrb[0].mxu0
        %4262 = vmatprep.mubr.f32.mxu0 0.0
        %4263 = vmatmul.mubr.f32.gmra.mrb[0].mxu0 %v3717
        %v4264 = vpop.f32.mrb[0].mxu0
        %v4265 = vadd.f32 %v4185, %v4264
        %v4266 = vpop.f32.mrb[0].mxu0
        %4267 = vdwg.mxu0
        %4268 = vst [vmem:[#allocation5 + $0x7] sm:$0xf] %v4255
        %4269 = vst [vmem:[#allocation5 + $0x7] sm:$0xc0] %v4255
        %4270 = vst [vmem:[#allocation5 + $0xf] sm:$0x3] %v4260
        %4271 = vst [vmem:[#allocation5 + $0xf] sm:$0xf0] %v4260
        %4272 = vst [vmem:[#allocation5 + $0x17] sm:$0x3c] %v4265
        %v4273 = vld [vmem:[#allocation5] sm:$0xff]
        %v4274 = vld [vmem:[#allocation5 + $0x8] sm:$0xff]
        %v4275 = vld [vmem:[#allocation5 + $0x10] sm:$0x3f]
        %v4276 = vld [vmem:[#allocation5 + $0x1] sm:$0xff]
        %v4277 = vld [vmem:[#allocation5 + $0x9] sm:$0xff]
        %v4278 = vld [vmem:[#allocation5 + $0x11] sm:$0x3f]
        %v4279 = vld [vmem:[#allocation5 + $0x2] sm:$0xff]
        %v4280 = vld [vmem:[#allocation5 + $0xa] sm:$0xff]
        %v4281 = vld [vmem:[#allocation5 + $0x12] sm:$0x3f]
        %v4282 = vld [vmem:[#allocation5 + $0x6] sm:$0xff]
        %v4283 = vld [vmem:[#allocation5 + $0xe] sm:$0xff]
        %v4284 = vld [vmem:[#allocation5 + $0x16] sm:$0x3f]
        %v4285 = vld [vmem:[#allocation5 + $0x7] sm:$0xff]
        %v4286 = vld [vmem:[#allocation5 + $0xf] sm:$0xff]
        %v4287 = vld [vmem:[#allocation5 + $0x17] sm:$0x3f]
        %v4288 = vld [vmem:[#allocation5 + $0x10] sm:$0xff]
        %v4289 = vld [vmem:[#allocation5 + $0x18] sm:$0x3f]
        %v4290 = vld [vmem:[#allocation5 + $0xc] sm:$0xff]
        %v4291 = vld [vmem:[#allocation5 + $0x14] sm:$0xff]
        %v4292 = vld [vmem:[#allocation5 + $0x1c] sm:$0x3f]
        %v4293 = vld [vmem:[#allocation5 + $0xd] sm:$0xff]
        %v4294 = vld [vmem:[#allocation5 + $0x15] sm:$0xff]
        %v4295 = vld [vmem:[#allocation5 + $0x1d] sm:$0x3f]
        %v4296 = vld [vmem:[#allocation5 + $0x16] sm:$0xff]
        %v4297 = vld [vmem:[#allocation5 + $0x1e] sm:$0x3f]
        %s4298 = scalar_lea.vmem %s1, 4608
        %v4299 = vld [vmem:[%s4298] sm:$0xff]
        %v4300 = vld [vmem:[%s4298 + $0x8] sm:$0xff]
        %v4301 = vld [vmem:[%s4298 + $0x10] sm:$0xff]
        %v4302 = vld [vmem:[%s4298 + $0x18] sm:$0xff]
        %v4303 = vld [vmem:[%s4298 + $0x20] sm:$0xff]
        %v4304 = vld [vmem:[%s4298 + $0x28] sm:$0xff]
        %v4305 = vld [vmem:[%s4298 + $0x30] sm:$0xff]
        %v4306 = vld [vmem:[%s4298 + $0x38] sm:$0xff]
        %v4307 = vld [vmem:[%s4298 + $0x40] sm:$0xff]
        %v4308 = vld [vmem:[%s4298 + $0x48] sm:$0xff]
        %v4309 = vld [vmem:[%s4298 + $0x50] sm:$0xff]
        %v4310 = vld [vmem:[%s4298 + $0x58] sm:$0xff]
        %v4311 = vld [vmem:[%s4298 + $0x60] sm:$0xff]
        %v4312 = vld [vmem:[%s4298 + $0x68] sm:$0xff]
        %v4313 = vld [vmem:[%s4298 + $0x70] sm:$0xff]
        %v4314 = vld [vmem:[%s4298 + $0x78] sm:$0xff]
        %v4315 = vld [vmem:[%s4298 + $0x80] sm:$0xff]
        %v4316 = vld [vmem:[%s4298 + $0x88] sm:$0xff]
        %v4317 = vld [vmem:[%s4298 + $0x90] sm:$0xff]
        %v4318 = vld [vmem:[%s4298 + $0x98] sm:$0xff]
        %v4319 = vld [vmem:[%s4298 + $0xa0] sm:$0xff]
        %v4320 = vld [vmem:[%s4298 + $0xa8] sm:$0xff]
        %v4321 = vld [vmem:[%s4298 + $0xb0] sm:$0xff]
        %v4322 = vld [vmem:[%s4298 + $0xb8] sm:$0xff]
        %v4323 = vld [vmem:[%s4298 + $0xc0] sm:$0xff]
        %v4324 = vld [vmem:[%s4298 + $0xc8] sm:$0xff]
        %v4325 = vld [vmem:[%s4298 + $0xd0] sm:$0xff]
        %v4326 = vld [vmem:[%s4298 + $0xd8] sm:$0xff]
        %v4327 = vld [vmem:[%s4298 + $0xe0] sm:$0xff]
        %v4328 = vld [vmem:[%s4298 + $0xe8] sm:$0xff]
        %v4329 = vld [vmem:[%s4298 + $0xf0] sm:$0xff]
        %v4330 = vld [vmem:[%s4298 + $0xf8] sm:$0xff]
        %v4331 = vld [vmem:[%s4298 + $0x100] sm:$0xff]
        %v4332 = vld [vmem:[%s4298 + $0x108] sm:$0xff]
        %v4333 = vld [vmem:[%s4298 + $0x110] sm:$0xff]
        %v4334 = vld [vmem:[%s4298 + $0x118] sm:$0xff]
        %v4335 = vld [vmem:[%s4298 + $0x120] sm:$0xff]
        %v4336 = vld [vmem:[%s4298 + $0x128] sm:$0xff]
        %v4337 = vld [vmem:[%s4298 + $0x130] sm:$0xff]
        %v4338 = vld [vmem:[%s4298 + $0x138] sm:$0xff]
        %v4339 = vld [vmem:[%s4298 + $0x140] sm:$0xff]
        %v4340 = vld [vmem:[%s4298 + $0x148] sm:$0xff]
        %v4341 = vld [vmem:[%s4298 + $0x150] sm:$0xff]
        %v4342 = vld [vmem:[%s4298 + $0x158] sm:$0xff]
        %v4343 = vld [vmem:[%s4298 + $0x160] sm:$0xff]
        %v4344 = vld [vmem:[%s4298 + $0x168] sm:$0xff]
        %v4345 = vld [vmem:[%s4298 + $0x170] sm:$0xff]
        %v4346 = vld [vmem:[%s4298 + $0x178] sm:$0xff]
        %v4347 = vld [vmem:[%s4298 + $0x180] sm:$0xff]
        %v4348 = vld [vmem:[%s4298 + $0x188] sm:$0xff]
        %v4349 = vld [vmem:[%s4298 + $0x190] sm:$0xff]
        %v4350 = vld [vmem:[%s4298 + $0x198] sm:$0xff]
        %v4351 = vld [vmem:[%s4298 + $0x1a0] sm:$0xff]
        %v4352 = vld [vmem:[%s4298 + $0x1a8] sm:$0xff]
        %v4353 = vld [vmem:[%s4298 + $0x1b0] sm:$0xff]
        %v4354 = vld [vmem:[%s4298 + $0x1b8] sm:$0xff]
        %v4355 = vld [vmem:[%s4298 + $0x1c0] sm:$0xff]
        %v4356 = vld [vmem:[%s4298 + $0x1c8] sm:$0xff]
        %v4357 = vld [vmem:[%s4298 + $0x1d0] sm:$0xff]
        %v4358 = vld [vmem:[%s4298 + $0x1d8] sm:$0xff]
        %v4359 = vld [vmem:[%s4298 + $0x1e0] sm:$0xff]
        %v4360 = vld [vmem:[%s4298 + $0x1e8] sm:$0xff]
        %v4361 = vld [vmem:[%s4298 + $0x1f0] sm:$0xff]
        %v4362 = vld [vmem:[%s4298 + $0x1f8] sm:$0xff]
        %v4363 = vld [vmem:[%s4298 + $0x200] sm:$0xff]
        %v4364 = vld [vmem:[%s4298 + $0x208] sm:$0xff]
        %v4365 = vld [vmem:[%s4298 + $0x210] sm:$0xff]
        %v4366 = vld [vmem:[%s4298 + $0x218] sm:$0xff]
        %v4367 = vld [vmem:[%s4298 + $0x220] sm:$0xff]
        %v4368 = vld [vmem:[%s4298 + $0x228] sm:$0xff]
        %v4369 = vld [vmem:[%s4298 + $0x230] sm:$0xff]
        %v4370 = vld [vmem:[%s4298 + $0x238] sm:$0xff]
        %v4371 = vld [vmem:[%s4298 + $0x240] sm:$0xff]
        %v4372 = vld [vmem:[%s4298 + $0x248] sm:$0xff]
        %v4373 = vld [vmem:[%s4298 + $0x250] sm:$0xff]
        %v4374 = vld [vmem:[%s4298 + $0x258] sm:$0xff]
        %v4375 = vld [vmem:[%s4298 + $0x260] sm:$0xff]
        %v4376 = vld [vmem:[%s4298 + $0x268] sm:$0xff]
        %v4377 = vld [vmem:[%s4298 + $0x270] sm:$0xff]
        %v4378 = vld [vmem:[%s4298 + $0x278] sm:$0xff]
        %v4379 = vld [vmem:[%s4298 + $0x280] sm:$0xff]
        %v4380 = vld [vmem:[%s4298 + $0x288] sm:$0xff]
        %v4381 = vld [vmem:[%s4298 + $0x290] sm:$0xff]
        %v4382 = vld [vmem:[%s4298 + $0x298] sm:$0xff]
        %v4383 = vld [vmem:[%s4298 + $0x2a0] sm:$0xff]
        %v4384 = vld [vmem:[%s4298 + $0x2a8] sm:$0xff]
        %v4385 = vld [vmem:[%s4298 + $0x2b0] sm:$0xff]
        %v4386 = vld [vmem:[%s4298 + $0x2b8] sm:$0xff]
        %v4387 = vld [vmem:[%s4298 + $0x2c0] sm:$0xff]
        %v4388 = vld [vmem:[%s4298 + $0x2c8] sm:$0xff]
        %v4389 = vld [vmem:[%s4298 + $0x2d0] sm:$0xff]
        %v4390 = vld [vmem:[%s4298 + $0x2d8] sm:$0xff]
        %v4391 = vld [vmem:[%s4298 + $0x2e0] sm:$0xff]
        %v4392 = vld [vmem:[%s4298 + $0x2e8] sm:$0xff]
        %v4393 = vld [vmem:[%s4298 + $0x2f0] sm:$0xff]
        %v4394 = vld [vmem:[%s4298 + $0x2f8] sm:$0xff]
        %v4395 = vld [vmem:[%s4298 + $0x300] sm:$0xff]
        %v4396 = vld [vmem:[%s4298 + $0x308] sm:$0xff]
        %v4397 = vld [vmem:[%s4298 + $0x310] sm:$0xff]
        %v4398 = vld [vmem:[%s4298 + $0x318] sm:$0xff]
        %v4399 = vld [vmem:[%s4298 + $0x320] sm:$0xff]
        %v4400 = vld [vmem:[%s4298 + $0x328] sm:$0xff]
        %v4401 = vld [vmem:[%s4298 + $0x330] sm:$0xff]
        %v4402 = vld [vmem:[%s4298 + $0x338] sm:$0xff]
        %v4403 = vld [vmem:[%s4298 + $0x340] sm:$0xff]
        %v4404 = vld [vmem:[%s4298 + $0x348] sm:$0xff]
        %v4405 = vld [vmem:[%s4298 + $0x350] sm:$0xff]
        %v4406 = vld [vmem:[%s4298 + $0x358] sm:$0xff]
        %v4407 = vld [vmem:[%s4298 + $0x360] sm:$0xff]
        %v4408 = vld [vmem:[%s4298 + $0x368] sm:$0xff]
        %v4409 = vld [vmem:[%s4298 + $0x370] sm:$0xff]
        %v4410 = vld [vmem:[%s4298 + $0x378] sm:$0xff]
        %v4411 = vld [vmem:[%s4298 + $0x380] sm:$0xff]
        %v4412 = vld [vmem:[%s4298 + $0x388] sm:$0xff]
        %v4413 = vld [vmem:[%s4298 + $0x390] sm:$0xff]
        %v4414 = vld [vmem:[%s4298 + $0x398] sm:$0xff]
        %v4415 = vld [vmem:[%s4298 + $0x3a0] sm:$0xff]
        %v4416 = vld [vmem:[%s4298 + $0x3a8] sm:$0xff]
        %v4417 = vld [vmem:[%s4298 + $0x3b0] sm:$0xff]
        %v4418 = vld [vmem:[%s4298 + $0x3b8] sm:$0xff]
        %v4419 = vld [vmem:[%s4298 + $0x3c0] sm:$0xff]
        %v4420 = vld [vmem:[%s4298 + $0x3c8] sm:$0xff]
        %v4421 = vld [vmem:[%s4298 + $0x3d0] sm:$0xff]
        %v4422 = vld [vmem:[%s4298 + $0x3d8] sm:$0xff]
        %v4423 = vld [vmem:[%s4298 + $0x3e0] sm:$0xff]
        %v4424 = vld [vmem:[%s4298 + $0x3e8] sm:$0xff]
        %v4425 = vld [vmem:[%s4298 + $0x3f0] sm:$0xff]
        %v4426 = vld [vmem:[%s4298 + $0x3f8] sm:$0xff]
        %v4427 = vld [vmem:[%s4298 + $0x400] sm:$0xff]
        %v4428 = vld [vmem:[%s4298 + $0x408] sm:$0xff]
        %v4429 = vld [vmem:[%s4298 + $0x410] sm:$0xff]
        %v4430 = vld [vmem:[%s4298 + $0x418] sm:$0xff]
        %v4431 = vld [vmem:[%s4298 + $0x420] sm:$0xff]
        %v4432 = vld [vmem:[%s4298 + $0x428] sm:$0xff]
        %v4433 = vld [vmem:[%s4298 + $0x430] sm:$0xff]
        %v4434 = vld [vmem:[%s4298 + $0x438] sm:$0xff]
        %v4435 = vld [vmem:[%s4298 + $0x440] sm:$0xff]
        %v4436 = vld [vmem:[%s4298 + $0x448] sm:$0xff]
        %v4437 = vld [vmem:[%s4298 + $0x450] sm:$0xff]
        %v4438 = vld [vmem:[%s4298 + $0x458] sm:$0xff]
        %v4439 = vld [vmem:[%s4298 + $0x460] sm:$0xff]
        %v4440 = vld [vmem:[%s4298 + $0x468] sm:$0xff]
        %v4441 = vld [vmem:[%s4298 + $0x470] sm:$0xff]
        %v4442 = vld [vmem:[%s4298 + $0x478] sm:$0xff]
        %v4443 = vld [vmem:[%s2 + $0x4] sm:$0x1]
        %v4444 = vlaneseq
        %v4445 = vshrl.u32 %v4444, 7
        %v4446 = vsub.s32 0, %v4445
        %v4447 = vrot.slane %v4443, %v4446
        %4448 = vmatprep.subr.mxu0 0.0
        %4449 = vmatpush1.msra.mxu0 %v4299
        %4450 = vmatprep.subr.mxu0 0.0
        %4451 = vmatpush1.msra.mxu0 %v4300
        %4452 = vmatprep.subr.mxu0 0.0
        %4453 = vmatpush1.msra.mxu0 %v4301
        %4454 = vmatprep.subr.mxu0 0.0
        %4455 = vmatpush1.msra.mxu0 %v4302
        %4456 = vmatprep.subr.mxu0 0.0
        %4457 = vmatpush1.msra.mxu0 %v4303
        %4458 = vmatprep.subr.mxu0 0.0
        %4459 = vmatpush1.msra.mxu0 %v4304
        %4460 = vmatprep.subr.mxu0 0.0
        %4461 = vmatpush1.msra.mxu0 %v4305
        %4462 = vmatprep.subr.mxu0 0.0
        %4463 = vmatpush1.msra.mxu0 %v4306
        %4464 = vmatprep.subr.mxu0 0.0
        %4465 = vmatpush1.msra.mxu0 %v4307
        %4466 = vmatprep.subr.mxu0 0.0
        %4467 = vmatpush1.msra.mxu0 %v4308
        %4468 = vmatprep.subr.mxu0 0.0
        %4469 = vmatpush1.msra.mxu0 %v4309
        %4470 = vmatprep.subr.mxu0 0.0
        %4471 = vmatpush1.msra.mxu0 %v4310
        %4472 = vmatprep.subr.mxu0 0.0
        %4473 = vmatpush1.msra.mxu0 %v4311
        %4474 = vmatprep.subr.mxu0 0.0
        %4475 = vmatpush1.msra.mxu0 %v4312
        %4476 = vmatprep.subr.mxu0 0.0
        %4477 = vmatpush1.msra.mxu0 %v4313
        %4478 = vmatprep.subr.mxu0 0.0
        %4479 = vmatpush1.msra.mxu0 %v4314
        %4480 = vmatprep.subr.mxu0 0.0
        %4481 = vmatpush1.msra.mxu0 %v4315
        %4482 = vmatprep.subr.mxu0 0.0
        %4483 = vmatpush1.msra.mxu0 %v4316
        %4484 = vmatprep.subr.mxu0 0.0
        %4485 = vmatpush1.msra.mxu0 %v4317
        %4486 = vmatprep.subr.mxu0 0.0
        %4487 = vmatpush1.msra.mxu0 %v4318
        %4488 = vmatprep.subr.mxu0 0.0
        %4489 = vmatpush1.msra.mxu0 %v4319
        %4490 = vmatprep.subr.mxu0 0.0
        %4491 = vmatpush1.msra.mxu0 %v4320
        %4492 = vmatprep.subr.mxu0 0.0
        %4493 = vmatpush1.msra.mxu0 %v4321
        %4494 = vmatprep.subr.mxu0 0.0
        %4495 = vmatpush1.msra.mxu0 %v4322
        %4496 = vmatprep.subr.mxu0 0.0
        %4497 = vmatpush1.msra.mxu0 %v4323
        %4498 = vmatprep.subr.mxu0 0.0
        %4499 = vmatpush1.msra.mxu0 %v4324
        %4500 = vmatprep.subr.mxu0 0.0
        %4501 = vmatpush1.msra.mxu0 %v4325
        %4502 = vmatprep.subr.mxu0 0.0
        %4503 = vmatpush1.msra.mxu0 %v4326
        %4504 = vmatprep.subr.mxu0 0.0
        %4505 = vmatpush1.msra.mxu0 %v4327
        %4506 = vmatprep.subr.mxu0 0.0
        %4507 = vmatpush1.msra.mxu0 %v4328
        %4508 = vmatprep.subr.mxu0 0.0
        %4509 = vmatpush1.msra.mxu0 %v4329
        %4510 = vmatprep.subr.mxu0 0.0
        %4511 = vmatpush1.msra.mxu0 %v4330
        %4512 = vmatprep.mubr.f32.mxu0 %v4276
        %4513 = vmatmul.mubr.f32.gmra.mrb[0].mxu0 %v4273
        %v4514 = vpop.f32.mrb[0].mxu0
        %v4515 = vadd.f32 %v4447, %v4514
        %v4516 = vpop.f32.mrb[0].mxu0
        %4517 = vmatprep.mubr.f32.mxu0 %v4277
        %4518 = vmatmul.mubr.f32.gmra.mrb[0].mxu0 %v4274
        %v4519 = vpop.f32.mrb[0].mxu0
        %v4520 = vadd.f32 %v4447, %v4519
        %v4521 = vpop.f32.mrb[0].mxu0
        %4522 = vmatprep.mubr.f32.mxu0 %v4278
        %4523 = vmatmul.mubr.f32.gmra.mrb[0].mxu0 %v4275
        %v4524 = vpop.f32.mrb[0].mxu0
        %v4525 = vadd.f32 %v4447, %v4524
        %v4526 = vpop.f32.mrb[0].mxu0
        %4527 = vdwg.mxu0
        %4528 = vmatprep.subr.mxu0 0.0
        %4529 = vmatpush1.msra.mxu0 %v4331
        %4530 = vmatprep.subr.mxu0 0.0
        %4531 = vmatpush1.msra.mxu0 %v4332
        %4532 = vmatprep.subr.mxu0 0.0
        %4533 = vmatpush1.msra.mxu0 %v4333
        %4534 = vmatprep.subr.mxu0 0.0
        %4535 = vmatpush1.msra.mxu0 %v4334
        %4536 = vmatprep.subr.mxu0 0.0
        %4537 = vmatpush1.msra.mxu0 %v4335
        %4538 = vmatprep.subr.mxu0 0.0
        %4539 = vmatpush1.msra.mxu0 %v4336
        %4540 = vmatprep.subr.mxu0 0.0
        %4541 = vmatpush1.msra.mxu0 %v4337
        %4542 = vmatprep.subr.mxu0 0.0
        %4543 = vmatpush1.msra.mxu0 %v4338
        %4544 = vmatprep.subr.mxu0 0.0
        %4545 = vmatpush1.msra.mxu0 %v4339
        %4546 = vmatprep.subr.mxu0 0.0
        %4547 = vmatpush1.msra.mxu0 %v4340
        %4548 = vmatprep.subr.mxu0 0.0
        %4549 = vmatpush1.msra.mxu0 %v4341
        %4550 = vmatprep.subr.mxu0 0.0
        %4551 = vmatpush1.msra.mxu0 %v4342
        %4552 = vmatprep.subr.mxu0 0.0
        %4553 = vmatpush1.msra.mxu0 %v4343
        %4554 = vmatprep.subr.mxu0 0.0
        %4555 = vmatpush1.msra.mxu0 %v4344
        %4556 = vmatprep.subr.mxu0 0.0
        %4557 = vmatpush1.msra.mxu0 %v4345
        %4558 = vmatprep.subr.mxu0 0.0
        %4559 = vmatpush1.msra.mxu0 %v4346
        %4560 = vmatprep.subr.mxu0 0.0
        %4561 = vmatpush1.msra.mxu0 %v4347
        %4562 = vmatprep.subr.mxu0 0.0
        %4563 = vmatpush1.msra.mxu0 %v4348
        %4564 = vmatprep.subr.mxu0 0.0
        %4565 = vmatpush1.msra.mxu0 %v4349
        %4566 = vmatprep.subr.mxu0 0.0
        %4567 = vmatpush1.msra.mxu0 %v4350
        %4568 = vmatprep.subr.mxu0 0.0
        %4569 = vmatpush1.msra.mxu0 %v4351
        %4570 = vmatprep.subr.mxu0 0.0
        %4571 = vmatpush1.msra.mxu0 %v4352
        %4572 = vmatprep.subr.mxu0 0.0
        %4573 = vmatpush1.msra.mxu0 %v4353
        %4574 = vmatprep.subr.mxu0 0.0
        %4575 = vmatpush1.msra.mxu0 %v4354
        %4576 = vmatprep.subr.mxu0 0.0
        %4577 = vmatpush1.msra.mxu0 %v4355
        %4578 = vmatprep.subr.mxu0 0.0
        %4579 = vmatpush1.msra.mxu0 %v4356
        %4580 = vmatprep.subr.mxu0 0.0
        %4581 = vmatpush1.msra.mxu0 %v4357
        %4582 = vmatprep.subr.mxu0 0.0
        %4583 = vmatpush1.msra.mxu0 %v4358
        %4584 = vmatprep.subr.mxu0 0.0
        %4585 = vmatpush1.msra.mxu0 %v4359
        %4586 = vmatprep.subr.mxu0 0.0
        %4587 = vmatpush1.msra.mxu0 %v4360
        %4588 = vmatprep.subr.mxu0 0.0
        %4589 = vmatpush1.msra.mxu0 %v4361
        %4590 = vmatprep.subr.mxu0 0.0
        %4591 = vmatpush1.msra.mxu0 %v4362
        %4592 = vmatprep.mubr.f32.mxu0 %v4282
        %4593 = vmatmul.mubr.f32.gmra.mrb[0].mxu0 %v4279
        %v4594 = vpop.f32.mrb[0].mxu0
        %v4595 = vadd.f32 %v4515, %v4594
        %v4596 = vpop.f32.mrb[0].mxu0
        %4597 = vmatprep.mubr.f32.mxu0 %v4283
        %4598 = vmatmul.mubr.f32.gmra.mrb[0].mxu0 %v4280
        %v4599 = vpop.f32.mrb[0].mxu0
        %v4600 = vadd.f32 %v4520, %v4599
        %v4601 = vpop.f32.mrb[0].mxu0
        %4602 = vmatprep.mubr.f32.mxu0 %v4284
        %4603 = vmatmul.mubr.f32.gmra.mrb[0].mxu0 %v4281
        %v4604 = vpop.f32.mrb[0].mxu0
        %v4605 = vadd.f32 %v4525, %v4604
        %v4606 = vpop.f32.mrb[0].mxu0
        %4607 = vdwg.mxu0
        %4608 = vmatprep.subr.mxu0 0.0
        %4609 = vmatpush1.msra.mxu0 %v4363
        %4610 = vmatprep.subr.mxu0 0.0
        %4611 = vmatpush1.msra.mxu0 %v4364
        %4612 = vmatprep.subr.mxu0 0.0
        %4613 = vmatpush1.msra.mxu0 %v4365
        %4614 = vmatprep.subr.mxu0 0.0
        %4615 = vmatpush1.msra.mxu0 %v4366
        %4616 = vmatprep.subr.mxu0 0.0
        %4617 = vmatpush1.msra.mxu0 %v4367
        %4618 = vmatprep.subr.mxu0 0.0
        %4619 = vmatpush1.msra.mxu0 %v4368
        %4620 = vmatprep.subr.mxu0 0.0
        %4621 = vmatpush1.msra.mxu0 %v4369
        %4622 = vmatprep.subr.mxu0 0.0
        %4623 = vmatpush1.msra.mxu0 %v4370
        %4624 = vmatprep.subr.mxu0 0.0
        %4625 = vmatpush1.msra.mxu0 %v4371
        %4626 = vmatprep.subr.mxu0 0.0
        %4627 = vmatpush1.msra.mxu0 %v4372
        %4628 = vmatprep.subr.mxu0 0.0
        %4629 = vmatpush1.msra.mxu0 %v4373
        %4630 = vmatprep.subr.mxu0 0.0
        %4631 = vmatpush1.msra.mxu0 %v4374
        %4632 = vmatprep.subr.mxu0 0.0
        %4633 = vmatpush1.msra.mxu0 %v4375
        %4634 = vmatprep.subr.mxu0 0.0
        %4635 = vmatpush1.msra.mxu0 %v4376
        %4636 = vmatprep.subr.mxu0 0.0
        %4637 = vmatpush1.msra.mxu0 %v4377
        %4638 = vmatprep.subr.mxu0 0.0
        %4639 = vmatpush1.msra.mxu0 %v4378
        %4640 = vmatprep.subr.mxu0 0.0
        %4641 = vmatpush1.msra.mxu0 %v4379
        %4642 = vmatprep.subr.mxu0 0.0
        %4643 = vmatpush1.msra.mxu0 %v4380
        %4644 = vmatprep.subr.mxu0 0.0
        %4645 = vmatpush1.msra.mxu0 %v4381
        %4646 = vmatprep.subr.mxu0 0.0
        %4647 = vmatpush1.msra.mxu0 %v4382
        %4648 = vmatprep.subr.mxu0 0.0
        %4649 = vmatpush1.msra.mxu0 %v4383
        %4650 = vmatprep.subr.mxu0 0.0
        %4651 = vmatpush1.msra.mxu0 %v4384
        %4652 = vmatprep.subr.mxu0 0.0
        %4653 = vmatpush1.msra.mxu0 %v4385
        %4654 = vmatprep.subr.mxu0 0.0
        %4655 = vmatpush1.msra.mxu0 %v4386
        %4656 = vmatprep.subr.mxu0 0.0
        %4657 = vmatpush1.msra.mxu0 %v4387
        %4658 = vmatprep.subr.mxu0 0.0
        %4659 = vmatpush1.msra.mxu0 %v4388
        %4660 = vmatprep.subr.mxu0 0.0
        %4661 = vmatpush1.msra.mxu0 %v4389
        %4662 = vmatprep.subr.mxu0 0.0
        %4663 = vmatpush1.msra.mxu0 %v4390
        %4664 = vmatprep.subr.mxu0 0.0
        %4665 = vmatpush1.msra.mxu0 %v4391
        %4666 = vmatprep.subr.mxu0 0.0
        %4667 = vmatpush1.msra.mxu0 %v4392
        %4668 = vmatprep.subr.mxu0 0.0
        %4669 = vmatpush1.msra.mxu0 %v4393
        %4670 = vmatprep.subr.mxu0 0.0
        %4671 = vmatpush1.msra.mxu0 %v4394
        %4672 = vmatprep.mubr.f32.mxu0 %v4274
        %4673 = vmatmul.mubr.f32.gmra.mrb[0].mxu0 %v4285
        %v4674 = vpop.f32.mrb[0].mxu0
        %v4675 = vadd.f32 %v4595, %v4674
        %v4676 = vpop.f32.mrb[0].mxu0
        %4677 = vmatprep.mubr.f32.mxu0 %v4288
        %4678 = vmatmul.mubr.f32.gmra.mrb[0].mxu0 %v4286
        %v4679 = vpop.f32.mrb[0].mxu0
        %v4680 = vadd.f32 %v4600, %v4679
        %v4681 = vpop.f32.mrb[0].mxu0
        %4682 = vmatprep.mubr.f32.mxu0 %v4289
        %4683 = vmatmul.mubr.f32.gmra.mrb[0].mxu0 %v4287
        %v4684 = vpop.f32.mrb[0].mxu0
        %v4685 = vadd.f32 %v4605, %v4684
        %v4686 = vpop.f32.mrb[0].mxu0
        %4687 = vdwg.mxu0
        %4688 = vmatprep.subr.mxu0 0.0
        %4689 = vmatpush1.msra.mxu0 %v4395
        %4690 = vmatprep.subr.mxu0 0.0
        %4691 = vmatpush1.msra.mxu0 %v4396
        %4692 = vmatprep.subr.mxu0 0.0
        %4693 = vmatpush1.msra.mxu0 %v4397
        %4694 = vmatprep.subr.mxu0 0.0
        %4695 = vmatpush1.msra.mxu0 %v4398
        %4696 = vmatprep.subr.mxu0 0.0
        %4697 = vmatpush1.msra.mxu0 %v4399
        %4698 = vmatprep.subr.mxu0 0.0
        %4699 = vmatpush1.msra.mxu0 %v4400
        %4700 = vmatprep.subr.mxu0 0.0
        %4701 = vmatpush1.msra.mxu0 %v4401
        %4702 = vmatprep.subr.mxu0 0.0
        %4703 = vmatpush1.msra.mxu0 %v4402
        %4704 = vmatprep.subr.mxu0 0.0
        %4705 = vmatpush1.msra.mxu0 %v4403
        %4706 = vmatprep.subr.mxu0 0.0
        %4707 = vmatpush1.msra.mxu0 %v4404
        %4708 = vmatprep.subr.mxu0 0.0
        %4709 = vmatpush1.msra.mxu0 %v4405
        %4710 = vmatprep.subr.mxu0 0.0
        %4711 = vmatpush1.msra.mxu0 %v4406
        %4712 = vmatprep.subr.mxu0 0.0
        %4713 = vmatpush1.msra.mxu0 %v4407
        %4714 = vmatprep.subr.mxu0 0.0
        %4715 = vmatpush1.msra.mxu0 %v4408
        %4716 = vmatprep.subr.mxu0 0.0
        %4717 = vmatpush1.msra.mxu0 %v4409
        %4718 = vmatprep.subr.mxu0 0.0
        %4719 = vmatpush1.msra.mxu0 %v4410
        %4720 = vmatprep.subr.mxu0 0.0
        %4721 = vmatpush1.msra.mxu0 %v4411
        %4722 = vmatprep.subr.mxu0 0.0
        %4723 = vmatpush1.msra.mxu0 %v4412
        %4724 = vmatprep.subr.mxu0 0.0
        %4725 = vmatpush1.msra.mxu0 %v4413
        %4726 = vmatprep.subr.mxu0 0.0
        %4727 = vmatpush1.msra.mxu0 %v4414
        %4728 = vmatprep.subr.mxu0 0.0
        %4729 = vmatpush1.msra.mxu0 %v4415
        %4730 = vmatprep.subr.mxu0 0.0
        %4731 = vmatpush1.msra.mxu0 %v4416
        %4732 = vmatprep.subr.mxu0 0.0
        %4733 = vmatpush1.msra.mxu0 %v4417
        %4734 = vmatprep.subr.mxu0 0.0
        %4735 = vmatpush1.msra.mxu0 %v4418
        %4736 = vmatprep.subr.mxu0 0.0
        %4737 = vmatpush1.msra.mxu0 %v4419
        %4738 = vmatprep.subr.mxu0 0.0
        %4739 = vmatpush1.msra.mxu0 %v4420
        %4740 = vmatprep.subr.mxu0 0.0
        %4741 = vmatpush1.msra.mxu0 %v4421
        %4742 = vmatprep.subr.mxu0 0.0
        %4743 = vmatpush1.msra.mxu0 %v4422
        %4744 = vmatprep.subr.mxu0 0.0
        %4745 = vmatpush1.msra.mxu0 %v4423
        %4746 = vmatprep.subr.mxu0 0.0
        %4747 = vmatpush1.msra.mxu0 %v4424
        %4748 = vmatprep.subr.mxu0 0.0
        %4749 = vmatpush1.msra.mxu0 %v4425
        %4750 = vmatprep.subr.mxu0 0.0
        %4751 = vmatpush1.msra.mxu0 %v4426
        %4752 = vmatprep.mubr.f32.mxu0 %v4293
        %4753 = vmatmul.mubr.f32.gmra.mrb[0].mxu0 %v4290
        %v4754 = vpop.f32.mrb[0].mxu0
        %v4755 = vadd.f32 %v4675, %v4754
        %v4756 = vpop.f32.mrb[0].mxu0
        %4757 = vmatprep.mubr.f32.mxu0 %v4294
        %4758 = vmatmul.mubr.f32.gmra.mrb[0].mxu0 %v4291
        %v4759 = vpop.f32.mrb[0].mxu0
        %v4760 = vadd.f32 %v4680, %v4759
        %v4761 = vpop.f32.mrb[0].mxu0
        %4762 = vmatprep.mubr.f32.mxu0 %v4295
        %4763 = vmatmul.mubr.f32.gmra.mrb[0].mxu0 %v4292
        %v4764 = vpop.f32.mrb[0].mxu0
        %v4765 = vadd.f32 %v4685, %v4764
        %v4766 = vpop.f32.mrb[0].mxu0
        %4767 = vdwg.mxu0
        %4768 = vmatprep.subr.mxu0 0.0
        %4769 = vmatpush1.msra.mxu0 %v4427
        %4770 = vmatprep.subr.mxu0 0.0
        %4771 = vmatpush1.msra.mxu0 %v4428
        %4772 = vmatprep.subr.mxu0 0.0
        %4773 = vmatpush1.msra.mxu0 %v4429
        %4774 = vmatprep.subr.mxu0 0.0
        %4775 = vmatpush1.msra.mxu0 %v4430
        %4776 = vmatprep.subr.mxu0 0.0
        %4777 = vmatpush1.msra.mxu0 %v4431
        %4778 = vmatprep.subr.mxu0 0.0
        %4779 = vmatpush1.msra.mxu0 %v4432
        %4780 = vmatprep.subr.mxu0 0.0
        %4781 = vmatpush1.msra.mxu0 %v4433
        %4782 = vmatprep.subr.mxu0 0.0
        %4783 = vmatpush1.msra.mxu0 %v4434
        %4784 = vmatprep.subr.mxu0 0.0
        %4785 = vmatpush1.msra.mxu0 %v4435
        %4786 = vmatprep.subr.mxu0 0.0
        %4787 = vmatpush1.msra.mxu0 %v4436
        %4788 = vmatprep.subr.mxu0 0.0
        %4789 = vmatpush1.msra.mxu0 %v4437
        %4790 = vmatprep.subr.mxu0 0.0
        %4791 = vmatpush1.msra.mxu0 %v4438
        %4792 = vmatprep.subr.mxu0 0.0
        %4793 = vmatpush1.msra.mxu0 %v4439
        %4794 = vmatprep.subr.mxu0 0.0
        %4795 = vmatpush1.msra.mxu0 %v4440
        %4796 = vmatprep.subr.mxu0 0.0
        %4797 = vmatpush1.msra.mxu0 %v4441
        %4798 = vmatprep.subr.mxu0 0.0
        %4799 = vmatpush1.msra.mxu0 %v4442
        %4800 = vmatprep.subr.mxu0 0.0
        %4801 = vmatpush1.msra.mxu0 0.0
        %4802 = vmatprep.subr.mxu0 0.0
        %4803 = vmatpush1.msra.mxu0 0.0
        %4804 = vmatprep.subr.mxu0 0.0
        %4805 = vmatpush1.msra.mxu0 0.0
        %4806 = vmatprep.subr.mxu0 0.0
        %4807 = vmatpush1.msra.mxu0 0.0
        %4808 = vmatprep.subr.mxu0 0.0
        %4809 = vmatpush1.msra.mxu0 0.0
        %4810 = vmatprep.subr.mxu0 0.0
        %4811 = vmatpush1.msra.mxu0 0.0
        %4812 = vmatprep.subr.mxu0 0.0
        %4813 = vmatpush1.msra.mxu0 0.0
        %4814 = vmatprep.subr.mxu0 0.0
        %4815 = vmatpush1.msra.mxu0 0.0
        %4816 = vmatprep.subr.mxu0 0.0
        %4817 = vmatpush1.msra.mxu0 0.0
        %4818 = vmatprep.subr.mxu0 0.0
        %4819 = vmatpush1.msra.mxu0 0.0
        %4820 = vmatprep.subr.mxu0 0.0
        %4821 = vmatpush1.msra.mxu0 0.0
        %4822 = vmatprep.subr.mxu0 0.0
        %4823 = vmatpush1.msra.mxu0 0.0
        %4824 = vmatprep.subr.mxu0 0.0
        %4825 = vmatpush1.msra.mxu0 0.0
        %4826 = vmatprep.subr.mxu0 0.0
        %4827 = vmatpush1.msra.mxu0 0.0
        %4828 = vmatprep.subr.mxu0 0.0
        %4829 = vmatpush1.msra.mxu0 0.0
        %4830 = vmatprep.subr.mxu0 0.0
        %4831 = vmatpush1.msra.mxu0 0.0
        %4832 = vmatprep.mubr.f32.mxu0 0.0
        %4833 = vmatmul.mubr.f32.gmra.mrb[0].mxu0 %v4283
        %v4834 = vpop.f32.mrb[0].mxu0
        %v4835 = vadd.f32 %v4755, %v4834
        %v4836 = vpop.f32.mrb[0].mxu0
        %4837 = vmatprep.mubr.f32.mxu0 0.0
        %4838 = vmatmul.mubr.f32.gmra.mrb[0].mxu0 %v4296
        %v4839 = vpop.f32.mrb[0].mxu0
        %v4840 = vadd.f32 %v4760, %v4839
        %v4841 = vpop.f32.mrb[0].mxu0
        %4842 = vmatprep.mubr.f32.mxu0 0.0
        %4843 = vmatmul.mubr.f32.gmra.mrb[0].mxu0 %v4297
        %v4844 = vpop.f32.mrb[0].mxu0
        %v4845 = vadd.f32 %v4765, %v4844
        %v4846 = vpop.f32.mrb[0].mxu0
        %4847 = vdwg.mxu0
        %4848 = vst [vmem:[#allocation7] sm:$0xff] %v4835
        %4849 = vst [vmem:[#allocation7 + $0x8] sm:$0xff] %v4840
        %4850 = vst [vmem:[#allocation7 + $0x10] sm:$0x3f] %v4845
        %v4851 = vld [vmem:[#allocation7] sm:$0xf]
        %v4853 = vrot.slane %v4851, 1
        %v4855 = vmax.f32 %v4851, %v4853
        %vm4856 = vcmask 1040384
        %v4857 = vsel %vm4856, %v4851, %v4855
        %vm4858 = vcmask 1041408
        %v4859 = vsel %vm4858, %v4857, %v4853
        %4860 = vst [vmem:[#allocation6 + $0x6] sm:$0x7] %v4859
        %v4861 = vld [vmem:[#allocation7 + $0x6] sm:$0xf]
        %v4862 = vld [vmem:[#allocation7 + $0xc] sm:$0xf]
        %v4863 = vmax.f32 %v4861, %v4862
        %v4865 = vrot.slane %v4863, 1
        %v4867 = vmax.f32 %v4863, %v4865
        %v4868 = vsel %vm4856, %v4863, %v4867
        %v4869 = vsel %vm4858, %v4868, %v4865
        %4870 = vst [vmem:[#allocation6 + $0xb] sm:$0x7] %v4869
        %v4871 = vld [vmem:[#allocation7 + $0x12] sm:$0xf]
        %v4873 = vrot.slane %v4871, 1
        %v4875 = vmax.f32 %v4871, %v4873
        %v4876 = vsel %vm4856, %v4871, %v4875
        %v4877 = vsel %vm4858, %v4876, %v4873
        %4878 = vst [vmem:[#allocation6 + $0x10] sm:$0x7] %v4877
        %v4879 = vld [vmem:[#allocation6] sm:$0xff]
        %v4880 = vld [vmem:[#allocation6 + $0x8] sm:$0x1f]
        %v4881 = vld [vmem:[#allocation6 + $0x1] sm:$0xff]
        %v4882 = vld [vmem:[#allocation6 + $0x9] sm:$0x1f]
        %v4883 = vld [vmem:[#allocation6 + $0x2] sm:$0xff]
        %v4884 = vld [vmem:[#allocation6 + $0xa] sm:$0x1f]
        %v4885 = vld [vmem:[#allocation6 + $0x5] sm:$0xff]
        %v4886 = vld [vmem:[#allocation6 + $0xd] sm:$0x1f]
        %v4887 = vld [vmem:[#allocation6 + $0x6] sm:$0xff]
        %v4888 = vld [vmem:[#allocation6 + $0xe] sm:$0x1f]
        %v4889 = vld [vmem:[#allocation6 + $0x7] sm:$0xff]
        %v4890 = vld [vmem:[#allocation6 + $0xf] sm:$0x1f]
        %v4891 = vld [vmem:[#allocation6 + $0xa] sm:$0xff]
        %v4892 = vld [vmem:[#allocation6 + $0x12] sm:$0x1f]
        %v4893 = vld [vmem:[#allocation6 + $0xb] sm:$0xff]
        %v4894 = vld [vmem:[#allocation6 + $0x13] sm:$0x1f]
        %v4895 = vld [vmem:[#allocation6 + $0xc] sm:$0xff]
        %v4896 = vld [vmem:[#allocation6 + $0x14] sm:$0x1f]
        %s4897 = scalar_lea.vmem %s1, 5760
        %v4898 = vld [vmem:[%s4897] sm:$0xff]
        %v4899 = vld [vmem:[%s4897 + $0x8] sm:$0xff]
        %v4900 = vld [vmem:[%s4897 + $0x10] sm:$0xff]
        %v4901 = vld [vmem:[%s4897 + $0x18] sm:$0xff]
        %v4902 = vld [vmem:[%s4897 + $0x20] sm:$0xff]
        %v4903 = vld [vmem:[%s4897 + $0x28] sm:$0xff]
        %v4904 = vld [vmem:[%s4897 + $0x30] sm:$0xff]
        %v4905 = vld [vmem:[%s4897 + $0x38] sm:$0xff]
        %v4906 = vld [vmem:[%s4897 + $0x40] sm:$0xff]
        %v4907 = vld [vmem:[%s4897 + $0x48] sm:$0xff]
        %v4908 = vld [vmem:[%s4897 + $0x50] sm:$0xff]
        %v4909 = vld [vmem:[%s4897 + $0x58] sm:$0xff]
        %v4910 = vld [vmem:[%s4897 + $0x60] sm:$0xff]
        %v4911 = vld [vmem:[%s4897 + $0x68] sm:$0xff]
        %v4912 = vld [vmem:[%s4897 + $0x70] sm:$0xff]
        %v4913 = vld [vmem:[%s4897 + $0x78] sm:$0xff]
        %v4914 = vld [vmem:[%s4897 + $0x80] sm:$0xff]
        %v4915 = vld [vmem:[%s4897 + $0x88] sm:$0xff]
        %v4916 = vld [vmem:[%s4897 + $0x90] sm:$0xff]
        %v4917 = vld [vmem:[%s4897 + $0x98] sm:$0xff]
        %v4918 = vld [vmem:[%s4897 + $0xa0] sm:$0xff]
        %v4919 = vld [vmem:[%s4897 + $0xa8] sm:$0xff]
        %v4920 = vld [vmem:[%s4897 + $0xb0] sm:$0xff]
        %v4921 = vld [vmem:[%s4897 + $0xb8] sm:$0xff]
        %v4922 = vld [vmem:[%s4897 + $0xc0] sm:$0xff]
        %v4923 = vld [vmem:[%s4897 + $0xc8] sm:$0xff]
        %v4924 = vld [vmem:[%s4897 + $0xd0] sm:$0xff]
        %v4925 = vld [vmem:[%s4897 + $0xd8] sm:$0xff]
        %v4926 = vld [vmem:[%s4897 + $0xe0] sm:$0xff]
        %v4927 = vld [vmem:[%s4897 + $0xe8] sm:$0xff]
        %v4928 = vld [vmem:[%s4897 + $0xf0] sm:$0xff]
        %v4929 = vld [vmem:[%s4897 + $0xf8] sm:$0xff]
        %v4930 = vld [vmem:[%s4897 + $0x100] sm:$0xff]
        %v4931 = vld [vmem:[%s4897 + $0x108] sm:$0xff]
        %v4932 = vld [vmem:[%s4897 + $0x110] sm:$0xff]
        %v4933 = vld [vmem:[%s4897 + $0x118] sm:$0xff]
        %v4934 = vld [vmem:[%s4897 + $0x120] sm:$0xff]
        %v4935 = vld [vmem:[%s4897 + $0x128] sm:$0xff]
        %v4936 = vld [vmem:[%s4897 + $0x130] sm:$0xff]
        %v4937 = vld [vmem:[%s4897 + $0x138] sm:$0xff]
        %v4938 = vld [vmem:[%s4897 + $0x140] sm:$0xff]
        %v4939 = vld [vmem:[%s4897 + $0x148] sm:$0xff]
        %v4940 = vld [vmem:[%s4897 + $0x150] sm:$0xff]
        %v4941 = vld [vmem:[%s4897 + $0x158] sm:$0xff]
        %v4942 = vld [vmem:[%s4897 + $0x160] sm:$0xff]
        %v4943 = vld [vmem:[%s4897 + $0x168] sm:$0xff]
        %v4944 = vld [vmem:[%s4897 + $0x170] sm:$0xff]
        %v4945 = vld [vmem:[%s4897 + $0x178] sm:$0xff]
        %v4946 = vld [vmem:[%s4897 + $0x180] sm:$0xff]
        %v4947 = vld [vmem:[%s4897 + $0x188] sm:$0xff]
        %v4948 = vld [vmem:[%s4897 + $0x190] sm:$0xff]
        %v4949 = vld [vmem:[%s4897 + $0x198] sm:$0xff]
        %v4950 = vld [vmem:[%s4897 + $0x1a0] sm:$0xff]
        %v4951 = vld [vmem:[%s4897 + $0x1a8] sm:$0xff]
        %v4952 = vld [vmem:[%s4897 + $0x1b0] sm:$0xff]
        %v4953 = vld [vmem:[%s4897 + $0x1b8] sm:$0xff]
        %v4954 = vld [vmem:[%s4897 + $0x1c0] sm:$0xff]
        %v4955 = vld [vmem:[%s4897 + $0x1c8] sm:$0xff]
        %v4956 = vld [vmem:[%s4897 + $0x1d0] sm:$0xff]
        %v4957 = vld [vmem:[%s4897 + $0x1d8] sm:$0xff]
        %v4958 = vld [vmem:[%s4897 + $0x1e0] sm:$0xff]
        %v4959 = vld [vmem:[%s4897 + $0x1e8] sm:$0xff]
        %v4960 = vld [vmem:[%s4897 + $0x1f0] sm:$0xff]
        %v4961 = vld [vmem:[%s4897 + $0x1f8] sm:$0xff]
        %v4962 = vld [vmem:[%s4897 + $0x200] sm:$0xff]
        %v4963 = vld [vmem:[%s4897 + $0x208] sm:$0xff]
        %v4964 = vld [vmem:[%s4897 + $0x210] sm:$0xff]
        %v4965 = vld [vmem:[%s4897 + $0x218] sm:$0xff]
        %v4966 = vld [vmem:[%s4897 + $0x220] sm:$0xff]
        %v4967 = vld [vmem:[%s4897 + $0x228] sm:$0xff]
        %v4968 = vld [vmem:[%s4897 + $0x230] sm:$0xff]
        %v4969 = vld [vmem:[%s4897 + $0x238] sm:$0xff]
        %v4970 = vld [vmem:[%s4897 + $0x240] sm:$0xff]
        %v4971 = vld [vmem:[%s4897 + $0x248] sm:$0xff]
        %v4972 = vld [vmem:[%s4897 + $0x250] sm:$0xff]
        %v4973 = vld [vmem:[%s4897 + $0x258] sm:$0xff]
        %v4974 = vld [vmem:[%s4897 + $0x260] sm:$0xff]
        %v4975 = vld [vmem:[%s4897 + $0x268] sm:$0xff]
        %v4976 = vld [vmem:[%s4897 + $0x270] sm:$0xff]
        %v4977 = vld [vmem:[%s4897 + $0x278] sm:$0xff]
        %v4978 = vld [vmem:[%s4897 + $0x280] sm:$0xff]
        %v4979 = vld [vmem:[%s4897 + $0x288] sm:$0xff]
        %v4980 = vld [vmem:[%s4897 + $0x290] sm:$0xff]
        %v4981 = vld [vmem:[%s4897 + $0x298] sm:$0xff]
        %v4982 = vld [vmem:[%s4897 + $0x2a0] sm:$0xff]
        %v4983 = vld [vmem:[%s4897 + $0x2a8] sm:$0xff]
        %v4984 = vld [vmem:[%s4897 + $0x2b0] sm:$0xff]
        %v4985 = vld [vmem:[%s4897 + $0x2b8] sm:$0xff]
        %v4986 = vld [vmem:[%s4897 + $0x2c0] sm:$0xff]
        %v4987 = vld [vmem:[%s4897 + $0x2c8] sm:$0xff]
        %v4988 = vld [vmem:[%s4897 + $0x2d0] sm:$0xff]
        %v4989 = vld [vmem:[%s4897 + $0x2d8] sm:$0xff]
        %v4990 = vld [vmem:[%s4897 + $0x2e0] sm:$0xff]
        %v4991 = vld [vmem:[%s4897 + $0x2e8] sm:$0xff]
        %v4992 = vld [vmem:[%s4897 + $0x2f0] sm:$0xff]
        %v4993 = vld [vmem:[%s4897 + $0x2f8] sm:$0xff]
        %v4994 = vld [vmem:[%s4897 + $0x300] sm:$0xff]
        %v4995 = vld [vmem:[%s4897 + $0x308] sm:$0xff]
        %v4996 = vld [vmem:[%s4897 + $0x310] sm:$0xff]
        %v4997 = vld [vmem:[%s4897 + $0x318] sm:$0xff]
        %v4998 = vld [vmem:[%s4897 + $0x320] sm:$0xff]
        %v4999 = vld [vmem:[%s4897 + $0x328] sm:$0xff]
        %v5000 = vld [vmem:[%s4897 + $0x330] sm:$0xff]
        %v5001 = vld [vmem:[%s4897 + $0x338] sm:$0xff]
        %v5002 = vld [vmem:[%s4897 + $0x340] sm:$0xff]
        %v5003 = vld [vmem:[%s4897 + $0x348] sm:$0xff]
        %v5004 = vld [vmem:[%s4897 + $0x350] sm:$0xff]
        %v5005 = vld [vmem:[%s4897 + $0x358] sm:$0xff]
        %v5006 = vld [vmem:[%s4897 + $0x360] sm:$0xff]
        %v5007 = vld [vmem:[%s4897 + $0x368] sm:$0xff]
        %v5008 = vld [vmem:[%s4897 + $0x370] sm:$0xff]
        %v5009 = vld [vmem:[%s4897 + $0x378] sm:$0xff]
        %v5010 = vld [vmem:[%s4897 + $0x380] sm:$0xff]
        %v5011 = vld [vmem:[%s4897 + $0x388] sm:$0xff]
        %v5012 = vld [vmem:[%s4897 + $0x390] sm:$0xff]
        %v5013 = vld [vmem:[%s4897 + $0x398] sm:$0xff]
        %v5014 = vld [vmem:[%s4897 + $0x3a0] sm:$0xff]
        %v5015 = vld [vmem:[%s4897 + $0x3a8] sm:$0xff]
        %v5016 = vld [vmem:[%s4897 + $0x3b0] sm:$0xff]
        %v5017 = vld [vmem:[%s4897 + $0x3b8] sm:$0xff]
        %v5018 = vld [vmem:[%s4897 + $0x3c0] sm:$0xff]
        %v5019 = vld [vmem:[%s4897 + $0x3c8] sm:$0xff]
        %v5020 = vld [vmem:[%s4897 + $0x3d0] sm:$0xff]
        %v5021 = vld [vmem:[%s4897 + $0x3d8] sm:$0xff]
        %v5022 = vld [vmem:[%s4897 + $0x3e0] sm:$0xff]
        %v5023 = vld [vmem:[%s4897 + $0x3e8] sm:$0xff]
        %v5024 = vld [vmem:[%s4897 + $0x3f0] sm:$0xff]
        %v5025 = vld [vmem:[%s4897 + $0x3f8] sm:$0xff]
        %v5026 = vld [vmem:[%s4897 + $0x400] sm:$0xff]
        %v5027 = vld [vmem:[%s4897 + $0x408] sm:$0xff]
        %v5028 = vld [vmem:[%s4897 + $0x410] sm:$0xff]
        %v5029 = vld [vmem:[%s4897 + $0x418] sm:$0xff]
        %v5030 = vld [vmem:[%s4897 + $0x420] sm:$0xff]
        %v5031 = vld [vmem:[%s4897 + $0x428] sm:$0xff]
        %v5032 = vld [vmem:[%s4897 + $0x430] sm:$0xff]
        %v5033 = vld [vmem:[%s4897 + $0x438] sm:$0xff]
        %v5034 = vld [vmem:[%s4897 + $0x440] sm:$0xff]
        %v5035 = vld [vmem:[%s4897 + $0x448] sm:$0xff]
        %v5036 = vld [vmem:[%s4897 + $0x450] sm:$0xff]
        %v5037 = vld [vmem:[%s4897 + $0x458] sm:$0xff]
        %v5038 = vld [vmem:[%s4897 + $0x460] sm:$0xff]
        %v5039 = vld [vmem:[%s4897 + $0x468] sm:$0xff]
        %v5040 = vld [vmem:[%s4897 + $0x470] sm:$0xff]
        %v5041 = vld [vmem:[%s4897 + $0x478] sm:$0xff]
        %v5042 = vld [vmem:[%s2 + $0x5] sm:$0x1]
        %v5043 = vlaneseq
        %v5044 = vshrl.u32 %v5043, 7
        %v5045 = vsub.s32 0, %v5044
        %v5046 = vrot.slane %v5042, %v5045
        %5047 = vmatprep.subr.mxu0 0.0
        %5048 = vmatpush1.msra.mxu0 %v4898
        %5049 = vmatprep.subr.mxu0 0.0
        %5050 = vmatpush1.msra.mxu0 %v4899
        %5051 = vmatprep.subr.mxu0 0.0
        %5052 = vmatpush1.msra.mxu0 %v4900
        %5053 = vmatprep.subr.mxu0 0.0
        %5054 = vmatpush1.msra.mxu0 %v4901
        %5055 = vmatprep.subr.mxu0 0.0
        %5056 = vmatpush1.msra.mxu0 %v4902
        %5057 = vmatprep.subr.mxu0 0.0
        %5058 = vmatpush1.msra.mxu0 %v4903
        %5059 = vmatprep.subr.mxu0 0.0
        %5060 = vmatpush1.msra.mxu0 %v4904
        %5061 = vmatprep.subr.mxu0 0.0
        %5062 = vmatpush1.msra.mxu0 %v4905
        %5063 = vmatprep.subr.mxu0 0.0
        %5064 = vmatpush1.msra.mxu0 %v4906
        %5065 = vmatprep.subr.mxu0 0.0
        %5066 = vmatpush1.msra.mxu0 %v4907
        %5067 = vmatprep.subr.mxu0 0.0
        %5068 = vmatpush1.msra.mxu0 %v4908
        %5069 = vmatprep.subr.mxu0 0.0
        %5070 = vmatpush1.msra.mxu0 %v4909
        %5071 = vmatprep.subr.mxu0 0.0
        %5072 = vmatpush1.msra.mxu0 %v4910
        %5073 = vmatprep.subr.mxu0 0.0
        %5074 = vmatpush1.msra.mxu0 %v4911
        %5075 = vmatprep.subr.mxu0 0.0
        %5076 = vmatpush1.msra.mxu0 %v4912
        %5077 = vmatprep.subr.mxu0 0.0
        %5078 = vmatpush1.msra.mxu0 %v4913
        %5079 = vmatprep.subr.mxu0 0.0
        %5080 = vmatpush1.msra.mxu0 %v4914
        %5081 = vmatprep.subr.mxu0 0.0
        %5082 = vmatpush1.msra.mxu0 %v4915
        %5083 = vmatprep.subr.mxu0 0.0
        %5084 = vmatpush1.msra.mxu0 %v4916
        %5085 = vmatprep.subr.mxu0 0.0
        %5086 = vmatpush1.msra.mxu0 %v4917
        %5087 = vmatprep.subr.mxu0 0.0
        %5088 = vmatpush1.msra.mxu0 %v4918
        %5089 = vmatprep.subr.mxu0 0.0
        %5090 = vmatpush1.msra.mxu0 %v4919
        %5091 = vmatprep.subr.mxu0 0.0
        %5092 = vmatpush1.msra.mxu0 %v4920
        %5093 = vmatprep.subr.mxu0 0.0
        %5094 = vmatpush1.msra.mxu0 %v4921
        %5095 = vmatprep.subr.mxu0 0.0
        %5096 = vmatpush1.msra.mxu0 %v4922
        %5097 = vmatprep.subr.mxu0 0.0
        %5098 = vmatpush1.msra.mxu0 %v4923
        %5099 = vmatprep.subr.mxu0 0.0
        %5100 = vmatpush1.msra.mxu0 %v4924
        %5101 = vmatprep.subr.mxu0 0.0
        %5102 = vmatpush1.msra.mxu0 %v4925
        %5103 = vmatprep.subr.mxu0 0.0
        %5104 = vmatpush1.msra.mxu0 %v4926
        %5105 = vmatprep.subr.mxu0 0.0
        %5106 = vmatpush1.msra.mxu0 %v4927
        %5107 = vmatprep.subr.mxu0 0.0
        %5108 = vmatpush1.msra.mxu0 %v4928
        %5109 = vmatprep.subr.mxu0 0.0
        %5110 = vmatpush1.msra.mxu0 %v4929
        %5111 = vmatprep.mubr.f32.mxu0 %v4881
        %5112 = vmatmul.mubr.f32.gmra.mrb[0].mxu0 %v4879
        %v5113 = vpop.f32.mrb[0].mxu0
        %v5114 = vadd.f32 %v5046, %v5113
        %v5115 = vpop.f32.mrb[0].mxu0
        %5116 = vmatprep.mubr.f32.mxu0 %v4882
        %5117 = vmatmul.mubr.f32.gmra.mrb[0].mxu0 %v4880
        %v5118 = vpop.f32.mrb[0].mxu0
        %v5119 = vadd.f32 %v5046, %v5118
        %v5120 = vpop.f32.mrb[0].mxu0
        %5121 = vdwg.mxu0
        %5122 = vmatprep.subr.mxu0 0.0
        %5123 = vmatpush1.msra.mxu0 %v4930
        %5124 = vmatprep.subr.mxu0 0.0
        %5125 = vmatpush1.msra.mxu0 %v4931
        %5126 = vmatprep.subr.mxu0 0.0
        %5127 = vmatpush1.msra.mxu0 %v4932
        %5128 = vmatprep.subr.mxu0 0.0
        %5129 = vmatpush1.msra.mxu0 %v4933
        %5130 = vmatprep.subr.mxu0 0.0
        %5131 = vmatpush1.msra.mxu0 %v4934
        %5132 = vmatprep.subr.mxu0 0.0
        %5133 = vmatpush1.msra.mxu0 %v4935
        %5134 = vmatprep.subr.mxu0 0.0
        %5135 = vmatpush1.msra.mxu0 %v4936
        %5136 = vmatprep.subr.mxu0 0.0
        %5137 = vmatpush1.msra.mxu0 %v4937
        %5138 = vmatprep.subr.mxu0 0.0
        %5139 = vmatpush1.msra.mxu0 %v4938
        %5140 = vmatprep.subr.mxu0 0.0
        %5141 = vmatpush1.msra.mxu0 %v4939
        %5142 = vmatprep.subr.mxu0 0.0
        %5143 = vmatpush1.msra.mxu0 %v4940
        %5144 = vmatprep.subr.mxu0 0.0
        %5145 = vmatpush1.msra.mxu0 %v4941
        %5146 = vmatprep.subr.mxu0 0.0
        %5147 = vmatpush1.msra.mxu0 %v4942
        %5148 = vmatprep.subr.mxu0 0.0
        %5149 = vmatpush1.msra.mxu0 %v4943
        %5150 = vmatprep.subr.mxu0 0.0
        %5151 = vmatpush1.msra.mxu0 %v4944
        %5152 = vmatprep.subr.mxu0 0.0
        %5153 = vmatpush1.msra.mxu0 %v4945
        %5154 = vmatprep.subr.mxu0 0.0
        %5155 = vmatpush1.msra.mxu0 %v4946
        %5156 = vmatprep.subr.mxu0 0.0
        %5157 = vmatpush1.msra.mxu0 %v4947
        %5158 = vmatprep.subr.mxu0 0.0
        %5159 = vmatpush1.msra.mxu0 %v4948
        %5160 = vmatprep.subr.mxu0 0.0
        %5161 = vmatpush1.msra.mxu0 %v4949
        %5162 = vmatprep.subr.mxu0 0.0
        %5163 = vmatpush1.msra.mxu0 %v4950
        %5164 = vmatprep.subr.mxu0 0.0
        %5165 = vmatpush1.msra.mxu0 %v4951
        %5166 = vmatprep.subr.mxu0 0.0
        %5167 = vmatpush1.msra.mxu0 %v4952
        %5168 = vmatprep.subr.mxu0 0.0
        %5169 = vmatpush1.msra.mxu0 %v4953
        %5170 = vmatprep.subr.mxu0 0.0
        %5171 = vmatpush1.msra.mxu0 %v4954
        %5172 = vmatprep.subr.mxu0 0.0
        %5173 = vmatpush1.msra.mxu0 %v4955
        %5174 = vmatprep.subr.mxu0 0.0
        %5175 = vmatpush1.msra.mxu0 %v4956
        %5176 = vmatprep.subr.mxu0 0.0
        %5177 = vmatpush1.msra.mxu0 %v4957
        %5178 = vmatprep.subr.mxu0 0.0
        %5179 = vmatpush1.msra.mxu0 %v4958
        %5180 = vmatprep.subr.mxu0 0.0
        %5181 = vmatpush1.msra.mxu0 %v4959
        %5182 = vmatprep.subr.mxu0 0.0
        %5183 = vmatpush1.msra.mxu0 %v4960
        %5184 = vmatprep.subr.mxu0 0.0
        %5185 = vmatpush1.msra.mxu0 %v4961
        %5186 = vmatprep.mubr.f32.mxu0 %v4885
        %5187 = vmatmul.mubr.f32.gmra.mrb[0].mxu0 %v4883
        %v5188 = vpop.f32.mrb[0].mxu0
        %v5189 = vadd.f32 %v5114, %v5188
        %v5190 = vpop.f32.mrb[0].mxu0
        %5191 = vmatprep.mubr.f32.mxu0 %v4886
        %5192 = vmatmul.mubr.f32.gmra.mrb[0].mxu0 %v4884
        %v5193 = vpop.f32.mrb[0].mxu0
        %v5194 = vadd.f32 %v5119, %v5193
        %v5195 = vpop.f32.mrb[0].mxu0
        %5196 = vdwg.mxu0
        %5197 = vmatprep.subr.mxu0 0.0
        %5198 = vmatpush1.msra.mxu0 %v4962
        %5199 = vmatprep.subr.mxu0 0.0
        %5200 = vmatpush1.msra.mxu0 %v4963
        %5201 = vmatprep.subr.mxu0 0.0
        %5202 = vmatpush1.msra.mxu0 %v4964
        %5203 = vmatprep.subr.mxu0 0.0
        %5204 = vmatpush1.msra.mxu0 %v4965
        %5205 = vmatprep.subr.mxu0 0.0
        %5206 = vmatpush1.msra.mxu0 %v4966
        %5207 = vmatprep.subr.mxu0 0.0
        %5208 = vmatpush1.msra.mxu0 %v4967
        %5209 = vmatprep.subr.mxu0 0.0
        %5210 = vmatpush1.msra.mxu0 %v4968
        %5211 = vmatprep.subr.mxu0 0.0
        %5212 = vmatpush1.msra.mxu0 %v4969
        %5213 = vmatprep.subr.mxu0 0.0
        %5214 = vmatpush1.msra.mxu0 %v4970
        %5215 = vmatprep.subr.mxu0 0.0
        %5216 = vmatpush1.msra.mxu0 %v4971
        %5217 = vmatprep.subr.mxu0 0.0
        %5218 = vmatpush1.msra.mxu0 %v4972
        %5219 = vmatprep.subr.mxu0 0.0
        %5220 = vmatpush1.msra.mxu0 %v4973
        %5221 = vmatprep.subr.mxu0 0.0
        %5222 = vmatpush1.msra.mxu0 %v4974
        %5223 = vmatprep.subr.mxu0 0.0
        %5224 = vmatpush1.msra.mxu0 %v4975
        %5225 = vmatprep.subr.mxu0 0.0
        %5226 = vmatpush1.msra.mxu0 %v4976
        %5227 = vmatprep.subr.mxu0 0.0
        %5228 = vmatpush1.msra.mxu0 %v4977
        %5229 = vmatprep.subr.mxu0 0.0
        %5230 = vmatpush1.msra.mxu0 %v4978
        %5231 = vmatprep.subr.mxu0 0.0
        %5232 = vmatpush1.msra.mxu0 %v4979
        %5233 = vmatprep.subr.mxu0 0.0
        %5234 = vmatpush1.msra.mxu0 %v4980
        %5235 = vmatprep.subr.mxu0 0.0
        %5236 = vmatpush1.msra.mxu0 %v4981
        %5237 = vmatprep.subr.mxu0 0.0
        %5238 = vmatpush1.msra.mxu0 %v4982
        %5239 = vmatprep.subr.mxu0 0.0
        %5240 = vmatpush1.msra.mxu0 %v4983
        %5241 = vmatprep.subr.mxu0 0.0
        %5242 = vmatpush1.msra.mxu0 %v4984
        %5243 = vmatprep.subr.mxu0 0.0
        %5244 = vmatpush1.msra.mxu0 %v4985
        %5245 = vmatprep.subr.mxu0 0.0
        %5246 = vmatpush1.msra.mxu0 %v4986
        %5247 = vmatprep.subr.mxu0 0.0
        %5248 = vmatpush1.msra.mxu0 %v4987
        %5249 = vmatprep.subr.mxu0 0.0
        %5250 = vmatpush1.msra.mxu0 %v4988
        %5251 = vmatprep.subr.mxu0 0.0
        %5252 = vmatpush1.msra.mxu0 %v4989
        %5253 = vmatprep.subr.mxu0 0.0
        %5254 = vmatpush1.msra.mxu0 %v4990
        %5255 = vmatprep.subr.mxu0 0.0
        %5256 = vmatpush1.msra.mxu0 %v4991
        %5257 = vmatprep.subr.mxu0 0.0
        %5258 = vmatpush1.msra.mxu0 %v4992
        %5259 = vmatprep.subr.mxu0 0.0
        %5260 = vmatpush1.msra.mxu0 %v4993
        %5261 = vmatprep.mubr.f32.mxu0 %v4889
        %5262 = vmatmul.mubr.f32.gmra.mrb[0].mxu0 %v4887
        %v5263 = vpop.f32.mrb[0].mxu0
        %v5264 = vadd.f32 %v5189, %v5263
        %v5265 = vpop.f32.mrb[0].mxu0
        %5266 = vmatprep.mubr.f32.mxu0 %v4890
        %5267 = vmatmul.mubr.f32.gmra.mrb[0].mxu0 %v4888
        %v5268 = vpop.f32.mrb[0].mxu0
        %v5269 = vadd.f32 %v5194, %v5268
        %v5270 = vpop.f32.mrb[0].mxu0
        %5271 = vdwg.mxu0
        %5272 = vmatprep.subr.mxu0 0.0
        %5273 = vmatpush1.msra.mxu0 %v4994
        %5274 = vmatprep.subr.mxu0 0.0
        %5275 = vmatpush1.msra.mxu0 %v4995
        %5276 = vmatprep.subr.mxu0 0.0
        %5277 = vmatpush1.msra.mxu0 %v4996
        %5278 = vmatprep.subr.mxu0 0.0
        %5279 = vmatpush1.msra.mxu0 %v4997
        %5280 = vmatprep.subr.mxu0 0.0
        %5281 = vmatpush1.msra.mxu0 %v4998
        %5282 = vmatprep.subr.mxu0 0.0
        %5283 = vmatpush1.msra.mxu0 %v4999
        %5284 = vmatprep.subr.mxu0 0.0
        %5285 = vmatpush1.msra.mxu0 %v5000
        %5286 = vmatprep.subr.mxu0 0.0
        %5287 = vmatpush1.msra.mxu0 %v5001
        %5288 = vmatprep.subr.mxu0 0.0
        %5289 = vmatpush1.msra.mxu0 %v5002
        %5290 = vmatprep.subr.mxu0 0.0
        %5291 = vmatpush1.msra.mxu0 %v5003
        %5292 = vmatprep.subr.mxu0 0.0
        %5293 = vmatpush1.msra.mxu0 %v5004
        %5294 = vmatprep.subr.mxu0 0.0
        %5295 = vmatpush1.msra.mxu0 %v5005
        %5296 = vmatprep.subr.mxu0 0.0
        %5297 = vmatpush1.msra.mxu0 %v5006
        %5298 = vmatprep.subr.mxu0 0.0
        %5299 = vmatpush1.msra.mxu0 %v5007
        %5300 = vmatprep.subr.mxu0 0.0
        %5301 = vmatpush1.msra.mxu0 %v5008
        %5302 = vmatprep.subr.mxu0 0.0
        %5303 = vmatpush1.msra.mxu0 %v5009
        %5304 = vmatprep.subr.mxu0 0.0
        %5305 = vmatpush1.msra.mxu0 %v5010
        %5306 = vmatprep.subr.mxu0 0.0
        %5307 = vmatpush1.msra.mxu0 %v5011
        %5308 = vmatprep.subr.mxu0 0.0
        %5309 = vmatpush1.msra.mxu0 %v5012
        %5310 = vmatprep.subr.mxu0 0.0
        %5311 = vmatpush1.msra.mxu0 %v5013
        %5312 = vmatprep.subr.mxu0 0.0
        %5313 = vmatpush1.msra.mxu0 %v5014
        %5314 = vmatprep.subr.mxu0 0.0
        %5315 = vmatpush1.msra.mxu0 %v5015
        %5316 = vmatprep.subr.mxu0 0.0
        %5317 = vmatpush1.msra.mxu0 %v5016
        %5318 = vmatprep.subr.mxu0 0.0
        %5319 = vmatpush1.msra.mxu0 %v5017
        %5320 = vmatprep.subr.mxu0 0.0
        %5321 = vmatpush1.msra.mxu0 %v5018
        %5322 = vmatprep.subr.mxu0 0.0
        %5323 = vmatpush1.msra.mxu0 %v5019
        %5324 = vmatprep.subr.mxu0 0.0
        %5325 = vmatpush1.msra.mxu0 %v5020
        %5326 = vmatprep.subr.mxu0 0.0
        %5327 = vmatpush1.msra.mxu0 %v5021
        %5328 = vmatprep.subr.mxu0 0.0
        %5329 = vmatpush1.msra.mxu0 %v5022
        %5330 = vmatprep.subr.mxu0 0.0
        %5331 = vmatpush1.msra.mxu0 %v5023
        %5332 = vmatprep.subr.mxu0 0.0
        %5333 = vmatpush1.msra.mxu0 %v5024
        %5334 = vmatprep.subr.mxu0 0.0
        %5335 = vmatpush1.msra.mxu0 %v5025
        %5336 = vmatprep.mubr.f32.mxu0 %v4893
        %5337 = vmatmul.mubr.f32.gmra.mrb[0].mxu0 %v4891
        %v5338 = vpop.f32.mrb[0].mxu0
        %v5339 = vadd.f32 %v5264, %v5338
        %v5340 = vpop.f32.mrb[0].mxu0
        %5341 = vmatprep.mubr.f32.mxu0 %v4894
        %5342 = vmatmul.mubr.f32.gmra.mrb[0].mxu0 %v4892
        %v5343 = vpop.f32.mrb[0].mxu0
        %v5344 = vadd.f32 %v5269, %v5343
        %v5345 = vpop.f32.mrb[0].mxu0
        %5346 = vdwg.mxu0
        %5347 = vmatprep.subr.mxu0 0.0
        %5348 = vmatpush1.msra.mxu0 %v5026
        %5349 = vmatprep.subr.mxu0 0.0
        %5350 = vmatpush1.msra.mxu0 %v5027
        %5351 = vmatprep.subr.mxu0 0.0
        %5352 = vmatpush1.msra.mxu0 %v5028
        %5353 = vmatprep.subr.mxu0 0.0
        %5354 = vmatpush1.msra.mxu0 %v5029
        %5355 = vmatprep.subr.mxu0 0.0
        %5356 = vmatpush1.msra.mxu0 %v5030
        %5357 = vmatprep.subr.mxu0 0.0
        %5358 = vmatpush1.msra.mxu0 %v5031
        %5359 = vmatprep.subr.mxu0 0.0
        %5360 = vmatpush1.msra.mxu0 %v5032
        %5361 = vmatprep.subr.mxu0 0.0
        %5362 = vmatpush1.msra.mxu0 %v5033
        %5363 = vmatprep.subr.mxu0 0.0
        %5364 = vmatpush1.msra.mxu0 %v5034
        %5365 = vmatprep.subr.mxu0 0.0
        %5366 = vmatpush1.msra.mxu0 %v5035
        %5367 = vmatprep.subr.mxu0 0.0
        %5368 = vmatpush1.msra.mxu0 %v5036
        %5369 = vmatprep.subr.mxu0 0.0
        %5370 = vmatpush1.msra.mxu0 %v5037
        %5371 = vmatprep.subr.mxu0 0.0
        %5372 = vmatpush1.msra.mxu0 %v5038
        %5373 = vmatprep.subr.mxu0 0.0
        %5374 = vmatpush1.msra.mxu0 %v5039
        %5375 = vmatprep.subr.mxu0 0.0
        %5376 = vmatpush1.msra.mxu0 %v5040
        %5377 = vmatprep.subr.mxu0 0.0
        %5378 = vmatpush1.msra.mxu0 %v5041
        %5379 = vmatprep.subr.mxu0 0.0
        %5380 = vmatpush1.msra.mxu0 0.0
        %5381 = vmatprep.subr.mxu0 0.0
        %5382 = vmatpush1.msra.mxu0 0.0
        %5383 = vmatprep.subr.mxu0 0.0
        %5384 = vmatpush1.msra.mxu0 0.0
        %5385 = vmatprep.subr.mxu0 0.0
        %5386 = vmatpush1.msra.mxu0 0.0
        %5387 = vmatprep.subr.mxu0 0.0
        %5388 = vmatpush1.msra.mxu0 0.0
        %5389 = vmatprep.subr.mxu0 0.0
        %5390 = vmatpush1.msra.mxu0 0.0
        %5391 = vmatprep.subr.mxu0 0.0
        %5392 = vmatpush1.msra.mxu0 0.0
        %5393 = vmatprep.subr.mxu0 0.0
        %5394 = vmatpush1.msra.mxu0 0.0
        %5395 = vmatprep.subr.mxu0 0.0
        %5396 = vmatpush1.msra.mxu0 0.0
        %5397 = vmatprep.subr.mxu0 0.0
        %5398 = vmatpush1.msra.mxu0 0.0
        %5399 = vmatprep.subr.mxu0 0.0
        %5400 = vmatpush1.msra.mxu0 0.0
        %5401 = vmatprep.subr.mxu0 0.0
        %5402 = vmatpush1.msra.mxu0 0.0
        %5403 = vmatprep.subr.mxu0 0.0
        %5404 = vmatpush1.msra.mxu0 0.0
        %5405 = vmatprep.subr.mxu0 0.0
        %5406 = vmatpush1.msra.mxu0 0.0
        %5407 = vmatprep.subr.mxu0 0.0
        %5408 = vmatpush1.msra.mxu0 0.0
        %5409 = vmatprep.subr.mxu0 0.0
        %5410 = vmatpush1.msra.mxu0 0.0
        %5411 = vmatprep.mubr.f32.mxu0 0.0
        %5412 = vmatmul.mubr.f32.gmra.mrb[0].mxu0 %v4895
        %v5413 = vpop.f32.mrb[0].mxu0
        %v5414 = vadd.f32 %v5339, %v5413
        %v5415 = vpop.f32.mrb[0].mxu0
        %5416 = vmatprep.mubr.f32.mxu0 0.0
        %5417 = vmatmul.mubr.f32.gmra.mrb[0].mxu0 %v4896
        %v5418 = vpop.f32.mrb[0].mxu0
        %v5419 = vadd.f32 %v5344, %v5418
        %v5420 = vpop.f32.mrb[0].mxu0
        %5421 = vdwg.mxu0
        %v5423 = vrot.slane %v5414, 5
        %v5425 = vmax.f32 %v5414, %v5423
        %v5427 = vrot.slane %v5419, 2
        %v5429 = vmax.f32 %v5425, %v5427
        %vm5430 = vcmask 1042432
        %v5431 = vsel %vm5430, %v5429, -inf
        %v5432 = vrot.slane %v5431, 4
        %v5433 = vmax.f32 %v5431, %v5432
        %v5434 = vrot.slane %v5433, 2
        %v5435 = vmax.f32 %v5433, %v5434
        %v5436 = vrot.slane %v5435, 1
        %v5437 = vmax.f32 %v5435, %v5436
        %v5438 = vld [vmem:[%s3] sm:$0xff]
        %v5439 = vld [vmem:[%s3 + $0x8] sm:$0xff]
        %v5440 = vld [vmem:[%s3 + $0x10] sm:$0xff]
        %v5441 = vld [vmem:[%s3 + $0x18] sm:$0xff]
        %v5442 = vld [vmem:[%s3 + $0x20] sm:$0xff]
        %v5443 = vld [vmem:[%s3 + $0x28] sm:$0xff]
        %v5444 = vld [vmem:[%s3 + $0x30] sm:$0xff]
        %v5445 = vld [vmem:[%s3 + $0x38] sm:$0xff]
        %v5446 = vld [vmem:[%s3 + $0x40] sm:$0xff]
        %v5447 = vld [vmem:[%s3 + $0x48] sm:$0xff]
        %v5448 = vld [vmem:[%s3 + $0x50] sm:$0xff]
        %v5449 = vld [vmem:[%s3 + $0x58] sm:$0xff]
        %v5450 = vld [vmem:[%s3 + $0x60] sm:$0xff]
        %v5451 = vld [vmem:[%s3 + $0x68] sm:$0xff]
        %v5452 = vld [vmem:[%s3 + $0x70] sm:$0xff]
        %v5453 = vld [vmem:[%s3 + $0x78] sm:$0xff]
        %v5454 = vld [vmem:[%s4] sm:$0x1]
        %5455 = vmatprep.subr.mxu0 0.0
        %5456 = vmatpush1.msra.mxu0 %v5438
        %5457 = vmatprep.subr.mxu0 0.0
        %5458 = vmatpush1.msra.mxu0 %v5439
        %5459 = vmatprep.subr.mxu0 0.0
        %5460 = vmatpush1.msra.mxu0 %v5440
        %5461 = vmatprep.subr.mxu0 0.0
        %5462 = vmatpush1.msra.mxu0 %v5441
        %5463 = vmatprep.subr.mxu0 0.0
        %5464 = vmatpush1.msra.mxu0 %v5442
        %5465 = vmatprep.subr.mxu0 0.0
        %5466 = vmatpush1.msra.mxu0 %v5443
        %5467 = vmatprep.subr.mxu0 0.0
        %5468 = vmatpush1.msra.mxu0 %v5444
        %5469 = vmatprep.subr.mxu0 0.0
        %5470 = vmatpush1.msra.mxu0 %v5445
        %5471 = vmatprep.subr.mxu0 0.0
        %5472 = vmatpush1.msra.mxu0 %v5446
        %5473 = vmatprep.subr.mxu0 0.0
        %5474 = vmatpush1.msra.mxu0 %v5447
        %5475 = vmatprep.subr.mxu0 0.0
        %5476 = vmatpush1.msra.mxu0 %v5448
        %5477 = vmatprep.subr.mxu0 0.0
        %5478 = vmatpush1.msra.mxu0 %v5449
        %5479 = vmatprep.subr.mxu0 0.0
        %5480 = vmatpush1.msra.mxu0 %v5450
        %5481 = vmatprep.subr.mxu0 0.0
        %5482 = vmatpush1.msra.mxu0 %v5451
        %5483 = vmatprep.subr.mxu0 0.0
        %5484 = vmatpush1.msra.mxu0 %v5452
        %5485 = vmatprep.subr.mxu0 0.0
        %5486 = vmatpush1.msra.mxu0 %v5453
        %5487 = vmatprep.subr.mxu0 0.0
        %5488 = vmatpush1.msra.mxu0 0.0
        %5489 = vmatprep.subr.mxu0 0.0
        %5490 = vmatpush1.msra.mxu0 0.0
        %5491 = vmatprep.subr.mxu0 0.0
        %5492 = vmatpush1.msra.mxu0 0.0
        %5493 = vmatprep.subr.mxu0 0.0
        %5494 = vmatpush1.msra.mxu0 0.0
        %5495 = vmatprep.subr.mxu0 0.0
        %5496 = vmatpush1.msra.mxu0 0.0
        %5497 = vmatprep.subr.mxu0 0.0
        %5498 = vmatpush1.msra.mxu0 0.0
        %5499 = vmatprep.subr.mxu0 0.0
        %5500 = vmatpush1.msra.mxu0 0.0
        %5501 = vmatprep.subr.mxu0 0.0
        %5502 = vmatpush1.msra.mxu0 0.0
        %5503 = vmatprep.subr.mxu0 0.0
        %5504 = vmatpush1.msra.mxu0 0.0
        %5505 = vmatprep.subr.mxu0 0.0
        %5506 = vmatpush1.msra.mxu0 0.0
        %5507 = vmatprep.subr.mxu0 0.0
        %5508 = vmatpush1.msra.mxu0 0.0
        %5509 = vmatprep.subr.mxu0 0.0
        %5510 = vmatpush1.msra.mxu0 0.0
        %5511 = vmatprep.subr.mxu0 0.0
        %5512 = vmatpush1.msra.mxu0 0.0
        %5513 = vmatprep.subr.mxu0 0.0
        %5514 = vmatpush1.msra.mxu0 0.0
        %5515 = vmatprep.subr.mxu0 0.0
        %5516 = vmatpush1.msra.mxu0 0.0
        %5517 = vmatprep.subr.mxu0 0.0
        %5518 = vmatpush1.msra.mxu0 0.0
        %5519 = vmatprep.mubr.f32.mxu0 0.0
        %5520 = vmatmul.mubr.f32.gmra.mrb[0].mxu0 %v5437
        %v5521 = vpop.f32.mrb[0].mxu0
        %v5522 = vadd.f32 %v5454, %v5521
        %v5523 = vpop.f32.mrb[0].mxu0
        %5524 = vdwg.mxu0
        %v5525 = vmax.f32 %v5522, 0.0
        %s5526 = scalar_lea.vmem %s3, 128
        %v5527 = vld [vmem:[%s5526] sm:$0xff]
        %v5528 = vld [vmem:[%s5526 + $0x8] sm:$0xff]
        %v5529 = vld [vmem:[%s5526 + $0x10] sm:$0xff]
        %v5530 = vld [vmem:[%s5526 + $0x18] sm:$0xff]
        %v5531 = vld [vmem:[%s5526 + $0x20] sm:$0xff]
        %v5532 = vld [vmem:[%s5526 + $0x28] sm:$0xff]
        %v5533 = vld [vmem:[%s5526 + $0x30] sm:$0xff]
        %v5534 = vld [vmem:[%s5526 + $0x38] sm:$0xff]
        %v5535 = vld [vmem:[%s5526 + $0x40] sm:$0xff]
        %v5536 = vld [vmem:[%s5526 + $0x48] sm:$0xff]
        %v5537 = vld [vmem:[%s5526 + $0x50] sm:$0xff]
        %v5538 = vld [vmem:[%s5526 + $0x58] sm:$0xff]
        %v5539 = vld [vmem:[%s5526 + $0x60] sm:$0xff]
        %v5540 = vld [vmem:[%s5526 + $0x68] sm:$0xff]
        %v5541 = vld [vmem:[%s5526 + $0x70] sm:$0xff]
        %v5542 = vld [vmem:[%s5526 + $0x78] sm:$0xff]
        %v5543 = vld [vmem:[%s4 + $0x1] sm:$0x1]
        %5544 = vmatprep.subr.mxu0 0.0
        %5545 = vmatpush1.msra.mxu0 %v5527
        %5546 = vmatprep.subr.mxu0 0.0
        %5547 = vmatpush1.msra.mxu0 %v5528
        %5548 = vmatprep.subr.mxu0 0.0
        %5549 = vmatpush1.msra.mxu0 %v5529
        %5550 = vmatprep.subr.mxu0 0.0
        %5551 = vmatpush1.msra.mxu0 %v5530
        %5552 = vmatprep.subr.mxu0 0.0
        %5553 = vmatpush1.msra.mxu0 %v5531
        %5554 = vmatprep.subr.mxu0 0.0
        %5555 = vmatpush1.msra.mxu0 %v5532
        %5556 = vmatprep.subr.mxu0 0.0
        %5557 = vmatpush1.msra.mxu0 %v5533
        %5558 = vmatprep.subr.mxu0 0.0
        %5559 = vmatpush1.msra.mxu0 %v5534
        %5560 = vmatprep.subr.mxu0 0.0
        %5561 = vmatpush1.msra.mxu0 %v5535
        %5562 = vmatprep.subr.mxu0 0.0
        %5563 = vmatpush1.msra.mxu0 %v5536
        %5564 = vmatprep.subr.mxu0 0.0
        %5565 = vmatpush1.msra.mxu0 %v5537
        %5566 = vmatprep.subr.mxu0 0.0
        %5567 = vmatpush1.msra.mxu0 %v5538
        %5568 = vmatprep.subr.mxu0 0.0
        %5569 = vmatpush1.msra.mxu0 %v5539
        %5570 = vmatprep.subr.mxu0 0.0
        %5571 = vmatpush1.msra.mxu0 %v5540
        %5572 = vmatprep.subr.mxu0 0.0
        %5573 = vmatpush1.msra.mxu0 %v5541
        %5574 = vmatprep.subr.mxu0 0.0
        %5575 = vmatpush1.msra.mxu0 %v5542
        %5576 = vmatprep.subr.mxu0 0.0
        %5577 = vmatpush1.msra.mxu0 0.0
        %5578 = vmatprep.subr.mxu0 0.0
        %5579 = vmatpush1.msra.mxu0 0.0
        %5580 = vmatprep.subr.mxu0 0.0
        %5581 = vmatpush1.msra.mxu0 0.0
        %5582 = vmatprep.subr.mxu0 0.0
        %5583 = vmatpush1.msra.mxu0 0.0
        %5584 = vmatprep.subr.mxu0 0.0
        %5585 = vmatpush1.msra.mxu0 0.0
        %5586 = vmatprep.subr.mxu0 0.0
        %5587 = vmatpush1.msra.mxu0 0.0
        %5588 = vmatprep.subr.mxu0 0.0
        %5589 = vmatpush1.msra.mxu0 0.0
        %5590 = vmatprep.subr.mxu0 0.0
        %5591 = vmatpush1.msra.mxu0 0.0
        %5592 = vmatprep.subr.mxu0 0.0
        %5593 = vmatpush1.msra.mxu0 0.0
        %5594 = vmatprep.subr.mxu0 0.0
        %5595 = vmatpush1.msra.mxu0 0.0
        %5596 = vmatprep.subr.mxu0 0.0
        %5597 = vmatpush1.msra.mxu0 0.0
        %5598 = vmatprep.subr.mxu0 0.0
        %5599 = vmatpush1.msra.mxu0 0.0
        %5600 = vmatprep.subr.mxu0 0.0
        %5601 = vmatpush1.msra.mxu0 0.0
        %5602 = vmatprep.subr.mxu0 0.0
        %5603 = vmatpush1.msra.mxu0 0.0
        %5604 = vmatprep.subr.mxu0 0.0
        %5605 = vmatpush1.msra.mxu0 0.0
        %5606 = vmatprep.subr.mxu0 0.0
        %5607 = vmatpush1.msra.mxu0 0.0
        %5608 = vmatprep.mubr.f32.mxu0 0.0
        %5609 = vmatmul.mubr.f32.gmra.mrb[0].mxu0 %v5525
        %v5610 = vpop.f32.mrb[0].mxu0
        %v5611 = vadd.f32 %v5543, %v5610
        %v5612 = vpop.f32.mrb[0].mxu0
        %5613 = vdwg.mxu0
        %v5614 = vmax.f32 %v5611, 0.0
        %s5615 = scalar_lea.vmem %s3, 256
        %v5616 = vld [vmem:[%s5615] sm:$0xff]
        %v5617 = vld [vmem:[%s5615 + $0x8] sm:$0xff]
        %v5618 = vld [vmem:[%s5615 + $0x10] sm:$0xff]
        %v5619 = vld [vmem:[%s5615 + $0x18] sm:$0xff]
        %v5620 = vld [vmem:[%s5615 + $0x20] sm:$0xff]
        %v5621 = vld [vmem:[%s5615 + $0x28] sm:$0xff]
        %v5622 = vld [vmem:[%s5615 + $0x30] sm:$0xff]
        %v5623 = vld [vmem:[%s5615 + $0x38] sm:$0xff]
        %v5624 = vld [vmem:[%s5615 + $0x40] sm:$0xff]
        %v5625 = vld [vmem:[%s5615 + $0x48] sm:$0xff]
        %v5626 = vld [vmem:[%s5615 + $0x50] sm:$0xff]
        %v5627 = vld [vmem:[%s5615 + $0x58] sm:$0xff]
        %v5628 = vld [vmem:[%s5615 + $0x60] sm:$0xff]
        %v5629 = vld [vmem:[%s5615 + $0x68] sm:$0xff]
        %v5630 = vld [vmem:[%s5615 + $0x70] sm:$0xff]
        %v5631 = vld [vmem:[%s5615 + $0x78] sm:$0xff]
        %v5632 = vld [vmem:[%s4 + $0x2] sm:$0x1]
        %5633 = vmatprep.subr.mxu0 0.0
        %5634 = vmatpush1.msra.mxu0 %v5616
        %5635 = vmatprep.subr.mxu0 0.0
        %5636 = vmatpush1.msra.mxu0 %v5617
        %5637 = vmatprep.subr.mxu0 0.0
        %5638 = vmatpush1.msra.mxu0 %v5618
        %5639 = vmatprep.subr.mxu0 0.0
        %5640 = vmatpush1.msra.mxu0 %v5619
        %5641 = vmatprep.subr.mxu0 0.0
        %5642 = vmatpush1.msra.mxu0 %v5620
        %5643 = vmatprep.subr.mxu0 0.0
        %5644 = vmatpush1.msra.mxu0 %v5621
        %5645 = vmatprep.subr.mxu0 0.0
        %5646 = vmatpush1.msra.mxu0 %v5622
        %5647 = vmatprep.subr.mxu0 0.0
        %5648 = vmatpush1.msra.mxu0 %v5623
        %5649 = vmatprep.subr.mxu0 0.0
        %5650 = vmatpush1.msra.mxu0 %v5624
        %5651 = vmatprep.subr.mxu0 0.0
        %5652 = vmatpush1.msra.mxu0 %v5625
        %5653 = vmatprep.subr.mxu0 0.0
        %5654 = vmatpush1.msra.mxu0 %v5626
        %5655 = vmatprep.subr.mxu0 0.0
        %5656 = vmatpush1.msra.mxu0 %v5627
        %5657 = vmatprep.subr.mxu0 0.0
        %5658 = vmatpush1.msra.mxu0 %v5628
        %5659 = vmatprep.subr.mxu0 0.0
        %5660 = vmatpush1.msra.mxu0 %v5629
        %5661 = vmatprep.subr.mxu0 0.0
        %5662 = vmatpush1.msra.mxu0 %v5630
        %5663 = vmatprep.subr.mxu0 0.0
        %5664 = vmatpush1.msra.mxu0 %v5631
        %5665 = vmatprep.subr.mxu0 0.0
        %5666 = vmatpush1.msra.mxu0 0.0
        %5667 = vmatprep.subr.mxu0 0.0
        %5668 = vmatpush1.msra.mxu0 0.0
        %5669 = vmatprep.subr.mxu0 0.0
        %5670 = vmatpush1.msra.mxu0 0.0
        %5671 = vmatprep.subr.mxu0 0.0
        %5672 = vmatpush1.msra.mxu0 0.0
        %5673 = vmatprep.subr.mxu0 0.0
        %5674 = vmatpush1.msra.mxu0 0.0
        %5675 = vmatprep.subr.mxu0 0.0
        %5676 = vmatpush1.msra.mxu0 0.0
        %5677 = vmatprep.subr.mxu0 0.0
        %5678 = vmatpush1.msra.mxu0 0.0
        %5679 = vmatprep.subr.mxu0 0.0
        %5680 = vmatpush1.msra.mxu0 0.0
        %5681 = vmatprep.subr.mxu0 0.0
        %5682 = vmatpush1.msra.mxu0 0.0
        %5683 = vmatprep.subr.mxu0 0.0
        %5684 = vmatpush1.msra.mxu0 0.0
        %5685 = vmatprep.subr.mxu0 0.0
        %5686 = vmatpush1.msra.mxu0 0.0
        %5687 = vmatprep.subr.mxu0 0.0
        %5688 = vmatpush1.msra.mxu0 0.0
        %5689 = vmatprep.subr.mxu0 0.0
        %5690 = vmatpush1.msra.mxu0 0.0
        %5691 = vmatprep.subr.mxu0 0.0
        %5692 = vmatpush1.msra.mxu0 0.0
        %5693 = vmatprep.subr.mxu0 0.0
        %5694 = vmatpush1.msra.mxu0 0.0
        %5695 = vmatprep.subr.mxu0 0.0
        %5696 = vmatpush1.msra.mxu0 0.0
        %5697 = vmatprep.mubr.f32.mxu0 0.0
        %5698 = vmatmul.mubr.f32.gmra.mrb[0].mxu0 %v5614
        %v5699 = vpop.f32.mrb[0].mxu0
        %v5700 = vadd.f32 %v5632, %v5699
        %v5701 = vpop.f32.mrb[0].mxu0
        %5702 = vdwg.mxu0
        %5703 = vst [vmem:[%s216] sm:$0x1] %v5700
        %s5704 = sand.u32 %s137, 1
        %s5705 = scalar_lea.sflag [#allocation9], %s5704
        %s5706 = sand.u32 %s137, 1
        %s5707 = scalar_lea.vmem [#allocation8], %s5706
        // Predicated region
        $region41: #{kazunet_forward.1} parent=39 // pred_check
          %p5708 = pneg %p147
        $region42: #{kazunet_forward.1} parent=39 // pred_check_branch
          %5710 = sbr.rel (%p5708) target = $region44
        $region43: #{kazunet_forward.1} parent=39 // pred_region
          %s5712 = ssub.s32 16, 16
          %5713 = vsyncadd %s5705, %s5712
          %s5714 = smul.addr %s19, 16
          %s5715 = scalar_lea.hbm %s5, %s5714
          %s5717 = sshll.u32 %s5707, 4
          %s5718 = int_to_ptr.vmem [resolvable:$true] %s5717
          %5720 = dma.vmem_to_hbm [thread:$0]  %s5718, 16, %s5715, %s5705
        $region44: #{kazunet_forward.1} parent=39 // pred_fallthru
          _
      $region40: #{kazunet_forward.1} parent=5 // pred_fallthru
        _
      %p5721 = scmp.le.s32.totalorder 2, %s14
      // Predicated region
      $region45: #{kazunet_forward.1} parent=5 // pred_check
        %p5722 = pneg %p5721
      $region46: #{kazunet_forward.1} parent=5 // pred_check_branch
        %5724 = sbr.rel (%p5722) target = $region48
      $region47: #{kazunet_forward.1} parent=5 // pred_region
        %s5725 = ssub.s32 %s14, 2
        // Predicated region
        $region49: #{kazunet_forward.1} parent=47 // pred_check
          %p5726 = pneg %p153
        $region50: #{kazunet_forward.1} parent=47 // pred_check_branch
          %5728 = sbr.rel (%p5726) target = $region52
        $region51: #{kazunet_forward.1} parent=47 // pred_region
          %s5729 = sand.u32 %s138, 1
          %s5730 = scalar_lea.sflag [#allocation9], %s5729
          %s5731 = sand.u32 %s138, 1
          %s5732 = scalar_lea.vmem [#allocation8], %s5731
          %5733 = dma.done %s5730, 16
        $region52: #{kazunet_forward.1} parent=47 // pred_fallthru
          _
      $region48: #{kazunet_forward.1} parent=5 // pred_fallthru
        _
    $region6: #{kazunet_forward.1} parent=1 // loop_footer
      %s18 = sadd.s32 1, %s14
    $region7: #{kazunet_forward.1} parent=1 // loop_footer_branch
      %13 = sbr.rel target = $region3
    $region8: #{kazunet_forward.1} parent=1 // loop_exit
      _
    %5734 = vsyncpa [#allocation9], 1
    %s5735 = scalar_lea.sflag [#allocation9], 1
    %5736 = vsyncpa %s5735, 1

</llo_original>
